<compile_context>
chip_gen: v7x
topology: tpu7x:2x2x1
jax: 0.10.0
libtpu: 0.0.40
codegen_flags: <defaults>
</compile_context>

<pallas_src>
import functools

import numpy as np
import jax
import jax.numpy as jnp
from jax import lax
from jax.experimental import pallas as pl

# ---- config (mirrors the torch `c.*` constants, chosen small) ----
N_EMBD = 32                 # c.n_embd
N_HIDDEN = 32               # c.n_hidden  -> FFN hidden = 4 * n_hidden
HIDDEN = 4 * N_HIDDEN       # 128
BLOCK_SIZE = 8              # c.block_size (= T here)
N_HEAD = 4
HEAD_SIZE = N_EMBD // N_HEAD
N_LAYER = 4
VOCAB = 16
EPS = 1e-5
MASK_VALUE = -1e30          # large finite negative instead of -inf


def _layernorm(x, g, b):
    mu = jnp.mean(x, axis=-1, keepdims=True)
    var = jnp.mean(jnp.square(x - mu), axis=-1, keepdims=True)
    return (x - mu) * lax.rsqrt(var + EPS) * g + b


# ------------------------------------------------------------------
# Single kernel: 4 x (LN -> causal MHA -> residual -> LN -> FFN -> residual)
#                + final LN + lm_head, all in one grid-less pallas_call.
# ------------------------------------------------------------------
def decoder_kernel(x_ref, bias_ref,
                   wqkv_ref, wo_ref, bo_ref,
                   ln1g_ref, ln1b_ref, ln2g_ref, ln2b_ref,
                   w1_ref, b1_ref, w2_ref, b2_ref,
                   lnfg_ref, lnfb_ref, wlm_ref, blm_ref,
                   logits_ref, attn_ref, *, batch, seq):
    B, T, C, D = batch, seq, N_EMBD, HEAD_SIZE
    scale = D ** -0.5

    x = x_ref[...]            # (B*T, C) residual stream, lives in vregs
    bias = bias_ref[...]      # (B*T, B*T) additive causal/same-batch mask

    attn_layers = []
    for l in range(N_LAYER):                      # static unroll over layers
        # ---- causal multi-head self-attention on ln1(x) ----
        h = _layernorm(x, ln1g_ref[l], ln1b_ref[l])
        qkv = jnp.dot(h, wqkv_ref[l], preferred_element_type=jnp.float32)  # (B*T, 3C)
        head_outs, head_maps = [], []
        for hd in range(N_HEAD):                  # static unroll over heads
            qh = qkv[:, hd * D:(hd + 1) * D]
            kh = qkv[:, C + hd * D:C + (hd + 1) * D]
            vh = qkv[:, 2 * C + hd * D:2 * C + (hd + 1) * D]
            # scores over the folded (batch*seq) key axis; cross-batch and
            # non-causal entries get -1e30 via the additive bias.
            s = jnp.einsum('td,sd->ts', qh, kh,
                           preferred_element_type=jnp.float32) * scale + bias
            s = s - jnp.max(s, axis=-1, keepdims=True)
            p = jnp.exp(s)
            p = p / jnp.sum(p, axis=-1, keepdims=True)     # rows sum to 1
            # Cross-batch probabilities are exactly 0, so summing the key-axis
            # column blocks recovers the per-batch (B*T, T) attention map
            # without any sublane slicing / 3-D reshapes.
            blk = p[:, 0:T]
            for b in range(1, B):
                blk = blk + p[:, b * T:(b + 1) * T]
            head_maps.append(blk)                                  # (B*T, T)
            head_outs.append(jnp.dot(p, vh,
                                     preferred_element_type=jnp.float32))
        attn_layers.append(jnp.concatenate(head_maps, axis=-1))    # (B*T, H*T)
        sa = jnp.concatenate(head_outs, axis=-1)                   # (B*T, C)
        sa = jnp.dot(sa, wo_ref[l],
                     preferred_element_type=jnp.float32) + bo_ref[l]
        x = x + sa

        # ---- feed-forward on ln2(x) ----
        h2 = _layernorm(x, ln2g_ref[l], ln2b_ref[l])
        f = jnp.dot(h2, w1_ref[l], preferred_element_type=jnp.float32) + b1_ref[l]
        f = jnp.maximum(f, 0.0)
        f = jnp.dot(f, w2_ref[l], preferred_element_type=jnp.float32) + b2_ref[l]
        x = x + f

    # ---- final layernorm + lm_head (fused, no second pallas_call) ----
    xf = _layernorm(x, lnfg_ref[...], lnfb_ref[...])
    logits_ref[...] = jnp.dot(xf, wlm_ref[...],
                              preferred_element_type=jnp.float32) + blm_ref[...]

    # single lane-dense store: last dim = L*H*T = 128
    attn_ref[...] = jnp.concatenate(attn_layers, axis=-1)


def run_decoder(x2d, attn_bias, p, *, batch, seq):
    BT = batch * seq
    kernel = functools.partial(decoder_kernel, batch=batch, seq=seq)
    # Everything (weights + activations) fits comfortably in VMEM on v5e/v6e/
    # v7x, so no grid / BlockSpec tiling is needed: whole arrays in VMEM.
    return pl.pallas_call(
        kernel,
        out_shape=(
            jax.ShapeDtypeStruct((BT, VOCAB), jnp.float32),                 # logits
            jax.ShapeDtypeStruct((BT, N_LAYER * N_HEAD * seq), jnp.float32)  # attn
        ),
    )(x2d, attn_bias,
      p['wqkv'], p['wo'], p['bo'],
      p['ln1g'], p['ln1b'], p['ln2g'], p['ln2b'],
      p['w1'], p['b1'], p['w2'], p['b2'],
      p['lnfg'], p['lnfb'], p['wlm'], p['blm'])


def _attn_bias(batch, seq):
    """Additive mask on the folded (batch*seq) axis: 0 where attending is
    allowed (same batch element AND causal), -1e30 elsewhere. Host constant."""
    i = np.arange(batch * seq)
    same = (i[:, None] // seq) == (i[None, :] // seq)
    causal = (i[:, None] % seq) >= (i[None, :] % seq)
    return jnp.asarray(np.where(same & causal, 0.0, MASK_VALUE),
                       dtype=jnp.float32)


# ------------------------------------------------------------------
# Full Decoder.forward
# ------------------------------------------------------------------
def decoder_forward(params, idx, targets=None):
    B, T = idx.shape
    # token + position embedding lookup (gather) is plain-JAX glue
    x = params['tok_emb'][idx] + params['pos_emb'][:T][None, :, :]
    x2d = x.reshape(B * T, N_EMBD).astype(jnp.float32)

    logits2d, attn2d = run_decoder(x2d, _attn_bias(B, T), params,
                                   batch=B, seq=T)

    # (B*T, L*H*T) lane-dense slab -> (L*H, B, T, T), layer-major then head
    # (matches torch.stack order of all_attn_maps). Free reshape/transpose.
    attn_maps = attn2d.reshape(B, T, N_LAYER, N_HEAD, T)
    attn_maps = jnp.transpose(attn_maps, (2, 3, 0, 1, 4)).reshape(
        N_LAYER * N_HEAD, B, T, T)

    if targets is None:
        return logits2d.reshape(B, T, VOCAB), None, attn_maps

    # cross-entropy loss (plain-JAX glue, matches F.cross_entropy mean)
    tg = targets.reshape(B * T)
    logz = jax.nn.logsumexp(logits2d, axis=-1)
    picked = jnp.take_along_axis(logits2d, tg[:, None], axis=-1)[:, 0]
    loss = jnp.mean(logz - picked)
    return logits2d, loss, attn_maps


# ------------------------------------------------------------------
# Pure-JAX reference (no Pallas) — used only to sanity-check the kernel.
# ------------------------------------------------------------------
def decoder_reference(params, idx):
    B, T = idx.shape
    C, D = N_EMBD, HEAD_SIZE
    x = params['tok_emb'][idx] + params['pos_emb'][:T][None, :, :]
    causal = jnp.asarray(np.tril(np.ones((T, T), dtype=bool)))
    attn_all = []
    for l in range(N_LAYER):
        h = _layernorm(x, params['ln1g'][l], params['ln1b'][l])
        wqkv = params['wqkv'][l]
        q, k, v = h @ wqkv[:, :C], h @ wqkv[:, C:2 * C], h @ wqkv[:, 2 * C:]
        outs = []
        for hd in range(N_HEAD):
            sl = slice(hd * D, (hd + 1) * D)
            s = jnp.einsum('btd,bsd->bts', q[..., sl], k[..., sl]) * D ** -0.5
            s = jnp.where(causal[None], s, -jnp.inf)
            p = jax.nn.softmax(s, axis=-1)
            attn_all.append(p)
            outs.append(jnp.einsum('bts,bsd->btd', p, v[..., sl]))
        x = x + jnp.concatenate(outs, -1) @ params['wo'][l] + params['bo'][l]
        h2 = _layernorm(x, params['ln2g'][l], params['ln2b'][l])
        x = x + jnp.maximum(h2 @ params['w1'][l] + params['b1'][l],
                            0.0) @ params['w2'][l] + params['b2'][l]
    xf = _layernorm(x, params['lnfg'], params['lnfb'])
    logits = xf @ params['wlm'] + params['blm']
    return logits, jnp.stack(attn_all)


def init_params(key):
    keys = jax.random.split(key, 8)
    n = lambda k, shape: jax.random.normal(k, shape, jnp.float32) * 0.02
    L, C, H = N_LAYER, N_EMBD, HIDDEN
    return dict(
        tok_emb=n(keys[0], (VOCAB, C)),
        pos_emb=n(keys[1], (BLOCK_SIZE, C)),
        # fused [Wq | Wk | Wv]; within each C-wide block, columns are
        # head-blocked (head h owns columns h*HEAD_SIZE:(h+1)*HEAD_SIZE)
        wqkv=n(keys[2], (L, C, 3 * C)),
        wo=n(keys[3], (L, C, C)),
        bo=jnp.zeros((L, 1, C), jnp.float32),
        ln1g=jnp.ones((L, 1, C), jnp.float32),
        ln1b=jnp.zeros((L, 1, C), jnp.float32),
        ln2g=jnp.ones((L, 1, C), jnp.float32),
        ln2b=jnp.zeros((L, 1, C), jnp.float32),
        w1=n(keys[4], (L, C, H)),
        b1=jnp.zeros((L, 1, H), jnp.float32),
        w2=n(keys[5], (L, H, C)),
        b2=jnp.zeros((L, 1, C), jnp.float32),
        lnfg=jnp.ones((1, C), jnp.float32),
        lnfb=jnp.zeros((1, C), jnp.float32),
        wlm=n(keys[6], (C, VOCAB)),
        blm=jnp.zeros((1, VOCAB), jnp.float32),
    )


if __name__ == "__main__":
    key = jax.random.PRNGKey(0)
    pkey, ikey = jax.random.split(key)
    params = init_params(pkey)
    B, T = 2, BLOCK_SIZE
    idx = jax.random.randint(ikey, (B, T), 0, VOCAB, dtype=jnp.int32)

    logits, loss, attn_maps = decoder_forward(params, idx, targets=None)
    jax.block_until_ready((logits, attn_maps))

    assert logits.shape == (B, T, VOCAB)
    assert attn_maps.shape == (N_LAYER * N_HEAD, B, T, T)
    assert loss is None
    # attention rows must sum to 1 (softmax check)
    assert jnp.allclose(attn_maps.sum(-1), 1.0, atol=1e-4)

    # sanity-check against the plain-JAX reference (loose tolerance: XLA's
    # default TPU matmul precision may differ from the in-kernel f32 matmuls)
    with jax.default_matmul_precision('highest'):
        ref_logits, ref_attn = decoder_reference(params, idx)
    assert jnp.allclose(logits, ref_logits, atol=5e-2, rtol=5e-2)
    assert jnp.allclose(attn_maps, ref_attn, atol=5e-2)

    print("KERNEL_OK")
</pallas_src>

<mosaic_0001>
module attributes {stable_mosaic.version = 11 : i64} {
  func.func @decoder_kernel(%arg0: memref<16x32xf32, #tpu.memory_space<vmem>>, %arg1: memref<16x16xf32, #tpu.memory_space<vmem>>, %arg2: memref<4x32x96xf32, #tpu.memory_space<vmem>>, %arg3: memref<4x32x32xf32, #tpu.memory_space<vmem>>, %arg4: memref<4x1x32xf32, #tpu.memory_space<vmem>>, %arg5: memref<4x1x32xf32, #tpu.memory_space<vmem>>, %arg6: memref<4x1x32xf32, #tpu.memory_space<vmem>>, %arg7: memref<4x1x32xf32, #tpu.memory_space<vmem>>, %arg8: memref<4x1x32xf32, #tpu.memory_space<vmem>>, %arg9: memref<4x32x128xf32, #tpu.memory_space<vmem>>, %arg10: memref<4x1x128xf32, #tpu.memory_space<vmem>>, %arg11: memref<4x128x32xf32, #tpu.memory_space<vmem>>, %arg12: memref<4x1x32xf32, #tpu.memory_space<vmem>>, %arg13: memref<1x32xf32, #tpu.memory_space<vmem>>, %arg14: memref<1x32xf32, #tpu.memory_space<vmem>>, %arg15: memref<32x16xf32, #tpu.memory_space<vmem>>, %arg16: memref<1x16xf32, #tpu.memory_space<vmem>>, %arg17: memref<16x16xf32, #tpu.memory_space<vmem>>, %arg18: memref<16x128xf32, #tpu.memory_space<vmem>>) attributes {dimension_semantics = [], scalar_prefetch = 0 : i64, scratch_operands = 0 : i64, tpu.core_type = #tpu.core_type<tc>} {
    %c0 = arith.constant 0 : index
    %c0_0 = arith.constant 0 : index
    %0 = vector.load %arg0[%c0, %c0_0] : memref<16x32xf32, #tpu.memory_space<vmem>>, vector<16x32xf32>
    %c0_1 = arith.constant 0 : index
    %c0_2 = arith.constant 0 : index
    %1 = vector.load %arg1[%c0_1, %c0_2] : memref<16x16xf32, #tpu.memory_space<vmem>>, vector<16x16xf32>
    %c0_3 = arith.constant 0 : index
    %c0_4 = arith.constant 0 : index
    %c0_5 = arith.constant 0 : index
    %2 = vector.load %arg5[%c0_3, %c0_4, %c0_5] : memref<4x1x32xf32, #tpu.memory_space<vmem>>, vector<1x1x32xf32>
    %3 = vector.shape_cast %2 : vector<1x1x32xf32> to vector<1x32xf32>
    %c0_6 = arith.constant 0 : index
    %c0_7 = arith.constant 0 : index
    %c0_8 = arith.constant 0 : index
    %4 = vector.load %arg6[%c0_6, %c0_7, %c0_8] : memref<4x1x32xf32, #tpu.memory_space<vmem>>, vector<1x1x32xf32>
    %5 = vector.shape_cast %4 : vector<1x1x32xf32> to vector<1x32xf32>
    %cst = arith.constant dense<0.000000e+00> : vector<16xf32>
    %6 = vector.multi_reduction <add>, %0, %cst [1] : vector<16x32xf32> to vector<16xf32>
    %7 = vector.shape_cast %6 : vector<16xf32> to vector<16x1xf32>
    %cst_9 = arith.constant 3.200000e+01 : f32
    %8 = vector.broadcast %cst_9 : f32 to vector<16x1xf32>
    %9 = arith.divf %7, %8 : vector<16x1xf32>
    %10 = vector.broadcast %9 : vector<16x1xf32> to vector<16x32xf32>
    %11 = arith.subf %0, %10 : vector<16x32xf32>
    %12 = arith.mulf %11, %11 : vector<16x32xf32>
    %cst_10 = arith.constant dense<0.000000e+00> : vector<16xf32>
    %13 = vector.multi_reduction <add>, %12, %cst_10 [1] : vector<16x32xf32> to vector<16xf32>
    %14 = vector.shape_cast %13 : vector<16xf32> to vector<16x1xf32>
    %cst_11 = arith.constant 3.200000e+01 : f32
    %15 = vector.broadcast %cst_11 : f32 to vector<16x1xf32>
    %16 = arith.divf %14, %15 : vector<16x1xf32>
    %17 = vector.broadcast %9 : vector<16x1xf32> to vector<16x32xf32>
    %18 = arith.subf %0, %17 : vector<16x32xf32>
    %cst_12 = arith.constant 9.99999974E-6 : f32
    %19 = vector.broadcast %cst_12 : f32 to vector<16x1xf32>
    %20 = arith.addf %16, %19 : vector<16x1xf32>
    %21 = math.rsqrt %20 : vector<16x1xf32>
    %22 = vector.broadcast %21 : vector<16x1xf32> to vector<16x32xf32>
    %23 = arith.mulf %18, %22 : vector<16x32xf32>
    %24 = vector.broadcast %3 : vector<1x32xf32> to vector<16x32xf32>
    %25 = arith.mulf %23, %24 : vector<16x32xf32>
    %26 = vector.broadcast %5 : vector<1x32xf32> to vector<16x32xf32>
    %27 = arith.addf %25, %26 : vector<16x32xf32>
    %c0_13 = arith.constant 0 : index
    %c0_14 = arith.constant 0 : index
    %c0_15 = arith.constant 0 : index
    %28 = vector.load %arg2[%c0_13, %c0_14, %c0_15] : memref<4x32x96xf32, #tpu.memory_space<vmem>>, vector<1x32x96xf32>
    %29 = vector.shape_cast %28 : vector<1x32x96xf32> to vector<32x96xf32>
    %cst_16 = arith.constant dense<0.000000e+00> : vector<16x96xf32>
    %30 = tpu.matmul %27, %29, %cst_16 {dimension_numbers = #tpu.dot_dimension_numbers<[1], [0], [0], [1], [0, 0, 1, 1], [], []>} : vector<16x32xf32>, vector<32x96xf32>, vector<16x96xf32> -> vector<16x96xf32>
    %31 = vector.extract_strided_slice %30 {offsets = [0, 0], sizes = [16, 8], strides = [1, 1]} : vector<16x96xf32> to vector<16x8xf32>
    %32 = vector.extract_strided_slice %30 {offsets = [0, 32], sizes = [16, 8], strides = [1, 1]} : vector<16x96xf32> to vector<16x8xf32>
    %33 = vector.extract_strided_slice %30 {offsets = [0, 64], sizes = [16, 8], strides = [1, 1]} : vector<16x96xf32> to vector<16x8xf32>
    "tpu.trace_start"() <{level = 10 : i32, message = "td,sd->ts"}> : () -> ()
    %cst_17 = arith.constant dense<0.000000e+00> : vector<16x16xf32>
    %34 = tpu.matmul %31, %32, %cst_17 {dimension_numbers = #tpu.dot_dimension_numbers<[1], [1], [0], [0], [0, 0, 1, 0], [], []>} : vector<16x8xf32>, vector<16x8xf32>, vector<16x16xf32> -> vector<16x16xf32>
    "tpu.trace_stop"() : () -> ()
    %cst_18 = arith.constant 0.353553385 : f32
    %35 = vector.broadcast %cst_18 : f32 to vector<16x16xf32>
    %36 = arith.mulf %34, %35 : vector<16x16xf32>
    %37 = arith.addf %36, %1 : vector<16x16xf32>
    %cst_19 = arith.constant dense<0xFF800000> : vector<16xf32>
    %38 = vector.multi_reduction <maximumf>, %37, %cst_19 [1] : vector<16x16xf32> to vector<16xf32>
    %39 = vector.shape_cast %38 : vector<16xf32> to vector<16x1xf32>
    %40 = vector.broadcast %39 : vector<16x1xf32> to vector<16x16xf32>
    %41 = arith.subf %37, %40 : vector<16x16xf32>
    %42 = math.exp %41 : vector<16x16xf32>
    %cst_20 = arith.constant dense<0.000000e+00> : vector<16xf32>
    %43 = vector.multi_reduction <add>, %42, %cst_20 [1] : vector<16x16xf32> to vector<16xf32>
    %44 = vector.shape_cast %43 : vector<16xf32> to vector<16x1xf32>
    %45 = vector.broadcast %44 : vector<16x1xf32> to vector<16x16xf32>
    %46 = arith.divf %42, %45 : vector<16x16xf32>
    %47 = vector.extract_strided_slice %46 {offsets = [0, 0], sizes = [16, 8], strides = [1, 1]} : vector<16x16xf32> to vector<16x8xf32>
    %48 = vector.extract_strided_slice %46 {offsets = [0, 8], sizes = [16, 8], strides = [1, 1]} : vector<16x16xf32> to vector<16x8xf32>
    %49 = arith.addf %47, %48 : vector<16x8xf32>
    %cst_21 = arith.constant dense<0.000000e+00> : vector<16x8xf32>
    %50 = tpu.matmul %46, %33, %cst_21 {dimension_numbers = #tpu.dot_dimension_numbers<[1], [0], [0], [1], [0, 0, 1, 1], [], []>} : vector<16x16xf32>, vector<16x8xf32>, vector<16x8xf32> -> vector<16x8xf32>
    %51 = vector.extract_strided_slice %30 {offsets = [0, 8], sizes = [16, 8], strides = [1, 1]} : vector<16x96xf32> to vector<16x8xf32>
    %52 = vector.extract_strided_slice %30 {offsets = [0, 40], sizes = [16, 8], strides = [1, 1]} : vector<16x96xf32> to vector<16x8xf32>
    %53 = vector.extract_strided_slice %30 {offsets = [0, 72], sizes = [16, 8], strides = [1, 1]} : vector<16x96xf32> to vector<16x8xf32>
    "tpu.trace_start"() <{level = 10 : i32, message = "td,sd->ts"}> : () -> ()
    %cst_22 = arith.constant dense<0.000000e+00> : vector<16x16xf32>
    %54 = tpu.matmul %51, %52, %cst_22 {dimension_numbers = #tpu.dot_dimension_numbers<[1], [1], [0], [0], [0, 0, 1, 0], [], []>} : vector<16x8xf32>, vector<16x8xf32>, vector<16x16xf32> -> vector<16x16xf32>
    "tpu.trace_stop"() : () -> ()
    %cst_23 = arith.constant 0.353553385 : f32
    %55 = vector.broadcast %cst_23 : f32 to vector<16x16xf32>
    %56 = arith.mulf %54, %55 : vector<16x16xf32>
    %57 = arith.addf %56, %1 : vector<16x16xf32>
    %cst_24 = arith.constant dense<0xFF800000> : vector<16xf32>
    %58 = vector.multi_reduction <maximumf>, %57, %cst_24 [1] : vector<16x16xf32> to vector<16xf32>
    %59 = vector.shape_cast %58 : vector<16xf32> to vector<16x1xf32>
    %60 = vector.broadcast %59 : vector<16x1xf32> to vector<16x16xf32>
    %61 = arith.subf %57, %60 : vector<16x16xf32>
    %62 = math.exp %61 : vector<16x16xf32>
    %cst_25 = arith.constant dense<0.000000e+00> : vector<16xf32>
    %63 = vector.multi_reduction <add>, %62, %cst_25 [1] : vector<16x16xf32> to vector<16xf32>
    %64 = vector.shape_cast %63 : vector<16xf32> to vector<16x1xf32>
    %65 = vector.broadcast %64 : vector<16x1xf32> to vector<16x16xf32>
    %66 = arith.divf %62, %65 : vector<16x16xf32>
    %67 = vector.extract_strided_slice %66 {offsets = [0, 0], sizes = [16, 8], strides = [1, 1]} : vector<16x16xf32> to vector<16x8xf32>
    %68 = vector.extract_strided_slice %66 {offsets = [0, 8], sizes = [16, 8], strides = [1, 1]} : vector<16x16xf32> to vector<16x8xf32>
    %69 = arith.addf %67, %68 : vector<16x8xf32>
    %cst_26 = arith.constant dense<0.000000e+00> : vector<16x8xf32>
    %70 = tpu.matmul %66, %53, %cst_26 {dimension_numbers = #tpu.dot_dimension_numbers<[1], [0], [0], [1], [0, 0, 1, 1], [], []>} : vector<16x16xf32>, vector<16x8xf32>, vector<16x8xf32> -> vector<16x8xf32>
    %71 = vector.extract_strided_slice %30 {offsets = [0, 16], sizes = [16, 8], strides = [1, 1]} : vector<16x96xf32> to vector<16x8xf32>
    %72 = vector.extract_strided_slice %30 {offsets = [0, 48], sizes = [16, 8], strides = [1, 1]} : vector<16x96xf32> to vector<16x8xf32>
    %73 = vector.extract_strided_slice %30 {offsets = [0, 80], sizes = [16, 8], strides = [1, 1]} : vector<16x96xf32> to vector<16x8xf32>
    "tpu.trace_start"() <{level = 10 : i32, message = "td,sd->ts"}> : () -> ()
    %cst_27 = arith.constant dense<0.000000e+00> : vector<16x16xf32>
    %74 = tpu.matmul %71, %72, %cst_27 {dimension_numbers = #tpu.dot_dimension_numbers<[1], [1], [0], [0], [0, 0, 1, 0], [], []>} : vector<16x8xf32>, vector<16x8xf32>, vector<16x16xf32> -> vector<16x16xf32>
    "tpu.trace_stop"() : () -> ()
    %cst_28 = arith.constant 0.353553385 : f32
    %75 = vector.broadcast %cst_28 : f32 to vector<16x16xf32>
    %76 = arith.mulf %74, %75 : vector<16x16xf32>
    %77 = arith.addf %76, %1 : vector<16x16xf32>
    %cst_29 = arith.constant dense<0xFF800000> : vector<16xf32>
    %78 = vector.multi_reduction <maximumf>, %77, %cst_29 [1] : vector<16x16xf32> to vector<16xf32>
    %79 = vector.shape_cast %78 : vector<16xf32> to vector<16x1xf32>
    %80 = vector.broadcast %79 : vector<16x1xf32> to vector<16x16xf32>
    %81 = arith.subf %77, %80 : vector<16x16xf32>
    %82 = math.exp %81 : vector<16x16xf32>
    %cst_30 = arith.constant dense<0.000000e+00> : vector<16xf32>
    %83 = vector.multi_reduction <add>, %82, %cst_30 [1] : vector<16x16xf32> to vector<16xf32>
    %84 = vector.shape_cast %83 : vector<16xf32> to vector<16x1xf32>
    %85 = vector.broadcast %84 : vector<16x1xf32> to vector<16x16xf32>
    %86 = arith.divf %82, %85 : vector<16x16xf32>
    %87 = vector.extract_strided_slice %86 {offsets = [0, 0], sizes = [16, 8], strides = [1, 1]} : vector<16x16xf32> to vector<16x8xf32>
    %88 = vector.extract_strided_slice %86 {offsets = [0, 8], sizes = [16, 8], strides = [1, 1]} : vector<16x16xf32> to vector<16x8xf32>
    %89 = arith.addf %87, %88 : vector<16x8xf32>
    %cst_31 = arith.constant dense<0.000000e+00> : vector<16x8xf32>
    %90 = tpu.matmul %86, %73, %cst_31 {dimension_numbers = #tpu.dot_dimension_numbers<[1], [0], [0], [1], [0, 0, 1, 1], [], []>} : vector<16x16xf32>, vector<16x8xf32>, vector<16x8xf32> -> vector<16x8xf32>
    %91 = vector.extract_strided_slice %30 {offsets = [0, 24], sizes = [16, 8], strides = [1, 1]} : vector<16x96xf32> to vector<16x8xf32>
    %92 = vector.extract_strided_slice %30 {offsets = [0, 56], sizes = [16, 8], strides = [1, 1]} : vector<16x96xf32> to vector<16x8xf32>
    %93 = vector.extract_strided_slice %30 {offsets = [0, 88], sizes = [16, 8], strides = [1, 1]} : vector<16x96xf32> to vector<16x8xf32>
    "tpu.trace_start"() <{level = 10 : i32, message = "td,sd->ts"}> : () -> ()
    %cst_32 = arith.constant dense<0.000000e+00> : vector<16x16xf32>
    %94 = tpu.matmul %91, %92, %cst_32 {dimension_numbers = #tpu.dot_dimension_numbers<[1], [1], [0], [0], [0, 0, 1, 0], [], []>} : vector<16x8xf32>, vector<16x8xf32>, vector<16x16xf32> -> vector<16x16xf32>
    "tpu.trace_stop"() : () -> ()
    %cst_33 = arith.constant 0.353553385 : f32
    %95 = vector.broadcast %cst_33 : f32 to vector<16x16xf32>
    %96 = arith.mulf %94, %95 : vector<16x16xf32>
    %97 = arith.addf %96, %1 : vector<16x16xf32>
    %cst_34 = arith.constant dense<0xFF800000> : vector<16xf32>
    %98 = vector.multi_reduction <maximumf>, %97, %cst_34 [1] : vector<16x16xf32> to vector<16xf32>
    %99 = vector.shape_cast %98 : vector<16xf32> to vector<16x1xf32>
    %100 = vector.broadcast %99 : vector<16x1xf32> to vector<16x16xf32>
    %101 = arith.subf %97, %100 : vector<16x16xf32>
    %102 = math.exp %101 : vector<16x16xf32>
    %cst_35 = arith.constant dense<0.000000e+00> : vector<16xf32>
    %103 = vector.multi_reduction <add>, %102, %cst_35 [1] : vector<16x16xf32> to vector<16xf32>
    %104 = vector.shape_cast %103 : vector<16xf32> to vector<16x1xf32>
    %105 = vector.broadcast %104 : vector<16x1xf32> to vector<16x16xf32>
    %106 = arith.divf %102, %105 : vector<16x16xf32>
    %107 = vector.extract_strided_slice %106 {offsets = [0, 0], sizes = [16, 8], strides = [1, 1]} : vector<16x16xf32> to vector<16x8xf32>
    %108 = vector.extract_strided_slice %106 {offsets = [0, 8], sizes = [16, 8], strides = [1, 1]} : vector<16x16xf32> to vector<16x8xf32>
    %109 = arith.addf %107, %108 : vector<16x8xf32>
    %cst_36 = arith.constant dense<0.000000e+00> : vector<16x8xf32>
    %110 = tpu.matmul %106, %93, %cst_36 {dimension_numbers = #tpu.dot_dimension_numbers<[1], [0], [0], [1], [0, 0, 1, 1], [], []>} : vector<16x16xf32>, vector<16x8xf32>, vector<16x8xf32> -> vector<16x8xf32>
    %111 = tpu.concatenate %49, %69, %89, %109 in 1 : vector<16x8xf32>, vector<16x8xf32>, vector<16x8xf32>, vector<16x8xf32> -> vector<16x32xf32>
    %112 = tpu.concatenate %50, %70, %90, %110 in 1 : vector<16x8xf32>, vector<16x8xf32>, vector<16x8xf32>, vector<16x8xf32> -> vector<16x32xf32>
    %c0_37 = arith.constant 0 : index
    %c0_38 = arith.constant 0 : index
    %c0_39 = arith.constant 0 : index
    %113 = vector.load %arg3[%c0_37, %c0_38, %c0_39] : memref<4x32x32xf32, #tpu.memory_space<vmem>>, vector<1x32x32xf32>
    %114 = vector.shape_cast %113 : vector<1x32x32xf32> to vector<32x32xf32>
    %cst_40 = arith.constant dense<0.000000e+00> : vector<16x32xf32>
    %115 = tpu.matmul %112, %114, %cst_40 {dimension_numbers = #tpu.dot_dimension_numbers<[1], [0], [0], [1], [0, 0, 1, 1], [], []>} : vector<16x32xf32>, vector<32x32xf32>, vector<16x32xf32> -> vector<16x32xf32>
    %c0_41 = arith.constant 0 : index
    %c0_42 = arith.constant 0 : index
    %c0_43 = arith.constant 0 : index
    %116 = vector.load %arg4[%c0_41, %c0_42, %c0_43] : memref<4x1x32xf32, #tpu.memory_space<vmem>>, vector<1x1x32xf32>
    %117 = vector.shape_cast %116 : vector<1x1x32xf32> to vector<1x32xf32>
    %118 = vector.broadcast %117 : vector<1x32xf32> to vector<16x32xf32>
    %119 = arith.addf %115, %118 : vector<16x32xf32>
    %120 = arith.addf %0, %119 : vector<16x32xf32>
    %c0_44 = arith.constant 0 : index
    %c0_45 = arith.constant 0 : index
    %c0_46 = arith.constant 0 : index
    %121 = vector.load %arg7[%c0_44, %c0_45, %c0_46] : memref<4x1x32xf32, #tpu.memory_space<vmem>>, vector<1x1x32xf32>
    %122 = vector.shape_cast %121 : vector<1x1x32xf32> to vector<1x32xf32>
    %c0_47 = arith.constant 0 : index
    %c0_48 = arith.constant 0 : index
    %c0_49 = arith.constant 0 : index
    %123 = vector.load %arg8[%c0_47, %c0_48, %c0_49] : memref<4x1x32xf32, #tpu.memory_space<vmem>>, vector<1x1x32xf32>
    %124 = vector.shape_cast %123 : vector<1x1x32xf32> to vector<1x32xf32>
    %cst_50 = arith.constant dense<0.000000e+00> : vector<16xf32>
    %125 = vector.multi_reduction <add>, %120, %cst_50 [1] : vector<16x32xf32> to vector<16xf32>
    %126 = vector.shape_cast %125 : vector<16xf32> to vector<16x1xf32>
    %cst_51 = arith.constant 3.200000e+01 : f32
    %127 = vector.broadcast %cst_51 : f32 to vector<16x1xf32>
    %128 = arith.divf %126, %127 : vector<16x1xf32>
    %129 = vector.broadcast %128 : vector<16x1xf32> to vector<16x32xf32>
    %130 = arith.subf %120, %129 : vector<16x32xf32>
    %131 = arith.mulf %130, %130 : vector<16x32xf32>
    %cst_52 = arith.constant dense<0.000000e+00> : vector<16xf32>
    %132 = vector.multi_reduction <add>, %131, %cst_52 [1] : vector<16x32xf32> to vector<16xf32>
    %133 = vector.shape_cast %132 : vector<16xf32> to vector<16x1xf32>
    %cst_53 = arith.constant 3.200000e+01 : f32
    %134 = vector.broadcast %cst_53 : f32 to vector<16x1xf32>
    %135 = arith.divf %133, %134 : vector<16x1xf32>
    %136 = vector.broadcast %128 : vector<16x1xf32> to vector<16x32xf32>
    %137 = arith.subf %120, %136 : vector<16x32xf32>
    %cst_54 = arith.constant 9.99999974E-6 : f32
    %138 = vector.broadcast %cst_54 : f32 to vector<16x1xf32>
    %139 = arith.addf %135, %138 : vector<16x1xf32>
    %140 = math.rsqrt %139 : vector<16x1xf32>
    %141 = vector.broadcast %140 : vector<16x1xf32> to vector<16x32xf32>
    %142 = arith.mulf %137, %141 : vector<16x32xf32>
    %143 = vector.broadcast %122 : vector<1x32xf32> to vector<16x32xf32>
    %144 = arith.mulf %142, %143 : vector<16x32xf32>
    %145 = vector.broadcast %124 : vector<1x32xf32> to vector<16x32xf32>
    %146 = arith.addf %144, %145 : vector<16x32xf32>
    %c0_55 = arith.constant 0 : index
    %c0_56 = arith.constant 0 : index
    %c0_57 = arith.constant 0 : index
    %147 = vector.load %arg9[%c0_55, %c0_56, %c0_57] : memref<4x32x128xf32, #tpu.memory_space<vmem>>, vector<1x32x128xf32>
    %148 = vector.shape_cast %147 : vector<1x32x128xf32> to vector<32x128xf32>
    %cst_58 = arith.constant dense<0.000000e+00> : vector<16x128xf32>
    %149 = tpu.matmul %146, %148, %cst_58 {dimension_numbers = #tpu.dot_dimension_numbers<[1], [0], [0], [1], [0, 0, 1, 1], [], []>} : vector<16x32xf32>, vector<32x128xf32>, vector<16x128xf32> -> vector<16x128xf32>
    %c0_59 = arith.constant 0 : index
    %c0_60 = arith.constant 0 : index
    %c0_61 = arith.constant 0 : index
    %150 = vector.load %arg10[%c0_59, %c0_60, %c0_61] : memref<4x1x128xf32, #tpu.memory_space<vmem>>, vector<1x1x128xf32>
    %151 = vector.shape_cast %150 : vector<1x1x128xf32> to vector<1x128xf32>
    %152 = vector.broadcast %151 : vector<1x128xf32> to vector<16x128xf32>
    %153 = arith.addf %149, %152 : vector<16x128xf32>
    %cst_62 = arith.constant 0.000000e+00 : f32
    %154 = vector.broadcast %cst_62 : f32 to vector<16x128xf32>
    %155 = arith.maximumf %153, %154 : vector<16x128xf32>
    %c0_63 = arith.constant 0 : index
    %c0_64 = arith.constant 0 : index
    %c0_65 = arith.constant 0 : index
    %156 = vector.load %arg11[%c0_63, %c0_64, %c0_65] : memref<4x128x32xf32, #tpu.memory_space<vmem>>, vector<1x128x32xf32>
    %157 = vector.shape_cast %156 : vector<1x128x32xf32> to vector<128x32xf32>
    %cst_66 = arith.constant dense<0.000000e+00> : vector<16x32xf32>
    %158 = tpu.matmul %155, %157, %cst_66 {dimension_numbers = #tpu.dot_dimension_numbers<[1], [0], [0], [1], [0, 0, 1, 1], [], []>} : vector<16x128xf32>, vector<128x32xf32>, vector<16x32xf32> -> vector<16x32xf32>
    %c0_67 = arith.constant 0 : index
    %c0_68 = arith.constant 0 : index
    %c0_69 = arith.constant 0 : index
    %159 = vector.load %arg12[%c0_67, %c0_68, %c0_69] : memref<4x1x32xf32, #tpu.memory_space<vmem>>, vector<1x1x32xf32>
    %160 = vector.shape_cast %159 : vector<1x1x32xf32> to vector<1x32xf32>
    %161 = vector.broadcast %160 : vector<1x32xf32> to vector<16x32xf32>
    %162 = arith.addf %158, %161 : vector<16x32xf32>
    %163 = arith.addf %120, %162 : vector<16x32xf32>
    %c1 = arith.constant 1 : index
    %c0_70 = arith.constant 0 : index
    %c0_71 = arith.constant 0 : index
    %164 = vector.load %arg5[%c1, %c0_70, %c0_71] : memref<4x1x32xf32, #tpu.memory_space<vmem>>, vector<1x1x32xf32>
    %165 = vector.shape_cast %164 : vector<1x1x32xf32> to vector<1x32xf32>
    %c1_72 = arith.constant 1 : index
    %c0_73 = arith.constant 0 : index
    %c0_74 = arith.constant 0 : index
    %166 = vector.load %arg6[%c1_72, %c0_73, %c0_74] : memref<4x1x32xf32, #tpu.memory_space<vmem>>, vector<1x1x32xf32>
    %167 = vector.shape_cast %166 : vector<1x1x32xf32> to vector<1x32xf32>
    %cst_75 = arith.constant dense<0.000000e+00> : vector<16xf32>
    %168 = vector.multi_reduction <add>, %163, %cst_75 [1] : vector<16x32xf32> to vector<16xf32>
    %169 = vector.shape_cast %168 : vector<16xf32> to vector<16x1xf32>
    %cst_76 = arith.constant 3.200000e+01 : f32
    %170 = vector.broadcast %cst_76 : f32 to vector<16x1xf32>
    %171 = arith.divf %169, %170 : vector<16x1xf32>
    %172 = vector.broadcast %171 : vector<16x1xf32> to vector<16x32xf32>
    %173 = arith.subf %163, %172 : vector<16x32xf32>
    %174 = arith.mulf %173, %173 : vector<16x32xf32>
    %cst_77 = arith.constant dense<0.000000e+00> : vector<16xf32>
    %175 = vector.multi_reduction <add>, %174, %cst_77 [1] : vector<16x32xf32> to vector<16xf32>
    %176 = vector.shape_cast %175 : vector<16xf32> to vector<16x1xf32>
    %cst_78 = arith.constant 3.200000e+01 : f32
    %177 = vector.broadcast %cst_78 : f32 to vector<16x1xf32>
    %178 = arith.divf %176, %177 : vector<16x1xf32>
    %179 = vector.broadcast %171 : vector<16x1xf32> to vector<16x32xf32>
    %180 = arith.subf %163, %179 : vector<16x32xf32>
    %cst_79 = arith.constant 9.99999974E-6 : f32
    %181 = vector.broadcast %cst_79 : f32 to vector<16x1xf32>
    %182 = arith.addf %178, %181 : vector<16x1xf32>
    %183 = math.rsqrt %182 : vector<16x1xf32>
    %184 = vector.broadcast %183 : vector<16x1xf32> to vector<16x32xf32>
    %185 = arith.mulf %180, %184 : vector<16x32xf32>
    %186 = vector.broadcast %165 : vector<1x32xf32> to vector<16x32xf32>
    %187 = arith.mulf %185, %186 : vector<16x32xf32>
    %188 = vector.broadcast %167 : vector<1x32xf32> to vector<16x32xf32>
    %189 = arith.addf %187, %188 : vector<16x32xf32>
    %c1_80 = arith.constant 1 : index
    %c0_81 = arith.constant 0 : index
    %c0_82 = arith.constant 0 : index
    %190 = vector.load %arg2[%c1_80, %c0_81, %c0_82] : memref<4x32x96xf32, #tpu.memory_space<vmem>>, vector<1x32x96xf32>
    %191 = vector.shape_cast %190 : vector<1x32x96xf32> to vector<32x96xf32>
    %cst_83 = arith.constant dense<0.000000e+00> : vector<16x96xf32>
    %192 = tpu.matmul %189, %191, %cst_83 {dimension_numbers = #tpu.dot_dimension_numbers<[1], [0], [0], [1], [0, 0, 1, 1], [], []>} : vector<16x32xf32>, vector<32x96xf32>, vector<16x96xf32> -> vector<16x96xf32>
    %193 = vector.extract_strided_slice %192 {offsets = [0, 0], sizes = [16, 8], strides = [1, 1]} : vector<16x96xf32> to vector<16x8xf32>
    %194 = vector.extract_strided_slice %192 {offsets = [0, 32], sizes = [16, 8], strides = [1, 1]} : vector<16x96xf32> to vector<16x8xf32>
    %195 = vector.extract_strided_slice %192 {offsets = [0, 64], sizes = [16, 8], strides = [1, 1]} : vector<16x96xf32> to vector<16x8xf32>
    "tpu.trace_start"() <{level = 10 : i32, message = "td,sd->ts"}> : () -> ()
    %cst_84 = arith.constant dense<0.000000e+00> : vector<16x16xf32>
    %196 = tpu.matmul %193, %194, %cst_84 {dimension_numbers = #tpu.dot_dimension_numbers<[1], [1], [0], [0], [0, 0, 1, 0], [], []>} : vector<16x8xf32>, vector<16x8xf32>, vector<16x16xf32> -> vector<16x16xf32>
    "tpu.trace_stop"() : () -> ()
    %cst_85 = arith.constant 0.353553385 : f32
    %197 = vector.broadcast %cst_85 : f32 to vector<16x16xf32>
    %198 = arith.mulf %196, %197 : vector<16x16xf32>
    %199 = arith.addf %198, %1 : vector<16x16xf32>
    %cst_86 = arith.constant dense<0xFF800000> : vector<16xf32>
    %200 = vector.multi_reduction <maximumf>, %199, %cst_86 [1] : vector<16x16xf32> to vector<16xf32>
    %201 = vector.shape_cast %200 : vector<16xf32> to vector<16x1xf32>
    %202 = vector.broadcast %201 : vector<16x1xf32> to vector<16x16xf32>
    %203 = arith.subf %199, %202 : vector<16x16xf32>
    %204 = math.exp %203 : vector<16x16xf32>
    %cst_87 = arith.constant dense<0.000000e+00> : vector<16xf32>
    %205 = vector.multi_reduction <add>, %204, %cst_87 [1] : vector<16x16xf32> to vector<16xf32>
    %206 = vector.shape_cast %205 : vector<16xf32> to vector<16x1xf32>
    %207 = vector.broadcast %206 : vector<16x1xf32> to vector<16x16xf32>
    %208 = arith.divf %204, %207 : vector<16x16xf32>
    %209 = vector.extract_strided_slice %208 {offsets = [0, 0], sizes = [16, 8], strides = [1, 1]} : vector<16x16xf32> to vector<16x8xf32>
    %210 = vector.extract_strided_slice %208 {offsets = [0, 8], sizes = [16, 8], strides = [1, 1]} : vector<16x16xf32> to vector<16x8xf32>
    %211 = arith.addf %209, %210 : vector<16x8xf32>
    %cst_88 = arith.constant dense<0.000000e+00> : vector<16x8xf32>
    %212 = tpu.matmul %208, %195, %cst_88 {dimension_numbers = #tpu.dot_dimension_numbers<[1], [0], [0], [1], [0, 0, 1, 1], [], []>} : vector<16x16xf32>, vector<16x8xf32>, vector<16x8xf32> -> vector<16x8xf32>
    %213 = vector.extract_strided_slice %192 {offsets = [0, 8], sizes = [16, 8], strides = [1, 1]} : vector<16x96xf32> to vector<16x8xf32>
    %214 = vector.extract_strided_slice %192 {offsets = [0, 40], sizes = [16, 8], strides = [1, 1]} : vector<16x96xf32> to vector<16x8xf32>
    %215 = vector.extract_strided_slice %192 {offsets = [0, 72], sizes = [16, 8], strides = [1, 1]} : vector<16x96xf32> to vector<16x8xf32>
    "tpu.trace_start"() <{level = 10 : i32, message = "td,sd->ts"}> : () -> ()
    %cst_89 = arith.constant dense<0.000000e+00> : vector<16x16xf32>
    %216 = tpu.matmul %213, %214, %cst_89 {dimension_numbers = #tpu.dot_dimension_numbers<[1], [1], [0], [0], [0, 0, 1, 0], [], []>} : vector<16x8xf32>, vector<16x8xf32>, vector<16x16xf32> -> vector<16x16xf32>
    "tpu.trace_stop"() : () -> ()
    %cst_90 = arith.constant 0.353553385 : f32
    %217 = vector.broadcast %cst_90 : f32 to vector<16x16xf32>
    %218 = arith.mulf %216, %217 : vector<16x16xf32>
    %219 = arith.addf %218, %1 : vector<16x16xf32>
    %cst_91 = arith.constant dense<0xFF800000> : vector<16xf32>
    %220 = vector.multi_reduction <maximumf>, %219, %cst_91 [1] : vector<16x16xf32> to vector<16xf32>
    %221 = vector.shape_cast %220 : vector<16xf32> to vector<16x1xf32>
    %222 = vector.broadcast %221 : vector<16x1xf32> to vector<16x16xf32>
    %223 = arith.subf %219, %222 : vector<16x16xf32>
    %224 = math.exp %223 : vector<16x16xf32>
    %cst_92 = arith.constant dense<0.000000e+00> : vector<16xf32>
    %225 = vector.multi_reduction <add>, %224, %cst_92 [1] : vector<16x16xf32> to vector<16xf32>
    %226 = vector.shape_cast %225 : vector<16xf32> to vector<16x1xf32>
    %227 = vector.broadcast %226 : vector<16x1xf32> to vector<16x16xf32>
    %228 = arith.divf %224, %227 : vector<16x16xf32>
    %229 = vector.extract_strided_slice %228 {offsets = [0, 0], sizes = [16, 8], strides = [1, 1]} : vector<16x16xf32> to vector<16x8xf32>
    %230 = vector.extract_strided_slice %228 {offsets = [0, 8], sizes = [16, 8], strides = [1, 1]} : vector<16x16xf32> to vector<16x8xf32>
    %231 = arith.addf %229, %230 : vector<16x8xf32>
    %cst_93 = arith.constant dense<0.000000e+00> : vector<16x8xf32>
    %232 = tpu.matmul %228, %215, %cst_93 {dimension_numbers = #tpu.dot_dimension_numbers<[1], [0], [0], [1], [0, 0, 1, 1], [], []>} : vector<16x16xf32>, vector<16x8xf32>, vector<16x8xf32> -> vector<16x8xf32>
    %233 = vector.extract_strided_slice %192 {offsets = [0, 16], sizes = [16, 8], strides = [1, 1]} : vector<16x96xf32> to vector<16x8xf32>
    %234 = vector.extract_strided_slice %192 {offsets = [0, 48], sizes = [16, 8], strides = [1, 1]} : vector<16x96xf32> to vector<16x8xf32>
    %235 = vector.extract_strided_slice %192 {offsets = [0, 80], sizes = [16, 8], strides = [1, 1]} : vector<16x96xf32> to vector<16x8xf32>
    "tpu.trace_start"() <{level = 10 : i32, message = "td,sd->ts"}> : () -> ()
    %cst_94 = arith.constant dense<0.000000e+00> : vector<16x16xf32>
    %236 = tpu.matmul %233, %234, %cst_94 {dimension_numbers = #tpu.dot_dimension_numbers<[1], [1], [0], [0], [0, 0, 1, 0], [], []>} : vector<16x8xf32>, vector<16x8xf32>, vector<16x16xf32> -> vector<16x16xf32>
    "tpu.trace_stop"() : () -> ()
    %cst_95 = arith.constant 0.353553385 : f32
    %237 = vector.broadcast %cst_95 : f32 to vector<16x16xf32>
    %238 = arith.mulf %236, %237 : vector<16x16xf32>
    %239 = arith.addf %238, %1 : vector<16x16xf32>
    %cst_96 = arith.constant dense<0xFF800000> : vector<16xf32>
    %240 = vector.multi_reduction <maximumf>, %239, %cst_96 [1] : vector<16x16xf32> to vector<16xf32>
    %241 = vector.shape_cast %240 : vector<16xf32> to vector<16x1xf32>
    %242 = vector.broadcast %241 : vector<16x1xf32> to vector<16x16xf32>
    %243 = arith.subf %239, %242 : vector<16x16xf32>
    %244 = math.exp %243 : vector<16x16xf32>
    %cst_97 = arith.constant dense<0.000000e+00> : vector<16xf32>
    %245 = vector.multi_reduction <add>, %244, %cst_97 [1] : vector<16x16xf32> to vector<16xf32>
    %246 = vector.shape_cast %245 : vector<16xf32> to vector<16x1xf32>
    %247 = vector.broadcast %246 : vector<16x1xf32> to vector<16x16xf32>
    %248 = arith.divf %244, %247 : vector<16x16xf32>
    %249 = vector.extract_strided_slice %248 {offsets = [0, 0], sizes = [16, 8], strides = [1, 1]} : vector<16x16xf32> to vector<16x8xf32>
    %250 = vector.extract_strided_slice %248 {offsets = [0, 8], sizes = [16, 8], strides = [1, 1]} : vector<16x16xf32> to vector<16x8xf32>
    %251 = arith.addf %249, %250 : vector<16x8xf32>
    %cst_98 = arith.constant dense<0.000000e+00> : vector<16x8xf32>
    %252 = tpu.matmul %248, %235, %cst_98 {dimension_numbers = #tpu.dot_dimension_numbers<[1], [0], [0], [1], [0, 0, 1, 1], [], []>} : vector<16x16xf32>, vector<16x8xf32>, vector<16x8xf32> -> vector<16x8xf32>
    %253 = vector.extract_strided_slice %192 {offsets = [0, 24], sizes = [16, 8], strides = [1, 1]} : vector<16x96xf32> to vector<16x8xf32>
    %254 = vector.extract_strided_slice %192 {offsets = [0, 56], sizes = [16, 8], strides = [1, 1]} : vector<16x96xf32> to vector<16x8xf32>
    %255 = vector.extract_strided_slice %192 {offsets = [0, 88], sizes = [16, 8], strides = [1, 1]} : vector<16x96xf32> to vector<16x8xf32>
    "tpu.trace_start"() <{level = 10 : i32, message = "td,sd->ts"}> : () -> ()
    %cst_99 = arith.constant dense<0.000000e+00> : vector<16x16xf32>
    %256 = tpu.matmul %253, %254, %cst_99 {dimension_numbers = #tpu.dot_dimension_numbers<[1], [1], [0], [0], [0, 0, 1, 0], [], []>} : vector<16x8xf32>, vector<16x8xf32>, vector<16x16xf32> -> vector<16x16xf32>
    "tpu.trace_stop"() : () -> ()
    %cst_100 = arith.constant 0.353553385 : f32
    %257 = vector.broadcast %cst_100 : f32 to vector<16x16xf32>
    %258 = arith.mulf %256, %257 : vector<16x16xf32>
    %259 = arith.addf %258, %1 : vector<16x16xf32>
    %cst_101 = arith.constant dense<0xFF800000> : vector<16xf32>
    %260 = vector.multi_reduction <maximumf>, %259, %cst_101 [1] : vector<16x16xf32> to vector<16xf32>
    %261 = vector.shape_cast %260 : vector<16xf32> to vector<16x1xf32>
    %262 = vector.broadcast %261 : vector<16x1xf32> to vector<16x16xf32>
    %263 = arith.subf %259, %262 : vector<16x16xf32>
    %264 = math.exp %263 : vector<16x16xf32>
    %cst_102 = arith.constant dense<0.000000e+00> : vector<16xf32>
    %265 = vector.multi_reduction <add>, %264, %cst_102 [1] : vector<16x16xf32> to vector<16xf32>
    %266 = vector.shape_cast %265 : vector<16xf32> to vector<16x1xf32>
    %267 = vector.broadcast %266 : vector<16x1xf32> to vector<16x16xf32>
    %268 = arith.divf %264, %267 : vector<16x16xf32>
    %269 = vector.extract_strided_slice %268 {offsets = [0, 0], sizes = [16, 8], strides = [1, 1]} : vector<16x16xf32> to vector<16x8xf32>
    %270 = vector.extract_strided_slice %268 {offsets = [0, 8], sizes = [16, 8], strides = [1, 1]} : vector<16x16xf32> to vector<16x8xf32>
    %271 = arith.addf %269, %270 : vector<16x8xf32>
    %cst_103 = arith.constant dense<0.000000e+00> : vector<16x8xf32>
    %272 = tpu.matmul %268, %255, %cst_103 {dimension_numbers = #tpu.dot_dimension_numbers<[1], [0], [0], [1], [0, 0, 1, 1], [], []>} : vector<16x16xf32>, vector<16x8xf32>, vector<16x8xf32> -> vector<16x8xf32>
    %273 = tpu.concatenate %211, %231, %251, %271 in 1 : vector<16x8xf32>, vector<16x8xf32>, vector<16x8xf32>, vector<16x8xf32> -> vector<16x32xf32>
    %274 = tpu.concatenate %212, %232, %252, %272 in 1 : vector<16x8xf32>, vector<16x8xf32>, vector<16x8xf32>, vector<16x8xf32> -> vector<16x32xf32>
    %c1_104 = arith.constant 1 : index
    %c0_105 = arith.constant 0 : index
    %c0_106 = arith.constant 0 : index
    %275 = vector.load %arg3[%c1_104, %c0_105, %c0_106] : memref<4x32x32xf32, #tpu.memory_space<vmem>>, vector<1x32x32xf32>
    %276 = vector.shape_cast %275 : vector<1x32x32xf32> to vector<32x32xf32>
    %cst_107 = arith.constant dense<0.000000e+00> : vector<16x32xf32>
    %277 = tpu.matmul %274, %276, %cst_107 {dimension_numbers = #tpu.dot_dimension_numbers<[1], [0], [0], [1], [0, 0, 1, 1], [], []>} : vector<16x32xf32>, vector<32x32xf32>, vector<16x32xf32> -> vector<16x32xf32>
    %c1_108 = arith.constant 1 : index
    %c0_109 = arith.constant 0 : index
    %c0_110 = arith.constant 0 : index
    %278 = vector.load %arg4[%c1_108, %c0_109, %c0_110] : memref<4x1x32xf32, #tpu.memory_space<vmem>>, vector<1x1x32xf32>
    %279 = vector.shape_cast %278 : vector<1x1x32xf32> to vector<1x32xf32>
    %280 = vector.broadcast %279 : vector<1x32xf32> to vector<16x32xf32>
    %281 = arith.addf %277, %280 : vector<16x32xf32>
    %282 = arith.addf %163, %281 : vector<16x32xf32>
    %c1_111 = arith.constant 1 : index
    %c0_112 = arith.constant 0 : index
    %c0_113 = arith.constant 0 : index
    %283 = vector.load %arg7[%c1_111, %c0_112, %c0_113] : memref<4x1x32xf32, #tpu.memory_space<vmem>>, vector<1x1x32xf32>
    %284 = vector.shape_cast %283 : vector<1x1x32xf32> to vector<1x32xf32>
    %c1_114 = arith.constant 1 : index
    %c0_115 = arith.constant 0 : index
    %c0_116 = arith.constant 0 : index
    %285 = vector.load %arg8[%c1_114, %c0_115, %c0_116] : memref<4x1x32xf32, #tpu.memory_space<vmem>>, vector<1x1x32xf32>
    %286 = vector.shape_cast %285 : vector<1x1x32xf32> to vector<1x32xf32>
    %cst_117 = arith.constant dense<0.000000e+00> : vector<16xf32>
    %287 = vector.multi_reduction <add>, %282, %cst_117 [1] : vector<16x32xf32> to vector<16xf32>
    %288 = vector.shape_cast %287 : vector<16xf32> to vector<16x1xf32>
    %cst_118 = arith.constant 3.200000e+01 : f32
    %289 = vector.broadcast %cst_118 : f32 to vector<16x1xf32>
    %290 = arith.divf %288, %289 : vector<16x1xf32>
    %291 = vector.broadcast %290 : vector<16x1xf32> to vector<16x32xf32>
    %292 = arith.subf %282, %291 : vector<16x32xf32>
    %293 = arith.mulf %292, %292 : vector<16x32xf32>
    %cst_119 = arith.constant dense<0.000000e+00> : vector<16xf32>
    %294 = vector.multi_reduction <add>, %293, %cst_119 [1] : vector<16x32xf32> to vector<16xf32>
    %295 = vector.shape_cast %294 : vector<16xf32> to vector<16x1xf32>
    %cst_120 = arith.constant 3.200000e+01 : f32
    %296 = vector.broadcast %cst_120 : f32 to vector<16x1xf32>
    %297 = arith.divf %295, %296 : vector<16x1xf32>
    %298 = vector.broadcast %290 : vector<16x1xf32> to vector<16x32xf32>
    %299 = arith.subf %282, %298 : vector<16x32xf32>
    %cst_121 = arith.constant 9.99999974E-6 : f32
    %300 = vector.broadcast %cst_121 : f32 to vector<16x1xf32>
    %301 = arith.addf %297, %300 : vector<16x1xf32>
    %302 = math.rsqrt %301 : vector<16x1xf32>
    %303 = vector.broadcast %302 : vector<16x1xf32> to vector<16x32xf32>
    %304 = arith.mulf %299, %303 : vector<16x32xf32>
    %305 = vector.broadcast %284 : vector<1x32xf32> to vector<16x32xf32>
    %306 = arith.mulf %304, %305 : vector<16x32xf32>
    %307 = vector.broadcast %286 : vector<1x32xf32> to vector<16x32xf32>
    %308 = arith.addf %306, %307 : vector<16x32xf32>
    %c1_122 = arith.constant 1 : index
    %c0_123 = arith.constant 0 : index
    %c0_124 = arith.constant 0 : index
    %309 = vector.load %arg9[%c1_122, %c0_123, %c0_124] : memref<4x32x128xf32, #tpu.memory_space<vmem>>, vector<1x32x128xf32>
    %310 = vector.shape_cast %309 : vector<1x32x128xf32> to vector<32x128xf32>
    %cst_125 = arith.constant dense<0.000000e+00> : vector<16x128xf32>
    %311 = tpu.matmul %308, %310, %cst_125 {dimension_numbers = #tpu.dot_dimension_numbers<[1], [0], [0], [1], [0, 0, 1, 1], [], []>} : vector<16x32xf32>, vector<32x128xf32>, vector<16x128xf32> -> vector<16x128xf32>
    %c1_126 = arith.constant 1 : index
    %c0_127 = arith.constant 0 : index
    %c0_128 = arith.constant 0 : index
    %312 = vector.load %arg10[%c1_126, %c0_127, %c0_128] : memref<4x1x128xf32, #tpu.memory_space<vmem>>, vector<1x1x128xf32>
    %313 = vector.shape_cast %312 : vector<1x1x128xf32> to vector<1x128xf32>
    %314 = vector.broadcast %313 : vector<1x128xf32> to vector<16x128xf32>
    %315 = arith.addf %311, %314 : vector<16x128xf32>
    %cst_129 = arith.constant 0.000000e+00 : f32
    %316 = vector.broadcast %cst_129 : f32 to vector<16x128xf32>
    %317 = arith.maximumf %315, %316 : vector<16x128xf32>
    %c1_130 = arith.constant 1 : index
    %c0_131 = arith.constant 0 : index
    %c0_132 = arith.constant 0 : index
    %318 = vector.load %arg11[%c1_130, %c0_131, %c0_132] : memref<4x128x32xf32, #tpu.memory_space<vmem>>, vector<1x128x32xf32>
    %319 = vector.shape_cast %318 : vector<1x128x32xf32> to vector<128x32xf32>
    %cst_133 = arith.constant dense<0.000000e+00> : vector<16x32xf32>
    %320 = tpu.matmul %317, %319, %cst_133 {dimension_numbers = #tpu.dot_dimension_numbers<[1], [0], [0], [1], [0, 0, 1, 1], [], []>} : vector<16x128xf32>, vector<128x32xf32>, vector<16x32xf32> -> vector<16x32xf32>
    %c1_134 = arith.constant 1 : index
    %c0_135 = arith.constant 0 : index
    %c0_136 = arith.constant 0 : index
    %321 = vector.load %arg12[%c1_134, %c0_135, %c0_136] : memref<4x1x32xf32, #tpu.memory_space<vmem>>, vector<1x1x32xf32>
    %322 = vector.shape_cast %321 : vector<1x1x32xf32> to vector<1x32xf32>
    %323 = vector.broadcast %322 : vector<1x32xf32> to vector<16x32xf32>
    %324 = arith.addf %320, %323 : vector<16x32xf32>
    %325 = arith.addf %282, %324 : vector<16x32xf32>
    %c2 = arith.constant 2 : index
    %c0_137 = arith.constant 0 : index
    %c0_138 = arith.constant 0 : index
    %326 = vector.load %arg5[%c2, %c0_137, %c0_138] : memref<4x1x32xf32, #tpu.memory_space<vmem>>, vector<1x1x32xf32>
    %327 = vector.shape_cast %326 : vector<1x1x32xf32> to vector<1x32xf32>
    %c2_139 = arith.constant 2 : index
    %c0_140 = arith.constant 0 : index
    %c0_141 = arith.constant 0 : index
    %328 = vector.load %arg6[%c2_139, %c0_140, %c0_141] : memref<4x1x32xf32, #tpu.memory_space<vmem>>, vector<1x1x32xf32>
    %329 = vector.shape_cast %328 : vector<1x1x32xf32> to vector<1x32xf32>
    %cst_142 = arith.constant dense<0.000000e+00> : vector<16xf32>
    %330 = vector.multi_reduction <add>, %325, %cst_142 [1] : vector<16x32xf32> to vector<16xf32>
    %331 = vector.shape_cast %330 : vector<16xf32> to vector<16x1xf32>
    %cst_143 = arith.constant 3.200000e+01 : f32
    %332 = vector.broadcast %cst_143 : f32 to vector<16x1xf32>
    %333 = arith.divf %331, %332 : vector<16x1xf32>
    %334 = vector.broadcast %333 : vector<16x1xf32> to vector<16x32xf32>
    %335 = arith.subf %325, %334 : vector<16x32xf32>
    %336 = arith.mulf %335, %335 : vector<16x32xf32>
    %cst_144 = arith.constant dense<0.000000e+00> : vector<16xf32>
    %337 = vector.multi_reduction <add>, %336, %cst_144 [1] : vector<16x32xf32> to vector<16xf32>
    %338 = vector.shape_cast %337 : vector<16xf32> to vector<16x1xf32>
    %cst_145 = arith.constant 3.200000e+01 : f32
    %339 = vector.broadcast %cst_145 : f32 to vector<16x1xf32>
    %340 = arith.divf %338, %339 : vector<16x1xf32>
    %341 = vector.broadcast %333 : vector<16x1xf32> to vector<16x32xf32>
    %342 = arith.subf %325, %341 : vector<16x32xf32>
    %cst_146 = arith.constant 9.99999974E-6 : f32
    %343 = vector.broadcast %cst_146 : f32 to vector<16x1xf32>
    %344 = arith.addf %340, %343 : vector<16x1xf32>
    %345 = math.rsqrt %344 : vector<16x1xf32>
    %346 = vector.broadcast %345 : vector<16x1xf32> to vector<16x32xf32>
    %347 = arith.mulf %342, %346 : vector<16x32xf32>
    %348 = vector.broadcast %327 : vector<1x32xf32> to vector<16x32xf32>
    %349 = arith.mulf %347, %348 : vector<16x32xf32>
    %350 = vector.broadcast %329 : vector<1x32xf32> to vector<16x32xf32>
    %351 = arith.addf %349, %350 : vector<16x32xf32>
    %c2_147 = arith.constant 2 : index
    %c0_148 = arith.constant 0 : index
    %c0_149 = arith.constant 0 : index
    %352 = vector.load %arg2[%c2_147, %c0_148, %c0_149] : memref<4x32x96xf32, #tpu.memory_space<vmem>>, vector<1x32x96xf32>
    %353 = vector.shape_cast %352 : vector<1x32x96xf32> to vector<32x96xf32>
    %cst_150 = arith.constant dense<0.000000e+00> : vector<16x96xf32>
    %354 = tpu.matmul %351, %353, %cst_150 {dimension_numbers = #tpu.dot_dimension_numbers<[1], [0], [0], [1], [0, 0, 1, 1], [], []>} : vector<16x32xf32>, vector<32x96xf32>, vector<16x96xf32> -> vector<16x96xf32>
    %355 = vector.extract_strided_slice %354 {offsets = [0, 0], sizes = [16, 8], strides = [1, 1]} : vector<16x96xf32> to vector<16x8xf32>
    %356 = vector.extract_strided_slice %354 {offsets = [0, 32], sizes = [16, 8], strides = [1, 1]} : vector<16x96xf32> to vector<16x8xf32>
    %357 = vector.extract_strided_slice %354 {offsets = [0, 64], sizes = [16, 8], strides = [1, 1]} : vector<16x96xf32> to vector<16x8xf32>
    "tpu.trace_start"() <{level = 10 : i32, message = "td,sd->ts"}> : () -> ()
    %cst_151 = arith.constant dense<0.000000e+00> : vector<16x16xf32>
    %358 = tpu.matmul %355, %356, %cst_151 {dimension_numbers = #tpu.dot_dimension_numbers<[1], [1], [0], [0], [0, 0, 1, 0], [], []>} : vector<16x8xf32>, vector<16x8xf32>, vector<16x16xf32> -> vector<16x16xf32>
    "tpu.trace_stop"() : () -> ()
    %cst_152 = arith.constant 0.353553385 : f32
    %359 = vector.broadcast %cst_152 : f32 to vector<16x16xf32>
    %360 = arith.mulf %358, %359 : vector<16x16xf32>
    %361 = arith.addf %360, %1 : vector<16x16xf32>
    %cst_153 = arith.constant dense<0xFF800000> : vector<16xf32>
    %362 = vector.multi_reduction <maximumf>, %361, %cst_153 [1] : vector<16x16xf32> to vector<16xf32>
    %363 = vector.shape_cast %362 : vector<16xf32> to vector<16x1xf32>
    %364 = vector.broadcast %363 : vector<16x1xf32> to vector<16x16xf32>
    %365 = arith.subf %361, %364 : vector<16x16xf32>
    %366 = math.exp %365 : vector<16x16xf32>
    %cst_154 = arith.constant dense<0.000000e+00> : vector<16xf32>
    %367 = vector.multi_reduction <add>, %366, %cst_154 [1] : vector<16x16xf32> to vector<16xf32>
    %368 = vector.shape_cast %367 : vector<16xf32> to vector<16x1xf32>
    %369 = vector.broadcast %368 : vector<16x1xf32> to vector<16x16xf32>
    %370 = arith.divf %366, %369 : vector<16x16xf32>
    %371 = vector.extract_strided_slice %370 {offsets = [0, 0], sizes = [16, 8], strides = [1, 1]} : vector<16x16xf32> to vector<16x8xf32>
    %372 = vector.extract_strided_slice %370 {offsets = [0, 8], sizes = [16, 8], strides = [1, 1]} : vector<16x16xf32> to vector<16x8xf32>
    %373 = arith.addf %371, %372 : vector<16x8xf32>
    %cst_155 = arith.constant dense<0.000000e+00> : vector<16x8xf32>
    %374 = tpu.matmul %370, %357, %cst_155 {dimension_numbers = #tpu.dot_dimension_numbers<[1], [0], [0], [1], [0, 0, 1, 1], [], []>} : vector<16x16xf32>, vector<16x8xf32>, vector<16x8xf32> -> vector<16x8xf32>
    %375 = vector.extract_strided_slice %354 {offsets = [0, 8], sizes = [16, 8], strides = [1, 1]} : vector<16x96xf32> to vector<16x8xf32>
    %376 = vector.extract_strided_slice %354 {offsets = [0, 40], sizes = [16, 8], strides = [1, 1]} : vector<16x96xf32> to vector<16x8xf32>
    %377 = vector.extract_strided_slice %354 {offsets = [0, 72], sizes = [16, 8], strides = [1, 1]} : vector<16x96xf32> to vector<16x8xf32>
    "tpu.trace_start"() <{level = 10 : i32, message = "td,sd->ts"}> : () -> ()
    %cst_156 = arith.constant dense<0.000000e+00> : vector<16x16xf32>
    %378 = tpu.matmul %375, %376, %cst_156 {dimension_numbers = #tpu.dot_dimension_numbers<[1], [1], [0], [0], [0, 0, 1, 0], [], []>} : vector<16x8xf32>, vector<16x8xf32>, vector<16x16xf32> -> vector<16x16xf32>
    "tpu.trace_stop"() : () -> ()
    %cst_157 = arith.constant 0.353553385 : f32
    %379 = vector.broadcast %cst_157 : f32 to vector<16x16xf32>
    %380 = arith.mulf %378, %379 : vector<16x16xf32>
    %381 = arith.addf %380, %1 : vector<16x16xf32>
    %cst_158 = arith.constant dense<0xFF800000> : vector<16xf32>
    %382 = vector.multi_reduction <maximumf>, %381, %cst_158 [1] : vector<16x16xf32> to vector<16xf32>
    %383 = vector.shape_cast %382 : vector<16xf32> to vector<16x1xf32>
    %384 = vector.broadcast %383 : vector<16x1xf32> to vector<16x16xf32>
    %385 = arith.subf %381, %384 : vector<16x16xf32>
    %386 = math.exp %385 : vector<16x16xf32>
    %cst_159 = arith.constant dense<0.000000e+00> : vector<16xf32>
    %387 = vector.multi_reduction <add>, %386, %cst_159 [1] : vector<16x16xf32> to vector<16xf32>
    %388 = vector.shape_cast %387 : vector<16xf32> to vector<16x1xf32>
    %389 = vector.broadcast %388 : vector<16x1xf32> to vector<16x16xf32>
    %390 = arith.divf %386, %389 : vector<16x16xf32>
    %391 = vector.extract_strided_slice %390 {offsets = [0, 0], sizes = [16, 8], strides = [1, 1]} : vector<16x16xf32> to vector<16x8xf32>
    %392 = vector.extract_strided_slice %390 {offsets = [0, 8], sizes = [16, 8], strides = [1, 1]} : vector<16x16xf32> to vector<16x8xf32>
    %393 = arith.addf %391, %392 : vector<16x8xf32>
    %cst_160 = arith.constant dense<0.000000e+00> : vector<16x8xf32>
    %394 = tpu.matmul %390, %377, %cst_160 {dimension_numbers = #tpu.dot_dimension_numbers<[1], [0], [0], [1], [0, 0, 1, 1], [], []>} : vector<16x16xf32>, vector<16x8xf32>, vector<16x8xf32> -> vector<16x8xf32>
    %395 = vector.extract_strided_slice %354 {offsets = [0, 16], sizes = [16, 8], strides = [1, 1]} : vector<16x96xf32> to vector<16x8xf32>
    %396 = vector.extract_strided_slice %354 {offsets = [0, 48], sizes = [16, 8], strides = [1, 1]} : vector<16x96xf32> to vector<16x8xf32>
    %397 = vector.extract_strided_slice %354 {offsets = [0, 80], sizes = [16, 8], strides = [1, 1]} : vector<16x96xf32> to vector<16x8xf32>
    "tpu.trace_start"() <{level = 10 : i32, message = "td,sd->ts"}> : () -> ()
    %cst_161 = arith.constant dense<0.000000e+00> : vector<16x16xf32>
    %398 = tpu.matmul %395, %396, %cst_161 {dimension_numbers = #tpu.dot_dimension_numbers<[1], [1], [0], [0], [0, 0, 1, 0], [], []>} : vector<16x8xf32>, vector<16x8xf32>, vector<16x16xf32> -> vector<16x16xf32>
    "tpu.trace_stop"() : () -> ()
    %cst_162 = arith.constant 0.353553385 : f32
    %399 = vector.broadcast %cst_162 : f32 to vector<16x16xf32>
    %400 = arith.mulf %398, %399 : vector<16x16xf32>
    %401 = arith.addf %400, %1 : vector<16x16xf32>
    %cst_163 = arith.constant dense<0xFF800000> : vector<16xf32>
    %402 = vector.multi_reduction <maximumf>, %401, %cst_163 [1] : vector<16x16xf32> to vector<16xf32>
    %403 = vector.shape_cast %402 : vector<16xf32> to vector<16x1xf32>
    %404 = vector.broadcast %403 : vector<16x1xf32> to vector<16x16xf32>
    %405 = arith.subf %401, %404 : vector<16x16xf32>
    %406 = math.exp %405 : vector<16x16xf32>
    %cst_164 = arith.constant dense<0.000000e+00> : vector<16xf32>
    %407 = vector.multi_reduction <add>, %406, %cst_164 [1] : vector<16x16xf32> to vector<16xf32>
    %408 = vector.shape_cast %407 : vector<16xf32> to vector<16x1xf32>
    %409 = vector.broadcast %408 : vector<16x1xf32> to vector<16x16xf32>
    %410 = arith.divf %406, %409 : vector<16x16xf32>
    %411 = vector.extract_strided_slice %410 {offsets = [0, 0], sizes = [16, 8], strides = [1, 1]} : vector<16x16xf32> to vector<16x8xf32>
    %412 = vector.extract_strided_slice %410 {offsets = [0, 8], sizes = [16, 8], strides = [1, 1]} : vector<16x16xf32> to vector<16x8xf32>
    %413 = arith.addf %411, %412 : vector<16x8xf32>
    %cst_165 = arith.constant dense<0.000000e+00> : vector<16x8xf32>
    %414 = tpu.matmul %410, %397, %cst_165 {dimension_numbers = #tpu.dot_dimension_numbers<[1], [0], [0], [1], [0, 0, 1, 1], [], []>} : vector<16x16xf32>, vector<16x8xf32>, vector<16x8xf32> -> vector<16x8xf32>
    %415 = vector.extract_strided_slice %354 {offsets = [0, 24], sizes = [16, 8], strides = [1, 1]} : vector<16x96xf32> to vector<16x8xf32>
    %416 = vector.extract_strided_slice %354 {offsets = [0, 56], sizes = [16, 8], strides = [1, 1]} : vector<16x96xf32> to vector<16x8xf32>
    %417 = vector.extract_strided_slice %354 {offsets = [0, 88], sizes = [16, 8], strides = [1, 1]} : vector<16x96xf32> to vector<16x8xf32>
    "tpu.trace_start"() <{level = 10 : i32, message = "td,sd->ts"}> : () -> ()
    %cst_166 = arith.constant dense<0.000000e+00> : vector<16x16xf32>
    %418 = tpu.matmul %415, %416, %cst_166 {dimension_numbers = #tpu.dot_dimension_numbers<[1], [1], [0], [0], [0, 0, 1, 0], [], []>} : vector<16x8xf32>, vector<16x8xf32>, vector<16x16xf32> -> vector<16x16xf32>
    "tpu.trace_stop"() : () -> ()
    %cst_167 = arith.constant 0.353553385 : f32
    %419 = vector.broadcast %cst_167 : f32 to vector<16x16xf32>
    %420 = arith.mulf %418, %419 : vector<16x16xf32>
    %421 = arith.addf %420, %1 : vector<16x16xf32>
    %cst_168 = arith.constant dense<0xFF800000> : vector<16xf32>
    %422 = vector.multi_reduction <maximumf>, %421, %cst_168 [1] : vector<16x16xf32> to vector<16xf32>
    %423 = vector.shape_cast %422 : vector<16xf32> to vector<16x1xf32>
    %424 = vector.broadcast %423 : vector<16x1xf32> to vector<16x16xf32>
    %425 = arith.subf %421, %424 : vector<16x16xf32>
    %426 = math.exp %425 : vector<16x16xf32>
    %cst_169 = arith.constant dense<0.000000e+00> : vector<16xf32>
    %427 = vector.multi_reduction <add>, %426, %cst_169 [1] : vector<16x16xf32> to vector<16xf32>
    %428 = vector.shape_cast %427 : vector<16xf32> to vector<16x1xf32>
    %429 = vector.broadcast %428 : vector<16x1xf32> to vector<16x16xf32>
    %430 = arith.divf %426, %429 : vector<16x16xf32>
    %431 = vector.extract_strided_slice %430 {offsets = [0, 0], sizes = [16, 8], strides = [1, 1]} : vector<16x16xf32> to vector<16x8xf32>
    %432 = vector.extract_strided_slice %430 {offsets = [0, 8], sizes = [16, 8], strides = [1, 1]} : vector<16x16xf32> to vector<16x8xf32>
    %433 = arith.addf %431, %432 : vector<16x8xf32>
    %cst_170 = arith.constant dense<0.000000e+00> : vector<16x8xf32>
    %434 = tpu.matmul %430, %417, %cst_170 {dimension_numbers = #tpu.dot_dimension_numbers<[1], [0], [0], [1], [0, 0, 1, 1], [], []>} : vector<16x16xf32>, vector<16x8xf32>, vector<16x8xf32> -> vector<16x8xf32>
    %435 = tpu.concatenate %373, %393, %413, %433 in 1 : vector<16x8xf32>, vector<16x8xf32>, vector<16x8xf32>, vector<16x8xf32> -> vector<16x32xf32>
    %436 = tpu.concatenate %374, %394, %414, %434 in 1 : vector<16x8xf32>, vector<16x8xf32>, vector<16x8xf32>, vector<16x8xf32> -> vector<16x32xf32>
    %c2_171 = arith.constant 2 : index
    %c0_172 = arith.constant 0 : index
    %c0_173 = arith.constant 0 : index
    %437 = vector.load %arg3[%c2_171, %c0_172, %c0_173] : memref<4x32x32xf32, #tpu.memory_space<vmem>>, vector<1x32x32xf32>
    %438 = vector.shape_cast %437 : vector<1x32x32xf32> to vector<32x32xf32>
    %cst_174 = arith.constant dense<0.000000e+00> : vector<16x32xf32>
    %439 = tpu.matmul %436, %438, %cst_174 {dimension_numbers = #tpu.dot_dimension_numbers<[1], [0], [0], [1], [0, 0, 1, 1], [], []>} : vector<16x32xf32>, vector<32x32xf32>, vector<16x32xf32> -> vector<16x32xf32>
    %c2_175 = arith.constant 2 : index
    %c0_176 = arith.constant 0 : index
    %c0_177 = arith.constant 0 : index
    %440 = vector.load %arg4[%c2_175, %c0_176, %c0_177] : memref<4x1x32xf32, #tpu.memory_space<vmem>>, vector<1x1x32xf32>
    %441 = vector.shape_cast %440 : vector<1x1x32xf32> to vector<1x32xf32>
    %442 = vector.broadcast %441 : vector<1x32xf32> to vector<16x32xf32>
    %443 = arith.addf %439, %442 : vector<16x32xf32>
    %444 = arith.addf %325, %443 : vector<16x32xf32>
    %c2_178 = arith.constant 2 : index
    %c0_179 = arith.constant 0 : index
    %c0_180 = arith.constant 0 : index
    %445 = vector.load %arg7[%c2_178, %c0_179, %c0_180] : memref<4x1x32xf32, #tpu.memory_space<vmem>>, vector<1x1x32xf32>
    %446 = vector.shape_cast %445 : vector<1x1x32xf32> to vector<1x32xf32>
    %c2_181 = arith.constant 2 : index
    %c0_182 = arith.constant 0 : index
    %c0_183 = arith.constant 0 : index
    %447 = vector.load %arg8[%c2_181, %c0_182, %c0_183] : memref<4x1x32xf32, #tpu.memory_space<vmem>>, vector<1x1x32xf32>
    %448 = vector.shape_cast %447 : vector<1x1x32xf32> to vector<1x32xf32>
    %cst_184 = arith.constant dense<0.000000e+00> : vector<16xf32>
    %449 = vector.multi_reduction <add>, %444, %cst_184 [1] : vector<16x32xf32> to vector<16xf32>
    %450 = vector.shape_cast %449 : vector<16xf32> to vector<16x1xf32>
    %cst_185 = arith.constant 3.200000e+01 : f32
    %451 = vector.broadcast %cst_185 : f32 to vector<16x1xf32>
    %452 = arith.divf %450, %451 : vector<16x1xf32>
    %453 = vector.broadcast %452 : vector<16x1xf32> to vector<16x32xf32>
    %454 = arith.subf %444, %453 : vector<16x32xf32>
    %455 = arith.mulf %454, %454 : vector<16x32xf32>
    %cst_186 = arith.constant dense<0.000000e+00> : vector<16xf32>
    %456 = vector.multi_reduction <add>, %455, %cst_186 [1] : vector<16x32xf32> to vector<16xf32>
    %457 = vector.shape_cast %456 : vector<16xf32> to vector<16x1xf32>
    %cst_187 = arith.constant 3.200000e+01 : f32
    %458 = vector.broadcast %cst_187 : f32 to vector<16x1xf32>
    %459 = arith.divf %457, %458 : vector<16x1xf32>
    %460 = vector.broadcast %452 : vector<16x1xf32> to vector<16x32xf32>
    %461 = arith.subf %444, %460 : vector<16x32xf32>
    %cst_188 = arith.constant 9.99999974E-6 : f32
    %462 = vector.broadcast %cst_188 : f32 to vector<16x1xf32>
    %463 = arith.addf %459, %462 : vector<16x1xf32>
    %464 = math.rsqrt %463 : vector<16x1xf32>
    %465 = vector.broadcast %464 : vector<16x1xf32> to vector<16x32xf32>
    %466 = arith.mulf %461, %465 : vector<16x32xf32>
    %467 = vector.broadcast %446 : vector<1x32xf32> to vector<16x32xf32>
    %468 = arith.mulf %466, %467 : vector<16x32xf32>
    %469 = vector.broadcast %448 : vector<1x32xf32> to vector<16x32xf32>
    %470 = arith.addf %468, %469 : vector<16x32xf32>
    %c2_189 = arith.constant 2 : index
    %c0_190 = arith.constant 0 : index
    %c0_191 = arith.constant 0 : index
    %471 = vector.load %arg9[%c2_189, %c0_190, %c0_191] : memref<4x32x128xf32, #tpu.memory_space<vmem>>, vector<1x32x128xf32>
    %472 = vector.shape_cast %471 : vector<1x32x128xf32> to vector<32x128xf32>
    %cst_192 = arith.constant dense<0.000000e+00> : vector<16x128xf32>
    %473 = tpu.matmul %470, %472, %cst_192 {dimension_numbers = #tpu.dot_dimension_numbers<[1], [0], [0], [1], [0, 0, 1, 1], [], []>} : vector<16x32xf32>, vector<32x128xf32>, vector<16x128xf32> -> vector<16x128xf32>
    %c2_193 = arith.constant 2 : index
    %c0_194 = arith.constant 0 : index
    %c0_195 = arith.constant 0 : index
    %474 = vector.load %arg10[%c2_193, %c0_194, %c0_195] : memref<4x1x128xf32, #tpu.memory_space<vmem>>, vector<1x1x128xf32>
    %475 = vector.shape_cast %474 : vector<1x1x128xf32> to vector<1x128xf32>
    %476 = vector.broadcast %475 : vector<1x128xf32> to vector<16x128xf32>
    %477 = arith.addf %473, %476 : vector<16x128xf32>
    %cst_196 = arith.constant 0.000000e+00 : f32
    %478 = vector.broadcast %cst_196 : f32 to vector<16x128xf32>
    %479 = arith.maximumf %477, %478 : vector<16x128xf32>
    %c2_197 = arith.constant 2 : index
    %c0_198 = arith.constant 0 : index
    %c0_199 = arith.constant 0 : index
    %480 = vector.load %arg11[%c2_197, %c0_198, %c0_199] : memref<4x128x32xf32, #tpu.memory_space<vmem>>, vector<1x128x32xf32>
    %481 = vector.shape_cast %480 : vector<1x128x32xf32> to vector<128x32xf32>
    %cst_200 = arith.constant dense<0.000000e+00> : vector<16x32xf32>
    %482 = tpu.matmul %479, %481, %cst_200 {dimension_numbers = #tpu.dot_dimension_numbers<[1], [0], [0], [1], [0, 0, 1, 1], [], []>} : vector<16x128xf32>, vector<128x32xf32>, vector<16x32xf32> -> vector<16x32xf32>
    %c2_201 = arith.constant 2 : index
    %c0_202 = arith.constant 0 : index
    %c0_203 = arith.constant 0 : index
    %483 = vector.load %arg12[%c2_201, %c0_202, %c0_203] : memref<4x1x32xf32, #tpu.memory_space<vmem>>, vector<1x1x32xf32>
    %484 = vector.shape_cast %483 : vector<1x1x32xf32> to vector<1x32xf32>
    %485 = vector.broadcast %484 : vector<1x32xf32> to vector<16x32xf32>
    %486 = arith.addf %482, %485 : vector<16x32xf32>
    %487 = arith.addf %444, %486 : vector<16x32xf32>
    %c3 = arith.constant 3 : index
    %c0_204 = arith.constant 0 : index
    %c0_205 = arith.constant 0 : index
    %488 = vector.load %arg5[%c3, %c0_204, %c0_205] : memref<4x1x32xf32, #tpu.memory_space<vmem>>, vector<1x1x32xf32>
    %489 = vector.shape_cast %488 : vector<1x1x32xf32> to vector<1x32xf32>
    %c3_206 = arith.constant 3 : index
    %c0_207 = arith.constant 0 : index
    %c0_208 = arith.constant 0 : index
    %490 = vector.load %arg6[%c3_206, %c0_207, %c0_208] : memref<4x1x32xf32, #tpu.memory_space<vmem>>, vector<1x1x32xf32>
    %491 = vector.shape_cast %490 : vector<1x1x32xf32> to vector<1x32xf32>
    %cst_209 = arith.constant dense<0.000000e+00> : vector<16xf32>
    %492 = vector.multi_reduction <add>, %487, %cst_209 [1] : vector<16x32xf32> to vector<16xf32>
    %493 = vector.shape_cast %492 : vector<16xf32> to vector<16x1xf32>
    %cst_210 = arith.constant 3.200000e+01 : f32
    %494 = vector.broadcast %cst_210 : f32 to vector<16x1xf32>
    %495 = arith.divf %493, %494 : vector<16x1xf32>
    %496 = vector.broadcast %495 : vector<16x1xf32> to vector<16x32xf32>
    %497 = arith.subf %487, %496 : vector<16x32xf32>
    %498 = arith.mulf %497, %497 : vector<16x32xf32>
    %cst_211 = arith.constant dense<0.000000e+00> : vector<16xf32>
    %499 = vector.multi_reduction <add>, %498, %cst_211 [1] : vector<16x32xf32> to vector<16xf32>
    %500 = vector.shape_cast %499 : vector<16xf32> to vector<16x1xf32>
    %cst_212 = arith.constant 3.200000e+01 : f32
    %501 = vector.broadcast %cst_212 : f32 to vector<16x1xf32>
    %502 = arith.divf %500, %501 : vector<16x1xf32>
    %503 = vector.broadcast %495 : vector<16x1xf32> to vector<16x32xf32>
    %504 = arith.subf %487, %503 : vector<16x32xf32>
    %cst_213 = arith.constant 9.99999974E-6 : f32
    %505 = vector.broadcast %cst_213 : f32 to vector<16x1xf32>
    %506 = arith.addf %502, %505 : vector<16x1xf32>
    %507 = math.rsqrt %506 : vector<16x1xf32>
    %508 = vector.broadcast %507 : vector<16x1xf32> to vector<16x32xf32>
    %509 = arith.mulf %504, %508 : vector<16x32xf32>
    %510 = vector.broadcast %489 : vector<1x32xf32> to vector<16x32xf32>
    %511 = arith.mulf %509, %510 : vector<16x32xf32>
    %512 = vector.broadcast %491 : vector<1x32xf32> to vector<16x32xf32>
    %513 = arith.addf %511, %512 : vector<16x32xf32>
    %c3_214 = arith.constant 3 : index
    %c0_215 = arith.constant 0 : index
    %c0_216 = arith.constant 0 : index
    %514 = vector.load %arg2[%c3_214, %c0_215, %c0_216] : memref<4x32x96xf32, #tpu.memory_space<vmem>>, vector<1x32x96xf32>
    %515 = vector.shape_cast %514 : vector<1x32x96xf32> to vector<32x96xf32>
    %cst_217 = arith.constant dense<0.000000e+00> : vector<16x96xf32>
    %516 = tpu.matmul %513, %515, %cst_217 {dimension_numbers = #tpu.dot_dimension_numbers<[1], [0], [0], [1], [0, 0, 1, 1], [], []>} : vector<16x32xf32>, vector<32x96xf32>, vector<16x96xf32> -> vector<16x96xf32>
    %517 = vector.extract_strided_slice %516 {offsets = [0, 0], sizes = [16, 8], strides = [1, 1]} : vector<16x96xf32> to vector<16x8xf32>
    %518 = vector.extract_strided_slice %516 {offsets = [0, 32], sizes = [16, 8], strides = [1, 1]} : vector<16x96xf32> to vector<16x8xf32>
    %519 = vector.extract_strided_slice %516 {offsets = [0, 64], sizes = [16, 8], strides = [1, 1]} : vector<16x96xf32> to vector<16x8xf32>
    "tpu.trace_start"() <{level = 10 : i32, message = "td,sd->ts"}> : () -> ()
    %cst_218 = arith.constant dense<0.000000e+00> : vector<16x16xf32>
    %520 = tpu.matmul %517, %518, %cst_218 {dimension_numbers = #tpu.dot_dimension_numbers<[1], [1], [0], [0], [0, 0, 1, 0], [], []>} : vector<16x8xf32>, vector<16x8xf32>, vector<16x16xf32> -> vector<16x16xf32>
    "tpu.trace_stop"() : () -> ()
    %cst_219 = arith.constant 0.353553385 : f32
    %521 = vector.broadcast %cst_219 : f32 to vector<16x16xf32>
    %522 = arith.mulf %520, %521 : vector<16x16xf32>
    %523 = arith.addf %522, %1 : vector<16x16xf32>
    %cst_220 = arith.constant dense<0xFF800000> : vector<16xf32>
    %524 = vector.multi_reduction <maximumf>, %523, %cst_220 [1] : vector<16x16xf32> to vector<16xf32>
    %525 = vector.shape_cast %524 : vector<16xf32> to vector<16x1xf32>
    %526 = vector.broadcast %525 : vector<16x1xf32> to vector<16x16xf32>
    %527 = arith.subf %523, %526 : vector<16x16xf32>
    %528 = math.exp %527 : vector<16x16xf32>
    %cst_221 = arith.constant dense<0.000000e+00> : vector<16xf32>
    %529 = vector.multi_reduction <add>, %528, %cst_221 [1] : vector<16x16xf32> to vector<16xf32>
    %530 = vector.shape_cast %529 : vector<16xf32> to vector<16x1xf32>
    %531 = vector.broadcast %530 : vector<16x1xf32> to vector<16x16xf32>
    %532 = arith.divf %528, %531 : vector<16x16xf32>
    %533 = vector.extract_strided_slice %532 {offsets = [0, 0], sizes = [16, 8], strides = [1, 1]} : vector<16x16xf32> to vector<16x8xf32>
    %534 = vector.extract_strided_slice %532 {offsets = [0, 8], sizes = [16, 8], strides = [1, 1]} : vector<16x16xf32> to vector<16x8xf32>
    %535 = arith.addf %533, %534 : vector<16x8xf32>
    %cst_222 = arith.constant dense<0.000000e+00> : vector<16x8xf32>
    %536 = tpu.matmul %532, %519, %cst_222 {dimension_numbers = #tpu.dot_dimension_numbers<[1], [0], [0], [1], [0, 0, 1, 1], [], []>} : vector<16x16xf32>, vector<16x8xf32>, vector<16x8xf32> -> vector<16x8xf32>
    %537 = vector.extract_strided_slice %516 {offsets = [0, 8], sizes = [16, 8], strides = [1, 1]} : vector<16x96xf32> to vector<16x8xf32>
    %538 = vector.extract_strided_slice %516 {offsets = [0, 40], sizes = [16, 8], strides = [1, 1]} : vector<16x96xf32> to vector<16x8xf32>
    %539 = vector.extract_strided_slice %516 {offsets = [0, 72], sizes = [16, 8], strides = [1, 1]} : vector<16x96xf32> to vector<16x8xf32>
    "tpu.trace_start"() <{level = 10 : i32, message = "td,sd->ts"}> : () -> ()
    %cst_223 = arith.constant dense<0.000000e+00> : vector<16x16xf32>
    %540 = tpu.matmul %537, %538, %cst_223 {dimension_numbers = #tpu.dot_dimension_numbers<[1], [1], [0], [0], [0, 0, 1, 0], [], []>} : vector<16x8xf32>, vector<16x8xf32>, vector<16x16xf32> -> vector<16x16xf32>
    "tpu.trace_stop"() : () -> ()
    %cst_224 = arith.constant 0.353553385 : f32
    %541 = vector.broadcast %cst_224 : f32 to vector<16x16xf32>
    %542 = arith.mulf %540, %541 : vector<16x16xf32>
    %543 = arith.addf %542, %1 : vector<16x16xf32>
    %cst_225 = arith.constant dense<0xFF800000> : vector<16xf32>
    %544 = vector.multi_reduction <maximumf>, %543, %cst_225 [1] : vector<16x16xf32> to vector<16xf32>
    %545 = vector.shape_cast %544 : vector<16xf32> to vector<16x1xf32>
    %546 = vector.broadcast %545 : vector<16x1xf32> to vector<16x16xf32>
    %547 = arith.subf %543, %546 : vector<16x16xf32>
    %548 = math.exp %547 : vector<16x16xf32>
    %cst_226 = arith.constant dense<0.000000e+00> : vector<16xf32>
    %549 = vector.multi_reduction <add>, %548, %cst_226 [1] : vector<16x16xf32> to vector<16xf32>
    %550 = vector.shape_cast %549 : vector<16xf32> to vector<16x1xf32>
    %551 = vector.broadcast %550 : vector<16x1xf32> to vector<16x16xf32>
    %552 = arith.divf %548, %551 : vector<16x16xf32>
    %553 = vector.extract_strided_slice %552 {offsets = [0, 0], sizes = [16, 8], strides = [1, 1]} : vector<16x16xf32> to vector<16x8xf32>
    %554 = vector.extract_strided_slice %552 {offsets = [0, 8], sizes = [16, 8], strides = [1, 1]} : vector<16x16xf32> to vector<16x8xf32>
    %555 = arith.addf %553, %554 : vector<16x8xf32>
    %cst_227 = arith.constant dense<0.000000e+00> : vector<16x8xf32>
    %556 = tpu.matmul %552, %539, %cst_227 {dimension_numbers = #tpu.dot_dimension_numbers<[1], [0], [0], [1], [0, 0, 1, 1], [], []>} : vector<16x16xf32>, vector<16x8xf32>, vector<16x8xf32> -> vector<16x8xf32>
    %557 = vector.extract_strided_slice %516 {offsets = [0, 16], sizes = [16, 8], strides = [1, 1]} : vector<16x96xf32> to vector<16x8xf32>
    %558 = vector.extract_strided_slice %516 {offsets = [0, 48], sizes = [16, 8], strides = [1, 1]} : vector<16x96xf32> to vector<16x8xf32>
    %559 = vector.extract_strided_slice %516 {offsets = [0, 80], sizes = [16, 8], strides = [1, 1]} : vector<16x96xf32> to vector<16x8xf32>
    "tpu.trace_start"() <{level = 10 : i32, message = "td,sd->ts"}> : () -> ()
    %cst_228 = arith.constant dense<0.000000e+00> : vector<16x16xf32>
    %560 = tpu.matmul %557, %558, %cst_228 {dimension_numbers = #tpu.dot_dimension_numbers<[1], [1], [0], [0], [0, 0, 1, 0], [], []>} : vector<16x8xf32>, vector<16x8xf32>, vector<16x16xf32> -> vector<16x16xf32>
    "tpu.trace_stop"() : () -> ()
    %cst_229 = arith.constant 0.353553385 : f32
    %561 = vector.broadcast %cst_229 : f32 to vector<16x16xf32>
    %562 = arith.mulf %560, %561 : vector<16x16xf32>
    %563 = arith.addf %562, %1 : vector<16x16xf32>
    %cst_230 = arith.constant dense<0xFF800000> : vector<16xf32>
    %564 = vector.multi_reduction <maximumf>, %563, %cst_230 [1] : vector<16x16xf32> to vector<16xf32>
    %565 = vector.shape_cast %564 : vector<16xf32> to vector<16x1xf32>
    %566 = vector.broadcast %565 : vector<16x1xf32> to vector<16x16xf32>
    %567 = arith.subf %563, %566 : vector<16x16xf32>
    %568 = math.exp %567 : vector<16x16xf32>
    %cst_231 = arith.constant dense<0.000000e+00> : vector<16xf32>
    %569 = vector.multi_reduction <add>, %568, %cst_231 [1] : vector<16x16xf32> to vector<16xf32>
    %570 = vector.shape_cast %569 : vector<16xf32> to vector<16x1xf32>
    %571 = vector.broadcast %570 : vector<16x1xf32> to vector<16x16xf32>
    %572 = arith.divf %568, %571 : vector<16x16xf32>
    %573 = vector.extract_strided_slice %572 {offsets = [0, 0], sizes = [16, 8], strides = [1, 1]} : vector<16x16xf32> to vector<16x8xf32>
    %574 = vector.extract_strided_slice %572 {offsets = [0, 8], sizes = [16, 8], strides = [1, 1]} : vector<16x16xf32> to vector<16x8xf32>
    %575 = arith.addf %573, %574 : vector<16x8xf32>
    %cst_232 = arith.constant dense<0.000000e+00> : vector<16x8xf32>
    %576 = tpu.matmul %572, %559, %cst_232 {dimension_numbers = #tpu.dot_dimension_numbers<[1], [0], [0], [1], [0, 0, 1, 1], [], []>} : vector<16x16xf32>, vector<16x8xf32>, vector<16x8xf32> -> vector<16x8xf32>
    %577 = vector.extract_strided_slice %516 {offsets = [0, 24], sizes = [16, 8], strides = [1, 1]} : vector<16x96xf32> to vector<16x8xf32>
    %578 = vector.extract_strided_slice %516 {offsets = [0, 56], sizes = [16, 8], strides = [1, 1]} : vector<16x96xf32> to vector<16x8xf32>
    %579 = vector.extract_strided_slice %516 {offsets = [0, 88], sizes = [16, 8], strides = [1, 1]} : vector<16x96xf32> to vector<16x8xf32>
    "tpu.trace_start"() <{level = 10 : i32, message = "td,sd->ts"}> : () -> ()
    %cst_233 = arith.constant dense<0.000000e+00> : vector<16x16xf32>
    %580 = tpu.matmul %577, %578, %cst_233 {dimension_numbers = #tpu.dot_dimension_numbers<[1], [1], [0], [0], [0, 0, 1, 0], [], []>} : vector<16x8xf32>, vector<16x8xf32>, vector<16x16xf32> -> vector<16x16xf32>
    "tpu.trace_stop"() : () -> ()
    %cst_234 = arith.constant 0.353553385 : f32
    %581 = vector.broadcast %cst_234 : f32 to vector<16x16xf32>
    %582 = arith.mulf %580, %581 : vector<16x16xf32>
    %583 = arith.addf %582, %1 : vector<16x16xf32>
    %cst_235 = arith.constant dense<0xFF800000> : vector<16xf32>
    %584 = vector.multi_reduction <maximumf>, %583, %cst_235 [1] : vector<16x16xf32> to vector<16xf32>
    %585 = vector.shape_cast %584 : vector<16xf32> to vector<16x1xf32>
    %586 = vector.broadcast %585 : vector<16x1xf32> to vector<16x16xf32>
    %587 = arith.subf %583, %586 : vector<16x16xf32>
    %588 = math.exp %587 : vector<16x16xf32>
    %cst_236 = arith.constant dense<0.000000e+00> : vector<16xf32>
    %589 = vector.multi_reduction <add>, %588, %cst_236 [1] : vector<16x16xf32> to vector<16xf32>
    %590 = vector.shape_cast %589 : vector<16xf32> to vector<16x1xf32>
    %591 = vector.broadcast %590 : vector<16x1xf32> to vector<16x16xf32>
    %592 = arith.divf %588, %591 : vector<16x16xf32>
    %593 = vector.extract_strided_slice %592 {offsets = [0, 0], sizes = [16, 8], strides = [1, 1]} : vector<16x16xf32> to vector<16x8xf32>
    %594 = vector.extract_strided_slice %592 {offsets = [0, 8], sizes = [16, 8], strides = [1, 1]} : vector<16x16xf32> to vector<16x8xf32>
    %595 = arith.addf %593, %594 : vector<16x8xf32>
    %cst_237 = arith.constant dense<0.000000e+00> : vector<16x8xf32>
    %596 = tpu.matmul %592, %579, %cst_237 {dimension_numbers = #tpu.dot_dimension_numbers<[1], [0], [0], [1], [0, 0, 1, 1], [], []>} : vector<16x16xf32>, vector<16x8xf32>, vector<16x8xf32> -> vector<16x8xf32>
    %597 = tpu.concatenate %535, %555, %575, %595 in 1 : vector<16x8xf32>, vector<16x8xf32>, vector<16x8xf32>, vector<16x8xf32> -> vector<16x32xf32>
    %598 = tpu.concatenate %536, %556, %576, %596 in 1 : vector<16x8xf32>, vector<16x8xf32>, vector<16x8xf32>, vector<16x8xf32> -> vector<16x32xf32>
    %c3_238 = arith.constant 3 : index
    %c0_239 = arith.constant 0 : index
    %c0_240 = arith.constant 0 : index
    %599 = vector.load %arg3[%c3_238, %c0_239, %c0_240] : memref<4x32x32xf32, #tpu.memory_space<vmem>>, vector<1x32x32xf32>
    %600 = vector.shape_cast %599 : vector<1x32x32xf32> to vector<32x32xf32>
    %cst_241 = arith.constant dense<0.000000e+00> : vector<16x32xf32>
    %601 = tpu.matmul %598, %600, %cst_241 {dimension_numbers = #tpu.dot_dimension_numbers<[1], [0], [0], [1], [0, 0, 1, 1], [], []>} : vector<16x32xf32>, vector<32x32xf32>, vector<16x32xf32> -> vector<16x32xf32>
    %c3_242 = arith.constant 3 : index
    %c0_243 = arith.constant 0 : index
    %c0_244 = arith.constant 0 : index
    %602 = vector.load %arg4[%c3_242, %c0_243, %c0_244] : memref<4x1x32xf32, #tpu.memory_space<vmem>>, vector<1x1x32xf32>
    %603 = vector.shape_cast %602 : vector<1x1x32xf32> to vector<1x32xf32>
    %604 = vector.broadcast %603 : vector<1x32xf32> to vector<16x32xf32>
    %605 = arith.addf %601, %604 : vector<16x32xf32>
    %606 = arith.addf %487, %605 : vector<16x32xf32>
    %c3_245 = arith.constant 3 : index
    %c0_246 = arith.constant 0 : index
    %c0_247 = arith.constant 0 : index
    %607 = vector.load %arg7[%c3_245, %c0_246, %c0_247] : memref<4x1x32xf32, #tpu.memory_space<vmem>>, vector<1x1x32xf32>
    %608 = vector.shape_cast %607 : vector<1x1x32xf32> to vector<1x32xf32>
    %c3_248 = arith.constant 3 : index
    %c0_249 = arith.constant 0 : index
    %c0_250 = arith.constant 0 : index
    %609 = vector.load %arg8[%c3_248, %c0_249, %c0_250] : memref<4x1x32xf32, #tpu.memory_space<vmem>>, vector<1x1x32xf32>
    %610 = vector.shape_cast %609 : vector<1x1x32xf32> to vector<1x32xf32>
    %cst_251 = arith.constant dense<0.000000e+00> : vector<16xf32>
    %611 = vector.multi_reduction <add>, %606, %cst_251 [1] : vector<16x32xf32> to vector<16xf32>
    %612 = vector.shape_cast %611 : vector<16xf32> to vector<16x1xf32>
    %cst_252 = arith.constant 3.200000e+01 : f32
    %613 = vector.broadcast %cst_252 : f32 to vector<16x1xf32>
    %614 = arith.divf %612, %613 : vector<16x1xf32>
    %615 = vector.broadcast %614 : vector<16x1xf32> to vector<16x32xf32>
    %616 = arith.subf %606, %615 : vector<16x32xf32>
    %617 = arith.mulf %616, %616 : vector<16x32xf32>
    %cst_253 = arith.constant dense<0.000000e+00> : vector<16xf32>
    %618 = vector.multi_reduction <add>, %617, %cst_253 [1] : vector<16x32xf32> to vector<16xf32>
    %619 = vector.shape_cast %618 : vector<16xf32> to vector<16x1xf32>
    %cst_254 = arith.constant 3.200000e+01 : f32
    %620 = vector.broadcast %cst_254 : f32 to vector<16x1xf32>
    %621 = arith.divf %619, %620 : vector<16x1xf32>
    %622 = vector.broadcast %614 : vector<16x1xf32> to vector<16x32xf32>
    %623 = arith.subf %606, %622 : vector<16x32xf32>
    %cst_255 = arith.constant 9.99999974E-6 : f32
    %624 = vector.broadcast %cst_255 : f32 to vector<16x1xf32>
    %625 = arith.addf %621, %624 : vector<16x1xf32>
    %626 = math.rsqrt %625 : vector<16x1xf32>
    %627 = vector.broadcast %626 : vector<16x1xf32> to vector<16x32xf32>
    %628 = arith.mulf %623, %627 : vector<16x32xf32>
    %629 = vector.broadcast %608 : vector<1x32xf32> to vector<16x32xf32>
    %630 = arith.mulf %628, %629 : vector<16x32xf32>
    %631 = vector.broadcast %610 : vector<1x32xf32> to vector<16x32xf32>
    %632 = arith.addf %630, %631 : vector<16x32xf32>
    %c3_256 = arith.constant 3 : index
    %c0_257 = arith.constant 0 : index
    %c0_258 = arith.constant 0 : index
    %633 = vector.load %arg9[%c3_256, %c0_257, %c0_258] : memref<4x32x128xf32, #tpu.memory_space<vmem>>, vector<1x32x128xf32>
    %634 = vector.shape_cast %633 : vector<1x32x128xf32> to vector<32x128xf32>
    %cst_259 = arith.constant dense<0.000000e+00> : vector<16x128xf32>
    %635 = tpu.matmul %632, %634, %cst_259 {dimension_numbers = #tpu.dot_dimension_numbers<[1], [0], [0], [1], [0, 0, 1, 1], [], []>} : vector<16x32xf32>, vector<32x128xf32>, vector<16x128xf32> -> vector<16x128xf32>
    %c3_260 = arith.constant 3 : index
    %c0_261 = arith.constant 0 : index
    %c0_262 = arith.constant 0 : index
    %636 = vector.load %arg10[%c3_260, %c0_261, %c0_262] : memref<4x1x128xf32, #tpu.memory_space<vmem>>, vector<1x1x128xf32>
    %637 = vector.shape_cast %636 : vector<1x1x128xf32> to vector<1x128xf32>
    %638 = vector.broadcast %637 : vector<1x128xf32> to vector<16x128xf32>
    %639 = arith.addf %635, %638 : vector<16x128xf32>
    %cst_263 = arith.constant 0.000000e+00 : f32
    %640 = vector.broadcast %cst_263 : f32 to vector<16x128xf32>
    %641 = arith.maximumf %639, %640 : vector<16x128xf32>
    %c3_264 = arith.constant 3 : index
    %c0_265 = arith.constant 0 : index
    %c0_266 = arith.constant 0 : index
    %642 = vector.load %arg11[%c3_264, %c0_265, %c0_266] : memref<4x128x32xf32, #tpu.memory_space<vmem>>, vector<1x128x32xf32>
    %643 = vector.shape_cast %642 : vector<1x128x32xf32> to vector<128x32xf32>
    %cst_267 = arith.constant dense<0.000000e+00> : vector<16x32xf32>
    %644 = tpu.matmul %641, %643, %cst_267 {dimension_numbers = #tpu.dot_dimension_numbers<[1], [0], [0], [1], [0, 0, 1, 1], [], []>} : vector<16x128xf32>, vector<128x32xf32>, vector<16x32xf32> -> vector<16x32xf32>
    %c3_268 = arith.constant 3 : index
    %c0_269 = arith.constant 0 : index
    %c0_270 = arith.constant 0 : index
    %645 = vector.load %arg12[%c3_268, %c0_269, %c0_270] : memref<4x1x32xf32, #tpu.memory_space<vmem>>, vector<1x1x32xf32>
    %646 = vector.shape_cast %645 : vector<1x1x32xf32> to vector<1x32xf32>
    %647 = vector.broadcast %646 : vector<1x32xf32> to vector<16x32xf32>
    %648 = arith.addf %644, %647 : vector<16x32xf32>
    %649 = arith.addf %606, %648 : vector<16x32xf32>
    %c0_271 = arith.constant 0 : index
    %c0_272 = arith.constant 0 : index
    %650 = vector.load %arg13[%c0_271, %c0_272] : memref<1x32xf32, #tpu.memory_space<vmem>>, vector<1x32xf32>
    %c0_273 = arith.constant 0 : index
    %c0_274 = arith.constant 0 : index
    %651 = vector.load %arg14[%c0_273, %c0_274] : memref<1x32xf32, #tpu.memory_space<vmem>>, vector<1x32xf32>
    %cst_275 = arith.constant dense<0.000000e+00> : vector<16xf32>
    %652 = vector.multi_reduction <add>, %649, %cst_275 [1] : vector<16x32xf32> to vector<16xf32>
    %653 = vector.shape_cast %652 : vector<16xf32> to vector<16x1xf32>
    %cst_276 = arith.constant 3.200000e+01 : f32
    %654 = vector.broadcast %cst_276 : f32 to vector<16x1xf32>
    %655 = arith.divf %653, %654 : vector<16x1xf32>
    %656 = vector.broadcast %655 : vector<16x1xf32> to vector<16x32xf32>
    %657 = arith.subf %649, %656 : vector<16x32xf32>
    %658 = arith.mulf %657, %657 : vector<16x32xf32>
    %cst_277 = arith.constant dense<0.000000e+00> : vector<16xf32>
    %659 = vector.multi_reduction <add>, %658, %cst_277 [1] : vector<16x32xf32> to vector<16xf32>
    %660 = vector.shape_cast %659 : vector<16xf32> to vector<16x1xf32>
    %cst_278 = arith.constant 3.200000e+01 : f32
    %661 = vector.broadcast %cst_278 : f32 to vector<16x1xf32>
    %662 = arith.divf %660, %661 : vector<16x1xf32>
    %663 = vector.broadcast %655 : vector<16x1xf32> to vector<16x32xf32>
    %664 = arith.subf %649, %663 : vector<16x32xf32>
    %cst_279 = arith.constant 9.99999974E-6 : f32
    %665 = vector.broadcast %cst_279 : f32 to vector<16x1xf32>
    %666 = arith.addf %662, %665 : vector<16x1xf32>
    %667 = math.rsqrt %666 : vector<16x1xf32>
    %668 = vector.broadcast %667 : vector<16x1xf32> to vector<16x32xf32>
    %669 = arith.mulf %664, %668 : vector<16x32xf32>
    %670 = vector.broadcast %650 : vector<1x32xf32> to vector<16x32xf32>
    %671 = arith.mulf %669, %670 : vector<16x32xf32>
    %672 = vector.broadcast %651 : vector<1x32xf32> to vector<16x32xf32>
    %673 = arith.addf %671, %672 : vector<16x32xf32>
    %c0_280 = arith.constant 0 : index
    %c0_281 = arith.constant 0 : index
    %674 = vector.load %arg15[%c0_280, %c0_281] : memref<32x16xf32, #tpu.memory_space<vmem>>, vector<32x16xf32>
    %cst_282 = arith.constant dense<0.000000e+00> : vector<16x16xf32>
    %675 = tpu.matmul %673, %674, %cst_282 {dimension_numbers = #tpu.dot_dimension_numbers<[1], [0], [0], [1], [0, 0, 1, 1], [], []>} : vector<16x32xf32>, vector<32x16xf32>, vector<16x16xf32> -> vector<16x16xf32>
    %c0_283 = arith.constant 0 : index
    %c0_284 = arith.constant 0 : index
    %676 = vector.load %arg16[%c0_283, %c0_284] : memref<1x16xf32, #tpu.memory_space<vmem>>, vector<1x16xf32>
    %677 = vector.broadcast %676 : vector<1x16xf32> to vector<16x16xf32>
    %678 = arith.addf %675, %677 : vector<16x16xf32>
    %c0_285 = arith.constant 0 : index
    %c0_286 = arith.constant 0 : index
    %679 = vector.load %arg17[%c0_285, %c0_286] : memref<16x16xf32, #tpu.memory_space<vmem>>, vector<16x16xf32>
    tpu.vector_store %arg17[%c0_285, %c0_286], %678 {strides = array<i32>} : memref<16x16xf32, #tpu.memory_space<vmem>>, vector<16x16xf32>,
    %680 = tpu.concatenate %111, %273, %435, %597 in 1 : vector<16x32xf32>, vector<16x32xf32>, vector<16x32xf32>, vector<16x32xf32> -> vector<16x128xf32>
    %c0_287 = arith.constant 0 : index
    %c0_288 = arith.constant 0 : index
    %681 = vector.load %arg18[%c0_287, %c0_288] : memref<16x128xf32, #tpu.memory_space<vmem>>, vector<16x128xf32>
    tpu.vector_store %arg18[%c0_287, %c0_288], %680 {strides = array<i32>} : memref<16x128xf32, #tpu.memory_space<vmem>>, vector<16x128xf32>,
    return
  }
}

</mosaic_0001>

<llo_original>
// kernel: tpu_custom_call.1
$region0: #{tpu_custom_call.1}
  #allocation0 [shape = 'u32[]', space=smem, size = 0x4, offset = 0x4, fixed_abs, tag = 'smem constant byte address 0x4 - core index']
  #allocation1 [shape = 'u32[144,128]{1,0:T(1,128)}', space=vmem, size = 0x12000, scoped, tag = 'internal scratch']
  %s0 = inlined_call_operand.vmem [shape: f32[16,32], index: 0, kind: input, shape index: {}]
  %s1 = inlined_call_operand.vmem [shape: f32[16,16], index: 1, kind: input, shape index: {}]
  %s2 = inlined_call_operand.vmem [shape: f32[4,32,96], index: 2, kind: input, shape index: {}]
  %s3 = inlined_call_operand.vmem [shape: f32[4,32,32], index: 3, kind: input, shape index: {}]
  %s4 = inlined_call_operand.vmem [shape: f32[4,1,32], index: 4, kind: input, shape index: {}]
  %s5 = inlined_call_operand.vmem [shape: f32[4,1,32], index: 5, kind: input, shape index: {}]
  %s6 = inlined_call_operand.vmem [shape: f32[4,1,32], index: 6, kind: input, shape index: {}]
  %s7 = inlined_call_operand.vmem [shape: f32[4,1,32], index: 7, kind: input, shape index: {}]
  %s8 = inlined_call_operand.vmem [shape: f32[4,1,32], index: 8, kind: input, shape index: {}]
  %s9 = inlined_call_operand.vmem [shape: f32[4,32,128], index: 9, kind: input, shape index: {}]
  %s10 = inlined_call_operand.vmem [shape: f32[4,1,128], index: 10, kind: input, shape index: {}]
  %s11 = inlined_call_operand.vmem [shape: f32[4,128,32], index: 11, kind: input, shape index: {}]
  %s12 = inlined_call_operand.vmem [shape: f32[4,1,32], index: 12, kind: input, shape index: {}]
  %s13 = inlined_call_operand.vmem [shape: f32[1,32], index: 13, kind: input, shape index: {}]
  %s14 = inlined_call_operand.vmem [shape: f32[1,32], index: 14, kind: input, shape index: {}]
  %s15 = inlined_call_operand.vmem [shape: f32[32,16], index: 15, kind: input, shape index: {}]
  %s16 = inlined_call_operand.vmem [shape: f32[1,16], index: 16, kind: input, shape index: {}]
  %s17 = inlined_call_operand.hbm [shape: f32[16,16], index: 17, kind: output, shape index: {0}]
  %s18 = inlined_call_operand.hbm [shape: f32[16,128], index: 18, kind: output, shape index: {1}]
  %19 = xla_tuple %s17, %s18
  %s20 = sld [smem:[#allocation0]]
  $region86: #{tpu_custom_call.1} parent=0
    _
  %s22 = ssub.s32 1, %s20
  %s23 = scalar_select 0, %s22, %s20
  $region1: #{tpu_custom_call.1} parent=0
    #allocation2 [shape = 'u8[8192]{0}', space=vmem, size = 0x2000, scoped, tag = 'output window, operand 0, single buffered']
    #allocation3 [shape = 's32[1]{0}', space=sflag, size = 0x4, scoped, tag = 'scoped memory for tpu_custom_call.1']
    #allocation4 [shape = 'u8[8192]{0}', space=vmem, size = 0x2000, scoped, tag = 'output window, operand 1, single buffered']
    #allocation5 [shape = 's32[1]{0}', space=sflag, size = 0x4, scoped, tag = 'scoped memory for tpu_custom_call.1']
    %24 = vsyncpa [#allocation3], 0
    %25 = vsyncpa [#allocation5], 0
    // Predicated region
    $region2: #{tpu_custom_call.1} parent=1 // pred_check
      _
    $region3: #{tpu_custom_call.1} parent=1 // pred_check_branch
      %27 = sbr.rel (0) target = $region5
    $region4: #{tpu_custom_call.1} parent=1 // pred_region
      _
    $region5: #{tpu_custom_call.1} parent=1 // pred_fallthru
      _
    // Predicated region
    $region6: #{tpu_custom_call.1} parent=1 // pred_check
      _
    $region7: #{tpu_custom_call.1} parent=1 // pred_check_branch
      %29 = sbr.rel (0) target = $region9
    $region8: #{tpu_custom_call.1} parent=1 // pred_region
      _
    $region9: #{tpu_custom_call.1} parent=1 // pred_fallthru
      _
    // Predicated region
    $region10: #{tpu_custom_call.1} parent=1 // pred_check
      _
    $region11: #{tpu_custom_call.1} parent=1 // pred_check_branch
      %31 = sbr.rel (0) target = $region13
    $region12: #{tpu_custom_call.1} parent=1 // pred_region
      _
    $region13: #{tpu_custom_call.1} parent=1 // pred_fallthru
      _
    // Predicated region
    $region14: #{tpu_custom_call.1} parent=1 // pred_check
      _
    $region15: #{tpu_custom_call.1} parent=1 // pred_check_branch
      %33 = sbr.rel (0) target = $region17
    $region16: #{tpu_custom_call.1} parent=1 // pred_region
      _
    $region17: #{tpu_custom_call.1} parent=1 // pred_fallthru
      _
    // Predicated region
    $region18: #{tpu_custom_call.1} parent=1 // pred_check
      _
    $region19: #{tpu_custom_call.1} parent=1 // pred_check_branch
      %35 = sbr.rel (0) target = $region21
    $region20: #{tpu_custom_call.1} parent=1 // pred_region
      _
    $region21: #{tpu_custom_call.1} parent=1 // pred_fallthru
      _
    // Predicated region
    $region22: #{tpu_custom_call.1} parent=1 // pred_check
      _
    $region23: #{tpu_custom_call.1} parent=1 // pred_check_branch
      %37 = sbr.rel (0) target = $region25
    $region24: #{tpu_custom_call.1} parent=1 // pred_region
      _
    $region25: #{tpu_custom_call.1} parent=1 // pred_fallthru
      _
    // Predicated region
    $region26: #{tpu_custom_call.1} parent=1 // pred_check
      _
    $region27: #{tpu_custom_call.1} parent=1 // pred_check_branch
      %39 = sbr.rel (0) target = $region29
    $region28: #{tpu_custom_call.1} parent=1 // pred_region
      _
    $region29: #{tpu_custom_call.1} parent=1 // pred_fallthru
      _
    // Predicated region
    $region30: #{tpu_custom_call.1} parent=1 // pred_check
      _
    $region31: #{tpu_custom_call.1} parent=1 // pred_check_branch
      %41 = sbr.rel (0) target = $region33
    $region32: #{tpu_custom_call.1} parent=1 // pred_region
      _
    $region33: #{tpu_custom_call.1} parent=1 // pred_fallthru
      _
    // Predicated region
    $region34: #{tpu_custom_call.1} parent=1 // pred_check
      _
    $region35: #{tpu_custom_call.1} parent=1 // pred_check_branch
      %43 = sbr.rel (0) target = $region37
    $region36: #{tpu_custom_call.1} parent=1 // pred_region
      _
    $region37: #{tpu_custom_call.1} parent=1 // pred_fallthru
      _
    // Predicated region
    $region38: #{tpu_custom_call.1} parent=1 // pred_check
      _
    $region39: #{tpu_custom_call.1} parent=1 // pred_check_branch
      %45 = sbr.rel (0) target = $region41
    $region40: #{tpu_custom_call.1} parent=1 // pred_region
      _
    $region41: #{tpu_custom_call.1} parent=1 // pred_fallthru
      _
    // Predicated region
    $region42: #{tpu_custom_call.1} parent=1 // pred_check
      _
    $region43: #{tpu_custom_call.1} parent=1 // pred_check_branch
      %47 = sbr.rel (0) target = $region45
    $region44: #{tpu_custom_call.1} parent=1 // pred_region
      _
    $region45: #{tpu_custom_call.1} parent=1 // pred_fallthru
      _
    // Predicated region
    $region46: #{tpu_custom_call.1} parent=1 // pred_check
      _
    $region47: #{tpu_custom_call.1} parent=1 // pred_check_branch
      %49 = sbr.rel (0) target = $region49
    $region48: #{tpu_custom_call.1} parent=1 // pred_region
      _
    $region49: #{tpu_custom_call.1} parent=1 // pred_fallthru
      _
    // Predicated region
    $region50: #{tpu_custom_call.1} parent=1 // pred_check
      _
    $region51: #{tpu_custom_call.1} parent=1 // pred_check_branch
      %51 = sbr.rel (0) target = $region53
    $region52: #{tpu_custom_call.1} parent=1 // pred_region
      _
    $region53: #{tpu_custom_call.1} parent=1 // pred_fallthru
      _
    // Predicated region
    $region54: #{tpu_custom_call.1} parent=1 // pred_check
      _
    $region55: #{tpu_custom_call.1} parent=1 // pred_check_branch
      %53 = sbr.rel (0) target = $region57
    $region56: #{tpu_custom_call.1} parent=1 // pred_region
      _
    $region57: #{tpu_custom_call.1} parent=1 // pred_fallthru
      _
    // Predicated region
    $region58: #{tpu_custom_call.1} parent=1 // pred_check
      _
    $region59: #{tpu_custom_call.1} parent=1 // pred_check_branch
      %55 = sbr.rel (0) target = $region61
    $region60: #{tpu_custom_call.1} parent=1 // pred_region
      _
    $region61: #{tpu_custom_call.1} parent=1 // pred_fallthru
      _
    // Predicated region
    $region62: #{tpu_custom_call.1} parent=1 // pred_check
      _
    $region63: #{tpu_custom_call.1} parent=1 // pred_check_branch
      %57 = sbr.rel (0) target = $region65
    $region64: #{tpu_custom_call.1} parent=1 // pred_region
      _
    $region65: #{tpu_custom_call.1} parent=1 // pred_fallthru
      _
    // Predicated region
    $region66: #{tpu_custom_call.1} parent=1 // pred_check
      _
    $region67: #{tpu_custom_call.1} parent=1 // pred_check_branch
      %59 = sbr.rel (0) target = $region69
    $region68: #{tpu_custom_call.1} parent=1 // pred_region
      _
    $region69: #{tpu_custom_call.1} parent=1 // pred_fallthru
      _
    %v60 = vld [vmem:[%s0] sm:$0xff]
    %v61 = vld [vmem:[%s0 + $0x8] sm:$0xff]
    %v62 = vld [vmem:[%s1] sm:$0xff]
    %v63 = vld [vmem:[%s1 + $0x8] sm:$0xff]
    %v64 = vld [vmem:[%s5] sm:$0x1]
    %v65 = vld [vmem:[%s6] sm:$0x1]
    %vm66 = vcmask 261120
    %v67 = vsel %vm66, %v60, 0.0
    %68 = vadd.xlane.f32.xlu0 %v67
    %v69 = vpop.xlane.xlu0 %68
    %v70 = vsel %vm66, %v61, 0.0
    %71 = vadd.xlane.f32.xlu0 %v70
    %v72 = vpop.xlane.xlu0 %71
    %v73 = vrcp.pop 32.0
    %v74 = vmul.f32 %v69, %v73
    %v75 = vmul.f32 %v72, %v73
    %v76 = vsub.f32 %v60, %v74
    %v77 = vsub.f32 %v61, %v75
    %v78 = vmul.f32 %v76, %v76
    %v79 = vmul.f32 %v77, %v77
    %v80 = vsel %vm66, %v78, 0.0
    %81 = vadd.xlane.f32.xlu0 %v80
    %v82 = vpop.xlane.xlu0 %81
    %v83 = vsel %vm66, %v79, 0.0
    %84 = vadd.xlane.f32.xlu0 %v83
    %v85 = vpop.xlane.xlu0 %84
    %v86 = vmul.f32 %v82, %v73
    %v87 = vmul.f32 %v85, %v73
    %v88 = vadd.f32 %v86, 1e-05
    %v89 = vadd.f32 %v87, 1e-05
    %v90 = vrsqrt.pop %v88
    %v91 = vrsqrt.pop %v89
    %v92 = vmul.f32 %v76, %v90
    %v93 = vmul.f32 %v77, %v91
    %v95 = vlaneseq
    %v96 = vshrl.u32 %v95, 7
    %v97 = vsub.s32 0, %v96
    %v98 = vrot.slane %v64, %v97
    %v100 = vmul.f32 %v92, %v98
    %v101 = vmul.f32 %v93, %v98
    %v103 = vlaneseq
    %v104 = vshrl.u32 %v103, 7
    %v105 = vsub.s32 0, %v104
    %v106 = vrot.slane %v65, %v105
    %v108 = vadd.f32 %v100, %v106
    %v109 = vadd.f32 %v101, %v106
    %v110 = vld [vmem:[%s2] sm:$0xff]
    %v111 = vld [vmem:[%s2 + $0x8] sm:$0xff]
    %v112 = vld [vmem:[%s2 + $0x10] sm:$0xff]
    %v113 = vld [vmem:[%s2 + $0x18] sm:$0xff]
    %v115 = vsel %vm66, %v108, 0
    %v118 = vsel %vm66, %v109, 0
    %120 = vmatprep.subr.mxu0 0.0
    %121 = vmatpush1.msra.mxu0 %v110
    %122 = vmatprep.subr.mxu0 0.0
    %123 = vmatpush1.msra.mxu0 %v111
    %124 = vmatprep.subr.mxu0 0.0
    %125 = vmatpush1.msra.mxu0 %v112
    %126 = vmatprep.subr.mxu0 0.0
    %127 = vmatpush1.msra.mxu0 %v113
    %128 = vmatprep.subr.mxu0 0.0
    %129 = vmatpush1.msra.mxu0 0.0
    %130 = vmatprep.subr.mxu0 0.0
    %131 = vmatpush1.msra.mxu0 0.0
    %132 = vmatprep.subr.mxu0 0.0
    %133 = vmatpush1.msra.mxu0 0.0
    %134 = vmatprep.subr.mxu0 0.0
    %135 = vmatpush1.msra.mxu0 0.0
    %136 = vmatprep.subr.mxu0 0.0
    %137 = vmatpush1.msra.mxu0 0.0
    %138 = vmatprep.subr.mxu0 0.0
    %139 = vmatpush1.msra.mxu0 0.0
    %140 = vmatprep.subr.mxu0 0.0
    %141 = vmatpush1.msra.mxu0 0.0
    %142 = vmatprep.subr.mxu0 0.0
    %143 = vmatpush1.msra.mxu0 0.0
    %144 = vmatprep.subr.mxu0 0.0
    %145 = vmatpush1.msra.mxu0 0.0
    %146 = vmatprep.subr.mxu0 0.0
    %147 = vmatpush1.msra.mxu0 0.0
    %148 = vmatprep.subr.mxu0 0.0
    %149 = vmatpush1.msra.mxu0 0.0
    %150 = vmatprep.subr.mxu0 0.0
    %151 = vmatpush1.msra.mxu0 0.0
    %152 = vmatprep.subr.mxu0 0.0
    %153 = vmatpush1.msra.mxu0 0.0
    %154 = vmatprep.subr.mxu0 0.0
    %155 = vmatpush1.msra.mxu0 0.0
    %156 = vmatprep.subr.mxu0 0.0
    %157 = vmatpush1.msra.mxu0 0.0
    %158 = vmatprep.subr.mxu0 0.0
    %159 = vmatpush1.msra.mxu0 0.0
    %160 = vmatprep.subr.mxu0 0.0
    %161 = vmatpush1.msra.mxu0 0.0
    %162 = vmatprep.subr.mxu0 0.0
    %163 = vmatpush1.msra.mxu0 0.0
    %164 = vmatprep.subr.mxu0 0.0
    %165 = vmatpush1.msra.mxu0 0.0
    %166 = vmatprep.subr.mxu0 0.0
    %167 = vmatpush1.msra.mxu0 0.0
    %168 = vmatprep.subr.mxu0 0.0
    %169 = vmatpush1.msra.mxu0 0.0
    %170 = vmatprep.subr.mxu0 0.0
    %171 = vmatpush1.msra.mxu0 0.0
    %172 = vmatprep.subr.mxu0 0.0
    %173 = vmatpush1.msra.mxu0 0.0
    %174 = vmatprep.subr.mxu0 0.0
    %175 = vmatpush1.msra.mxu0 0.0
    %176 = vmatprep.subr.mxu0 0.0
    %177 = vmatpush1.msra.mxu0 0.0
    %178 = vmatprep.subr.mxu0 0.0
    %179 = vmatpush1.msra.mxu0 0.0
    %180 = vmatprep.subr.mxu0 0.0
    %181 = vmatpush1.msra.mxu0 0.0
    %182 = vmatprep.subr.mxu0 0.0
    %183 = vmatpush1.msra.mxu0 0.0
    %184 = vmatprep.mubr.f32.mxu0 0.0
    %185 = vmatmul.mubr.f32.gmra.mrb[0].mxu0 %v115
    %v186 = vpop.f32.mrb[0].mxu0
    %v187 = vadd.f32 0.0, %v186
    %v188 = vpop.f32.mrb[0].mxu0
    %189 = vmatprep.mubr.f32.mxu0 0.0
    %190 = vmatmul.mubr.f32.gmra.mrb[0].mxu0 %v118
    %v191 = vpop.f32.mrb[0].mxu0
    %v192 = vadd.f32 0.0, %v191
    %v193 = vpop.f32.mrb[0].mxu0
    %194 = vdwg.mxu0
    %197 = vrot.lane.b32.xlu0 %v187, 96
    %v198 = vpop.permute.xlu0 %197
    %199 = vrot.lane.b32.xlu0 %v192, 96
    %v200 = vpop.permute.xlu0 %199
    %vm201 = vcmask 64512
    %v202 = vsel %vm201, %v187, 0
    %v204 = vsel %vm201, %v192, 0
    %v206 = vsel %vm201, %v198, 0
    %v208 = vsel %vm201, %v200, 0
    %210 = vmatprep.subr.mxu0 0.0
    %211 = vmatpush1.xpose.msra.mxu0 %v206
    %212 = vmatprep.subr.mxu0 0.0
    %213 = vmatpush1.xpose.msra.mxu0 %v208
    %214 = vmatprep.subr.mxu0 0.0
    %215 = vmatpush1.xpose.msra.mxu0 0.0
    %216 = vmatprep.subr.mxu0 0.0
    %217 = vmatpush1.xpose.msra.mxu0 0.0
    %218 = vmatprep.subr.mxu0 0.0
    %219 = vmatpush1.xpose.msra.mxu0 0.0
    %220 = vmatprep.subr.mxu0 0.0
    %221 = vmatpush1.xpose.msra.mxu0 0.0
    %222 = vmatprep.subr.mxu0 0.0
    %223 = vmatpush1.xpose.msra.mxu0 0.0
    %224 = vmatprep.subr.mxu0 0.0
    %225 = vmatpush1.xpose.msra.mxu0 0.0
    %226 = vmatprep.subr.mxu0 0.0
    %227 = vmatpush1.xpose.msra.mxu0 0.0
    %228 = vmatprep.subr.mxu0 0.0
    %229 = vmatpush1.xpose.msra.mxu0 0.0
    %230 = vmatprep.subr.mxu0 0.0
    %231 = vmatpush1.xpose.msra.mxu0 0.0
    %232 = vmatprep.subr.mxu0 0.0
    %233 = vmatpush1.xpose.msra.mxu0 0.0
    %234 = vmatprep.subr.mxu0 0.0
    %235 = vmatpush1.xpose.msra.mxu0 0.0
    %236 = vmatprep.subr.mxu0 0.0
    %237 = vmatpush1.xpose.msra.mxu0 0.0
    %238 = vmatprep.subr.mxu0 0.0
    %239 = vmatpush1.xpose.msra.mxu0 0.0
    %240 = vmatprep.subr.mxu0 0.0
    %241 = vmatpush1.xpose.msra.mxu0 0.0
    %242 = vmatprep.subr.mxu0 0.0
    %243 = vmatpush1.xpose.msra.mxu0 0.0
    %244 = vmatprep.subr.mxu0 0.0
    %245 = vmatpush1.xpose.msra.mxu0 0.0
    %246 = vmatprep.subr.mxu0 0.0
    %247 = vmatpush1.xpose.msra.mxu0 0.0
    %248 = vmatprep.subr.mxu0 0.0
    %249 = vmatpush1.xpose.msra.mxu0 0.0
    %250 = vmatprep.subr.mxu0 0.0
    %251 = vmatpush1.xpose.msra.mxu0 0.0
    %252 = vmatprep.subr.mxu0 0.0
    %253 = vmatpush1.xpose.msra.mxu0 0.0
    %254 = vmatprep.subr.mxu0 0.0
    %255 = vmatpush1.xpose.msra.mxu0 0.0
    %256 = vmatprep.subr.mxu0 0.0
    %257 = vmatpush1.xpose.msra.mxu0 0.0
    %258 = vmatprep.subr.mxu0 0.0
    %259 = vmatpush1.xpose.msra.mxu0 0.0
    %260 = vmatprep.subr.mxu0 0.0
    %261 = vmatpush1.xpose.msra.mxu0 0.0
    %262 = vmatprep.subr.mxu0 0.0
    %263 = vmatpush1.xpose.msra.mxu0 0.0
    %264 = vmatprep.subr.mxu0 0.0
    %265 = vmatpush1.xpose.msra.mxu0 0.0
    %266 = vmatprep.subr.mxu0 0.0
    %267 = vmatpush1.xpose.msra.mxu0 0.0
    %268 = vmatprep.subr.mxu0 0.0
    %269 = vmatpush1.xpose.msra.mxu0 0.0
    %270 = vmatprep.subr.mxu0 0.0
    %271 = vmatpush1.xpose.msra.mxu0 0.0
    %272 = vmatprep.subr.mxu0 0.0
    %273 = vmatpush1.xpose.msra.mxu0 0.0
    %274 = vmatprep.mubr.f32.mxu0 0.0
    %275 = vmatmul.mubr.f32.gmra.mrb[0].mxu0 %v202
    %v276 = vpop.f32.mrb[0].mxu0
    %v277 = vadd.f32 0.0, %v276
    %v278 = vpop.f32.mrb[0].mxu0
    %279 = vmatprep.mubr.f32.mxu0 0.0
    %280 = vmatmul.mubr.f32.gmra.mrb[0].mxu0 %v204
    %v281 = vpop.f32.mrb[0].mxu0
    %v282 = vadd.f32 0.0, %v281
    %v283 = vpop.f32.mrb[0].mxu0
    %284 = vdwg.mxu0
    %v285 = vmul.f32 %v277, 0.35355338
    %v286 = vmul.f32 %v282, 0.35355338
    %v287 = vadd.f32 %v285, %v62
    %v288 = vadd.f32 %v286, %v63
    %vm289 = vcmask 130048
    %v290 = vsel %vm289, %v287, -inf
    %291 = vmax.xlane.f32.xlu0 %v290
    %v292 = vpop.xlane.xlu0 %291
    %v293 = vsel %vm289, %v288, -inf
    %294 = vmax.xlane.f32.xlu0 %v293
    %v295 = vpop.xlane.xlu0 %294
    %v296 = vsub.f32 %v287, %v292
    %v297 = vsub.f32 %v288, %v295
    %v298 = vmul.f32 %v296, 1.442695
    %v299 = vpow.pop %v298
    %v300 = vmul.f32 %v297, 1.442695
    %v301 = vpow.pop %v300
    %v302 = vsel %vm289, %v299, 0.0
    %303 = vadd.xlane.f32.xlu0 %v302
    %v304 = vpop.xlane.xlu0 %303
    %v305 = vsel %vm289, %v301, 0.0
    %306 = vadd.xlane.f32.xlu0 %v305
    %v307 = vpop.xlane.xlu0 %306
    %v308 = vrcp.pop %v304
    %v309 = vmul.f32 %v299, %v308
    %v310 = vrcp.pop %v307
    %v311 = vmul.f32 %v301, %v310
    %314 = vrot.lane.b32.xlu0 %v309, 120
    %v315 = vpop.permute.xlu0 %314
    %316 = vrot.lane.b32.xlu0 %v311, 120
    %v317 = vpop.permute.xlu0 %316
    %v320 = vadd.f32 %v309, %v315
    %v321 = vadd.f32 %v311, %v317
    %322 = vrot.lane.b32.xlu0 %v187, 64
    %v323 = vpop.permute.xlu0 %322
    %324 = vrot.lane.b32.xlu0 %v192, 64
    %v325 = vpop.permute.xlu0 %324
    %v328 = vsel %vm289, %v309, 0
    %v330 = vsel %vm289, %v311, 0
    %332 = vmatprep.subr.mxu0 0.0
    %333 = vmatpush1.msra.mxu0 %v323
    %334 = vmatprep.subr.mxu0 0.0
    %335 = vmatpush1.msra.mxu0 %v325
    %336 = vmatprep.subr.mxu0 0.0
    %337 = vmatpush1.msra.mxu0 0.0
    %338 = vmatprep.subr.mxu0 0.0
    %339 = vmatpush1.msra.mxu0 0.0
    %340 = vmatprep.subr.mxu0 0.0
    %341 = vmatpush1.msra.mxu0 0.0
    %342 = vmatprep.subr.mxu0 0.0
    %343 = vmatpush1.msra.mxu0 0.0
    %344 = vmatprep.subr.mxu0 0.0
    %345 = vmatpush1.msra.mxu0 0.0
    %346 = vmatprep.subr.mxu0 0.0
    %347 = vmatpush1.msra.mxu0 0.0
    %348 = vmatprep.subr.mxu0 0.0
    %349 = vmatpush1.msra.mxu0 0.0
    %350 = vmatprep.subr.mxu0 0.0
    %351 = vmatpush1.msra.mxu0 0.0
    %352 = vmatprep.subr.mxu0 0.0
    %353 = vmatpush1.msra.mxu0 0.0
    %354 = vmatprep.subr.mxu0 0.0
    %355 = vmatpush1.msra.mxu0 0.0
    %356 = vmatprep.subr.mxu0 0.0
    %357 = vmatpush1.msra.mxu0 0.0
    %358 = vmatprep.subr.mxu0 0.0
    %359 = vmatpush1.msra.mxu0 0.0
    %360 = vmatprep.subr.mxu0 0.0
    %361 = vmatpush1.msra.mxu0 0.0
    %362 = vmatprep.subr.mxu0 0.0
    %363 = vmatpush1.msra.mxu0 0.0
    %364 = vmatprep.subr.mxu0 0.0
    %365 = vmatpush1.msra.mxu0 0.0
    %366 = vmatprep.subr.mxu0 0.0
    %367 = vmatpush1.msra.mxu0 0.0
    %368 = vmatprep.subr.mxu0 0.0
    %369 = vmatpush1.msra.mxu0 0.0
    %370 = vmatprep.subr.mxu0 0.0
    %371 = vmatpush1.msra.mxu0 0.0
    %372 = vmatprep.subr.mxu0 0.0
    %373 = vmatpush1.msra.mxu0 0.0
    %374 = vmatprep.subr.mxu0 0.0
    %375 = vmatpush1.msra.mxu0 0.0
    %376 = vmatprep.subr.mxu0 0.0
    %377 = vmatpush1.msra.mxu0 0.0
    %378 = vmatprep.subr.mxu0 0.0
    %379 = vmatpush1.msra.mxu0 0.0
    %380 = vmatprep.subr.mxu0 0.0
    %381 = vmatpush1.msra.mxu0 0.0
    %382 = vmatprep.subr.mxu0 0.0
    %383 = vmatpush1.msra.mxu0 0.0
    %384 = vmatprep.subr.mxu0 0.0
    %385 = vmatpush1.msra.mxu0 0.0
    %386 = vmatprep.subr.mxu0 0.0
    %387 = vmatpush1.msra.mxu0 0.0
    %388 = vmatprep.subr.mxu0 0.0
    %389 = vmatpush1.msra.mxu0 0.0
    %390 = vmatprep.subr.mxu0 0.0
    %391 = vmatpush1.msra.mxu0 0.0
    %392 = vmatprep.subr.mxu0 0.0
    %393 = vmatpush1.msra.mxu0 0.0
    %394 = vmatprep.subr.mxu0 0.0
    %395 = vmatpush1.msra.mxu0 0.0
    %396 = vmatprep.mubr.f32.mxu0 0.0
    %397 = vmatmul.mubr.f32.gmra.mrb[0].mxu0 %v328
    %v398 = vpop.f32.mrb[0].mxu0
    %v399 = vadd.f32 0.0, %v398
    %v400 = vpop.f32.mrb[0].mxu0
    %401 = vmatprep.mubr.f32.mxu0 0.0
    %402 = vmatmul.mubr.f32.gmra.mrb[0].mxu0 %v330
    %v403 = vpop.f32.mrb[0].mxu0
    %v404 = vadd.f32 0.0, %v403
    %v405 = vpop.f32.mrb[0].mxu0
    %406 = vdwg.mxu0
    %407 = vrot.lane.b32.xlu0 %v187, 120
    %v408 = vpop.permute.xlu0 %407
    %409 = vrot.lane.b32.xlu0 %v192, 120
    %v410 = vpop.permute.xlu0 %409
    %411 = vrot.lane.b32.xlu0 %v187, 88
    %v412 = vpop.permute.xlu0 %411
    %413 = vrot.lane.b32.xlu0 %v192, 88
    %v414 = vpop.permute.xlu0 %413
    %v415 = vsel %vm201, %v408, 0
    %v417 = vsel %vm201, %v410, 0
    %v419 = vsel %vm201, %v412, 0
    %v421 = vsel %vm201, %v414, 0
    %423 = vmatprep.subr.mxu0 0.0
    %424 = vmatpush1.xpose.msra.mxu0 %v419
    %425 = vmatprep.subr.mxu0 0.0
    %426 = vmatpush1.xpose.msra.mxu0 %v421
    %427 = vmatprep.subr.mxu0 0.0
    %428 = vmatpush1.xpose.msra.mxu0 0.0
    %429 = vmatprep.subr.mxu0 0.0
    %430 = vmatpush1.xpose.msra.mxu0 0.0
    %431 = vmatprep.subr.mxu0 0.0
    %432 = vmatpush1.xpose.msra.mxu0 0.0
    %433 = vmatprep.subr.mxu0 0.0
    %434 = vmatpush1.xpose.msra.mxu0 0.0
    %435 = vmatprep.subr.mxu0 0.0
    %436 = vmatpush1.xpose.msra.mxu0 0.0
    %437 = vmatprep.subr.mxu0 0.0
    %438 = vmatpush1.xpose.msra.mxu0 0.0
    %439 = vmatprep.subr.mxu0 0.0
    %440 = vmatpush1.xpose.msra.mxu0 0.0
    %441 = vmatprep.subr.mxu0 0.0
    %442 = vmatpush1.xpose.msra.mxu0 0.0
    %443 = vmatprep.subr.mxu0 0.0
    %444 = vmatpush1.xpose.msra.mxu0 0.0
    %445 = vmatprep.subr.mxu0 0.0
    %446 = vmatpush1.xpose.msra.mxu0 0.0
    %447 = vmatprep.subr.mxu0 0.0
    %448 = vmatpush1.xpose.msra.mxu0 0.0
    %449 = vmatprep.subr.mxu0 0.0
    %450 = vmatpush1.xpose.msra.mxu0 0.0
    %451 = vmatprep.subr.mxu0 0.0
    %452 = vmatpush1.xpose.msra.mxu0 0.0
    %453 = vmatprep.subr.mxu0 0.0
    %454 = vmatpush1.xpose.msra.mxu0 0.0
    %455 = vmatprep.subr.mxu0 0.0
    %456 = vmatpush1.xpose.msra.mxu0 0.0
    %457 = vmatprep.subr.mxu0 0.0
    %458 = vmatpush1.xpose.msra.mxu0 0.0
    %459 = vmatprep.subr.mxu0 0.0
    %460 = vmatpush1.xpose.msra.mxu0 0.0
    %461 = vmatprep.subr.mxu0 0.0
    %462 = vmatpush1.xpose.msra.mxu0 0.0
    %463 = vmatprep.subr.mxu0 0.0
    %464 = vmatpush1.xpose.msra.mxu0 0.0
    %465 = vmatprep.subr.mxu0 0.0
    %466 = vmatpush1.xpose.msra.mxu0 0.0
    %467 = vmatprep.subr.mxu0 0.0
    %468 = vmatpush1.xpose.msra.mxu0 0.0
    %469 = vmatprep.subr.mxu0 0.0
    %470 = vmatpush1.xpose.msra.mxu0 0.0
    %471 = vmatprep.subr.mxu0 0.0
    %472 = vmatpush1.xpose.msra.mxu0 0.0
    %473 = vmatprep.subr.mxu0 0.0
    %474 = vmatpush1.xpose.msra.mxu0 0.0
    %475 = vmatprep.subr.mxu0 0.0
    %476 = vmatpush1.xpose.msra.mxu0 0.0
    %477 = vmatprep.subr.mxu0 0.0
    %478 = vmatpush1.xpose.msra.mxu0 0.0
    %479 = vmatprep.subr.mxu0 0.0
    %480 = vmatpush1.xpose.msra.mxu0 0.0
    %481 = vmatprep.subr.mxu0 0.0
    %482 = vmatpush1.xpose.msra.mxu0 0.0
    %483 = vmatprep.subr.mxu0 0.0
    %484 = vmatpush1.xpose.msra.mxu0 0.0
    %485 = vmatprep.subr.mxu0 0.0
    %486 = vmatpush1.xpose.msra.mxu0 0.0
    %487 = vmatprep.mubr.f32.mxu0 0.0
    %488 = vmatmul.mubr.f32.gmra.mrb[0].mxu0 %v415
    %v489 = vpop.f32.mrb[0].mxu0
    %v490 = vadd.f32 0.0, %v489
    %v491 = vpop.f32.mrb[0].mxu0
    %492 = vmatprep.mubr.f32.mxu0 0.0
    %493 = vmatmul.mubr.f32.gmra.mrb[0].mxu0 %v417
    %v494 = vpop.f32.mrb[0].mxu0
    %v495 = vadd.f32 0.0, %v494
    %v496 = vpop.f32.mrb[0].mxu0
    %497 = vdwg.mxu0
    %v498 = vmul.f32 %v490, 0.35355338
    %v499 = vmul.f32 %v495, 0.35355338
    %v500 = vadd.f32 %v498, %v62
    %v501 = vadd.f32 %v499, %v63
    %v502 = vsel %vm289, %v500, -inf
    %503 = vmax.xlane.f32.xlu0 %v502
    %v504 = vpop.xlane.xlu0 %503
    %v505 = vsel %vm289, %v501, -inf
    %506 = vmax.xlane.f32.xlu0 %v505
    %v507 = vpop.xlane.xlu0 %506
    %v508 = vsub.f32 %v500, %v504
    %v509 = vsub.f32 %v501, %v507
    %v510 = vmul.f32 %v508, 1.442695
    %v511 = vpow.pop %v510
    %v512 = vmul.f32 %v509, 1.442695
    %v513 = vpow.pop %v512
    %v514 = vsel %vm289, %v511, 0.0
    %515 = vadd.xlane.f32.xlu0 %v514
    %v516 = vpop.xlane.xlu0 %515
    %v517 = vsel %vm289, %v513, 0.0
    %518 = vadd.xlane.f32.xlu0 %v517
    %v519 = vpop.xlane.xlu0 %518
    %v520 = vrcp.pop %v516
    %v521 = vmul.f32 %v511, %v520
    %v522 = vrcp.pop %v519
    %v523 = vmul.f32 %v513, %v522
    %526 = vrot.lane.b32.xlu0 %v521, 120
    %v527 = vpop.permute.xlu0 %526
    %528 = vrot.lane.b32.xlu0 %v523, 120
    %v529 = vpop.permute.xlu0 %528
    %v532 = vadd.f32 %v521, %v527
    %v533 = vadd.f32 %v523, %v529
    %534 = vrot.lane.b32.xlu0 %v187, 56
    %v535 = vpop.permute.xlu0 %534
    %536 = vrot.lane.b32.xlu0 %v192, 56
    %v537 = vpop.permute.xlu0 %536
    %v540 = vsel %vm289, %v521, 0
    %v542 = vsel %vm289, %v523, 0
    %544 = vmatprep.subr.mxu0 0.0
    %545 = vmatpush1.msra.mxu0 %v535
    %546 = vmatprep.subr.mxu0 0.0
    %547 = vmatpush1.msra.mxu0 %v537
    %548 = vmatprep.subr.mxu0 0.0
    %549 = vmatpush1.msra.mxu0 0.0
    %550 = vmatprep.subr.mxu0 0.0
    %551 = vmatpush1.msra.mxu0 0.0
    %552 = vmatprep.subr.mxu0 0.0
    %553 = vmatpush1.msra.mxu0 0.0
    %554 = vmatprep.subr.mxu0 0.0
    %555 = vmatpush1.msra.mxu0 0.0
    %556 = vmatprep.subr.mxu0 0.0
    %557 = vmatpush1.msra.mxu0 0.0
    %558 = vmatprep.subr.mxu0 0.0
    %559 = vmatpush1.msra.mxu0 0.0
    %560 = vmatprep.subr.mxu0 0.0
    %561 = vmatpush1.msra.mxu0 0.0
    %562 = vmatprep.subr.mxu0 0.0
    %563 = vmatpush1.msra.mxu0 0.0
    %564 = vmatprep.subr.mxu0 0.0
    %565 = vmatpush1.msra.mxu0 0.0
    %566 = vmatprep.subr.mxu0 0.0
    %567 = vmatpush1.msra.mxu0 0.0
    %568 = vmatprep.subr.mxu0 0.0
    %569 = vmatpush1.msra.mxu0 0.0
    %570 = vmatprep.subr.mxu0 0.0
    %571 = vmatpush1.msra.mxu0 0.0
    %572 = vmatprep.subr.mxu0 0.0
    %573 = vmatpush1.msra.mxu0 0.0
    %574 = vmatprep.subr.mxu0 0.0
    %575 = vmatpush1.msra.mxu0 0.0
    %576 = vmatprep.subr.mxu0 0.0
    %577 = vmatpush1.msra.mxu0 0.0
    %578 = vmatprep.subr.mxu0 0.0
    %579 = vmatpush1.msra.mxu0 0.0
    %580 = vmatprep.subr.mxu0 0.0
    %581 = vmatpush1.msra.mxu0 0.0
    %582 = vmatprep.subr.mxu0 0.0
    %583 = vmatpush1.msra.mxu0 0.0
    %584 = vmatprep.subr.mxu0 0.0
    %585 = vmatpush1.msra.mxu0 0.0
    %586 = vmatprep.subr.mxu0 0.0
    %587 = vmatpush1.msra.mxu0 0.0
    %588 = vmatprep.subr.mxu0 0.0
    %589 = vmatpush1.msra.mxu0 0.0
    %590 = vmatprep.subr.mxu0 0.0
    %591 = vmatpush1.msra.mxu0 0.0
    %592 = vmatprep.subr.mxu0 0.0
    %593 = vmatpush1.msra.mxu0 0.0
    %594 = vmatprep.subr.mxu0 0.0
    %595 = vmatpush1.msra.mxu0 0.0
    %596 = vmatprep.subr.mxu0 0.0
    %597 = vmatpush1.msra.mxu0 0.0
    %598 = vmatprep.subr.mxu0 0.0
    %599 = vmatpush1.msra.mxu0 0.0
    %600 = vmatprep.subr.mxu0 0.0
    %601 = vmatpush1.msra.mxu0 0.0
    %602 = vmatprep.subr.mxu0 0.0
    %603 = vmatpush1.msra.mxu0 0.0
    %604 = vmatprep.subr.mxu0 0.0
    %605 = vmatpush1.msra.mxu0 0.0
    %606 = vmatprep.subr.mxu0 0.0
    %607 = vmatpush1.msra.mxu0 0.0
    %608 = vmatprep.mubr.f32.mxu0 0.0
    %609 = vmatmul.mubr.f32.gmra.mrb[0].mxu0 %v540
    %v610 = vpop.f32.mrb[0].mxu0
    %v611 = vadd.f32 0.0, %v610
    %v612 = vpop.f32.mrb[0].mxu0
    %613 = vmatprep.mubr.f32.mxu0 0.0
    %614 = vmatmul.mubr.f32.gmra.mrb[0].mxu0 %v542
    %v615 = vpop.f32.mrb[0].mxu0
    %v616 = vadd.f32 0.0, %v615
    %v617 = vpop.f32.mrb[0].mxu0
    %618 = vdwg.mxu0
    %619 = vrot.lane.b32.xlu0 %v187, 112
    %v620 = vpop.permute.xlu0 %619
    %621 = vrot.lane.b32.xlu0 %v192, 112
    %v622 = vpop.permute.xlu0 %621
    %623 = vrot.lane.b32.xlu0 %v187, 80
    %v624 = vpop.permute.xlu0 %623
    %625 = vrot.lane.b32.xlu0 %v192, 80
    %v626 = vpop.permute.xlu0 %625
    %v627 = vsel %vm201, %v620, 0
    %v629 = vsel %vm201, %v622, 0
    %v631 = vsel %vm201, %v624, 0
    %v633 = vsel %vm201, %v626, 0
    %635 = vmatprep.subr.mxu0 0.0
    %636 = vmatpush1.xpose.msra.mxu0 %v631
    %637 = vmatprep.subr.mxu0 0.0
    %638 = vmatpush1.xpose.msra.mxu0 %v633
    %639 = vmatprep.subr.mxu0 0.0
    %640 = vmatpush1.xpose.msra.mxu0 0.0
    %641 = vmatprep.subr.mxu0 0.0
    %642 = vmatpush1.xpose.msra.mxu0 0.0
    %643 = vmatprep.subr.mxu0 0.0
    %644 = vmatpush1.xpose.msra.mxu0 0.0
    %645 = vmatprep.subr.mxu0 0.0
    %646 = vmatpush1.xpose.msra.mxu0 0.0
    %647 = vmatprep.subr.mxu0 0.0
    %648 = vmatpush1.xpose.msra.mxu0 0.0
    %649 = vmatprep.subr.mxu0 0.0
    %650 = vmatpush1.xpose.msra.mxu0 0.0
    %651 = vmatprep.subr.mxu0 0.0
    %652 = vmatpush1.xpose.msra.mxu0 0.0
    %653 = vmatprep.subr.mxu0 0.0
    %654 = vmatpush1.xpose.msra.mxu0 0.0
    %655 = vmatprep.subr.mxu0 0.0
    %656 = vmatpush1.xpose.msra.mxu0 0.0
    %657 = vmatprep.subr.mxu0 0.0
    %658 = vmatpush1.xpose.msra.mxu0 0.0
    %659 = vmatprep.subr.mxu0 0.0
    %660 = vmatpush1.xpose.msra.mxu0 0.0
    %661 = vmatprep.subr.mxu0 0.0
    %662 = vmatpush1.xpose.msra.mxu0 0.0
    %663 = vmatprep.subr.mxu0 0.0
    %664 = vmatpush1.xpose.msra.mxu0 0.0
    %665 = vmatprep.subr.mxu0 0.0
    %666 = vmatpush1.xpose.msra.mxu0 0.0
    %667 = vmatprep.subr.mxu0 0.0
    %668 = vmatpush1.xpose.msra.mxu0 0.0
    %669 = vmatprep.subr.mxu0 0.0
    %670 = vmatpush1.xpose.msra.mxu0 0.0
    %671 = vmatprep.subr.mxu0 0.0
    %672 = vmatpush1.xpose.msra.mxu0 0.0
    %673 = vmatprep.subr.mxu0 0.0
    %674 = vmatpush1.xpose.msra.mxu0 0.0
    %675 = vmatprep.subr.mxu0 0.0
    %676 = vmatpush1.xpose.msra.mxu0 0.0
    %677 = vmatprep.subr.mxu0 0.0
    %678 = vmatpush1.xpose.msra.mxu0 0.0
    %679 = vmatprep.subr.mxu0 0.0
    %680 = vmatpush1.xpose.msra.mxu0 0.0
    %681 = vmatprep.subr.mxu0 0.0
    %682 = vmatpush1.xpose.msra.mxu0 0.0
    %683 = vmatprep.subr.mxu0 0.0
    %684 = vmatpush1.xpose.msra.mxu0 0.0
    %685 = vmatprep.subr.mxu0 0.0
    %686 = vmatpush1.xpose.msra.mxu0 0.0
    %687 = vmatprep.subr.mxu0 0.0
    %688 = vmatpush1.xpose.msra.mxu0 0.0
    %689 = vmatprep.subr.mxu0 0.0
    %690 = vmatpush1.xpose.msra.mxu0 0.0
    %691 = vmatprep.subr.mxu0 0.0
    %692 = vmatpush1.xpose.msra.mxu0 0.0
    %693 = vmatprep.subr.mxu0 0.0
    %694 = vmatpush1.xpose.msra.mxu0 0.0
    %695 = vmatprep.subr.mxu0 0.0
    %696 = vmatpush1.xpose.msra.mxu0 0.0
    %697 = vmatprep.subr.mxu0 0.0
    %698 = vmatpush1.xpose.msra.mxu0 0.0
    %699 = vmatprep.mubr.f32.mxu0 0.0
    %700 = vmatmul.mubr.f32.gmra.mrb[0].mxu0 %v627
    %v701 = vpop.f32.mrb[0].mxu0
    %v702 = vadd.f32 0.0, %v701
    %v703 = vpop.f32.mrb[0].mxu0
    %704 = vmatprep.mubr.f32.mxu0 0.0
    %705 = vmatmul.mubr.f32.gmra.mrb[0].mxu0 %v629
    %v706 = vpop.f32.mrb[0].mxu0
    %v707 = vadd.f32 0.0, %v706
    %v708 = vpop.f32.mrb[0].mxu0
    %709 = vdwg.mxu0
    %v710 = vmul.f32 %v702, 0.35355338
    %v711 = vmul.f32 %v707, 0.35355338
    %v712 = vadd.f32 %v710, %v62
    %v713 = vadd.f32 %v711, %v63
    %v714 = vsel %vm289, %v712, -inf
    %715 = vmax.xlane.f32.xlu0 %v714
    %v716 = vpop.xlane.xlu0 %715
    %v717 = vsel %vm289, %v713, -inf
    %718 = vmax.xlane.f32.xlu0 %v717
    %v719 = vpop.xlane.xlu0 %718
    %v720 = vsub.f32 %v712, %v716
    %v721 = vsub.f32 %v713, %v719
    %v722 = vmul.f32 %v720, 1.442695
    %v723 = vpow.pop %v722
    %v724 = vmul.f32 %v721, 1.442695
    %v725 = vpow.pop %v724
    %v726 = vsel %vm289, %v723, 0.0
    %727 = vadd.xlane.f32.xlu0 %v726
    %v728 = vpop.xlane.xlu0 %727
    %v729 = vsel %vm289, %v725, 0.0
    %730 = vadd.xlane.f32.xlu0 %v729
    %v731 = vpop.xlane.xlu0 %730
    %v732 = vrcp.pop %v728
    %v733 = vmul.f32 %v723, %v732
    %v734 = vrcp.pop %v731
    %v735 = vmul.f32 %v725, %v734
    %738 = vrot.lane.b32.xlu0 %v733, 120
    %v739 = vpop.permute.xlu0 %738
    %740 = vrot.lane.b32.xlu0 %v735, 120
    %v741 = vpop.permute.xlu0 %740
    %v744 = vadd.f32 %v733, %v739
    %v745 = vadd.f32 %v735, %v741
    %746 = vrot.lane.b32.xlu0 %v187, 48
    %v747 = vpop.permute.xlu0 %746
    %748 = vrot.lane.b32.xlu0 %v192, 48
    %v749 = vpop.permute.xlu0 %748
    %v752 = vsel %vm289, %v733, 0
    %v754 = vsel %vm289, %v735, 0
    %756 = vmatprep.subr.mxu0 0.0
    %757 = vmatpush1.msra.mxu0 %v747
    %758 = vmatprep.subr.mxu0 0.0
    %759 = vmatpush1.msra.mxu0 %v749
    %760 = vmatprep.subr.mxu0 0.0
    %761 = vmatpush1.msra.mxu0 0.0
    %762 = vmatprep.subr.mxu0 0.0
    %763 = vmatpush1.msra.mxu0 0.0
    %764 = vmatprep.subr.mxu0 0.0
    %765 = vmatpush1.msra.mxu0 0.0
    %766 = vmatprep.subr.mxu0 0.0
    %767 = vmatpush1.msra.mxu0 0.0
    %768 = vmatprep.subr.mxu0 0.0
    %769 = vmatpush1.msra.mxu0 0.0
    %770 = vmatprep.subr.mxu0 0.0
    %771 = vmatpush1.msra.mxu0 0.0
    %772 = vmatprep.subr.mxu0 0.0
    %773 = vmatpush1.msra.mxu0 0.0
    %774 = vmatprep.subr.mxu0 0.0
    %775 = vmatpush1.msra.mxu0 0.0
    %776 = vmatprep.subr.mxu0 0.0
    %777 = vmatpush1.msra.mxu0 0.0
    %778 = vmatprep.subr.mxu0 0.0
    %779 = vmatpush1.msra.mxu0 0.0
    %780 = vmatprep.subr.mxu0 0.0
    %781 = vmatpush1.msra.mxu0 0.0
    %782 = vmatprep.subr.mxu0 0.0
    %783 = vmatpush1.msra.mxu0 0.0
    %784 = vmatprep.subr.mxu0 0.0
    %785 = vmatpush1.msra.mxu0 0.0
    %786 = vmatprep.subr.mxu0 0.0
    %787 = vmatpush1.msra.mxu0 0.0
    %788 = vmatprep.subr.mxu0 0.0
    %789 = vmatpush1.msra.mxu0 0.0
    %790 = vmatprep.subr.mxu0 0.0
    %791 = vmatpush1.msra.mxu0 0.0
    %792 = vmatprep.subr.mxu0 0.0
    %793 = vmatpush1.msra.mxu0 0.0
    %794 = vmatprep.subr.mxu0 0.0
    %795 = vmatpush1.msra.mxu0 0.0
    %796 = vmatprep.subr.mxu0 0.0
    %797 = vmatpush1.msra.mxu0 0.0
    %798 = vmatprep.subr.mxu0 0.0
    %799 = vmatpush1.msra.mxu0 0.0
    %800 = vmatprep.subr.mxu0 0.0
    %801 = vmatpush1.msra.mxu0 0.0
    %802 = vmatprep.subr.mxu0 0.0
    %803 = vmatpush1.msra.mxu0 0.0
    %804 = vmatprep.subr.mxu0 0.0
    %805 = vmatpush1.msra.mxu0 0.0
    %806 = vmatprep.subr.mxu0 0.0
    %807 = vmatpush1.msra.mxu0 0.0
    %808 = vmatprep.subr.mxu0 0.0
    %809 = vmatpush1.msra.mxu0 0.0
    %810 = vmatprep.subr.mxu0 0.0
    %811 = vmatpush1.msra.mxu0 0.0
    %812 = vmatprep.subr.mxu0 0.0
    %813 = vmatpush1.msra.mxu0 0.0
    %814 = vmatprep.subr.mxu0 0.0
    %815 = vmatpush1.msra.mxu0 0.0
    %816 = vmatprep.subr.mxu0 0.0
    %817 = vmatpush1.msra.mxu0 0.0
    %818 = vmatprep.subr.mxu0 0.0
    %819 = vmatpush1.msra.mxu0 0.0
    %820 = vmatprep.mubr.f32.mxu0 0.0
    %821 = vmatmul.mubr.f32.gmra.mrb[0].mxu0 %v752
    %v822 = vpop.f32.mrb[0].mxu0
    %v823 = vadd.f32 0.0, %v822
    %v824 = vpop.f32.mrb[0].mxu0
    %825 = vmatprep.mubr.f32.mxu0 0.0
    %826 = vmatmul.mubr.f32.gmra.mrb[0].mxu0 %v754
    %v827 = vpop.f32.mrb[0].mxu0
    %v828 = vadd.f32 0.0, %v827
    %v829 = vpop.f32.mrb[0].mxu0
    %830 = vdwg.mxu0
    %831 = vrot.lane.b32.xlu0 %v187, 104
    %v832 = vpop.permute.xlu0 %831
    %833 = vrot.lane.b32.xlu0 %v192, 104
    %v834 = vpop.permute.xlu0 %833
    %835 = vrot.lane.b32.xlu0 %v187, 72
    %v836 = vpop.permute.xlu0 %835
    %837 = vrot.lane.b32.xlu0 %v192, 72
    %v838 = vpop.permute.xlu0 %837
    %v839 = vsel %vm201, %v832, 0
    %v841 = vsel %vm201, %v834, 0
    %v843 = vsel %vm201, %v836, 0
    %v845 = vsel %vm201, %v838, 0
    %847 = vmatprep.subr.mxu0 0.0
    %848 = vmatpush1.xpose.msra.mxu0 %v843
    %849 = vmatprep.subr.mxu0 0.0
    %850 = vmatpush1.xpose.msra.mxu0 %v845
    %851 = vmatprep.subr.mxu0 0.0
    %852 = vmatpush1.xpose.msra.mxu0 0.0
    %853 = vmatprep.subr.mxu0 0.0
    %854 = vmatpush1.xpose.msra.mxu0 0.0
    %855 = vmatprep.subr.mxu0 0.0
    %856 = vmatpush1.xpose.msra.mxu0 0.0
    %857 = vmatprep.subr.mxu0 0.0
    %858 = vmatpush1.xpose.msra.mxu0 0.0
    %859 = vmatprep.subr.mxu0 0.0
    %860 = vmatpush1.xpose.msra.mxu0 0.0
    %861 = vmatprep.subr.mxu0 0.0
    %862 = vmatpush1.xpose.msra.mxu0 0.0
    %863 = vmatprep.subr.mxu0 0.0
    %864 = vmatpush1.xpose.msra.mxu0 0.0
    %865 = vmatprep.subr.mxu0 0.0
    %866 = vmatpush1.xpose.msra.mxu0 0.0
    %867 = vmatprep.subr.mxu0 0.0
    %868 = vmatpush1.xpose.msra.mxu0 0.0
    %869 = vmatprep.subr.mxu0 0.0
    %870 = vmatpush1.xpose.msra.mxu0 0.0
    %871 = vmatprep.subr.mxu0 0.0
    %872 = vmatpush1.xpose.msra.mxu0 0.0
    %873 = vmatprep.subr.mxu0 0.0
    %874 = vmatpush1.xpose.msra.mxu0 0.0
    %875 = vmatprep.subr.mxu0 0.0
    %876 = vmatpush1.xpose.msra.mxu0 0.0
    %877 = vmatprep.subr.mxu0 0.0
    %878 = vmatpush1.xpose.msra.mxu0 0.0
    %879 = vmatprep.subr.mxu0 0.0
    %880 = vmatpush1.xpose.msra.mxu0 0.0
    %881 = vmatprep.subr.mxu0 0.0
    %882 = vmatpush1.xpose.msra.mxu0 0.0
    %883 = vmatprep.subr.mxu0 0.0
    %884 = vmatpush1.xpose.msra.mxu0 0.0
    %885 = vmatprep.subr.mxu0 0.0
    %886 = vmatpush1.xpose.msra.mxu0 0.0
    %887 = vmatprep.subr.mxu0 0.0
    %888 = vmatpush1.xpose.msra.mxu0 0.0
    %889 = vmatprep.subr.mxu0 0.0
    %890 = vmatpush1.xpose.msra.mxu0 0.0
    %891 = vmatprep.subr.mxu0 0.0
    %892 = vmatpush1.xpose.msra.mxu0 0.0
    %893 = vmatprep.subr.mxu0 0.0
    %894 = vmatpush1.xpose.msra.mxu0 0.0
    %895 = vmatprep.subr.mxu0 0.0
    %896 = vmatpush1.xpose.msra.mxu0 0.0
    %897 = vmatprep.subr.mxu0 0.0
    %898 = vmatpush1.xpose.msra.mxu0 0.0
    %899 = vmatprep.subr.mxu0 0.0
    %900 = vmatpush1.xpose.msra.mxu0 0.0
    %901 = vmatprep.subr.mxu0 0.0
    %902 = vmatpush1.xpose.msra.mxu0 0.0
    %903 = vmatprep.subr.mxu0 0.0
    %904 = vmatpush1.xpose.msra.mxu0 0.0
    %905 = vmatprep.subr.mxu0 0.0
    %906 = vmatpush1.xpose.msra.mxu0 0.0
    %907 = vmatprep.subr.mxu0 0.0
    %908 = vmatpush1.xpose.msra.mxu0 0.0
    %909 = vmatprep.subr.mxu0 0.0
    %910 = vmatpush1.xpose.msra.mxu0 0.0
    %911 = vmatprep.mubr.f32.mxu0 0.0
    %912 = vmatmul.mubr.f32.gmra.mrb[0].mxu0 %v839
    %v913 = vpop.f32.mrb[0].mxu0
    %v914 = vadd.f32 0.0, %v913
    %v915 = vpop.f32.mrb[0].mxu0
    %916 = vmatprep.mubr.f32.mxu0 0.0
    %917 = vmatmul.mubr.f32.gmra.mrb[0].mxu0 %v841
    %v918 = vpop.f32.mrb[0].mxu0
    %v919 = vadd.f32 0.0, %v918
    %v920 = vpop.f32.mrb[0].mxu0
    %921 = vdwg.mxu0
    %v922 = vmul.f32 %v914, 0.35355338
    %v923 = vmul.f32 %v919, 0.35355338
    %v924 = vadd.f32 %v922, %v62
    %v925 = vadd.f32 %v923, %v63
    %v926 = vsel %vm289, %v924, -inf
    %927 = vmax.xlane.f32.xlu0 %v926
    %v928 = vpop.xlane.xlu0 %927
    %v929 = vsel %vm289, %v925, -inf
    %930 = vmax.xlane.f32.xlu0 %v929
    %v931 = vpop.xlane.xlu0 %930
    %v932 = vsub.f32 %v924, %v928
    %v933 = vsub.f32 %v925, %v931
    %v934 = vmul.f32 %v932, 1.442695
    %v935 = vpow.pop %v934
    %v936 = vmul.f32 %v933, 1.442695
    %v937 = vpow.pop %v936
    %v938 = vsel %vm289, %v935, 0.0
    %939 = vadd.xlane.f32.xlu0 %v938
    %v940 = vpop.xlane.xlu0 %939
    %v941 = vsel %vm289, %v937, 0.0
    %942 = vadd.xlane.f32.xlu0 %v941
    %v943 = vpop.xlane.xlu0 %942
    %v944 = vrcp.pop %v940
    %v945 = vmul.f32 %v935, %v944
    %v946 = vrcp.pop %v943
    %v947 = vmul.f32 %v937, %v946
    %950 = vrot.lane.b32.xlu0 %v945, 120
    %v951 = vpop.permute.xlu0 %950
    %952 = vrot.lane.b32.xlu0 %v947, 120
    %v953 = vpop.permute.xlu0 %952
    %v956 = vadd.f32 %v945, %v951
    %v957 = vadd.f32 %v947, %v953
    %958 = vrot.lane.b32.xlu0 %v187, 40
    %v959 = vpop.permute.xlu0 %958
    %960 = vrot.lane.b32.xlu0 %v192, 40
    %v961 = vpop.permute.xlu0 %960
    %v964 = vsel %vm289, %v945, 0
    %v966 = vsel %vm289, %v947, 0
    %968 = vmatprep.subr.mxu0 0.0
    %969 = vmatpush1.msra.mxu0 %v959
    %970 = vmatprep.subr.mxu0 0.0
    %971 = vmatpush1.msra.mxu0 %v961
    %972 = vmatprep.subr.mxu0 0.0
    %973 = vmatpush1.msra.mxu0 0.0
    %974 = vmatprep.subr.mxu0 0.0
    %975 = vmatpush1.msra.mxu0 0.0
    %976 = vmatprep.subr.mxu0 0.0
    %977 = vmatpush1.msra.mxu0 0.0
    %978 = vmatprep.subr.mxu0 0.0
    %979 = vmatpush1.msra.mxu0 0.0
    %980 = vmatprep.subr.mxu0 0.0
    %981 = vmatpush1.msra.mxu0 0.0
    %982 = vmatprep.subr.mxu0 0.0
    %983 = vmatpush1.msra.mxu0 0.0
    %984 = vmatprep.subr.mxu0 0.0
    %985 = vmatpush1.msra.mxu0 0.0
    %986 = vmatprep.subr.mxu0 0.0
    %987 = vmatpush1.msra.mxu0 0.0
    %988 = vmatprep.subr.mxu0 0.0
    %989 = vmatpush1.msra.mxu0 0.0
    %990 = vmatprep.subr.mxu0 0.0
    %991 = vmatpush1.msra.mxu0 0.0
    %992 = vmatprep.subr.mxu0 0.0
    %993 = vmatpush1.msra.mxu0 0.0
    %994 = vmatprep.subr.mxu0 0.0
    %995 = vmatpush1.msra.mxu0 0.0
    %996 = vmatprep.subr.mxu0 0.0
    %997 = vmatpush1.msra.mxu0 0.0
    %998 = vmatprep.subr.mxu0 0.0
    %999 = vmatpush1.msra.mxu0 0.0
    %1000 = vmatprep.subr.mxu0 0.0
    %1001 = vmatpush1.msra.mxu0 0.0
    %1002 = vmatprep.subr.mxu0 0.0
    %1003 = vmatpush1.msra.mxu0 0.0
    %1004 = vmatprep.subr.mxu0 0.0
    %1005 = vmatpush1.msra.mxu0 0.0
    %1006 = vmatprep.subr.mxu0 0.0
    %1007 = vmatpush1.msra.mxu0 0.0
    %1008 = vmatprep.subr.mxu0 0.0
    %1009 = vmatpush1.msra.mxu0 0.0
    %1010 = vmatprep.subr.mxu0 0.0
    %1011 = vmatpush1.msra.mxu0 0.0
    %1012 = vmatprep.subr.mxu0 0.0
    %1013 = vmatpush1.msra.mxu0 0.0
    %1014 = vmatprep.subr.mxu0 0.0
    %1015 = vmatpush1.msra.mxu0 0.0
    %1016 = vmatprep.subr.mxu0 0.0
    %1017 = vmatpush1.msra.mxu0 0.0
    %1018 = vmatprep.subr.mxu0 0.0
    %1019 = vmatpush1.msra.mxu0 0.0
    %1020 = vmatprep.subr.mxu0 0.0
    %1021 = vmatpush1.msra.mxu0 0.0
    %1022 = vmatprep.subr.mxu0 0.0
    %1023 = vmatpush1.msra.mxu0 0.0
    %1024 = vmatprep.subr.mxu0 0.0
    %1025 = vmatpush1.msra.mxu0 0.0
    %1026 = vmatprep.subr.mxu0 0.0
    %1027 = vmatpush1.msra.mxu0 0.0
    %1028 = vmatprep.subr.mxu0 0.0
    %1029 = vmatpush1.msra.mxu0 0.0
    %1030 = vmatprep.subr.mxu0 0.0
    %1031 = vmatpush1.msra.mxu0 0.0
    %1032 = vmatprep.mubr.f32.mxu0 0.0
    %1033 = vmatmul.mubr.f32.gmra.mrb[0].mxu0 %v964
    %v1034 = vpop.f32.mrb[0].mxu0
    %v1035 = vadd.f32 0.0, %v1034
    %v1036 = vpop.f32.mrb[0].mxu0
    %1037 = vmatprep.mubr.f32.mxu0 0.0
    %1038 = vmatmul.mubr.f32.gmra.mrb[0].mxu0 %v966
    %v1039 = vpop.f32.mrb[0].mxu0
    %v1040 = vadd.f32 0.0, %v1039
    %v1041 = vpop.f32.mrb[0].mxu0
    %1042 = vdwg.mxu0
    %1045 = vrot.lane.b32.xlu0 %v532, 8
    %v1046 = vpop.permute.xlu0 %1045
    %1047 = vrot.lane.b32.xlu0 %v533, 8
    %v1048 = vpop.permute.xlu0 %1047
    %1053 = vrot.lane.b32.xlu0 %v744, 16
    %v1054 = vpop.permute.xlu0 %1053
    %1055 = vrot.lane.b32.xlu0 %v745, 16
    %v1056 = vpop.permute.xlu0 %1055
    %1061 = vrot.lane.b32.xlu0 %v956, 24
    %v1062 = vpop.permute.xlu0 %1061
    %1063 = vrot.lane.b32.xlu0 %v957, 24
    %v1064 = vpop.permute.xlu0 %1063
    %v1067 = vsel %vm201, %v320, %v1046
    %v1068 = vsel %vm201, %v321, %v1048
    %v1069 = vsel %vm289, %v1067, %v1054
    %v1070 = vsel %vm289, %v1068, %v1056
    %vm1071 = vcmask 195584
    %v1072 = vsel %vm1071, %v1069, %v1062
    %v1073 = vsel %vm1071, %v1070, %v1064
    %1076 = vrot.lane.b32.xlu0 %v611, 8
    %v1077 = vpop.permute.xlu0 %1076
    %1078 = vrot.lane.b32.xlu0 %v616, 8
    %v1079 = vpop.permute.xlu0 %1078
    %1084 = vrot.lane.b32.xlu0 %v823, 16
    %v1085 = vpop.permute.xlu0 %1084
    %1086 = vrot.lane.b32.xlu0 %v828, 16
    %v1087 = vpop.permute.xlu0 %1086
    %1092 = vrot.lane.b32.xlu0 %v1035, 24
    %v1093 = vpop.permute.xlu0 %1092
    %1094 = vrot.lane.b32.xlu0 %v1040, 24
    %v1095 = vpop.permute.xlu0 %1094
    %v1098 = vsel %vm201, %v399, %v1077
    %v1099 = vsel %vm201, %v404, %v1079
    %v1100 = vsel %vm289, %v1098, %v1085
    %v1101 = vsel %vm289, %v1099, %v1087
    %v1102 = vsel %vm1071, %v1100, %v1093
    %v1103 = vsel %vm1071, %v1101, %v1095
    %v1104 = vld [vmem:[%s3] sm:$0xff]
    %v1105 = vld [vmem:[%s3 + $0x8] sm:$0xff]
    %v1106 = vld [vmem:[%s3 + $0x10] sm:$0xff]
    %v1107 = vld [vmem:[%s3 + $0x18] sm:$0xff]
    %v1108 = vld [vmem:[%s4] sm:$0x1]
    %v1110 = vlaneseq
    %v1111 = vshrl.u32 %v1110, 7
    %v1112 = vsub.s32 0, %v1111
    %v1113 = vrot.slane %v1108, %v1112
    %v1116 = vsel %vm66, %v1102, 0
    %v1119 = vsel %vm66, %v1103, 0
    %1121 = vmatprep.subr.mxu0 0.0
    %1122 = vmatpush1.msra.mxu0 %v1104
    %1123 = vmatprep.subr.mxu0 0.0
    %1124 = vmatpush1.msra.mxu0 %v1105
    %1125 = vmatprep.subr.mxu0 0.0
    %1126 = vmatpush1.msra.mxu0 %v1106
    %1127 = vmatprep.subr.mxu0 0.0
    %1128 = vmatpush1.msra.mxu0 %v1107
    %1129 = vmatprep.subr.mxu0 0.0
    %1130 = vmatpush1.msra.mxu0 0.0
    %1131 = vmatprep.subr.mxu0 0.0
    %1132 = vmatpush1.msra.mxu0 0.0
    %1133 = vmatprep.subr.mxu0 0.0
    %1134 = vmatpush1.msra.mxu0 0.0
    %1135 = vmatprep.subr.mxu0 0.0
    %1136 = vmatpush1.msra.mxu0 0.0
    %1137 = vmatprep.subr.mxu0 0.0
    %1138 = vmatpush1.msra.mxu0 0.0
    %1139 = vmatprep.subr.mxu0 0.0
    %1140 = vmatpush1.msra.mxu0 0.0
    %1141 = vmatprep.subr.mxu0 0.0
    %1142 = vmatpush1.msra.mxu0 0.0
    %1143 = vmatprep.subr.mxu0 0.0
    %1144 = vmatpush1.msra.mxu0 0.0
    %1145 = vmatprep.subr.mxu0 0.0
    %1146 = vmatpush1.msra.mxu0 0.0
    %1147 = vmatprep.subr.mxu0 0.0
    %1148 = vmatpush1.msra.mxu0 0.0
    %1149 = vmatprep.subr.mxu0 0.0
    %1150 = vmatpush1.msra.mxu0 0.0
    %1151 = vmatprep.subr.mxu0 0.0
    %1152 = vmatpush1.msra.mxu0 0.0
    %1153 = vmatprep.subr.mxu0 0.0
    %1154 = vmatpush1.msra.mxu0 0.0
    %1155 = vmatprep.subr.mxu0 0.0
    %1156 = vmatpush1.msra.mxu0 0.0
    %1157 = vmatprep.subr.mxu0 0.0
    %1158 = vmatpush1.msra.mxu0 0.0
    %1159 = vmatprep.subr.mxu0 0.0
    %1160 = vmatpush1.msra.mxu0 0.0
    %1161 = vmatprep.subr.mxu0 0.0
    %1162 = vmatpush1.msra.mxu0 0.0
    %1163 = vmatprep.subr.mxu0 0.0
    %1164 = vmatpush1.msra.mxu0 0.0
    %1165 = vmatprep.subr.mxu0 0.0
    %1166 = vmatpush1.msra.mxu0 0.0
    %1167 = vmatprep.subr.mxu0 0.0
    %1168 = vmatpush1.msra.mxu0 0.0
    %1169 = vmatprep.subr.mxu0 0.0
    %1170 = vmatpush1.msra.mxu0 0.0
    %1171 = vmatprep.subr.mxu0 0.0
    %1172 = vmatpush1.msra.mxu0 0.0
    %1173 = vmatprep.subr.mxu0 0.0
    %1174 = vmatpush1.msra.mxu0 0.0
    %1175 = vmatprep.subr.mxu0 0.0
    %1176 = vmatpush1.msra.mxu0 0.0
    %1177 = vmatprep.subr.mxu0 0.0
    %1178 = vmatpush1.msra.mxu0 0.0
    %1179 = vmatprep.subr.mxu0 0.0
    %1180 = vmatpush1.msra.mxu0 0.0
    %1181 = vmatprep.subr.mxu0 0.0
    %1182 = vmatpush1.msra.mxu0 0.0
    %1183 = vmatprep.subr.mxu0 0.0
    %1184 = vmatpush1.msra.mxu0 0.0
    %1185 = vmatprep.mubr.f32.mxu0 0.0
    %1186 = vmatmul.mubr.f32.gmra.mrb[0].mxu0 %v1116
    %v1187 = vpop.f32.mrb[0].mxu0
    %v1188 = vadd.f32 %v1113, %v1187
    %v1189 = vpop.f32.mrb[0].mxu0
    %1190 = vmatprep.mubr.f32.mxu0 0.0
    %1191 = vmatmul.mubr.f32.gmra.mrb[0].mxu0 %v1119
    %v1192 = vpop.f32.mrb[0].mxu0
    %v1193 = vadd.f32 %v1113, %v1192
    %v1194 = vpop.f32.mrb[0].mxu0
    %1195 = vdwg.mxu0
    %v1196 = vadd.f32 %v60, %v1188
    %v1197 = vadd.f32 %v61, %v1193
    %v1198 = vld [vmem:[%s7] sm:$0x1]
    %v1199 = vld [vmem:[%s8] sm:$0x1]
    %v1200 = vsel %vm66, %v1196, 0.0
    %1201 = vadd.xlane.f32.xlu0 %v1200
    %v1202 = vpop.xlane.xlu0 %1201
    %v1203 = vsel %vm66, %v1197, 0.0
    %1204 = vadd.xlane.f32.xlu0 %v1203
    %v1205 = vpop.xlane.xlu0 %1204
    %v1206 = vmul.f32 %v1202, %v73
    %v1207 = vmul.f32 %v1205, %v73
    %v1208 = vsub.f32 %v1196, %v1206
    %v1209 = vsub.f32 %v1197, %v1207
    %v1210 = vmul.f32 %v1208, %v1208
    %v1211 = vmul.f32 %v1209, %v1209
    %v1212 = vsel %vm66, %v1210, 0.0
    %1213 = vadd.xlane.f32.xlu0 %v1212
    %v1214 = vpop.xlane.xlu0 %1213
    %v1215 = vsel %vm66, %v1211, 0.0
    %1216 = vadd.xlane.f32.xlu0 %v1215
    %v1217 = vpop.xlane.xlu0 %1216
    %v1218 = vmul.f32 %v1214, %v73
    %v1219 = vmul.f32 %v1217, %v73
    %v1220 = vadd.f32 %v1218, 1e-05
    %v1221 = vadd.f32 %v1219, 1e-05
    %v1222 = vrsqrt.pop %v1220
    %v1223 = vrsqrt.pop %v1221
    %v1224 = vmul.f32 %v1208, %v1222
    %v1225 = vmul.f32 %v1209, %v1223
    %v1227 = vlaneseq
    %v1228 = vshrl.u32 %v1227, 7
    %v1229 = vsub.s32 0, %v1228
    %v1230 = vrot.slane %v1198, %v1229
    %v1232 = vmul.f32 %v1224, %v1230
    %v1233 = vmul.f32 %v1225, %v1230
    %v1235 = vlaneseq
    %v1236 = vshrl.u32 %v1235, 7
    %v1237 = vsub.s32 0, %v1236
    %v1238 = vrot.slane %v1199, %v1237
    %v1240 = vadd.f32 %v1232, %v1238
    %v1241 = vadd.f32 %v1233, %v1238
    %v1242 = vld [vmem:[%s9] sm:$0xff]
    %v1243 = vld [vmem:[%s9 + $0x8] sm:$0xff]
    %v1244 = vld [vmem:[%s9 + $0x10] sm:$0xff]
    %v1245 = vld [vmem:[%s9 + $0x18] sm:$0xff]
    %v1246 = vld [vmem:[%s10] sm:$0x1]
    %v1248 = vlaneseq
    %v1249 = vshrl.u32 %v1248, 7
    %v1250 = vsub.s32 0, %v1249
    %v1251 = vrot.slane %v1246, %v1250
    %v1254 = vsel %vm66, %v1240, 0
    %v1257 = vsel %vm66, %v1241, 0
    %1259 = vmatprep.subr.mxu0 0.0
    %1260 = vmatpush1.msra.mxu0 %v1242
    %1261 = vmatprep.subr.mxu0 0.0
    %1262 = vmatpush1.msra.mxu0 %v1243
    %1263 = vmatprep.subr.mxu0 0.0
    %1264 = vmatpush1.msra.mxu0 %v1244
    %1265 = vmatprep.subr.mxu0 0.0
    %1266 = vmatpush1.msra.mxu0 %v1245
    %1267 = vmatprep.subr.mxu0 0.0
    %1268 = vmatpush1.msra.mxu0 0.0
    %1269 = vmatprep.subr.mxu0 0.0
    %1270 = vmatpush1.msra.mxu0 0.0
    %1271 = vmatprep.subr.mxu0 0.0
    %1272 = vmatpush1.msra.mxu0 0.0
    %1273 = vmatprep.subr.mxu0 0.0
    %1274 = vmatpush1.msra.mxu0 0.0
    %1275 = vmatprep.subr.mxu0 0.0
    %1276 = vmatpush1.msra.mxu0 0.0
    %1277 = vmatprep.subr.mxu0 0.0
    %1278 = vmatpush1.msra.mxu0 0.0
    %1279 = vmatprep.subr.mxu0 0.0
    %1280 = vmatpush1.msra.mxu0 0.0
    %1281 = vmatprep.subr.mxu0 0.0
    %1282 = vmatpush1.msra.mxu0 0.0
    %1283 = vmatprep.subr.mxu0 0.0
    %1284 = vmatpush1.msra.mxu0 0.0
    %1285 = vmatprep.subr.mxu0 0.0
    %1286 = vmatpush1.msra.mxu0 0.0
    %1287 = vmatprep.subr.mxu0 0.0
    %1288 = vmatpush1.msra.mxu0 0.0
    %1289 = vmatprep.subr.mxu0 0.0
    %1290 = vmatpush1.msra.mxu0 0.0
    %1291 = vmatprep.subr.mxu0 0.0
    %1292 = vmatpush1.msra.mxu0 0.0
    %1293 = vmatprep.subr.mxu0 0.0
    %1294 = vmatpush1.msra.mxu0 0.0
    %1295 = vmatprep.subr.mxu0 0.0
    %1296 = vmatpush1.msra.mxu0 0.0
    %1297 = vmatprep.subr.mxu0 0.0
    %1298 = vmatpush1.msra.mxu0 0.0
    %1299 = vmatprep.subr.mxu0 0.0
    %1300 = vmatpush1.msra.mxu0 0.0
    %1301 = vmatprep.subr.mxu0 0.0
    %1302 = vmatpush1.msra.mxu0 0.0
    %1303 = vmatprep.subr.mxu0 0.0
    %1304 = vmatpush1.msra.mxu0 0.0
    %1305 = vmatprep.subr.mxu0 0.0
    %1306 = vmatpush1.msra.mxu0 0.0
    %1307 = vmatprep.subr.mxu0 0.0
    %1308 = vmatpush1.msra.mxu0 0.0
    %1309 = vmatprep.subr.mxu0 0.0
    %1310 = vmatpush1.msra.mxu0 0.0
    %1311 = vmatprep.subr.mxu0 0.0
    %1312 = vmatpush1.msra.mxu0 0.0
    %1313 = vmatprep.subr.mxu0 0.0
    %1314 = vmatpush1.msra.mxu0 0.0
    %1315 = vmatprep.subr.mxu0 0.0
    %1316 = vmatpush1.msra.mxu0 0.0
    %1317 = vmatprep.subr.mxu0 0.0
    %1318 = vmatpush1.msra.mxu0 0.0
    %1319 = vmatprep.subr.mxu0 0.0
    %1320 = vmatpush1.msra.mxu0 0.0
    %1321 = vmatprep.subr.mxu0 0.0
    %1322 = vmatpush1.msra.mxu0 0.0
    %1323 = vmatprep.mubr.f32.mxu0 0.0
    %1324 = vmatmul.mubr.f32.gmra.mrb[0].mxu0 %v1254
    %v1325 = vpop.f32.mrb[0].mxu0
    %v1326 = vadd.f32 %v1251, %v1325
    %v1327 = vpop.f32.mrb[0].mxu0
    %1328 = vmatprep.mubr.f32.mxu0 0.0
    %1329 = vmatmul.mubr.f32.gmra.mrb[0].mxu0 %v1257
    %v1330 = vpop.f32.mrb[0].mxu0
    %v1331 = vadd.f32 %v1251, %v1330
    %v1332 = vpop.f32.mrb[0].mxu0
    %1333 = vdwg.mxu0
    %v1334 = vmax.f32 %v1326, 0.0
    %v1335 = vmax.f32 %v1331, 0.0
    %v1336 = vld [vmem:[%s11] sm:$0xff]
    %v1337 = vld [vmem:[%s11 + $0x8] sm:$0xff]
    %v1338 = vld [vmem:[%s11 + $0x10] sm:$0xff]
    %v1339 = vld [vmem:[%s11 + $0x18] sm:$0xff]
    %v1340 = vld [vmem:[%s11 + $0x20] sm:$0xff]
    %v1341 = vld [vmem:[%s11 + $0x28] sm:$0xff]
    %v1342 = vld [vmem:[%s11 + $0x30] sm:$0xff]
    %v1343 = vld [vmem:[%s11 + $0x38] sm:$0xff]
    %v1344 = vld [vmem:[%s11 + $0x40] sm:$0xff]
    %v1345 = vld [vmem:[%s11 + $0x48] sm:$0xff]
    %v1346 = vld [vmem:[%s11 + $0x50] sm:$0xff]
    %v1347 = vld [vmem:[%s11 + $0x58] sm:$0xff]
    %v1348 = vld [vmem:[%s11 + $0x60] sm:$0xff]
    %v1349 = vld [vmem:[%s11 + $0x68] sm:$0xff]
    %v1350 = vld [vmem:[%s11 + $0x70] sm:$0xff]
    %v1351 = vld [vmem:[%s11 + $0x78] sm:$0xff]
    %v1352 = vld [vmem:[%s12] sm:$0x1]
    %v1354 = vlaneseq
    %v1355 = vshrl.u32 %v1354, 7
    %v1356 = vsub.s32 0, %v1355
    %v1357 = vrot.slane %v1352, %v1356
    %1359 = vmatprep.subr.mxu0 0.0
    %1360 = vmatpush1.msra.mxu0 %v1336
    %1361 = vmatprep.subr.mxu0 0.0
    %1362 = vmatpush1.msra.mxu0 %v1337
    %1363 = vmatprep.subr.mxu0 0.0
    %1364 = vmatpush1.msra.mxu0 %v1338
    %1365 = vmatprep.subr.mxu0 0.0
    %1366 = vmatpush1.msra.mxu0 %v1339
    %1367 = vmatprep.subr.mxu0 0.0
    %1368 = vmatpush1.msra.mxu0 %v1340
    %1369 = vmatprep.subr.mxu0 0.0
    %1370 = vmatpush1.msra.mxu0 %v1341
    %1371 = vmatprep.subr.mxu0 0.0
    %1372 = vmatpush1.msra.mxu0 %v1342
    %1373 = vmatprep.subr.mxu0 0.0
    %1374 = vmatpush1.msra.mxu0 %v1343
    %1375 = vmatprep.subr.mxu0 0.0
    %1376 = vmatpush1.msra.mxu0 %v1344
    %1377 = vmatprep.subr.mxu0 0.0
    %1378 = vmatpush1.msra.mxu0 %v1345
    %1379 = vmatprep.subr.mxu0 0.0
    %1380 = vmatpush1.msra.mxu0 %v1346
    %1381 = vmatprep.subr.mxu0 0.0
    %1382 = vmatpush1.msra.mxu0 %v1347
    %1383 = vmatprep.subr.mxu0 0.0
    %1384 = vmatpush1.msra.mxu0 %v1348
    %1385 = vmatprep.subr.mxu0 0.0
    %1386 = vmatpush1.msra.mxu0 %v1349
    %1387 = vmatprep.subr.mxu0 0.0
    %1388 = vmatpush1.msra.mxu0 %v1350
    %1389 = vmatprep.subr.mxu0 0.0
    %1390 = vmatpush1.msra.mxu0 %v1351
    %1391 = vmatprep.subr.mxu0 0.0
    %1392 = vmatpush1.msra.mxu0 0.0
    %1393 = vmatprep.subr.mxu0 0.0
    %1394 = vmatpush1.msra.mxu0 0.0
    %1395 = vmatprep.subr.mxu0 0.0
    %1396 = vmatpush1.msra.mxu0 0.0
    %1397 = vmatprep.subr.mxu0 0.0
    %1398 = vmatpush1.msra.mxu0 0.0
    %1399 = vmatprep.subr.mxu0 0.0
    %1400 = vmatpush1.msra.mxu0 0.0
    %1401 = vmatprep.subr.mxu0 0.0
    %1402 = vmatpush1.msra.mxu0 0.0
    %1403 = vmatprep.subr.mxu0 0.0
    %1404 = vmatpush1.msra.mxu0 0.0
    %1405 = vmatprep.subr.mxu0 0.0
    %1406 = vmatpush1.msra.mxu0 0.0
    %1407 = vmatprep.subr.mxu0 0.0
    %1408 = vmatpush1.msra.mxu0 0.0
    %1409 = vmatprep.subr.mxu0 0.0
    %1410 = vmatpush1.msra.mxu0 0.0
    %1411 = vmatprep.subr.mxu0 0.0
    %1412 = vmatpush1.msra.mxu0 0.0
    %1413 = vmatprep.subr.mxu0 0.0
    %1414 = vmatpush1.msra.mxu0 0.0
    %1415 = vmatprep.subr.mxu0 0.0
    %1416 = vmatpush1.msra.mxu0 0.0
    %1417 = vmatprep.subr.mxu0 0.0
    %1418 = vmatpush1.msra.mxu0 0.0
    %1419 = vmatprep.subr.mxu0 0.0
    %1420 = vmatpush1.msra.mxu0 0.0
    %1421 = vmatprep.subr.mxu0 0.0
    %1422 = vmatpush1.msra.mxu0 0.0
    %1423 = vmatprep.mubr.f32.mxu0 0.0
    %1424 = vmatmul.mubr.f32.gmra.mrb[0].mxu0 %v1334
    %v1425 = vpop.f32.mrb[0].mxu0
    %v1426 = vadd.f32 %v1357, %v1425
    %v1427 = vpop.f32.mrb[0].mxu0
    %1428 = vmatprep.mubr.f32.mxu0 0.0
    %1429 = vmatmul.mubr.f32.gmra.mrb[0].mxu0 %v1335
    %v1430 = vpop.f32.mrb[0].mxu0
    %v1431 = vadd.f32 %v1357, %v1430
    %v1432 = vpop.f32.mrb[0].mxu0
    %1433 = vdwg.mxu0
    %v1434 = vadd.f32 %v1196, %v1426
    %v1435 = vadd.f32 %v1197, %v1431
    %s1436 = scalar_lea.vmem %s5, 1
    %v1437 = vld [vmem:[%s1436] sm:$0x1]
    %s1438 = scalar_lea.vmem %s6, 1
    %v1439 = vld [vmem:[%s1438] sm:$0x1]
    %v1440 = vsel %vm66, %v1434, 0.0
    %1441 = vadd.xlane.f32.xlu0 %v1440
    %v1442 = vpop.xlane.xlu0 %1441
    %v1443 = vsel %vm66, %v1435, 0.0
    %1444 = vadd.xlane.f32.xlu0 %v1443
    %v1445 = vpop.xlane.xlu0 %1444
    %v1446 = vmul.f32 %v1442, %v73
    %v1447 = vmul.f32 %v1445, %v73
    %v1448 = vsub.f32 %v1434, %v1446
    %v1449 = vsub.f32 %v1435, %v1447
    %v1450 = vmul.f32 %v1448, %v1448
    %v1451 = vmul.f32 %v1449, %v1449
    %v1452 = vsel %vm66, %v1450, 0.0
    %1453 = vadd.xlane.f32.xlu0 %v1452
    %v1454 = vpop.xlane.xlu0 %1453
    %v1455 = vsel %vm66, %v1451, 0.0
    %1456 = vadd.xlane.f32.xlu0 %v1455
    %v1457 = vpop.xlane.xlu0 %1456
    %v1458 = vmul.f32 %v1454, %v73
    %v1459 = vmul.f32 %v1457, %v73
    %v1460 = vadd.f32 %v1458, 1e-05
    %v1461 = vadd.f32 %v1459, 1e-05
    %v1462 = vrsqrt.pop %v1460
    %v1463 = vrsqrt.pop %v1461
    %v1464 = vmul.f32 %v1448, %v1462
    %v1465 = vmul.f32 %v1449, %v1463
    %v1467 = vlaneseq
    %v1468 = vshrl.u32 %v1467, 7
    %v1469 = vsub.s32 0, %v1468
    %v1470 = vrot.slane %v1437, %v1469
    %v1472 = vmul.f32 %v1464, %v1470
    %v1473 = vmul.f32 %v1465, %v1470
    %v1475 = vlaneseq
    %v1476 = vshrl.u32 %v1475, 7
    %v1477 = vsub.s32 0, %v1476
    %v1478 = vrot.slane %v1439, %v1477
    %v1480 = vadd.f32 %v1472, %v1478
    %v1481 = vadd.f32 %v1473, %v1478
    %s1482 = scalar_lea.vmem %s2, 32
    %v1483 = vld [vmem:[%s1482] sm:$0xff]
    %v1484 = vld [vmem:[%s1482 + $0x8] sm:$0xff]
    %v1485 = vld [vmem:[%s1482 + $0x10] sm:$0xff]
    %v1486 = vld [vmem:[%s1482 + $0x18] sm:$0xff]
    %v1488 = vsel %vm66, %v1480, 0
    %v1491 = vsel %vm66, %v1481, 0
    %1493 = vmatprep.subr.mxu0 0.0
    %1494 = vmatpush1.msra.mxu0 %v1483
    %1495 = vmatprep.subr.mxu0 0.0
    %1496 = vmatpush1.msra.mxu0 %v1484
    %1497 = vmatprep.subr.mxu0 0.0
    %1498 = vmatpush1.msra.mxu0 %v1485
    %1499 = vmatprep.subr.mxu0 0.0
    %1500 = vmatpush1.msra.mxu0 %v1486
    %1501 = vmatprep.subr.mxu0 0.0
    %1502 = vmatpush1.msra.mxu0 0.0
    %1503 = vmatprep.subr.mxu0 0.0
    %1504 = vmatpush1.msra.mxu0 0.0
    %1505 = vmatprep.subr.mxu0 0.0
    %1506 = vmatpush1.msra.mxu0 0.0
    %1507 = vmatprep.subr.mxu0 0.0
    %1508 = vmatpush1.msra.mxu0 0.0
    %1509 = vmatprep.subr.mxu0 0.0
    %1510 = vmatpush1.msra.mxu0 0.0
    %1511 = vmatprep.subr.mxu0 0.0
    %1512 = vmatpush1.msra.mxu0 0.0
    %1513 = vmatprep.subr.mxu0 0.0
    %1514 = vmatpush1.msra.mxu0 0.0
    %1515 = vmatprep.subr.mxu0 0.0
    %1516 = vmatpush1.msra.mxu0 0.0
    %1517 = vmatprep.subr.mxu0 0.0
    %1518 = vmatpush1.msra.mxu0 0.0
    %1519 = vmatprep.subr.mxu0 0.0
    %1520 = vmatpush1.msra.mxu0 0.0
    %1521 = vmatprep.subr.mxu0 0.0
    %1522 = vmatpush1.msra.mxu0 0.0
    %1523 = vmatprep.subr.mxu0 0.0
    %1524 = vmatpush1.msra.mxu0 0.0
    %1525 = vmatprep.subr.mxu0 0.0
    %1526 = vmatpush1.msra.mxu0 0.0
    %1527 = vmatprep.subr.mxu0 0.0
    %1528 = vmatpush1.msra.mxu0 0.0
    %1529 = vmatprep.subr.mxu0 0.0
    %1530 = vmatpush1.msra.mxu0 0.0
    %1531 = vmatprep.subr.mxu0 0.0
    %1532 = vmatpush1.msra.mxu0 0.0
    %1533 = vmatprep.subr.mxu0 0.0
    %1534 = vmatpush1.msra.mxu0 0.0
    %1535 = vmatprep.subr.mxu0 0.0
    %1536 = vmatpush1.msra.mxu0 0.0
    %1537 = vmatprep.subr.mxu0 0.0
    %1538 = vmatpush1.msra.mxu0 0.0
    %1539 = vmatprep.subr.mxu0 0.0
    %1540 = vmatpush1.msra.mxu0 0.0
    %1541 = vmatprep.subr.mxu0 0.0
    %1542 = vmatpush1.msra.mxu0 0.0
    %1543 = vmatprep.subr.mxu0 0.0
    %1544 = vmatpush1.msra.mxu0 0.0
    %1545 = vmatprep.subr.mxu0 0.0
    %1546 = vmatpush1.msra.mxu0 0.0
    %1547 = vmatprep.subr.mxu0 0.0
    %1548 = vmatpush1.msra.mxu0 0.0
    %1549 = vmatprep.subr.mxu0 0.0
    %1550 = vmatpush1.msra.mxu0 0.0
    %1551 = vmatprep.subr.mxu0 0.0
    %1552 = vmatpush1.msra.mxu0 0.0
    %1553 = vmatprep.subr.mxu0 0.0
    %1554 = vmatpush1.msra.mxu0 0.0
    %1555 = vmatprep.subr.mxu0 0.0
    %1556 = vmatpush1.msra.mxu0 0.0
    %1557 = vmatprep.mubr.f32.mxu0 0.0
    %1558 = vmatmul.mubr.f32.gmra.mrb[0].mxu0 %v1488
    %v1559 = vpop.f32.mrb[0].mxu0
    %v1560 = vadd.f32 0.0, %v1559
    %v1561 = vpop.f32.mrb[0].mxu0
    %1562 = vmatprep.mubr.f32.mxu0 0.0
    %1563 = vmatmul.mubr.f32.gmra.mrb[0].mxu0 %v1491
    %v1564 = vpop.f32.mrb[0].mxu0
    %v1565 = vadd.f32 0.0, %v1564
    %v1566 = vpop.f32.mrb[0].mxu0
    %1567 = vdwg.mxu0
    %1570 = vrot.lane.b32.xlu0 %v1560, 96
    %v1571 = vpop.permute.xlu0 %1570
    %1572 = vrot.lane.b32.xlu0 %v1565, 96
    %v1573 = vpop.permute.xlu0 %1572
    %v1574 = vsel %vm201, %v1560, 0
    %v1576 = vsel %vm201, %v1565, 0
    %v1578 = vsel %vm201, %v1571, 0
    %v1580 = vsel %vm201, %v1573, 0
    %1582 = vmatprep.subr.mxu0 0.0
    %1583 = vmatpush1.xpose.msra.mxu0 %v1578
    %1584 = vmatprep.subr.mxu0 0.0
    %1585 = vmatpush1.xpose.msra.mxu0 %v1580
    %1586 = vmatprep.subr.mxu0 0.0
    %1587 = vmatpush1.xpose.msra.mxu0 0.0
    %1588 = vmatprep.subr.mxu0 0.0
    %1589 = vmatpush1.xpose.msra.mxu0 0.0
    %1590 = vmatprep.subr.mxu0 0.0
    %1591 = vmatpush1.xpose.msra.mxu0 0.0
    %1592 = vmatprep.subr.mxu0 0.0
    %1593 = vmatpush1.xpose.msra.mxu0 0.0
    %1594 = vmatprep.subr.mxu0 0.0
    %1595 = vmatpush1.xpose.msra.mxu0 0.0
    %1596 = vmatprep.subr.mxu0 0.0
    %1597 = vmatpush1.xpose.msra.mxu0 0.0
    %1598 = vmatprep.subr.mxu0 0.0
    %1599 = vmatpush1.xpose.msra.mxu0 0.0
    %1600 = vmatprep.subr.mxu0 0.0
    %1601 = vmatpush1.xpose.msra.mxu0 0.0
    %1602 = vmatprep.subr.mxu0 0.0
    %1603 = vmatpush1.xpose.msra.mxu0 0.0
    %1604 = vmatprep.subr.mxu0 0.0
    %1605 = vmatpush1.xpose.msra.mxu0 0.0
    %1606 = vmatprep.subr.mxu0 0.0
    %1607 = vmatpush1.xpose.msra.mxu0 0.0
    %1608 = vmatprep.subr.mxu0 0.0
    %1609 = vmatpush1.xpose.msra.mxu0 0.0
    %1610 = vmatprep.subr.mxu0 0.0
    %1611 = vmatpush1.xpose.msra.mxu0 0.0
    %1612 = vmatprep.subr.mxu0 0.0
    %1613 = vmatpush1.xpose.msra.mxu0 0.0
    %1614 = vmatprep.subr.mxu0 0.0
    %1615 = vmatpush1.xpose.msra.mxu0 0.0
    %1616 = vmatprep.subr.mxu0 0.0
    %1617 = vmatpush1.xpose.msra.mxu0 0.0
    %1618 = vmatprep.subr.mxu0 0.0
    %1619 = vmatpush1.xpose.msra.mxu0 0.0
    %1620 = vmatprep.subr.mxu0 0.0
    %1621 = vmatpush1.xpose.msra.mxu0 0.0
    %1622 = vmatprep.subr.mxu0 0.0
    %1623 = vmatpush1.xpose.msra.mxu0 0.0
    %1624 = vmatprep.subr.mxu0 0.0
    %1625 = vmatpush1.xpose.msra.mxu0 0.0
    %1626 = vmatprep.subr.mxu0 0.0
    %1627 = vmatpush1.xpose.msra.mxu0 0.0
    %1628 = vmatprep.subr.mxu0 0.0
    %1629 = vmatpush1.xpose.msra.mxu0 0.0
    %1630 = vmatprep.subr.mxu0 0.0
    %1631 = vmatpush1.xpose.msra.mxu0 0.0
    %1632 = vmatprep.subr.mxu0 0.0
    %1633 = vmatpush1.xpose.msra.mxu0 0.0
    %1634 = vmatprep.subr.mxu0 0.0
    %1635 = vmatpush1.xpose.msra.mxu0 0.0
    %1636 = vmatprep.subr.mxu0 0.0
    %1637 = vmatpush1.xpose.msra.mxu0 0.0
    %1638 = vmatprep.subr.mxu0 0.0
    %1639 = vmatpush1.xpose.msra.mxu0 0.0
    %1640 = vmatprep.subr.mxu0 0.0
    %1641 = vmatpush1.xpose.msra.mxu0 0.0
    %1642 = vmatprep.subr.mxu0 0.0
    %1643 = vmatpush1.xpose.msra.mxu0 0.0
    %1644 = vmatprep.subr.mxu0 0.0
    %1645 = vmatpush1.xpose.msra.mxu0 0.0
    %1646 = vmatprep.mubr.f32.mxu0 0.0
    %1647 = vmatmul.mubr.f32.gmra.mrb[0].mxu0 %v1574
    %v1648 = vpop.f32.mrb[0].mxu0
    %v1649 = vadd.f32 0.0, %v1648
    %v1650 = vpop.f32.mrb[0].mxu0
    %1651 = vmatprep.mubr.f32.mxu0 0.0
    %1652 = vmatmul.mubr.f32.gmra.mrb[0].mxu0 %v1576
    %v1653 = vpop.f32.mrb[0].mxu0
    %v1654 = vadd.f32 0.0, %v1653
    %v1655 = vpop.f32.mrb[0].mxu0
    %1656 = vdwg.mxu0
    %v1657 = vmul.f32 %v1649, 0.35355338
    %v1658 = vmul.f32 %v1654, 0.35355338
    %v1659 = vadd.f32 %v1657, %v62
    %v1660 = vadd.f32 %v1658, %v63
    %v1661 = vsel %vm289, %v1659, -inf
    %1662 = vmax.xlane.f32.xlu0 %v1661
    %v1663 = vpop.xlane.xlu0 %1662
    %v1664 = vsel %vm289, %v1660, -inf
    %1665 = vmax.xlane.f32.xlu0 %v1664
    %v1666 = vpop.xlane.xlu0 %1665
    %v1667 = vsub.f32 %v1659, %v1663
    %v1668 = vsub.f32 %v1660, %v1666
    %v1669 = vmul.f32 %v1667, 1.442695
    %v1670 = vpow.pop %v1669
    %v1671 = vmul.f32 %v1668, 1.442695
    %v1672 = vpow.pop %v1671
    %v1673 = vsel %vm289, %v1670, 0.0
    %1674 = vadd.xlane.f32.xlu0 %v1673
    %v1675 = vpop.xlane.xlu0 %1674
    %v1676 = vsel %vm289, %v1672, 0.0
    %1677 = vadd.xlane.f32.xlu0 %v1676
    %v1678 = vpop.xlane.xlu0 %1677
    %v1679 = vrcp.pop %v1675
    %v1680 = vmul.f32 %v1670, %v1679
    %v1681 = vrcp.pop %v1678
    %v1682 = vmul.f32 %v1672, %v1681
    %1685 = vrot.lane.b32.xlu0 %v1680, 120
    %v1686 = vpop.permute.xlu0 %1685
    %1687 = vrot.lane.b32.xlu0 %v1682, 120
    %v1688 = vpop.permute.xlu0 %1687
    %v1691 = vadd.f32 %v1680, %v1686
    %v1692 = vadd.f32 %v1682, %v1688
    %1693 = vrot.lane.b32.xlu0 %v1560, 64
    %v1694 = vpop.permute.xlu0 %1693
    %1695 = vrot.lane.b32.xlu0 %v1565, 64
    %v1696 = vpop.permute.xlu0 %1695
    %v1699 = vsel %vm289, %v1680, 0
    %v1701 = vsel %vm289, %v1682, 0
    %1703 = vmatprep.subr.mxu0 0.0
    %1704 = vmatpush1.msra.mxu0 %v1694
    %1705 = vmatprep.subr.mxu0 0.0
    %1706 = vmatpush1.msra.mxu0 %v1696
    %1707 = vmatprep.subr.mxu0 0.0
    %1708 = vmatpush1.msra.mxu0 0.0
    %1709 = vmatprep.subr.mxu0 0.0
    %1710 = vmatpush1.msra.mxu0 0.0
    %1711 = vmatprep.subr.mxu0 0.0
    %1712 = vmatpush1.msra.mxu0 0.0
    %1713 = vmatprep.subr.mxu0 0.0
    %1714 = vmatpush1.msra.mxu0 0.0
    %1715 = vmatprep.subr.mxu0 0.0
    %1716 = vmatpush1.msra.mxu0 0.0
    %1717 = vmatprep.subr.mxu0 0.0
    %1718 = vmatpush1.msra.mxu0 0.0
    %1719 = vmatprep.subr.mxu0 0.0
    %1720 = vmatpush1.msra.mxu0 0.0
    %1721 = vmatprep.subr.mxu0 0.0
    %1722 = vmatpush1.msra.mxu0 0.0
    %1723 = vmatprep.subr.mxu0 0.0
    %1724 = vmatpush1.msra.mxu0 0.0
    %1725 = vmatprep.subr.mxu0 0.0
    %1726 = vmatpush1.msra.mxu0 0.0
    %1727 = vmatprep.subr.mxu0 0.0
    %1728 = vmatpush1.msra.mxu0 0.0
    %1729 = vmatprep.subr.mxu0 0.0
    %1730 = vmatpush1.msra.mxu0 0.0
    %1731 = vmatprep.subr.mxu0 0.0
    %1732 = vmatpush1.msra.mxu0 0.0
    %1733 = vmatprep.subr.mxu0 0.0
    %1734 = vmatpush1.msra.mxu0 0.0
    %1735 = vmatprep.subr.mxu0 0.0
    %1736 = vmatpush1.msra.mxu0 0.0
    %1737 = vmatprep.subr.mxu0 0.0
    %1738 = vmatpush1.msra.mxu0 0.0
    %1739 = vmatprep.subr.mxu0 0.0
    %1740 = vmatpush1.msra.mxu0 0.0
    %1741 = vmatprep.subr.mxu0 0.0
    %1742 = vmatpush1.msra.mxu0 0.0
    %1743 = vmatprep.subr.mxu0 0.0
    %1744 = vmatpush1.msra.mxu0 0.0
    %1745 = vmatprep.subr.mxu0 0.0
    %1746 = vmatpush1.msra.mxu0 0.0
    %1747 = vmatprep.subr.mxu0 0.0
    %1748 = vmatpush1.msra.mxu0 0.0
    %1749 = vmatprep.subr.mxu0 0.0
    %1750 = vmatpush1.msra.mxu0 0.0
    %1751 = vmatprep.subr.mxu0 0.0
    %1752 = vmatpush1.msra.mxu0 0.0
    %1753 = vmatprep.subr.mxu0 0.0
    %1754 = vmatpush1.msra.mxu0 0.0
    %1755 = vmatprep.subr.mxu0 0.0
    %1756 = vmatpush1.msra.mxu0 0.0
    %1757 = vmatprep.subr.mxu0 0.0
    %1758 = vmatpush1.msra.mxu0 0.0
    %1759 = vmatprep.subr.mxu0 0.0
    %1760 = vmatpush1.msra.mxu0 0.0
    %1761 = vmatprep.subr.mxu0 0.0
    %1762 = vmatpush1.msra.mxu0 0.0
    %1763 = vmatprep.subr.mxu0 0.0
    %1764 = vmatpush1.msra.mxu0 0.0
    %1765 = vmatprep.subr.mxu0 0.0
    %1766 = vmatpush1.msra.mxu0 0.0
    %1767 = vmatprep.mubr.f32.mxu0 0.0
    %1768 = vmatmul.mubr.f32.gmra.mrb[0].mxu0 %v1699
    %v1769 = vpop.f32.mrb[0].mxu0
    %v1770 = vadd.f32 0.0, %v1769
    %v1771 = vpop.f32.mrb[0].mxu0
    %1772 = vmatprep.mubr.f32.mxu0 0.0
    %1773 = vmatmul.mubr.f32.gmra.mrb[0].mxu0 %v1701
    %v1774 = vpop.f32.mrb[0].mxu0
    %v1775 = vadd.f32 0.0, %v1774
    %v1776 = vpop.f32.mrb[0].mxu0
    %1777 = vdwg.mxu0
    %1778 = vrot.lane.b32.xlu0 %v1560, 120
    %v1779 = vpop.permute.xlu0 %1778
    %1780 = vrot.lane.b32.xlu0 %v1565, 120
    %v1781 = vpop.permute.xlu0 %1780
    %1782 = vrot.lane.b32.xlu0 %v1560, 88
    %v1783 = vpop.permute.xlu0 %1782
    %1784 = vrot.lane.b32.xlu0 %v1565, 88
    %v1785 = vpop.permute.xlu0 %1784
    %v1786 = vsel %vm201, %v1779, 0
    %v1788 = vsel %vm201, %v1781, 0
    %v1790 = vsel %vm201, %v1783, 0
    %v1792 = vsel %vm201, %v1785, 0
    %1794 = vmatprep.subr.mxu0 0.0
    %1795 = vmatpush1.xpose.msra.mxu0 %v1790
    %1796 = vmatprep.subr.mxu0 0.0
    %1797 = vmatpush1.xpose.msra.mxu0 %v1792
    %1798 = vmatprep.subr.mxu0 0.0
    %1799 = vmatpush1.xpose.msra.mxu0 0.0
    %1800 = vmatprep.subr.mxu0 0.0
    %1801 = vmatpush1.xpose.msra.mxu0 0.0
    %1802 = vmatprep.subr.mxu0 0.0
    %1803 = vmatpush1.xpose.msra.mxu0 0.0
    %1804 = vmatprep.subr.mxu0 0.0
    %1805 = vmatpush1.xpose.msra.mxu0 0.0
    %1806 = vmatprep.subr.mxu0 0.0
    %1807 = vmatpush1.xpose.msra.mxu0 0.0
    %1808 = vmatprep.subr.mxu0 0.0
    %1809 = vmatpush1.xpose.msra.mxu0 0.0
    %1810 = vmatprep.subr.mxu0 0.0
    %1811 = vmatpush1.xpose.msra.mxu0 0.0
    %1812 = vmatprep.subr.mxu0 0.0
    %1813 = vmatpush1.xpose.msra.mxu0 0.0
    %1814 = vmatprep.subr.mxu0 0.0
    %1815 = vmatpush1.xpose.msra.mxu0 0.0
    %1816 = vmatprep.subr.mxu0 0.0
    %1817 = vmatpush1.xpose.msra.mxu0 0.0
    %1818 = vmatprep.subr.mxu0 0.0
    %1819 = vmatpush1.xpose.msra.mxu0 0.0
    %1820 = vmatprep.subr.mxu0 0.0
    %1821 = vmatpush1.xpose.msra.mxu0 0.0
    %1822 = vmatprep.subr.mxu0 0.0
    %1823 = vmatpush1.xpose.msra.mxu0 0.0
    %1824 = vmatprep.subr.mxu0 0.0
    %1825 = vmatpush1.xpose.msra.mxu0 0.0
    %1826 = vmatprep.subr.mxu0 0.0
    %1827 = vmatpush1.xpose.msra.mxu0 0.0
    %1828 = vmatprep.subr.mxu0 0.0
    %1829 = vmatpush1.xpose.msra.mxu0 0.0
    %1830 = vmatprep.subr.mxu0 0.0
    %1831 = vmatpush1.xpose.msra.mxu0 0.0
    %1832 = vmatprep.subr.mxu0 0.0
    %1833 = vmatpush1.xpose.msra.mxu0 0.0
    %1834 = vmatprep.subr.mxu0 0.0
    %1835 = vmatpush1.xpose.msra.mxu0 0.0
    %1836 = vmatprep.subr.mxu0 0.0
    %1837 = vmatpush1.xpose.msra.mxu0 0.0
    %1838 = vmatprep.subr.mxu0 0.0
    %1839 = vmatpush1.xpose.msra.mxu0 0.0
    %1840 = vmatprep.subr.mxu0 0.0
    %1841 = vmatpush1.xpose.msra.mxu0 0.0
    %1842 = vmatprep.subr.mxu0 0.0
    %1843 = vmatpush1.xpose.msra.mxu0 0.0
    %1844 = vmatprep.subr.mxu0 0.0
    %1845 = vmatpush1.xpose.msra.mxu0 0.0
    %1846 = vmatprep.subr.mxu0 0.0
    %1847 = vmatpush1.xpose.msra.mxu0 0.0
    %1848 = vmatprep.subr.mxu0 0.0
    %1849 = vmatpush1.xpose.msra.mxu0 0.0
    %1850 = vmatprep.subr.mxu0 0.0
    %1851 = vmatpush1.xpose.msra.mxu0 0.0
    %1852 = vmatprep.subr.mxu0 0.0
    %1853 = vmatpush1.xpose.msra.mxu0 0.0
    %1854 = vmatprep.subr.mxu0 0.0
    %1855 = vmatpush1.xpose.msra.mxu0 0.0
    %1856 = vmatprep.subr.mxu0 0.0
    %1857 = vmatpush1.xpose.msra.mxu0 0.0
    %1858 = vmatprep.mubr.f32.mxu0 0.0
    %1859 = vmatmul.mubr.f32.gmra.mrb[0].mxu0 %v1786
    %v1860 = vpop.f32.mrb[0].mxu0
    %v1861 = vadd.f32 0.0, %v1860
    %v1862 = vpop.f32.mrb[0].mxu0
    %1863 = vmatprep.mubr.f32.mxu0 0.0
    %1864 = vmatmul.mubr.f32.gmra.mrb[0].mxu0 %v1788
    %v1865 = vpop.f32.mrb[0].mxu0
    %v1866 = vadd.f32 0.0, %v1865
    %v1867 = vpop.f32.mrb[0].mxu0
    %1868 = vdwg.mxu0
    %v1869 = vmul.f32 %v1861, 0.35355338
    %v1870 = vmul.f32 %v1866, 0.35355338
    %v1871 = vadd.f32 %v1869, %v62
    %v1872 = vadd.f32 %v1870, %v63
    %v1873 = vsel %vm289, %v1871, -inf
    %1874 = vmax.xlane.f32.xlu0 %v1873
    %v1875 = vpop.xlane.xlu0 %1874
    %v1876 = vsel %vm289, %v1872, -inf
    %1877 = vmax.xlane.f32.xlu0 %v1876
    %v1878 = vpop.xlane.xlu0 %1877
    %v1879 = vsub.f32 %v1871, %v1875
    %v1880 = vsub.f32 %v1872, %v1878
    %v1881 = vmul.f32 %v1879, 1.442695
    %v1882 = vpow.pop %v1881
    %v1883 = vmul.f32 %v1880, 1.442695
    %v1884 = vpow.pop %v1883
    %v1885 = vsel %vm289, %v1882, 0.0
    %1886 = vadd.xlane.f32.xlu0 %v1885
    %v1887 = vpop.xlane.xlu0 %1886
    %v1888 = vsel %vm289, %v1884, 0.0
    %1889 = vadd.xlane.f32.xlu0 %v1888
    %v1890 = vpop.xlane.xlu0 %1889
    %v1891 = vrcp.pop %v1887
    %v1892 = vmul.f32 %v1882, %v1891
    %v1893 = vrcp.pop %v1890
    %v1894 = vmul.f32 %v1884, %v1893
    %1897 = vrot.lane.b32.xlu0 %v1892, 120
    %v1898 = vpop.permute.xlu0 %1897
    %1899 = vrot.lane.b32.xlu0 %v1894, 120
    %v1900 = vpop.permute.xlu0 %1899
    %v1903 = vadd.f32 %v1892, %v1898
    %v1904 = vadd.f32 %v1894, %v1900
    %1905 = vrot.lane.b32.xlu0 %v1560, 56
    %v1906 = vpop.permute.xlu0 %1905
    %1907 = vrot.lane.b32.xlu0 %v1565, 56
    %v1908 = vpop.permute.xlu0 %1907
    %v1911 = vsel %vm289, %v1892, 0
    %v1913 = vsel %vm289, %v1894, 0
    %1915 = vmatprep.subr.mxu0 0.0
    %1916 = vmatpush1.msra.mxu0 %v1906
    %1917 = vmatprep.subr.mxu0 0.0
    %1918 = vmatpush1.msra.mxu0 %v1908
    %1919 = vmatprep.subr.mxu0 0.0
    %1920 = vmatpush1.msra.mxu0 0.0
    %1921 = vmatprep.subr.mxu0 0.0
    %1922 = vmatpush1.msra.mxu0 0.0
    %1923 = vmatprep.subr.mxu0 0.0
    %1924 = vmatpush1.msra.mxu0 0.0
    %1925 = vmatprep.subr.mxu0 0.0
    %1926 = vmatpush1.msra.mxu0 0.0
    %1927 = vmatprep.subr.mxu0 0.0
    %1928 = vmatpush1.msra.mxu0 0.0
    %1929 = vmatprep.subr.mxu0 0.0
    %1930 = vmatpush1.msra.mxu0 0.0
    %1931 = vmatprep.subr.mxu0 0.0
    %1932 = vmatpush1.msra.mxu0 0.0
    %1933 = vmatprep.subr.mxu0 0.0
    %1934 = vmatpush1.msra.mxu0 0.0
    %1935 = vmatprep.subr.mxu0 0.0
    %1936 = vmatpush1.msra.mxu0 0.0
    %1937 = vmatprep.subr.mxu0 0.0
    %1938 = vmatpush1.msra.mxu0 0.0
    %1939 = vmatprep.subr.mxu0 0.0
    %1940 = vmatpush1.msra.mxu0 0.0
    %1941 = vmatprep.subr.mxu0 0.0
    %1942 = vmatpush1.msra.mxu0 0.0
    %1943 = vmatprep.subr.mxu0 0.0
    %1944 = vmatpush1.msra.mxu0 0.0
    %1945 = vmatprep.subr.mxu0 0.0
    %1946 = vmatpush1.msra.mxu0 0.0
    %1947 = vmatprep.subr.mxu0 0.0
    %1948 = vmatpush1.msra.mxu0 0.0
    %1949 = vmatprep.subr.mxu0 0.0
    %1950 = vmatpush1.msra.mxu0 0.0
    %1951 = vmatprep.subr.mxu0 0.0
    %1952 = vmatpush1.msra.mxu0 0.0
    %1953 = vmatprep.subr.mxu0 0.0
    %1954 = vmatpush1.msra.mxu0 0.0
    %1955 = vmatprep.subr.mxu0 0.0
    %1956 = vmatpush1.msra.mxu0 0.0
    %1957 = vmatprep.subr.mxu0 0.0
    %1958 = vmatpush1.msra.mxu0 0.0
    %1959 = vmatprep.subr.mxu0 0.0
    %1960 = vmatpush1.msra.mxu0 0.0
    %1961 = vmatprep.subr.mxu0 0.0
    %1962 = vmatpush1.msra.mxu0 0.0
    %1963 = vmatprep.subr.mxu0 0.0
    %1964 = vmatpush1.msra.mxu0 0.0
    %1965 = vmatprep.subr.mxu0 0.0
    %1966 = vmatpush1.msra.mxu0 0.0
    %1967 = vmatprep.subr.mxu0 0.0
    %1968 = vmatpush1.msra.mxu0 0.0
    %1969 = vmatprep.subr.mxu0 0.0
    %1970 = vmatpush1.msra.mxu0 0.0
    %1971 = vmatprep.subr.mxu0 0.0
    %1972 = vmatpush1.msra.mxu0 0.0
    %1973 = vmatprep.subr.mxu0 0.0
    %1974 = vmatpush1.msra.mxu0 0.0
    %1975 = vmatprep.subr.mxu0 0.0
    %1976 = vmatpush1.msra.mxu0 0.0
    %1977 = vmatprep.subr.mxu0 0.0
    %1978 = vmatpush1.msra.mxu0 0.0
    %1979 = vmatprep.mubr.f32.mxu0 0.0
    %1980 = vmatmul.mubr.f32.gmra.mrb[0].mxu0 %v1911
    %v1981 = vpop.f32.mrb[0].mxu0
    %v1982 = vadd.f32 0.0, %v1981
    %v1983 = vpop.f32.mrb[0].mxu0
    %1984 = vmatprep.mubr.f32.mxu0 0.0
    %1985 = vmatmul.mubr.f32.gmra.mrb[0].mxu0 %v1913
    %v1986 = vpop.f32.mrb[0].mxu0
    %v1987 = vadd.f32 0.0, %v1986
    %v1988 = vpop.f32.mrb[0].mxu0
    %1989 = vdwg.mxu0
    %1990 = vrot.lane.b32.xlu0 %v1560, 112
    %v1991 = vpop.permute.xlu0 %1990
    %1992 = vrot.lane.b32.xlu0 %v1565, 112
    %v1993 = vpop.permute.xlu0 %1992
    %1994 = vrot.lane.b32.xlu0 %v1560, 80
    %v1995 = vpop.permute.xlu0 %1994
    %1996 = vrot.lane.b32.xlu0 %v1565, 80
    %v1997 = vpop.permute.xlu0 %1996
    %v1998 = vsel %vm201, %v1991, 0
    %v2000 = vsel %vm201, %v1993, 0
    %v2002 = vsel %vm201, %v1995, 0
    %v2004 = vsel %vm201, %v1997, 0
    %2006 = vmatprep.subr.mxu0 0.0
    %2007 = vmatpush1.xpose.msra.mxu0 %v2002
    %2008 = vmatprep.subr.mxu0 0.0
    %2009 = vmatpush1.xpose.msra.mxu0 %v2004
    %2010 = vmatprep.subr.mxu0 0.0
    %2011 = vmatpush1.xpose.msra.mxu0 0.0
    %2012 = vmatprep.subr.mxu0 0.0
    %2013 = vmatpush1.xpose.msra.mxu0 0.0
    %2014 = vmatprep.subr.mxu0 0.0
    %2015 = vmatpush1.xpose.msra.mxu0 0.0
    %2016 = vmatprep.subr.mxu0 0.0
    %2017 = vmatpush1.xpose.msra.mxu0 0.0
    %2018 = vmatprep.subr.mxu0 0.0
    %2019 = vmatpush1.xpose.msra.mxu0 0.0
    %2020 = vmatprep.subr.mxu0 0.0
    %2021 = vmatpush1.xpose.msra.mxu0 0.0
    %2022 = vmatprep.subr.mxu0 0.0
    %2023 = vmatpush1.xpose.msra.mxu0 0.0
    %2024 = vmatprep.subr.mxu0 0.0
    %2025 = vmatpush1.xpose.msra.mxu0 0.0
    %2026 = vmatprep.subr.mxu0 0.0
    %2027 = vmatpush1.xpose.msra.mxu0 0.0
    %2028 = vmatprep.subr.mxu0 0.0
    %2029 = vmatpush1.xpose.msra.mxu0 0.0
    %2030 = vmatprep.subr.mxu0 0.0
    %2031 = vmatpush1.xpose.msra.mxu0 0.0
    %2032 = vmatprep.subr.mxu0 0.0
    %2033 = vmatpush1.xpose.msra.mxu0 0.0
    %2034 = vmatprep.subr.mxu0 0.0
    %2035 = vmatpush1.xpose.msra.mxu0 0.0
    %2036 = vmatprep.subr.mxu0 0.0
    %2037 = vmatpush1.xpose.msra.mxu0 0.0
    %2038 = vmatprep.subr.mxu0 0.0
    %2039 = vmatpush1.xpose.msra.mxu0 0.0
    %2040 = vmatprep.subr.mxu0 0.0
    %2041 = vmatpush1.xpose.msra.mxu0 0.0
    %2042 = vmatprep.subr.mxu0 0.0
    %2043 = vmatpush1.xpose.msra.mxu0 0.0
    %2044 = vmatprep.subr.mxu0 0.0
    %2045 = vmatpush1.xpose.msra.mxu0 0.0
    %2046 = vmatprep.subr.mxu0 0.0
    %2047 = vmatpush1.xpose.msra.mxu0 0.0
    %2048 = vmatprep.subr.mxu0 0.0
    %2049 = vmatpush1.xpose.msra.mxu0 0.0
    %2050 = vmatprep.subr.mxu0 0.0
    %2051 = vmatpush1.xpose.msra.mxu0 0.0
    %2052 = vmatprep.subr.mxu0 0.0
    %2053 = vmatpush1.xpose.msra.mxu0 0.0
    %2054 = vmatprep.subr.mxu0 0.0
    %2055 = vmatpush1.xpose.msra.mxu0 0.0
    %2056 = vmatprep.subr.mxu0 0.0
    %2057 = vmatpush1.xpose.msra.mxu0 0.0
    %2058 = vmatprep.subr.mxu0 0.0
    %2059 = vmatpush1.xpose.msra.mxu0 0.0
    %2060 = vmatprep.subr.mxu0 0.0
    %2061 = vmatpush1.xpose.msra.mxu0 0.0
    %2062 = vmatprep.subr.mxu0 0.0
    %2063 = vmatpush1.xpose.msra.mxu0 0.0
    %2064 = vmatprep.subr.mxu0 0.0
    %2065 = vmatpush1.xpose.msra.mxu0 0.0
    %2066 = vmatprep.subr.mxu0 0.0
    %2067 = vmatpush1.xpose.msra.mxu0 0.0
    %2068 = vmatprep.subr.mxu0 0.0
    %2069 = vmatpush1.xpose.msra.mxu0 0.0
    %2070 = vmatprep.mubr.f32.mxu0 0.0
    %2071 = vmatmul.mubr.f32.gmra.mrb[0].mxu0 %v1998
    %v2072 = vpop.f32.mrb[0].mxu0
    %v2073 = vadd.f32 0.0, %v2072
    %v2074 = vpop.f32.mrb[0].mxu0
    %2075 = vmatprep.mubr.f32.mxu0 0.0
    %2076 = vmatmul.mubr.f32.gmra.mrb[0].mxu0 %v2000
    %v2077 = vpop.f32.mrb[0].mxu0
    %v2078 = vadd.f32 0.0, %v2077
    %v2079 = vpop.f32.mrb[0].mxu0
    %2080 = vdwg.mxu0
    %v2081 = vmul.f32 %v2073, 0.35355338
    %v2082 = vmul.f32 %v2078, 0.35355338
    %v2083 = vadd.f32 %v2081, %v62
    %v2084 = vadd.f32 %v2082, %v63
    %v2085 = vsel %vm289, %v2083, -inf
    %2086 = vmax.xlane.f32.xlu0 %v2085
    %v2087 = vpop.xlane.xlu0 %2086
    %v2088 = vsel %vm289, %v2084, -inf
    %2089 = vmax.xlane.f32.xlu0 %v2088
    %v2090 = vpop.xlane.xlu0 %2089
    %v2091 = vsub.f32 %v2083, %v2087
    %v2092 = vsub.f32 %v2084, %v2090
    %v2093 = vmul.f32 %v2091, 1.442695
    %v2094 = vpow.pop %v2093
    %v2095 = vmul.f32 %v2092, 1.442695
    %v2096 = vpow.pop %v2095
    %v2097 = vsel %vm289, %v2094, 0.0
    %2098 = vadd.xlane.f32.xlu0 %v2097
    %v2099 = vpop.xlane.xlu0 %2098
    %v2100 = vsel %vm289, %v2096, 0.0
    %2101 = vadd.xlane.f32.xlu0 %v2100
    %v2102 = vpop.xlane.xlu0 %2101
    %v2103 = vrcp.pop %v2099
    %v2104 = vmul.f32 %v2094, %v2103
    %v2105 = vrcp.pop %v2102
    %v2106 = vmul.f32 %v2096, %v2105
    %2109 = vrot.lane.b32.xlu0 %v2104, 120
    %v2110 = vpop.permute.xlu0 %2109
    %2111 = vrot.lane.b32.xlu0 %v2106, 120
    %v2112 = vpop.permute.xlu0 %2111
    %v2115 = vadd.f32 %v2104, %v2110
    %v2116 = vadd.f32 %v2106, %v2112
    %2117 = vrot.lane.b32.xlu0 %v1560, 48
    %v2118 = vpop.permute.xlu0 %2117
    %2119 = vrot.lane.b32.xlu0 %v1565, 48
    %v2120 = vpop.permute.xlu0 %2119
    %v2123 = vsel %vm289, %v2104, 0
    %v2125 = vsel %vm289, %v2106, 0
    %2127 = vmatprep.subr.mxu0 0.0
    %2128 = vmatpush1.msra.mxu0 %v2118
    %2129 = vmatprep.subr.mxu0 0.0
    %2130 = vmatpush1.msra.mxu0 %v2120
    %2131 = vmatprep.subr.mxu0 0.0
    %2132 = vmatpush1.msra.mxu0 0.0
    %2133 = vmatprep.subr.mxu0 0.0
    %2134 = vmatpush1.msra.mxu0 0.0
    %2135 = vmatprep.subr.mxu0 0.0
    %2136 = vmatpush1.msra.mxu0 0.0
    %2137 = vmatprep.subr.mxu0 0.0
    %2138 = vmatpush1.msra.mxu0 0.0
    %2139 = vmatprep.subr.mxu0 0.0
    %2140 = vmatpush1.msra.mxu0 0.0
    %2141 = vmatprep.subr.mxu0 0.0
    %2142 = vmatpush1.msra.mxu0 0.0
    %2143 = vmatprep.subr.mxu0 0.0
    %2144 = vmatpush1.msra.mxu0 0.0
    %2145 = vmatprep.subr.mxu0 0.0
    %2146 = vmatpush1.msra.mxu0 0.0
    %2147 = vmatprep.subr.mxu0 0.0
    %2148 = vmatpush1.msra.mxu0 0.0
    %2149 = vmatprep.subr.mxu0 0.0
    %2150 = vmatpush1.msra.mxu0 0.0
    %2151 = vmatprep.subr.mxu0 0.0
    %2152 = vmatpush1.msra.mxu0 0.0
    %2153 = vmatprep.subr.mxu0 0.0
    %2154 = vmatpush1.msra.mxu0 0.0
    %2155 = vmatprep.subr.mxu0 0.0
    %2156 = vmatpush1.msra.mxu0 0.0
    %2157 = vmatprep.subr.mxu0 0.0
    %2158 = vmatpush1.msra.mxu0 0.0
    %2159 = vmatprep.subr.mxu0 0.0
    %2160 = vmatpush1.msra.mxu0 0.0
    %2161 = vmatprep.subr.mxu0 0.0
    %2162 = vmatpush1.msra.mxu0 0.0
    %2163 = vmatprep.subr.mxu0 0.0
    %2164 = vmatpush1.msra.mxu0 0.0
    %2165 = vmatprep.subr.mxu0 0.0
    %2166 = vmatpush1.msra.mxu0 0.0
    %2167 = vmatprep.subr.mxu0 0.0
    %2168 = vmatpush1.msra.mxu0 0.0
    %2169 = vmatprep.subr.mxu0 0.0
    %2170 = vmatpush1.msra.mxu0 0.0
    %2171 = vmatprep.subr.mxu0 0.0
    %2172 = vmatpush1.msra.mxu0 0.0
    %2173 = vmatprep.subr.mxu0 0.0
    %2174 = vmatpush1.msra.mxu0 0.0
    %2175 = vmatprep.subr.mxu0 0.0
    %2176 = vmatpush1.msra.mxu0 0.0
    %2177 = vmatprep.subr.mxu0 0.0
    %2178 = vmatpush1.msra.mxu0 0.0
    %2179 = vmatprep.subr.mxu0 0.0
    %2180 = vmatpush1.msra.mxu0 0.0
    %2181 = vmatprep.subr.mxu0 0.0
    %2182 = vmatpush1.msra.mxu0 0.0
    %2183 = vmatprep.subr.mxu0 0.0
    %2184 = vmatpush1.msra.mxu0 0.0
    %2185 = vmatprep.subr.mxu0 0.0
    %2186 = vmatpush1.msra.mxu0 0.0
    %2187 = vmatprep.subr.mxu0 0.0
    %2188 = vmatpush1.msra.mxu0 0.0
    %2189 = vmatprep.subr.mxu0 0.0
    %2190 = vmatpush1.msra.mxu0 0.0
    %2191 = vmatprep.mubr.f32.mxu0 0.0
    %2192 = vmatmul.mubr.f32.gmra.mrb[0].mxu0 %v2123
    %v2193 = vpop.f32.mrb[0].mxu0
    %v2194 = vadd.f32 0.0, %v2193
    %v2195 = vpop.f32.mrb[0].mxu0
    %2196 = vmatprep.mubr.f32.mxu0 0.0
    %2197 = vmatmul.mubr.f32.gmra.mrb[0].mxu0 %v2125
    %v2198 = vpop.f32.mrb[0].mxu0
    %v2199 = vadd.f32 0.0, %v2198
    %v2200 = vpop.f32.mrb[0].mxu0
    %2201 = vdwg.mxu0
    %2202 = vrot.lane.b32.xlu0 %v1560, 104
    %v2203 = vpop.permute.xlu0 %2202
    %2204 = vrot.lane.b32.xlu0 %v1565, 104
    %v2205 = vpop.permute.xlu0 %2204
    %2206 = vrot.lane.b32.xlu0 %v1560, 72
    %v2207 = vpop.permute.xlu0 %2206
    %2208 = vrot.lane.b32.xlu0 %v1565, 72
    %v2209 = vpop.permute.xlu0 %2208
    %v2210 = vsel %vm201, %v2203, 0
    %v2212 = vsel %vm201, %v2205, 0
    %v2214 = vsel %vm201, %v2207, 0
    %v2216 = vsel %vm201, %v2209, 0
    %2218 = vmatprep.subr.mxu0 0.0
    %2219 = vmatpush1.xpose.msra.mxu0 %v2214
    %2220 = vmatprep.subr.mxu0 0.0
    %2221 = vmatpush1.xpose.msra.mxu0 %v2216
    %2222 = vmatprep.subr.mxu0 0.0
    %2223 = vmatpush1.xpose.msra.mxu0 0.0
    %2224 = vmatprep.subr.mxu0 0.0
    %2225 = vmatpush1.xpose.msra.mxu0 0.0
    %2226 = vmatprep.subr.mxu0 0.0
    %2227 = vmatpush1.xpose.msra.mxu0 0.0
    %2228 = vmatprep.subr.mxu0 0.0
    %2229 = vmatpush1.xpose.msra.mxu0 0.0
    %2230 = vmatprep.subr.mxu0 0.0
    %2231 = vmatpush1.xpose.msra.mxu0 0.0
    %2232 = vmatprep.subr.mxu0 0.0
    %2233 = vmatpush1.xpose.msra.mxu0 0.0
    %2234 = vmatprep.subr.mxu0 0.0
    %2235 = vmatpush1.xpose.msra.mxu0 0.0
    %2236 = vmatprep.subr.mxu0 0.0
    %2237 = vmatpush1.xpose.msra.mxu0 0.0
    %2238 = vmatprep.subr.mxu0 0.0
    %2239 = vmatpush1.xpose.msra.mxu0 0.0
    %2240 = vmatprep.subr.mxu0 0.0
    %2241 = vmatpush1.xpose.msra.mxu0 0.0
    %2242 = vmatprep.subr.mxu0 0.0
    %2243 = vmatpush1.xpose.msra.mxu0 0.0
    %2244 = vmatprep.subr.mxu0 0.0
    %2245 = vmatpush1.xpose.msra.mxu0 0.0
    %2246 = vmatprep.subr.mxu0 0.0
    %2247 = vmatpush1.xpose.msra.mxu0 0.0
    %2248 = vmatprep.subr.mxu0 0.0
    %2249 = vmatpush1.xpose.msra.mxu0 0.0
    %2250 = vmatprep.subr.mxu0 0.0
    %2251 = vmatpush1.xpose.msra.mxu0 0.0
    %2252 = vmatprep.subr.mxu0 0.0
    %2253 = vmatpush1.xpose.msra.mxu0 0.0
    %2254 = vmatprep.subr.mxu0 0.0
    %2255 = vmatpush1.xpose.msra.mxu0 0.0
    %2256 = vmatprep.subr.mxu0 0.0
    %2257 = vmatpush1.xpose.msra.mxu0 0.0
    %2258 = vmatprep.subr.mxu0 0.0
    %2259 = vmatpush1.xpose.msra.mxu0 0.0
    %2260 = vmatprep.subr.mxu0 0.0
    %2261 = vmatpush1.xpose.msra.mxu0 0.0
    %2262 = vmatprep.subr.mxu0 0.0
    %2263 = vmatpush1.xpose.msra.mxu0 0.0
    %2264 = vmatprep.subr.mxu0 0.0
    %2265 = vmatpush1.xpose.msra.mxu0 0.0
    %2266 = vmatprep.subr.mxu0 0.0
    %2267 = vmatpush1.xpose.msra.mxu0 0.0
    %2268 = vmatprep.subr.mxu0 0.0
    %2269 = vmatpush1.xpose.msra.mxu0 0.0
    %2270 = vmatprep.subr.mxu0 0.0
    %2271 = vmatpush1.xpose.msra.mxu0 0.0
    %2272 = vmatprep.subr.mxu0 0.0
    %2273 = vmatpush1.xpose.msra.mxu0 0.0
    %2274 = vmatprep.subr.mxu0 0.0
    %2275 = vmatpush1.xpose.msra.mxu0 0.0
    %2276 = vmatprep.subr.mxu0 0.0
    %2277 = vmatpush1.xpose.msra.mxu0 0.0
    %2278 = vmatprep.subr.mxu0 0.0
    %2279 = vmatpush1.xpose.msra.mxu0 0.0
    %2280 = vmatprep.subr.mxu0 0.0
    %2281 = vmatpush1.xpose.msra.mxu0 0.0
    %2282 = vmatprep.mubr.f32.mxu0 0.0
    %2283 = vmatmul.mubr.f32.gmra.mrb[0].mxu0 %v2210
    %v2284 = vpop.f32.mrb[0].mxu0
    %v2285 = vadd.f32 0.0, %v2284
    %v2286 = vpop.f32.mrb[0].mxu0
    %2287 = vmatprep.mubr.f32.mxu0 0.0
    %2288 = vmatmul.mubr.f32.gmra.mrb[0].mxu0 %v2212
    %v2289 = vpop.f32.mrb[0].mxu0
    %v2290 = vadd.f32 0.0, %v2289
    %v2291 = vpop.f32.mrb[0].mxu0
    %2292 = vdwg.mxu0
    %v2293 = vmul.f32 %v2285, 0.35355338
    %v2294 = vmul.f32 %v2290, 0.35355338
    %v2295 = vadd.f32 %v2293, %v62
    %v2296 = vadd.f32 %v2294, %v63
    %v2297 = vsel %vm289, %v2295, -inf
    %2298 = vmax.xlane.f32.xlu0 %v2297
    %v2299 = vpop.xlane.xlu0 %2298
    %v2300 = vsel %vm289, %v2296, -inf
    %2301 = vmax.xlane.f32.xlu0 %v2300
    %v2302 = vpop.xlane.xlu0 %2301
    %v2303 = vsub.f32 %v2295, %v2299
    %v2304 = vsub.f32 %v2296, %v2302
    %v2305 = vmul.f32 %v2303, 1.442695
    %v2306 = vpow.pop %v2305
    %v2307 = vmul.f32 %v2304, 1.442695
    %v2308 = vpow.pop %v2307
    %v2309 = vsel %vm289, %v2306, 0.0
    %2310 = vadd.xlane.f32.xlu0 %v2309
    %v2311 = vpop.xlane.xlu0 %2310
    %v2312 = vsel %vm289, %v2308, 0.0
    %2313 = vadd.xlane.f32.xlu0 %v2312
    %v2314 = vpop.xlane.xlu0 %2313
    %v2315 = vrcp.pop %v2311
    %v2316 = vmul.f32 %v2306, %v2315
    %v2317 = vrcp.pop %v2314
    %v2318 = vmul.f32 %v2308, %v2317
    %2321 = vrot.lane.b32.xlu0 %v2316, 120
    %v2322 = vpop.permute.xlu0 %2321
    %2323 = vrot.lane.b32.xlu0 %v2318, 120
    %v2324 = vpop.permute.xlu0 %2323
    %v2327 = vadd.f32 %v2316, %v2322
    %v2328 = vadd.f32 %v2318, %v2324
    %2329 = vrot.lane.b32.xlu0 %v1560, 40
    %v2330 = vpop.permute.xlu0 %2329
    %2331 = vrot.lane.b32.xlu0 %v1565, 40
    %v2332 = vpop.permute.xlu0 %2331
    %v2335 = vsel %vm289, %v2316, 0
    %v2337 = vsel %vm289, %v2318, 0
    %2339 = vmatprep.subr.mxu0 0.0
    %2340 = vmatpush1.msra.mxu0 %v2330
    %2341 = vmatprep.subr.mxu0 0.0
    %2342 = vmatpush1.msra.mxu0 %v2332
    %2343 = vmatprep.subr.mxu0 0.0
    %2344 = vmatpush1.msra.mxu0 0.0
    %2345 = vmatprep.subr.mxu0 0.0
    %2346 = vmatpush1.msra.mxu0 0.0
    %2347 = vmatprep.subr.mxu0 0.0
    %2348 = vmatpush1.msra.mxu0 0.0
    %2349 = vmatprep.subr.mxu0 0.0
    %2350 = vmatpush1.msra.mxu0 0.0
    %2351 = vmatprep.subr.mxu0 0.0
    %2352 = vmatpush1.msra.mxu0 0.0
    %2353 = vmatprep.subr.mxu0 0.0
    %2354 = vmatpush1.msra.mxu0 0.0
    %2355 = vmatprep.subr.mxu0 0.0
    %2356 = vmatpush1.msra.mxu0 0.0
    %2357 = vmatprep.subr.mxu0 0.0
    %2358 = vmatpush1.msra.mxu0 0.0
    %2359 = vmatprep.subr.mxu0 0.0
    %2360 = vmatpush1.msra.mxu0 0.0
    %2361 = vmatprep.subr.mxu0 0.0
    %2362 = vmatpush1.msra.mxu0 0.0
    %2363 = vmatprep.subr.mxu0 0.0
    %2364 = vmatpush1.msra.mxu0 0.0
    %2365 = vmatprep.subr.mxu0 0.0
    %2366 = vmatpush1.msra.mxu0 0.0
    %2367 = vmatprep.subr.mxu0 0.0
    %2368 = vmatpush1.msra.mxu0 0.0
    %2369 = vmatprep.subr.mxu0 0.0
    %2370 = vmatpush1.msra.mxu0 0.0
    %2371 = vmatprep.subr.mxu0 0.0
    %2372 = vmatpush1.msra.mxu0 0.0
    %2373 = vmatprep.subr.mxu0 0.0
    %2374 = vmatpush1.msra.mxu0 0.0
    %2375 = vmatprep.subr.mxu0 0.0
    %2376 = vmatpush1.msra.mxu0 0.0
    %2377 = vmatprep.subr.mxu0 0.0
    %2378 = vmatpush1.msra.mxu0 0.0
    %2379 = vmatprep.subr.mxu0 0.0
    %2380 = vmatpush1.msra.mxu0 0.0
    %2381 = vmatprep.subr.mxu0 0.0
    %2382 = vmatpush1.msra.mxu0 0.0
    %2383 = vmatprep.subr.mxu0 0.0
    %2384 = vmatpush1.msra.mxu0 0.0
    %2385 = vmatprep.subr.mxu0 0.0
    %2386 = vmatpush1.msra.mxu0 0.0
    %2387 = vmatprep.subr.mxu0 0.0
    %2388 = vmatpush1.msra.mxu0 0.0
    %2389 = vmatprep.subr.mxu0 0.0
    %2390 = vmatpush1.msra.mxu0 0.0
    %2391 = vmatprep.subr.mxu0 0.0
    %2392 = vmatpush1.msra.mxu0 0.0
    %2393 = vmatprep.subr.mxu0 0.0
    %2394 = vmatpush1.msra.mxu0 0.0
    %2395 = vmatprep.subr.mxu0 0.0
    %2396 = vmatpush1.msra.mxu0 0.0
    %2397 = vmatprep.subr.mxu0 0.0
    %2398 = vmatpush1.msra.mxu0 0.0
    %2399 = vmatprep.subr.mxu0 0.0
    %2400 = vmatpush1.msra.mxu0 0.0
    %2401 = vmatprep.subr.mxu0 0.0
    %2402 = vmatpush1.msra.mxu0 0.0
    %2403 = vmatprep.mubr.f32.mxu0 0.0
    %2404 = vmatmul.mubr.f32.gmra.mrb[0].mxu0 %v2335
    %v2405 = vpop.f32.mrb[0].mxu0
    %v2406 = vadd.f32 0.0, %v2405
    %v2407 = vpop.f32.mrb[0].mxu0
    %2408 = vmatprep.mubr.f32.mxu0 0.0
    %2409 = vmatmul.mubr.f32.gmra.mrb[0].mxu0 %v2337
    %v2410 = vpop.f32.mrb[0].mxu0
    %v2411 = vadd.f32 0.0, %v2410
    %v2412 = vpop.f32.mrb[0].mxu0
    %2413 = vdwg.mxu0
    %2416 = vrot.lane.b32.xlu0 %v1903, 8
    %v2417 = vpop.permute.xlu0 %2416
    %2418 = vrot.lane.b32.xlu0 %v1904, 8
    %v2419 = vpop.permute.xlu0 %2418
    %2424 = vrot.lane.b32.xlu0 %v2115, 16
    %v2425 = vpop.permute.xlu0 %2424
    %2426 = vrot.lane.b32.xlu0 %v2116, 16
    %v2427 = vpop.permute.xlu0 %2426
    %2432 = vrot.lane.b32.xlu0 %v2327, 24
    %v2433 = vpop.permute.xlu0 %2432
    %2434 = vrot.lane.b32.xlu0 %v2328, 24
    %v2435 = vpop.permute.xlu0 %2434
    %v2438 = vsel %vm201, %v1691, %v2417
    %v2439 = vsel %vm201, %v1692, %v2419
    %v2440 = vsel %vm289, %v2438, %v2425
    %v2441 = vsel %vm289, %v2439, %v2427
    %v2442 = vsel %vm1071, %v2440, %v2433
    %v2443 = vsel %vm1071, %v2441, %v2435
    %2446 = vrot.lane.b32.xlu0 %v1982, 8
    %v2447 = vpop.permute.xlu0 %2446
    %2448 = vrot.lane.b32.xlu0 %v1987, 8
    %v2449 = vpop.permute.xlu0 %2448
    %2454 = vrot.lane.b32.xlu0 %v2194, 16
    %v2455 = vpop.permute.xlu0 %2454
    %2456 = vrot.lane.b32.xlu0 %v2199, 16
    %v2457 = vpop.permute.xlu0 %2456
    %2462 = vrot.lane.b32.xlu0 %v2406, 24
    %v2463 = vpop.permute.xlu0 %2462
    %2464 = vrot.lane.b32.xlu0 %v2411, 24
    %v2465 = vpop.permute.xlu0 %2464
    %v2468 = vsel %vm201, %v1770, %v2447
    %v2469 = vsel %vm201, %v1775, %v2449
    %v2470 = vsel %vm289, %v2468, %v2455
    %v2471 = vsel %vm289, %v2469, %v2457
    %v2472 = vsel %vm1071, %v2470, %v2463
    %v2473 = vsel %vm1071, %v2471, %v2465
    %s2474 = scalar_lea.vmem %s3, 32
    %v2475 = vld [vmem:[%s2474] sm:$0xff]
    %v2476 = vld [vmem:[%s2474 + $0x8] sm:$0xff]
    %v2477 = vld [vmem:[%s2474 + $0x10] sm:$0xff]
    %v2478 = vld [vmem:[%s2474 + $0x18] sm:$0xff]
    %s2479 = scalar_lea.vmem %s4, 1
    %v2480 = vld [vmem:[%s2479] sm:$0x1]
    %v2482 = vlaneseq
    %v2483 = vshrl.u32 %v2482, 7
    %v2484 = vsub.s32 0, %v2483
    %v2485 = vrot.slane %v2480, %v2484
    %v2488 = vsel %vm66, %v2472, 0
    %v2491 = vsel %vm66, %v2473, 0
    %2493 = vmatprep.subr.mxu0 0.0
    %2494 = vmatpush1.msra.mxu0 %v2475
    %2495 = vmatprep.subr.mxu0 0.0
    %2496 = vmatpush1.msra.mxu0 %v2476
    %2497 = vmatprep.subr.mxu0 0.0
    %2498 = vmatpush1.msra.mxu0 %v2477
    %2499 = vmatprep.subr.mxu0 0.0
    %2500 = vmatpush1.msra.mxu0 %v2478
    %2501 = vmatprep.subr.mxu0 0.0
    %2502 = vmatpush1.msra.mxu0 0.0
    %2503 = vmatprep.subr.mxu0 0.0
    %2504 = vmatpush1.msra.mxu0 0.0
    %2505 = vmatprep.subr.mxu0 0.0
    %2506 = vmatpush1.msra.mxu0 0.0
    %2507 = vmatprep.subr.mxu0 0.0
    %2508 = vmatpush1.msra.mxu0 0.0
    %2509 = vmatprep.subr.mxu0 0.0
    %2510 = vmatpush1.msra.mxu0 0.0
    %2511 = vmatprep.subr.mxu0 0.0
    %2512 = vmatpush1.msra.mxu0 0.0
    %2513 = vmatprep.subr.mxu0 0.0
    %2514 = vmatpush1.msra.mxu0 0.0
    %2515 = vmatprep.subr.mxu0 0.0
    %2516 = vmatpush1.msra.mxu0 0.0
    %2517 = vmatprep.subr.mxu0 0.0
    %2518 = vmatpush1.msra.mxu0 0.0
    %2519 = vmatprep.subr.mxu0 0.0
    %2520 = vmatpush1.msra.mxu0 0.0
    %2521 = vmatprep.subr.mxu0 0.0
    %2522 = vmatpush1.msra.mxu0 0.0
    %2523 = vmatprep.subr.mxu0 0.0
    %2524 = vmatpush1.msra.mxu0 0.0
    %2525 = vmatprep.subr.mxu0 0.0
    %2526 = vmatpush1.msra.mxu0 0.0
    %2527 = vmatprep.subr.mxu0 0.0
    %2528 = vmatpush1.msra.mxu0 0.0
    %2529 = vmatprep.subr.mxu0 0.0
    %2530 = vmatpush1.msra.mxu0 0.0
    %2531 = vmatprep.subr.mxu0 0.0
    %2532 = vmatpush1.msra.mxu0 0.0
    %2533 = vmatprep.subr.mxu0 0.0
    %2534 = vmatpush1.msra.mxu0 0.0
    %2535 = vmatprep.subr.mxu0 0.0
    %2536 = vmatpush1.msra.mxu0 0.0
    %2537 = vmatprep.subr.mxu0 0.0
    %2538 = vmatpush1.msra.mxu0 0.0
    %2539 = vmatprep.subr.mxu0 0.0
    %2540 = vmatpush1.msra.mxu0 0.0
    %2541 = vmatprep.subr.mxu0 0.0
    %2542 = vmatpush1.msra.mxu0 0.0
    %2543 = vmatprep.subr.mxu0 0.0
    %2544 = vmatpush1.msra.mxu0 0.0
    %2545 = vmatprep.subr.mxu0 0.0
    %2546 = vmatpush1.msra.mxu0 0.0
    %2547 = vmatprep.subr.mxu0 0.0
    %2548 = vmatpush1.msra.mxu0 0.0
    %2549 = vmatprep.subr.mxu0 0.0
    %2550 = vmatpush1.msra.mxu0 0.0
    %2551 = vmatprep.subr.mxu0 0.0
    %2552 = vmatpush1.msra.mxu0 0.0
    %2553 = vmatprep.subr.mxu0 0.0
    %2554 = vmatpush1.msra.mxu0 0.0
    %2555 = vmatprep.subr.mxu0 0.0
    %2556 = vmatpush1.msra.mxu0 0.0
    %2557 = vmatprep.mubr.f32.mxu0 0.0
    %2558 = vmatmul.mubr.f32.gmra.mrb[0].mxu0 %v2488
    %v2559 = vpop.f32.mrb[0].mxu0
    %v2560 = vadd.f32 %v2485, %v2559
    %v2561 = vpop.f32.mrb[0].mxu0
    %2562 = vmatprep.mubr.f32.mxu0 0.0
    %2563 = vmatmul.mubr.f32.gmra.mrb[0].mxu0 %v2491
    %v2564 = vpop.f32.mrb[0].mxu0
    %v2565 = vadd.f32 %v2485, %v2564
    %v2566 = vpop.f32.mrb[0].mxu0
    %2567 = vdwg.mxu0
    %v2568 = vadd.f32 %v1434, %v2560
    %v2569 = vadd.f32 %v1435, %v2565
    %s2570 = scalar_lea.vmem %s7, 1
    %v2571 = vld [vmem:[%s2570] sm:$0x1]
    %s2572 = scalar_lea.vmem %s8, 1
    %v2573 = vld [vmem:[%s2572] sm:$0x1]
    %v2574 = vsel %vm66, %v2568, 0.0
    %2575 = vadd.xlane.f32.xlu0 %v2574
    %v2576 = vpop.xlane.xlu0 %2575
    %v2577 = vsel %vm66, %v2569, 0.0
    %2578 = vadd.xlane.f32.xlu0 %v2577
    %v2579 = vpop.xlane.xlu0 %2578
    %v2580 = vmul.f32 %v2576, %v73
    %v2581 = vmul.f32 %v2579, %v73
    %v2582 = vsub.f32 %v2568, %v2580
    %v2583 = vsub.f32 %v2569, %v2581
    %v2584 = vmul.f32 %v2582, %v2582
    %v2585 = vmul.f32 %v2583, %v2583
    %v2586 = vsel %vm66, %v2584, 0.0
    %2587 = vadd.xlane.f32.xlu0 %v2586
    %v2588 = vpop.xlane.xlu0 %2587
    %v2589 = vsel %vm66, %v2585, 0.0
    %2590 = vadd.xlane.f32.xlu0 %v2589
    %v2591 = vpop.xlane.xlu0 %2590
    %v2592 = vmul.f32 %v2588, %v73
    %v2593 = vmul.f32 %v2591, %v73
    %v2594 = vadd.f32 %v2592, 1e-05
    %v2595 = vadd.f32 %v2593, 1e-05
    %v2596 = vrsqrt.pop %v2594
    %v2597 = vrsqrt.pop %v2595
    %v2598 = vmul.f32 %v2582, %v2596
    %v2599 = vmul.f32 %v2583, %v2597
    %v2601 = vlaneseq
    %v2602 = vshrl.u32 %v2601, 7
    %v2603 = vsub.s32 0, %v2602
    %v2604 = vrot.slane %v2571, %v2603
    %v2606 = vmul.f32 %v2598, %v2604
    %v2607 = vmul.f32 %v2599, %v2604
    %v2609 = vlaneseq
    %v2610 = vshrl.u32 %v2609, 7
    %v2611 = vsub.s32 0, %v2610
    %v2612 = vrot.slane %v2573, %v2611
    %v2614 = vadd.f32 %v2606, %v2612
    %v2615 = vadd.f32 %v2607, %v2612
    %s2616 = scalar_lea.vmem %s9, 32
    %v2617 = vld [vmem:[%s2616] sm:$0xff]
    %v2618 = vld [vmem:[%s2616 + $0x8] sm:$0xff]
    %v2619 = vld [vmem:[%s2616 + $0x10] sm:$0xff]
    %v2620 = vld [vmem:[%s2616 + $0x18] sm:$0xff]
    %s2621 = scalar_lea.vmem %s10, 1
    %v2622 = vld [vmem:[%s2621] sm:$0x1]
    %v2624 = vlaneseq
    %v2625 = vshrl.u32 %v2624, 7
    %v2626 = vsub.s32 0, %v2625
    %v2627 = vrot.slane %v2622, %v2626
    %v2630 = vsel %vm66, %v2614, 0
    %v2633 = vsel %vm66, %v2615, 0
    %2635 = vmatprep.subr.mxu0 0.0
    %2636 = vmatpush1.msra.mxu0 %v2617
    %2637 = vmatprep.subr.mxu0 0.0
    %2638 = vmatpush1.msra.mxu0 %v2618
    %2639 = vmatprep.subr.mxu0 0.0
    %2640 = vmatpush1.msra.mxu0 %v2619
    %2641 = vmatprep.subr.mxu0 0.0
    %2642 = vmatpush1.msra.mxu0 %v2620
    %2643 = vmatprep.subr.mxu0 0.0
    %2644 = vmatpush1.msra.mxu0 0.0
    %2645 = vmatprep.subr.mxu0 0.0
    %2646 = vmatpush1.msra.mxu0 0.0
    %2647 = vmatprep.subr.mxu0 0.0
    %2648 = vmatpush1.msra.mxu0 0.0
    %2649 = vmatprep.subr.mxu0 0.0
    %2650 = vmatpush1.msra.mxu0 0.0
    %2651 = vmatprep.subr.mxu0 0.0
    %2652 = vmatpush1.msra.mxu0 0.0
    %2653 = vmatprep.subr.mxu0 0.0
    %2654 = vmatpush1.msra.mxu0 0.0
    %2655 = vmatprep.subr.mxu0 0.0
    %2656 = vmatpush1.msra.mxu0 0.0
    %2657 = vmatprep.subr.mxu0 0.0
    %2658 = vmatpush1.msra.mxu0 0.0
    %2659 = vmatprep.subr.mxu0 0.0
    %2660 = vmatpush1.msra.mxu0 0.0
    %2661 = vmatprep.subr.mxu0 0.0
    %2662 = vmatpush1.msra.mxu0 0.0
    %2663 = vmatprep.subr.mxu0 0.0
    %2664 = vmatpush1.msra.mxu0 0.0
    %2665 = vmatprep.subr.mxu0 0.0
    %2666 = vmatpush1.msra.mxu0 0.0
    %2667 = vmatprep.subr.mxu0 0.0
    %2668 = vmatpush1.msra.mxu0 0.0
    %2669 = vmatprep.subr.mxu0 0.0
    %2670 = vmatpush1.msra.mxu0 0.0
    %2671 = vmatprep.subr.mxu0 0.0
    %2672 = vmatpush1.msra.mxu0 0.0
    %2673 = vmatprep.subr.mxu0 0.0
    %2674 = vmatpush1.msra.mxu0 0.0
    %2675 = vmatprep.subr.mxu0 0.0
    %2676 = vmatpush1.msra.mxu0 0.0
    %2677 = vmatprep.subr.mxu0 0.0
    %2678 = vmatpush1.msra.mxu0 0.0
    %2679 = vmatprep.subr.mxu0 0.0
    %2680 = vmatpush1.msra.mxu0 0.0
    %2681 = vmatprep.subr.mxu0 0.0
    %2682 = vmatpush1.msra.mxu0 0.0
    %2683 = vmatprep.subr.mxu0 0.0
    %2684 = vmatpush1.msra.mxu0 0.0
    %2685 = vmatprep.subr.mxu0 0.0
    %2686 = vmatpush1.msra.mxu0 0.0
    %2687 = vmatprep.subr.mxu0 0.0
    %2688 = vmatpush1.msra.mxu0 0.0
    %2689 = vmatprep.subr.mxu0 0.0
    %2690 = vmatpush1.msra.mxu0 0.0
    %2691 = vmatprep.subr.mxu0 0.0
    %2692 = vmatpush1.msra.mxu0 0.0
    %2693 = vmatprep.subr.mxu0 0.0
    %2694 = vmatpush1.msra.mxu0 0.0
    %2695 = vmatprep.subr.mxu0 0.0
    %2696 = vmatpush1.msra.mxu0 0.0
    %2697 = vmatprep.subr.mxu0 0.0
    %2698 = vmatpush1.msra.mxu0 0.0
    %2699 = vmatprep.mubr.f32.mxu0 0.0
    %2700 = vmatmul.mubr.f32.gmra.mrb[0].mxu0 %v2630
    %v2701 = vpop.f32.mrb[0].mxu0
    %v2702 = vadd.f32 %v2627, %v2701
    %v2703 = vpop.f32.mrb[0].mxu0
    %2704 = vmatprep.mubr.f32.mxu0 0.0
    %2705 = vmatmul.mubr.f32.gmra.mrb[0].mxu0 %v2633
    %v2706 = vpop.f32.mrb[0].mxu0
    %v2707 = vadd.f32 %v2627, %v2706
    %v2708 = vpop.f32.mrb[0].mxu0
    %2709 = vdwg.mxu0
    %v2710 = vmax.f32 %v2702, 0.0
    %v2711 = vmax.f32 %v2707, 0.0
    %s2712 = scalar_lea.vmem %s11, 128
    %v2713 = vld [vmem:[%s2712] sm:$0xff]
    %v2714 = vld [vmem:[%s2712 + $0x8] sm:$0xff]
    %v2715 = vld [vmem:[%s2712 + $0x10] sm:$0xff]
    %v2716 = vld [vmem:[%s2712 + $0x18] sm:$0xff]
    %v2717 = vld [vmem:[%s2712 + $0x20] sm:$0xff]
    %v2718 = vld [vmem:[%s2712 + $0x28] sm:$0xff]
    %v2719 = vld [vmem:[%s2712 + $0x30] sm:$0xff]
    %v2720 = vld [vmem:[%s2712 + $0x38] sm:$0xff]
    %v2721 = vld [vmem:[%s2712 + $0x40] sm:$0xff]
    %v2722 = vld [vmem:[%s2712 + $0x48] sm:$0xff]
    %v2723 = vld [vmem:[%s2712 + $0x50] sm:$0xff]
    %v2724 = vld [vmem:[%s2712 + $0x58] sm:$0xff]
    %v2725 = vld [vmem:[%s2712 + $0x60] sm:$0xff]
    %v2726 = vld [vmem:[%s2712 + $0x68] sm:$0xff]
    %v2727 = vld [vmem:[%s2712 + $0x70] sm:$0xff]
    %v2728 = vld [vmem:[%s2712 + $0x78] sm:$0xff]
    %s2729 = scalar_lea.vmem %s12, 1
    %v2730 = vld [vmem:[%s2729] sm:$0x1]
    %v2732 = vlaneseq
    %v2733 = vshrl.u32 %v2732, 7
    %v2734 = vsub.s32 0, %v2733
    %v2735 = vrot.slane %v2730, %v2734
    %2737 = vmatprep.subr.mxu0 0.0
    %2738 = vmatpush1.msra.mxu0 %v2713
    %2739 = vmatprep.subr.mxu0 0.0
    %2740 = vmatpush1.msra.mxu0 %v2714
    %2741 = vmatprep.subr.mxu0 0.0
    %2742 = vmatpush1.msra.mxu0 %v2715
    %2743 = vmatprep.subr.mxu0 0.0
    %2744 = vmatpush1.msra.mxu0 %v2716
    %2745 = vmatprep.subr.mxu0 0.0
    %2746 = vmatpush1.msra.mxu0 %v2717
    %2747 = vmatprep.subr.mxu0 0.0
    %2748 = vmatpush1.msra.mxu0 %v2718
    %2749 = vmatprep.subr.mxu0 0.0
    %2750 = vmatpush1.msra.mxu0 %v2719
    %2751 = vmatprep.subr.mxu0 0.0
    %2752 = vmatpush1.msra.mxu0 %v2720
    %2753 = vmatprep.subr.mxu0 0.0
    %2754 = vmatpush1.msra.mxu0 %v2721
    %2755 = vmatprep.subr.mxu0 0.0
    %2756 = vmatpush1.msra.mxu0 %v2722
    %2757 = vmatprep.subr.mxu0 0.0
    %2758 = vmatpush1.msra.mxu0 %v2723
    %2759 = vmatprep.subr.mxu0 0.0
    %2760 = vmatpush1.msra.mxu0 %v2724
    %2761 = vmatprep.subr.mxu0 0.0
    %2762 = vmatpush1.msra.mxu0 %v2725
    %2763 = vmatprep.subr.mxu0 0.0
    %2764 = vmatpush1.msra.mxu0 %v2726
    %2765 = vmatprep.subr.mxu0 0.0
    %2766 = vmatpush1.msra.mxu0 %v2727
    %2767 = vmatprep.subr.mxu0 0.0
    %2768 = vmatpush1.msra.mxu0 %v2728
    %2769 = vmatprep.subr.mxu0 0.0
    %2770 = vmatpush1.msra.mxu0 0.0
    %2771 = vmatprep.subr.mxu0 0.0
    %2772 = vmatpush1.msra.mxu0 0.0
    %2773 = vmatprep.subr.mxu0 0.0
    %2774 = vmatpush1.msra.mxu0 0.0
    %2775 = vmatprep.subr.mxu0 0.0
    %2776 = vmatpush1.msra.mxu0 0.0
    %2777 = vmatprep.subr.mxu0 0.0
    %2778 = vmatpush1.msra.mxu0 0.0
    %2779 = vmatprep.subr.mxu0 0.0
    %2780 = vmatpush1.msra.mxu0 0.0
    %2781 = vmatprep.subr.mxu0 0.0
    %2782 = vmatpush1.msra.mxu0 0.0
    %2783 = vmatprep.subr.mxu0 0.0
    %2784 = vmatpush1.msra.mxu0 0.0
    %2785 = vmatprep.subr.mxu0 0.0
    %2786 = vmatpush1.msra.mxu0 0.0
    %2787 = vmatprep.subr.mxu0 0.0
    %2788 = vmatpush1.msra.mxu0 0.0
    %2789 = vmatprep.subr.mxu0 0.0
    %2790 = vmatpush1.msra.mxu0 0.0
    %2791 = vmatprep.subr.mxu0 0.0
    %2792 = vmatpush1.msra.mxu0 0.0
    %2793 = vmatprep.subr.mxu0 0.0
    %2794 = vmatpush1.msra.mxu0 0.0
    %2795 = vmatprep.subr.mxu0 0.0
    %2796 = vmatpush1.msra.mxu0 0.0
    %2797 = vmatprep.subr.mxu0 0.0
    %2798 = vmatpush1.msra.mxu0 0.0
    %2799 = vmatprep.subr.mxu0 0.0
    %2800 = vmatpush1.msra.mxu0 0.0
    %2801 = vmatprep.mubr.f32.mxu0 0.0
    %2802 = vmatmul.mubr.f32.gmra.mrb[0].mxu0 %v2710
    %v2803 = vpop.f32.mrb[0].mxu0
    %v2804 = vadd.f32 %v2735, %v2803
    %v2805 = vpop.f32.mrb[0].mxu0
    %2806 = vmatprep.mubr.f32.mxu0 0.0
    %2807 = vmatmul.mubr.f32.gmra.mrb[0].mxu0 %v2711
    %v2808 = vpop.f32.mrb[0].mxu0
    %v2809 = vadd.f32 %v2735, %v2808
    %v2810 = vpop.f32.mrb[0].mxu0
    %2811 = vdwg.mxu0
    %v2812 = vadd.f32 %v2568, %v2804
    %v2813 = vadd.f32 %v2569, %v2809
    %s2814 = scalar_lea.vmem %s5, 2
    %v2815 = vld [vmem:[%s2814] sm:$0x1]
    %s2816 = scalar_lea.vmem %s6, 2
    %v2817 = vld [vmem:[%s2816] sm:$0x1]
    %v2818 = vsel %vm66, %v2812, 0.0
    %2819 = vadd.xlane.f32.xlu0 %v2818
    %v2820 = vpop.xlane.xlu0 %2819
    %v2821 = vsel %vm66, %v2813, 0.0
    %2822 = vadd.xlane.f32.xlu0 %v2821
    %v2823 = vpop.xlane.xlu0 %2822
    %v2824 = vmul.f32 %v2820, %v73
    %v2825 = vmul.f32 %v2823, %v73
    %v2826 = vsub.f32 %v2812, %v2824
    %v2827 = vsub.f32 %v2813, %v2825
    %v2828 = vmul.f32 %v2826, %v2826
    %v2829 = vmul.f32 %v2827, %v2827
    %v2830 = vsel %vm66, %v2828, 0.0
    %2831 = vadd.xlane.f32.xlu0 %v2830
    %v2832 = vpop.xlane.xlu0 %2831
    %v2833 = vsel %vm66, %v2829, 0.0
    %2834 = vadd.xlane.f32.xlu0 %v2833
    %v2835 = vpop.xlane.xlu0 %2834
    %v2836 = vmul.f32 %v2832, %v73
    %v2837 = vmul.f32 %v2835, %v73
    %v2838 = vadd.f32 %v2836, 1e-05
    %v2839 = vadd.f32 %v2837, 1e-05
    %v2840 = vrsqrt.pop %v2838
    %v2841 = vrsqrt.pop %v2839
    %v2842 = vmul.f32 %v2826, %v2840
    %v2843 = vmul.f32 %v2827, %v2841
    %v2845 = vlaneseq
    %v2846 = vshrl.u32 %v2845, 7
    %v2847 = vsub.s32 0, %v2846
    %v2848 = vrot.slane %v2815, %v2847
    %v2850 = vmul.f32 %v2842, %v2848
    %v2851 = vmul.f32 %v2843, %v2848
    %v2853 = vlaneseq
    %v2854 = vshrl.u32 %v2853, 7
    %v2855 = vsub.s32 0, %v2854
    %v2856 = vrot.slane %v2817, %v2855
    %v2858 = vadd.f32 %v2850, %v2856
    %v2859 = vadd.f32 %v2851, %v2856
    %s2860 = scalar_lea.vmem %s2, 64
    %v2861 = vld [vmem:[%s2860] sm:$0xff]
    %v2862 = vld [vmem:[%s2860 + $0x8] sm:$0xff]
    %v2863 = vld [vmem:[%s2860 + $0x10] sm:$0xff]
    %v2864 = vld [vmem:[%s2860 + $0x18] sm:$0xff]
    %v2866 = vsel %vm66, %v2858, 0
    %v2869 = vsel %vm66, %v2859, 0
    %2871 = vmatprep.subr.mxu0 0.0
    %2872 = vmatpush1.msra.mxu0 %v2861
    %2873 = vmatprep.subr.mxu0 0.0
    %2874 = vmatpush1.msra.mxu0 %v2862
    %2875 = vmatprep.subr.mxu0 0.0
    %2876 = vmatpush1.msra.mxu0 %v2863
    %2877 = vmatprep.subr.mxu0 0.0
    %2878 = vmatpush1.msra.mxu0 %v2864
    %2879 = vmatprep.subr.mxu0 0.0
    %2880 = vmatpush1.msra.mxu0 0.0
    %2881 = vmatprep.subr.mxu0 0.0
    %2882 = vmatpush1.msra.mxu0 0.0
    %2883 = vmatprep.subr.mxu0 0.0
    %2884 = vmatpush1.msra.mxu0 0.0
    %2885 = vmatprep.subr.mxu0 0.0
    %2886 = vmatpush1.msra.mxu0 0.0
    %2887 = vmatprep.subr.mxu0 0.0
    %2888 = vmatpush1.msra.mxu0 0.0
    %2889 = vmatprep.subr.mxu0 0.0
    %2890 = vmatpush1.msra.mxu0 0.0
    %2891 = vmatprep.subr.mxu0 0.0
    %2892 = vmatpush1.msra.mxu0 0.0
    %2893 = vmatprep.subr.mxu0 0.0
    %2894 = vmatpush1.msra.mxu0 0.0
    %2895 = vmatprep.subr.mxu0 0.0
    %2896 = vmatpush1.msra.mxu0 0.0
    %2897 = vmatprep.subr.mxu0 0.0
    %2898 = vmatpush1.msra.mxu0 0.0
    %2899 = vmatprep.subr.mxu0 0.0
    %2900 = vmatpush1.msra.mxu0 0.0
    %2901 = vmatprep.subr.mxu0 0.0
    %2902 = vmatpush1.msra.mxu0 0.0
    %2903 = vmatprep.subr.mxu0 0.0
    %2904 = vmatpush1.msra.mxu0 0.0
    %2905 = vmatprep.subr.mxu0 0.0
    %2906 = vmatpush1.msra.mxu0 0.0
    %2907 = vmatprep.subr.mxu0 0.0
    %2908 = vmatpush1.msra.mxu0 0.0
    %2909 = vmatprep.subr.mxu0 0.0
    %2910 = vmatpush1.msra.mxu0 0.0
    %2911 = vmatprep.subr.mxu0 0.0
    %2912 = vmatpush1.msra.mxu0 0.0
    %2913 = vmatprep.subr.mxu0 0.0
    %2914 = vmatpush1.msra.mxu0 0.0
    %2915 = vmatprep.subr.mxu0 0.0
    %2916 = vmatpush1.msra.mxu0 0.0
    %2917 = vmatprep.subr.mxu0 0.0
    %2918 = vmatpush1.msra.mxu0 0.0
    %2919 = vmatprep.subr.mxu0 0.0
    %2920 = vmatpush1.msra.mxu0 0.0
    %2921 = vmatprep.subr.mxu0 0.0
    %2922 = vmatpush1.msra.mxu0 0.0
    %2923 = vmatprep.subr.mxu0 0.0
    %2924 = vmatpush1.msra.mxu0 0.0
    %2925 = vmatprep.subr.mxu0 0.0
    %2926 = vmatpush1.msra.mxu0 0.0
    %2927 = vmatprep.subr.mxu0 0.0
    %2928 = vmatpush1.msra.mxu0 0.0
    %2929 = vmatprep.subr.mxu0 0.0
    %2930 = vmatpush1.msra.mxu0 0.0
    %2931 = vmatprep.subr.mxu0 0.0
    %2932 = vmatpush1.msra.mxu0 0.0
    %2933 = vmatprep.subr.mxu0 0.0
    %2934 = vmatpush1.msra.mxu0 0.0
    %2935 = vmatprep.mubr.f32.mxu0 0.0
    %2936 = vmatmul.mubr.f32.gmra.mrb[0].mxu0 %v2866
    %v2937 = vpop.f32.mrb[0].mxu0
    %v2938 = vadd.f32 0.0, %v2937
    %v2939 = vpop.f32.mrb[0].mxu0
    %2940 = vmatprep.mubr.f32.mxu0 0.0
    %2941 = vmatmul.mubr.f32.gmra.mrb[0].mxu0 %v2869
    %v2942 = vpop.f32.mrb[0].mxu0
    %v2943 = vadd.f32 0.0, %v2942
    %v2944 = vpop.f32.mrb[0].mxu0
    %2945 = vdwg.mxu0
    %2948 = vrot.lane.b32.xlu0 %v2938, 96
    %v2949 = vpop.permute.xlu0 %2948
    %2950 = vrot.lane.b32.xlu0 %v2943, 96
    %v2951 = vpop.permute.xlu0 %2950
    %v2952 = vsel %vm201, %v2938, 0
    %v2954 = vsel %vm201, %v2943, 0
    %v2956 = vsel %vm201, %v2949, 0
    %v2958 = vsel %vm201, %v2951, 0
    %2960 = vmatprep.subr.mxu0 0.0
    %2961 = vmatpush1.xpose.msra.mxu0 %v2956
    %2962 = vmatprep.subr.mxu0 0.0
    %2963 = vmatpush1.xpose.msra.mxu0 %v2958
    %2964 = vmatprep.subr.mxu0 0.0
    %2965 = vmatpush1.xpose.msra.mxu0 0.0
    %2966 = vmatprep.subr.mxu0 0.0
    %2967 = vmatpush1.xpose.msra.mxu0 0.0
    %2968 = vmatprep.subr.mxu0 0.0
    %2969 = vmatpush1.xpose.msra.mxu0 0.0
    %2970 = vmatprep.subr.mxu0 0.0
    %2971 = vmatpush1.xpose.msra.mxu0 0.0
    %2972 = vmatprep.subr.mxu0 0.0
    %2973 = vmatpush1.xpose.msra.mxu0 0.0
    %2974 = vmatprep.subr.mxu0 0.0
    %2975 = vmatpush1.xpose.msra.mxu0 0.0
    %2976 = vmatprep.subr.mxu0 0.0
    %2977 = vmatpush1.xpose.msra.mxu0 0.0
    %2978 = vmatprep.subr.mxu0 0.0
    %2979 = vmatpush1.xpose.msra.mxu0 0.0
    %2980 = vmatprep.subr.mxu0 0.0
    %2981 = vmatpush1.xpose.msra.mxu0 0.0
    %2982 = vmatprep.subr.mxu0 0.0
    %2983 = vmatpush1.xpose.msra.mxu0 0.0
    %2984 = vmatprep.subr.mxu0 0.0
    %2985 = vmatpush1.xpose.msra.mxu0 0.0
    %2986 = vmatprep.subr.mxu0 0.0
    %2987 = vmatpush1.xpose.msra.mxu0 0.0
    %2988 = vmatprep.subr.mxu0 0.0
    %2989 = vmatpush1.xpose.msra.mxu0 0.0
    %2990 = vmatprep.subr.mxu0 0.0
    %2991 = vmatpush1.xpose.msra.mxu0 0.0
    %2992 = vmatprep.subr.mxu0 0.0
    %2993 = vmatpush1.xpose.msra.mxu0 0.0
    %2994 = vmatprep.subr.mxu0 0.0
    %2995 = vmatpush1.xpose.msra.mxu0 0.0
    %2996 = vmatprep.subr.mxu0 0.0
    %2997 = vmatpush1.xpose.msra.mxu0 0.0
    %2998 = vmatprep.subr.mxu0 0.0
    %2999 = vmatpush1.xpose.msra.mxu0 0.0
    %3000 = vmatprep.subr.mxu0 0.0
    %3001 = vmatpush1.xpose.msra.mxu0 0.0
    %3002 = vmatprep.subr.mxu0 0.0
    %3003 = vmatpush1.xpose.msra.mxu0 0.0
    %3004 = vmatprep.subr.mxu0 0.0
    %3005 = vmatpush1.xpose.msra.mxu0 0.0
    %3006 = vmatprep.subr.mxu0 0.0
    %3007 = vmatpush1.xpose.msra.mxu0 0.0
    %3008 = vmatprep.subr.mxu0 0.0
    %3009 = vmatpush1.xpose.msra.mxu0 0.0
    %3010 = vmatprep.subr.mxu0 0.0
    %3011 = vmatpush1.xpose.msra.mxu0 0.0
    %3012 = vmatprep.subr.mxu0 0.0
    %3013 = vmatpush1.xpose.msra.mxu0 0.0
    %3014 = vmatprep.subr.mxu0 0.0
    %3015 = vmatpush1.xpose.msra.mxu0 0.0
    %3016 = vmatprep.subr.mxu0 0.0
    %3017 = vmatpush1.xpose.msra.mxu0 0.0
    %3018 = vmatprep.subr.mxu0 0.0
    %3019 = vmatpush1.xpose.msra.mxu0 0.0
    %3020 = vmatprep.subr.mxu0 0.0
    %3021 = vmatpush1.xpose.msra.mxu0 0.0
    %3022 = vmatprep.subr.mxu0 0.0
    %3023 = vmatpush1.xpose.msra.mxu0 0.0
    %3024 = vmatprep.mubr.f32.mxu0 0.0
    %3025 = vmatmul.mubr.f32.gmra.mrb[0].mxu0 %v2952
    %v3026 = vpop.f32.mrb[0].mxu0
    %v3027 = vadd.f32 0.0, %v3026
    %v3028 = vpop.f32.mrb[0].mxu0
    %3029 = vmatprep.mubr.f32.mxu0 0.0
    %3030 = vmatmul.mubr.f32.gmra.mrb[0].mxu0 %v2954
    %v3031 = vpop.f32.mrb[0].mxu0
    %v3032 = vadd.f32 0.0, %v3031
    %v3033 = vpop.f32.mrb[0].mxu0
    %3034 = vdwg.mxu0
    %v3035 = vmul.f32 %v3027, 0.35355338
    %v3036 = vmul.f32 %v3032, 0.35355338
    %v3037 = vadd.f32 %v3035, %v62
    %v3038 = vadd.f32 %v3036, %v63
    %v3039 = vsel %vm289, %v3037, -inf
    %3040 = vmax.xlane.f32.xlu0 %v3039
    %v3041 = vpop.xlane.xlu0 %3040
    %v3042 = vsel %vm289, %v3038, -inf
    %3043 = vmax.xlane.f32.xlu0 %v3042
    %v3044 = vpop.xlane.xlu0 %3043
    %v3045 = vsub.f32 %v3037, %v3041
    %v3046 = vsub.f32 %v3038, %v3044
    %v3047 = vmul.f32 %v3045, 1.442695
    %v3048 = vpow.pop %v3047
    %v3049 = vmul.f32 %v3046, 1.442695
    %v3050 = vpow.pop %v3049
    %v3051 = vsel %vm289, %v3048, 0.0
    %3052 = vadd.xlane.f32.xlu0 %v3051
    %v3053 = vpop.xlane.xlu0 %3052
    %v3054 = vsel %vm289, %v3050, 0.0
    %3055 = vadd.xlane.f32.xlu0 %v3054
    %v3056 = vpop.xlane.xlu0 %3055
    %v3057 = vrcp.pop %v3053
    %v3058 = vmul.f32 %v3048, %v3057
    %v3059 = vrcp.pop %v3056
    %v3060 = vmul.f32 %v3050, %v3059
    %3063 = vrot.lane.b32.xlu0 %v3058, 120
    %v3064 = vpop.permute.xlu0 %3063
    %3065 = vrot.lane.b32.xlu0 %v3060, 120
    %v3066 = vpop.permute.xlu0 %3065
    %v3069 = vadd.f32 %v3058, %v3064
    %v3070 = vadd.f32 %v3060, %v3066
    %3071 = vrot.lane.b32.xlu0 %v2938, 64
    %v3072 = vpop.permute.xlu0 %3071
    %3073 = vrot.lane.b32.xlu0 %v2943, 64
    %v3074 = vpop.permute.xlu0 %3073
    %v3077 = vsel %vm289, %v3058, 0
    %v3079 = vsel %vm289, %v3060, 0
    %3081 = vmatprep.subr.mxu0 0.0
    %3082 = vmatpush1.msra.mxu0 %v3072
    %3083 = vmatprep.subr.mxu0 0.0
    %3084 = vmatpush1.msra.mxu0 %v3074
    %3085 = vmatprep.subr.mxu0 0.0
    %3086 = vmatpush1.msra.mxu0 0.0
    %3087 = vmatprep.subr.mxu0 0.0
    %3088 = vmatpush1.msra.mxu0 0.0
    %3089 = vmatprep.subr.mxu0 0.0
    %3090 = vmatpush1.msra.mxu0 0.0
    %3091 = vmatprep.subr.mxu0 0.0
    %3092 = vmatpush1.msra.mxu0 0.0
    %3093 = vmatprep.subr.mxu0 0.0
    %3094 = vmatpush1.msra.mxu0 0.0
    %3095 = vmatprep.subr.mxu0 0.0
    %3096 = vmatpush1.msra.mxu0 0.0
    %3097 = vmatprep.subr.mxu0 0.0
    %3098 = vmatpush1.msra.mxu0 0.0
    %3099 = vmatprep.subr.mxu0 0.0
    %3100 = vmatpush1.msra.mxu0 0.0
    %3101 = vmatprep.subr.mxu0 0.0
    %3102 = vmatpush1.msra.mxu0 0.0
    %3103 = vmatprep.subr.mxu0 0.0
    %3104 = vmatpush1.msra.mxu0 0.0
    %3105 = vmatprep.subr.mxu0 0.0
    %3106 = vmatpush1.msra.mxu0 0.0
    %3107 = vmatprep.subr.mxu0 0.0
    %3108 = vmatpush1.msra.mxu0 0.0
    %3109 = vmatprep.subr.mxu0 0.0
    %3110 = vmatpush1.msra.mxu0 0.0
    %3111 = vmatprep.subr.mxu0 0.0
    %3112 = vmatpush1.msra.mxu0 0.0
    %3113 = vmatprep.subr.mxu0 0.0
    %3114 = vmatpush1.msra.mxu0 0.0
    %3115 = vmatprep.subr.mxu0 0.0
    %3116 = vmatpush1.msra.mxu0 0.0
    %3117 = vmatprep.subr.mxu0 0.0
    %3118 = vmatpush1.msra.mxu0 0.0
    %3119 = vmatprep.subr.mxu0 0.0
    %3120 = vmatpush1.msra.mxu0 0.0
    %3121 = vmatprep.subr.mxu0 0.0
    %3122 = vmatpush1.msra.mxu0 0.0
    %3123 = vmatprep.subr.mxu0 0.0
    %3124 = vmatpush1.msra.mxu0 0.0
    %3125 = vmatprep.subr.mxu0 0.0
    %3126 = vmatpush1.msra.mxu0 0.0
    %3127 = vmatprep.subr.mxu0 0.0
    %3128 = vmatpush1.msra.mxu0 0.0
    %3129 = vmatprep.subr.mxu0 0.0
    %3130 = vmatpush1.msra.mxu0 0.0
    %3131 = vmatprep.subr.mxu0 0.0
    %3132 = vmatpush1.msra.mxu0 0.0
    %3133 = vmatprep.subr.mxu0 0.0
    %3134 = vmatpush1.msra.mxu0 0.0
    %3135 = vmatprep.subr.mxu0 0.0
    %3136 = vmatpush1.msra.mxu0 0.0
    %3137 = vmatprep.subr.mxu0 0.0
    %3138 = vmatpush1.msra.mxu0 0.0
    %3139 = vmatprep.subr.mxu0 0.0
    %3140 = vmatpush1.msra.mxu0 0.0
    %3141 = vmatprep.subr.mxu0 0.0
    %3142 = vmatpush1.msra.mxu0 0.0
    %3143 = vmatprep.subr.mxu0 0.0
    %3144 = vmatpush1.msra.mxu0 0.0
    %3145 = vmatprep.mubr.f32.mxu0 0.0
    %3146 = vmatmul.mubr.f32.gmra.mrb[0].mxu0 %v3077
    %v3147 = vpop.f32.mrb[0].mxu0
    %v3148 = vadd.f32 0.0, %v3147
    %v3149 = vpop.f32.mrb[0].mxu0
    %3150 = vmatprep.mubr.f32.mxu0 0.0
    %3151 = vmatmul.mubr.f32.gmra.mrb[0].mxu0 %v3079
    %v3152 = vpop.f32.mrb[0].mxu0
    %v3153 = vadd.f32 0.0, %v3152
    %v3154 = vpop.f32.mrb[0].mxu0
    %3155 = vdwg.mxu0
    %3156 = vrot.lane.b32.xlu0 %v2938, 120
    %v3157 = vpop.permute.xlu0 %3156
    %3158 = vrot.lane.b32.xlu0 %v2943, 120
    %v3159 = vpop.permute.xlu0 %3158
    %3160 = vrot.lane.b32.xlu0 %v2938, 88
    %v3161 = vpop.permute.xlu0 %3160
    %3162 = vrot.lane.b32.xlu0 %v2943, 88
    %v3163 = vpop.permute.xlu0 %3162
    %v3164 = vsel %vm201, %v3157, 0
    %v3166 = vsel %vm201, %v3159, 0
    %v3168 = vsel %vm201, %v3161, 0
    %v3170 = vsel %vm201, %v3163, 0
    %3172 = vmatprep.subr.mxu0 0.0
    %3173 = vmatpush1.xpose.msra.mxu0 %v3168
    %3174 = vmatprep.subr.mxu0 0.0
    %3175 = vmatpush1.xpose.msra.mxu0 %v3170
    %3176 = vmatprep.subr.mxu0 0.0
    %3177 = vmatpush1.xpose.msra.mxu0 0.0
    %3178 = vmatprep.subr.mxu0 0.0
    %3179 = vmatpush1.xpose.msra.mxu0 0.0
    %3180 = vmatprep.subr.mxu0 0.0
    %3181 = vmatpush1.xpose.msra.mxu0 0.0
    %3182 = vmatprep.subr.mxu0 0.0
    %3183 = vmatpush1.xpose.msra.mxu0 0.0
    %3184 = vmatprep.subr.mxu0 0.0
    %3185 = vmatpush1.xpose.msra.mxu0 0.0
    %3186 = vmatprep.subr.mxu0 0.0
    %3187 = vmatpush1.xpose.msra.mxu0 0.0
    %3188 = vmatprep.subr.mxu0 0.0
    %3189 = vmatpush1.xpose.msra.mxu0 0.0
    %3190 = vmatprep.subr.mxu0 0.0
    %3191 = vmatpush1.xpose.msra.mxu0 0.0
    %3192 = vmatprep.subr.mxu0 0.0
    %3193 = vmatpush1.xpose.msra.mxu0 0.0
    %3194 = vmatprep.subr.mxu0 0.0
    %3195 = vmatpush1.xpose.msra.mxu0 0.0
    %3196 = vmatprep.subr.mxu0 0.0
    %3197 = vmatpush1.xpose.msra.mxu0 0.0
    %3198 = vmatprep.subr.mxu0 0.0
    %3199 = vmatpush1.xpose.msra.mxu0 0.0
    %3200 = vmatprep.subr.mxu0 0.0
    %3201 = vmatpush1.xpose.msra.mxu0 0.0
    %3202 = vmatprep.subr.mxu0 0.0
    %3203 = vmatpush1.xpose.msra.mxu0 0.0
    %3204 = vmatprep.subr.mxu0 0.0
    %3205 = vmatpush1.xpose.msra.mxu0 0.0
    %3206 = vmatprep.subr.mxu0 0.0
    %3207 = vmatpush1.xpose.msra.mxu0 0.0
    %3208 = vmatprep.subr.mxu0 0.0
    %3209 = vmatpush1.xpose.msra.mxu0 0.0
    %3210 = vmatprep.subr.mxu0 0.0
    %3211 = vmatpush1.xpose.msra.mxu0 0.0
    %3212 = vmatprep.subr.mxu0 0.0
    %3213 = vmatpush1.xpose.msra.mxu0 0.0
    %3214 = vmatprep.subr.mxu0 0.0
    %3215 = vmatpush1.xpose.msra.mxu0 0.0
    %3216 = vmatprep.subr.mxu0 0.0
    %3217 = vmatpush1.xpose.msra.mxu0 0.0
    %3218 = vmatprep.subr.mxu0 0.0
    %3219 = vmatpush1.xpose.msra.mxu0 0.0
    %3220 = vmatprep.subr.mxu0 0.0
    %3221 = vmatpush1.xpose.msra.mxu0 0.0
    %3222 = vmatprep.subr.mxu0 0.0
    %3223 = vmatpush1.xpose.msra.mxu0 0.0
    %3224 = vmatprep.subr.mxu0 0.0
    %3225 = vmatpush1.xpose.msra.mxu0 0.0
    %3226 = vmatprep.subr.mxu0 0.0
    %3227 = vmatpush1.xpose.msra.mxu0 0.0
    %3228 = vmatprep.subr.mxu0 0.0
    %3229 = vmatpush1.xpose.msra.mxu0 0.0
    %3230 = vmatprep.subr.mxu0 0.0
    %3231 = vmatpush1.xpose.msra.mxu0 0.0
    %3232 = vmatprep.subr.mxu0 0.0
    %3233 = vmatpush1.xpose.msra.mxu0 0.0
    %3234 = vmatprep.subr.mxu0 0.0
    %3235 = vmatpush1.xpose.msra.mxu0 0.0
    %3236 = vmatprep.mubr.f32.mxu0 0.0
    %3237 = vmatmul.mubr.f32.gmra.mrb[0].mxu0 %v3164
    %v3238 = vpop.f32.mrb[0].mxu0
    %v3239 = vadd.f32 0.0, %v3238
    %v3240 = vpop.f32.mrb[0].mxu0
    %3241 = vmatprep.mubr.f32.mxu0 0.0
    %3242 = vmatmul.mubr.f32.gmra.mrb[0].mxu0 %v3166
    %v3243 = vpop.f32.mrb[0].mxu0
    %v3244 = vadd.f32 0.0, %v3243
    %v3245 = vpop.f32.mrb[0].mxu0
    %3246 = vdwg.mxu0
    %v3247 = vmul.f32 %v3239, 0.35355338
    %v3248 = vmul.f32 %v3244, 0.35355338
    %v3249 = vadd.f32 %v3247, %v62
    %v3250 = vadd.f32 %v3248, %v63
    %v3251 = vsel %vm289, %v3249, -inf
    %3252 = vmax.xlane.f32.xlu0 %v3251
    %v3253 = vpop.xlane.xlu0 %3252
    %v3254 = vsel %vm289, %v3250, -inf
    %3255 = vmax.xlane.f32.xlu0 %v3254
    %v3256 = vpop.xlane.xlu0 %3255
    %v3257 = vsub.f32 %v3249, %v3253
    %v3258 = vsub.f32 %v3250, %v3256
    %v3259 = vmul.f32 %v3257, 1.442695
    %v3260 = vpow.pop %v3259
    %v3261 = vmul.f32 %v3258, 1.442695
    %v3262 = vpow.pop %v3261
    %v3263 = vsel %vm289, %v3260, 0.0
    %3264 = vadd.xlane.f32.xlu0 %v3263
    %v3265 = vpop.xlane.xlu0 %3264
    %v3266 = vsel %vm289, %v3262, 0.0
    %3267 = vadd.xlane.f32.xlu0 %v3266
    %v3268 = vpop.xlane.xlu0 %3267
    %v3269 = vrcp.pop %v3265
    %v3270 = vmul.f32 %v3260, %v3269
    %v3271 = vrcp.pop %v3268
    %v3272 = vmul.f32 %v3262, %v3271
    %3275 = vrot.lane.b32.xlu0 %v3270, 120
    %v3276 = vpop.permute.xlu0 %3275
    %3277 = vrot.lane.b32.xlu0 %v3272, 120
    %v3278 = vpop.permute.xlu0 %3277
    %v3281 = vadd.f32 %v3270, %v3276
    %v3282 = vadd.f32 %v3272, %v3278
    %3283 = vrot.lane.b32.xlu0 %v2938, 56
    %v3284 = vpop.permute.xlu0 %3283
    %3285 = vrot.lane.b32.xlu0 %v2943, 56
    %v3286 = vpop.permute.xlu0 %3285
    %v3289 = vsel %vm289, %v3270, 0
    %v3291 = vsel %vm289, %v3272, 0
    %3293 = vmatprep.subr.mxu0 0.0
    %3294 = vmatpush1.msra.mxu0 %v3284
    %3295 = vmatprep.subr.mxu0 0.0
    %3296 = vmatpush1.msra.mxu0 %v3286
    %3297 = vmatprep.subr.mxu0 0.0
    %3298 = vmatpush1.msra.mxu0 0.0
    %3299 = vmatprep.subr.mxu0 0.0
    %3300 = vmatpush1.msra.mxu0 0.0
    %3301 = vmatprep.subr.mxu0 0.0
    %3302 = vmatpush1.msra.mxu0 0.0
    %3303 = vmatprep.subr.mxu0 0.0
    %3304 = vmatpush1.msra.mxu0 0.0
    %3305 = vmatprep.subr.mxu0 0.0
    %3306 = vmatpush1.msra.mxu0 0.0
    %3307 = vmatprep.subr.mxu0 0.0
    %3308 = vmatpush1.msra.mxu0 0.0
    %3309 = vmatprep.subr.mxu0 0.0
    %3310 = vmatpush1.msra.mxu0 0.0
    %3311 = vmatprep.subr.mxu0 0.0
    %3312 = vmatpush1.msra.mxu0 0.0
    %3313 = vmatprep.subr.mxu0 0.0
    %3314 = vmatpush1.msra.mxu0 0.0
    %3315 = vmatprep.subr.mxu0 0.0
    %3316 = vmatpush1.msra.mxu0 0.0
    %3317 = vmatprep.subr.mxu0 0.0
    %3318 = vmatpush1.msra.mxu0 0.0
    %3319 = vmatprep.subr.mxu0 0.0
    %3320 = vmatpush1.msra.mxu0 0.0
    %3321 = vmatprep.subr.mxu0 0.0
    %3322 = vmatpush1.msra.mxu0 0.0
    %3323 = vmatprep.subr.mxu0 0.0
    %3324 = vmatpush1.msra.mxu0 0.0
    %3325 = vmatprep.subr.mxu0 0.0
    %3326 = vmatpush1.msra.mxu0 0.0
    %3327 = vmatprep.subr.mxu0 0.0
    %3328 = vmatpush1.msra.mxu0 0.0
    %3329 = vmatprep.subr.mxu0 0.0
    %3330 = vmatpush1.msra.mxu0 0.0
    %3331 = vmatprep.subr.mxu0 0.0
    %3332 = vmatpush1.msra.mxu0 0.0
    %3333 = vmatprep.subr.mxu0 0.0
    %3334 = vmatpush1.msra.mxu0 0.0
    %3335 = vmatprep.subr.mxu0 0.0
    %3336 = vmatpush1.msra.mxu0 0.0
    %3337 = vmatprep.subr.mxu0 0.0
    %3338 = vmatpush1.msra.mxu0 0.0
    %3339 = vmatprep.subr.mxu0 0.0
    %3340 = vmatpush1.msra.mxu0 0.0
    %3341 = vmatprep.subr.mxu0 0.0
    %3342 = vmatpush1.msra.mxu0 0.0
    %3343 = vmatprep.subr.mxu0 0.0
    %3344 = vmatpush1.msra.mxu0 0.0
    %3345 = vmatprep.subr.mxu0 0.0
    %3346 = vmatpush1.msra.mxu0 0.0
    %3347 = vmatprep.subr.mxu0 0.0
    %3348 = vmatpush1.msra.mxu0 0.0
    %3349 = vmatprep.subr.mxu0 0.0
    %3350 = vmatpush1.msra.mxu0 0.0
    %3351 = vmatprep.subr.mxu0 0.0
    %3352 = vmatpush1.msra.mxu0 0.0
    %3353 = vmatprep.subr.mxu0 0.0
    %3354 = vmatpush1.msra.mxu0 0.0
    %3355 = vmatprep.subr.mxu0 0.0
    %3356 = vmatpush1.msra.mxu0 0.0
    %3357 = vmatprep.mubr.f32.mxu0 0.0
    %3358 = vmatmul.mubr.f32.gmra.mrb[0].mxu0 %v3289
    %v3359 = vpop.f32.mrb[0].mxu0
    %v3360 = vadd.f32 0.0, %v3359
    %v3361 = vpop.f32.mrb[0].mxu0
    %3362 = vmatprep.mubr.f32.mxu0 0.0
    %3363 = vmatmul.mubr.f32.gmra.mrb[0].mxu0 %v3291
    %v3364 = vpop.f32.mrb[0].mxu0
    %v3365 = vadd.f32 0.0, %v3364
    %v3366 = vpop.f32.mrb[0].mxu0
    %3367 = vdwg.mxu0
    %3368 = vrot.lane.b32.xlu0 %v2938, 112
    %v3369 = vpop.permute.xlu0 %3368
    %3370 = vrot.lane.b32.xlu0 %v2943, 112
    %v3371 = vpop.permute.xlu0 %3370
    %3372 = vrot.lane.b32.xlu0 %v2938, 80
    %v3373 = vpop.permute.xlu0 %3372
    %3374 = vrot.lane.b32.xlu0 %v2943, 80
    %v3375 = vpop.permute.xlu0 %3374
    %v3376 = vsel %vm201, %v3369, 0
    %v3378 = vsel %vm201, %v3371, 0
    %v3380 = vsel %vm201, %v3373, 0
    %v3382 = vsel %vm201, %v3375, 0
    %3384 = vmatprep.subr.mxu0 0.0
    %3385 = vmatpush1.xpose.msra.mxu0 %v3380
    %3386 = vmatprep.subr.mxu0 0.0
    %3387 = vmatpush1.xpose.msra.mxu0 %v3382
    %3388 = vmatprep.subr.mxu0 0.0
    %3389 = vmatpush1.xpose.msra.mxu0 0.0
    %3390 = vmatprep.subr.mxu0 0.0
    %3391 = vmatpush1.xpose.msra.mxu0 0.0
    %3392 = vmatprep.subr.mxu0 0.0
    %3393 = vmatpush1.xpose.msra.mxu0 0.0
    %3394 = vmatprep.subr.mxu0 0.0
    %3395 = vmatpush1.xpose.msra.mxu0 0.0
    %3396 = vmatprep.subr.mxu0 0.0
    %3397 = vmatpush1.xpose.msra.mxu0 0.0
    %3398 = vmatprep.subr.mxu0 0.0
    %3399 = vmatpush1.xpose.msra.mxu0 0.0
    %3400 = vmatprep.subr.mxu0 0.0
    %3401 = vmatpush1.xpose.msra.mxu0 0.0
    %3402 = vmatprep.subr.mxu0 0.0
    %3403 = vmatpush1.xpose.msra.mxu0 0.0
    %3404 = vmatprep.subr.mxu0 0.0
    %3405 = vmatpush1.xpose.msra.mxu0 0.0
    %3406 = vmatprep.subr.mxu0 0.0
    %3407 = vmatpush1.xpose.msra.mxu0 0.0
    %3408 = vmatprep.subr.mxu0 0.0
    %3409 = vmatpush1.xpose.msra.mxu0 0.0
    %3410 = vmatprep.subr.mxu0 0.0
    %3411 = vmatpush1.xpose.msra.mxu0 0.0
    %3412 = vmatprep.subr.mxu0 0.0
    %3413 = vmatpush1.xpose.msra.mxu0 0.0
    %3414 = vmatprep.subr.mxu0 0.0
    %3415 = vmatpush1.xpose.msra.mxu0 0.0
    %3416 = vmatprep.subr.mxu0 0.0
    %3417 = vmatpush1.xpose.msra.mxu0 0.0
    %3418 = vmatprep.subr.mxu0 0.0
    %3419 = vmatpush1.xpose.msra.mxu0 0.0
    %3420 = vmatprep.subr.mxu0 0.0
    %3421 = vmatpush1.xpose.msra.mxu0 0.0
    %3422 = vmatprep.subr.mxu0 0.0
    %3423 = vmatpush1.xpose.msra.mxu0 0.0
    %3424 = vmatprep.subr.mxu0 0.0
    %3425 = vmatpush1.xpose.msra.mxu0 0.0
    %3426 = vmatprep.subr.mxu0 0.0
    %3427 = vmatpush1.xpose.msra.mxu0 0.0
    %3428 = vmatprep.subr.mxu0 0.0
    %3429 = vmatpush1.xpose.msra.mxu0 0.0
    %3430 = vmatprep.subr.mxu0 0.0
    %3431 = vmatpush1.xpose.msra.mxu0 0.0
    %3432 = vmatprep.subr.mxu0 0.0
    %3433 = vmatpush1.xpose.msra.mxu0 0.0
    %3434 = vmatprep.subr.mxu0 0.0
    %3435 = vmatpush1.xpose.msra.mxu0 0.0
    %3436 = vmatprep.subr.mxu0 0.0
    %3437 = vmatpush1.xpose.msra.mxu0 0.0
    %3438 = vmatprep.subr.mxu0 0.0
    %3439 = vmatpush1.xpose.msra.mxu0 0.0
    %3440 = vmatprep.subr.mxu0 0.0
    %3441 = vmatpush1.xpose.msra.mxu0 0.0
    %3442 = vmatprep.subr.mxu0 0.0
    %3443 = vmatpush1.xpose.msra.mxu0 0.0
    %3444 = vmatprep.subr.mxu0 0.0
    %3445 = vmatpush1.xpose.msra.mxu0 0.0
    %3446 = vmatprep.subr.mxu0 0.0
    %3447 = vmatpush1.xpose.msra.mxu0 0.0
    %3448 = vmatprep.mubr.f32.mxu0 0.0
    %3449 = vmatmul.mubr.f32.gmra.mrb[0].mxu0 %v3376
    %v3450 = vpop.f32.mrb[0].mxu0
    %v3451 = vadd.f32 0.0, %v3450
    %v3452 = vpop.f32.mrb[0].mxu0
    %3453 = vmatprep.mubr.f32.mxu0 0.0
    %3454 = vmatmul.mubr.f32.gmra.mrb[0].mxu0 %v3378
    %v3455 = vpop.f32.mrb[0].mxu0
    %v3456 = vadd.f32 0.0, %v3455
    %v3457 = vpop.f32.mrb[0].mxu0
    %3458 = vdwg.mxu0
    %v3459 = vmul.f32 %v3451, 0.35355338
    %v3460 = vmul.f32 %v3456, 0.35355338
    %v3461 = vadd.f32 %v3459, %v62
    %v3462 = vadd.f32 %v3460, %v63
    %v3463 = vsel %vm289, %v3461, -inf
    %3464 = vmax.xlane.f32.xlu0 %v3463
    %v3465 = vpop.xlane.xlu0 %3464
    %v3466 = vsel %vm289, %v3462, -inf
    %3467 = vmax.xlane.f32.xlu0 %v3466
    %v3468 = vpop.xlane.xlu0 %3467
    %v3469 = vsub.f32 %v3461, %v3465
    %v3470 = vsub.f32 %v3462, %v3468
    %v3471 = vmul.f32 %v3469, 1.442695
    %v3472 = vpow.pop %v3471
    %v3473 = vmul.f32 %v3470, 1.442695
    %v3474 = vpow.pop %v3473
    %v3475 = vsel %vm289, %v3472, 0.0
    %3476 = vadd.xlane.f32.xlu0 %v3475
    %v3477 = vpop.xlane.xlu0 %3476
    %v3478 = vsel %vm289, %v3474, 0.0
    %3479 = vadd.xlane.f32.xlu0 %v3478
    %v3480 = vpop.xlane.xlu0 %3479
    %v3481 = vrcp.pop %v3477
    %v3482 = vmul.f32 %v3472, %v3481
    %v3483 = vrcp.pop %v3480
    %v3484 = vmul.f32 %v3474, %v3483
    %3487 = vrot.lane.b32.xlu0 %v3482, 120
    %v3488 = vpop.permute.xlu0 %3487
    %3489 = vrot.lane.b32.xlu0 %v3484, 120
    %v3490 = vpop.permute.xlu0 %3489
    %v3493 = vadd.f32 %v3482, %v3488
    %v3494 = vadd.f32 %v3484, %v3490
    %3495 = vrot.lane.b32.xlu0 %v2938, 48
    %v3496 = vpop.permute.xlu0 %3495
    %3497 = vrot.lane.b32.xlu0 %v2943, 48
    %v3498 = vpop.permute.xlu0 %3497
    %v3501 = vsel %vm289, %v3482, 0
    %v3503 = vsel %vm289, %v3484, 0
    %3505 = vmatprep.subr.mxu0 0.0
    %3506 = vmatpush1.msra.mxu0 %v3496
    %3507 = vmatprep.subr.mxu0 0.0
    %3508 = vmatpush1.msra.mxu0 %v3498
    %3509 = vmatprep.subr.mxu0 0.0
    %3510 = vmatpush1.msra.mxu0 0.0
    %3511 = vmatprep.subr.mxu0 0.0
    %3512 = vmatpush1.msra.mxu0 0.0
    %3513 = vmatprep.subr.mxu0 0.0
    %3514 = vmatpush1.msra.mxu0 0.0
    %3515 = vmatprep.subr.mxu0 0.0
    %3516 = vmatpush1.msra.mxu0 0.0
    %3517 = vmatprep.subr.mxu0 0.0
    %3518 = vmatpush1.msra.mxu0 0.0
    %3519 = vmatprep.subr.mxu0 0.0
    %3520 = vmatpush1.msra.mxu0 0.0
    %3521 = vmatprep.subr.mxu0 0.0
    %3522 = vmatpush1.msra.mxu0 0.0
    %3523 = vmatprep.subr.mxu0 0.0
    %3524 = vmatpush1.msra.mxu0 0.0
    %3525 = vmatprep.subr.mxu0 0.0
    %3526 = vmatpush1.msra.mxu0 0.0
    %3527 = vmatprep.subr.mxu0 0.0
    %3528 = vmatpush1.msra.mxu0 0.0
    %3529 = vmatprep.subr.mxu0 0.0
    %3530 = vmatpush1.msra.mxu0 0.0
    %3531 = vmatprep.subr.mxu0 0.0
    %3532 = vmatpush1.msra.mxu0 0.0
    %3533 = vmatprep.subr.mxu0 0.0
    %3534 = vmatpush1.msra.mxu0 0.0
    %3535 = vmatprep.subr.mxu0 0.0
    %3536 = vmatpush1.msra.mxu0 0.0
    %3537 = vmatprep.subr.mxu0 0.0
    %3538 = vmatpush1.msra.mxu0 0.0
    %3539 = vmatprep.subr.mxu0 0.0
    %3540 = vmatpush1.msra.mxu0 0.0
    %3541 = vmatprep.subr.mxu0 0.0
    %3542 = vmatpush1.msra.mxu0 0.0
    %3543 = vmatprep.subr.mxu0 0.0
    %3544 = vmatpush1.msra.mxu0 0.0
    %3545 = vmatprep.subr.mxu0 0.0
    %3546 = vmatpush1.msra.mxu0 0.0
    %3547 = vmatprep.subr.mxu0 0.0
    %3548 = vmatpush1.msra.mxu0 0.0
    %3549 = vmatprep.subr.mxu0 0.0
    %3550 = vmatpush1.msra.mxu0 0.0
    %3551 = vmatprep.subr.mxu0 0.0
    %3552 = vmatpush1.msra.mxu0 0.0
    %3553 = vmatprep.subr.mxu0 0.0
    %3554 = vmatpush1.msra.mxu0 0.0
    %3555 = vmatprep.subr.mxu0 0.0
    %3556 = vmatpush1.msra.mxu0 0.0
    %3557 = vmatprep.subr.mxu0 0.0
    %3558 = vmatpush1.msra.mxu0 0.0
    %3559 = vmatprep.subr.mxu0 0.0
    %3560 = vmatpush1.msra.mxu0 0.0
    %3561 = vmatprep.subr.mxu0 0.0
    %3562 = vmatpush1.msra.mxu0 0.0
    %3563 = vmatprep.subr.mxu0 0.0
    %3564 = vmatpush1.msra.mxu0 0.0
    %3565 = vmatprep.subr.mxu0 0.0
    %3566 = vmatpush1.msra.mxu0 0.0
    %3567 = vmatprep.subr.mxu0 0.0
    %3568 = vmatpush1.msra.mxu0 0.0
    %3569 = vmatprep.mubr.f32.mxu0 0.0
    %3570 = vmatmul.mubr.f32.gmra.mrb[0].mxu0 %v3501
    %v3571 = vpop.f32.mrb[0].mxu0
    %v3572 = vadd.f32 0.0, %v3571
    %v3573 = vpop.f32.mrb[0].mxu0
    %3574 = vmatprep.mubr.f32.mxu0 0.0
    %3575 = vmatmul.mubr.f32.gmra.mrb[0].mxu0 %v3503
    %v3576 = vpop.f32.mrb[0].mxu0
    %v3577 = vadd.f32 0.0, %v3576
    %v3578 = vpop.f32.mrb[0].mxu0
    %3579 = vdwg.mxu0
    %3580 = vrot.lane.b32.xlu0 %v2938, 104
    %v3581 = vpop.permute.xlu0 %3580
    %3582 = vrot.lane.b32.xlu0 %v2943, 104
    %v3583 = vpop.permute.xlu0 %3582
    %3584 = vrot.lane.b32.xlu0 %v2938, 72
    %v3585 = vpop.permute.xlu0 %3584
    %3586 = vrot.lane.b32.xlu0 %v2943, 72
    %v3587 = vpop.permute.xlu0 %3586
    %v3588 = vsel %vm201, %v3581, 0
    %v3590 = vsel %vm201, %v3583, 0
    %v3592 = vsel %vm201, %v3585, 0
    %v3594 = vsel %vm201, %v3587, 0
    %3596 = vmatprep.subr.mxu0 0.0
    %3597 = vmatpush1.xpose.msra.mxu0 %v3592
    %3598 = vmatprep.subr.mxu0 0.0
    %3599 = vmatpush1.xpose.msra.mxu0 %v3594
    %3600 = vmatprep.subr.mxu0 0.0
    %3601 = vmatpush1.xpose.msra.mxu0 0.0
    %3602 = vmatprep.subr.mxu0 0.0
    %3603 = vmatpush1.xpose.msra.mxu0 0.0
    %3604 = vmatprep.subr.mxu0 0.0
    %3605 = vmatpush1.xpose.msra.mxu0 0.0
    %3606 = vmatprep.subr.mxu0 0.0
    %3607 = vmatpush1.xpose.msra.mxu0 0.0
    %3608 = vmatprep.subr.mxu0 0.0
    %3609 = vmatpush1.xpose.msra.mxu0 0.0
    %3610 = vmatprep.subr.mxu0 0.0
    %3611 = vmatpush1.xpose.msra.mxu0 0.0
    %3612 = vmatprep.subr.mxu0 0.0
    %3613 = vmatpush1.xpose.msra.mxu0 0.0
    %3614 = vmatprep.subr.mxu0 0.0
    %3615 = vmatpush1.xpose.msra.mxu0 0.0
    %3616 = vmatprep.subr.mxu0 0.0
    %3617 = vmatpush1.xpose.msra.mxu0 0.0
    %3618 = vmatprep.subr.mxu0 0.0
    %3619 = vmatpush1.xpose.msra.mxu0 0.0
    %3620 = vmatprep.subr.mxu0 0.0
    %3621 = vmatpush1.xpose.msra.mxu0 0.0
    %3622 = vmatprep.subr.mxu0 0.0
    %3623 = vmatpush1.xpose.msra.mxu0 0.0
    %3624 = vmatprep.subr.mxu0 0.0
    %3625 = vmatpush1.xpose.msra.mxu0 0.0
    %3626 = vmatprep.subr.mxu0 0.0
    %3627 = vmatpush1.xpose.msra.mxu0 0.0
    %3628 = vmatprep.subr.mxu0 0.0
    %3629 = vmatpush1.xpose.msra.mxu0 0.0
    %3630 = vmatprep.subr.mxu0 0.0
    %3631 = vmatpush1.xpose.msra.mxu0 0.0
    %3632 = vmatprep.subr.mxu0 0.0
    %3633 = vmatpush1.xpose.msra.mxu0 0.0
    %3634 = vmatprep.subr.mxu0 0.0
    %3635 = vmatpush1.xpose.msra.mxu0 0.0
    %3636 = vmatprep.subr.mxu0 0.0
    %3637 = vmatpush1.xpose.msra.mxu0 0.0
    %3638 = vmatprep.subr.mxu0 0.0
    %3639 = vmatpush1.xpose.msra.mxu0 0.0
    %3640 = vmatprep.subr.mxu0 0.0
    %3641 = vmatpush1.xpose.msra.mxu0 0.0
    %3642 = vmatprep.subr.mxu0 0.0
    %3643 = vmatpush1.xpose.msra.mxu0 0.0
    %3644 = vmatprep.subr.mxu0 0.0
    %3645 = vmatpush1.xpose.msra.mxu0 0.0
    %3646 = vmatprep.subr.mxu0 0.0
    %3647 = vmatpush1.xpose.msra.mxu0 0.0
    %3648 = vmatprep.subr.mxu0 0.0
    %3649 = vmatpush1.xpose.msra.mxu0 0.0
    %3650 = vmatprep.subr.mxu0 0.0
    %3651 = vmatpush1.xpose.msra.mxu0 0.0
    %3652 = vmatprep.subr.mxu0 0.0
    %3653 = vmatpush1.xpose.msra.mxu0 0.0
    %3654 = vmatprep.subr.mxu0 0.0
    %3655 = vmatpush1.xpose.msra.mxu0 0.0
    %3656 = vmatprep.subr.mxu0 0.0
    %3657 = vmatpush1.xpose.msra.mxu0 0.0
    %3658 = vmatprep.subr.mxu0 0.0
    %3659 = vmatpush1.xpose.msra.mxu0 0.0
    %3660 = vmatprep.mubr.f32.mxu0 0.0
    %3661 = vmatmul.mubr.f32.gmra.mrb[0].mxu0 %v3588
    %v3662 = vpop.f32.mrb[0].mxu0
    %v3663 = vadd.f32 0.0, %v3662
    %v3664 = vpop.f32.mrb[0].mxu0
    %3665 = vmatprep.mubr.f32.mxu0 0.0
    %3666 = vmatmul.mubr.f32.gmra.mrb[0].mxu0 %v3590
    %v3667 = vpop.f32.mrb[0].mxu0
    %v3668 = vadd.f32 0.0, %v3667
    %v3669 = vpop.f32.mrb[0].mxu0
    %3670 = vdwg.mxu0
    %v3671 = vmul.f32 %v3663, 0.35355338
    %v3672 = vmul.f32 %v3668, 0.35355338
    %v3673 = vadd.f32 %v3671, %v62
    %v3674 = vadd.f32 %v3672, %v63
    %v3675 = vsel %vm289, %v3673, -inf
    %3676 = vmax.xlane.f32.xlu0 %v3675
    %v3677 = vpop.xlane.xlu0 %3676
    %v3678 = vsel %vm289, %v3674, -inf
    %3679 = vmax.xlane.f32.xlu0 %v3678
    %v3680 = vpop.xlane.xlu0 %3679
    %v3681 = vsub.f32 %v3673, %v3677
    %v3682 = vsub.f32 %v3674, %v3680
    %v3683 = vmul.f32 %v3681, 1.442695
    %v3684 = vpow.pop %v3683
    %v3685 = vmul.f32 %v3682, 1.442695
    %v3686 = vpow.pop %v3685
    %v3687 = vsel %vm289, %v3684, 0.0
    %3688 = vadd.xlane.f32.xlu0 %v3687
    %v3689 = vpop.xlane.xlu0 %3688
    %v3690 = vsel %vm289, %v3686, 0.0
    %3691 = vadd.xlane.f32.xlu0 %v3690
    %v3692 = vpop.xlane.xlu0 %3691
    %v3693 = vrcp.pop %v3689
    %v3694 = vmul.f32 %v3684, %v3693
    %v3695 = vrcp.pop %v3692
    %v3696 = vmul.f32 %v3686, %v3695
    %3699 = vrot.lane.b32.xlu0 %v3694, 120
    %v3700 = vpop.permute.xlu0 %3699
    %3701 = vrot.lane.b32.xlu0 %v3696, 120
    %v3702 = vpop.permute.xlu0 %3701
    %v3705 = vadd.f32 %v3694, %v3700
    %v3706 = vadd.f32 %v3696, %v3702
    %3707 = vrot.lane.b32.xlu0 %v2938, 40
    %v3708 = vpop.permute.xlu0 %3707
    %3709 = vrot.lane.b32.xlu0 %v2943, 40
    %v3710 = vpop.permute.xlu0 %3709
    %v3713 = vsel %vm289, %v3694, 0
    %v3715 = vsel %vm289, %v3696, 0
    %3717 = vmatprep.subr.mxu0 0.0
    %3718 = vmatpush1.msra.mxu0 %v3708
    %3719 = vmatprep.subr.mxu0 0.0
    %3720 = vmatpush1.msra.mxu0 %v3710
    %3721 = vmatprep.subr.mxu0 0.0
    %3722 = vmatpush1.msra.mxu0 0.0
    %3723 = vmatprep.subr.mxu0 0.0
    %3724 = vmatpush1.msra.mxu0 0.0
    %3725 = vmatprep.subr.mxu0 0.0
    %3726 = vmatpush1.msra.mxu0 0.0
    %3727 = vmatprep.subr.mxu0 0.0
    %3728 = vmatpush1.msra.mxu0 0.0
    %3729 = vmatprep.subr.mxu0 0.0
    %3730 = vmatpush1.msra.mxu0 0.0
    %3731 = vmatprep.subr.mxu0 0.0
    %3732 = vmatpush1.msra.mxu0 0.0
    %3733 = vmatprep.subr.mxu0 0.0
    %3734 = vmatpush1.msra.mxu0 0.0
    %3735 = vmatprep.subr.mxu0 0.0
    %3736 = vmatpush1.msra.mxu0 0.0
    %3737 = vmatprep.subr.mxu0 0.0
    %3738 = vmatpush1.msra.mxu0 0.0
    %3739 = vmatprep.subr.mxu0 0.0
    %3740 = vmatpush1.msra.mxu0 0.0
    %3741 = vmatprep.subr.mxu0 0.0
    %3742 = vmatpush1.msra.mxu0 0.0
    %3743 = vmatprep.subr.mxu0 0.0
    %3744 = vmatpush1.msra.mxu0 0.0
    %3745 = vmatprep.subr.mxu0 0.0
    %3746 = vmatpush1.msra.mxu0 0.0
    %3747 = vmatprep.subr.mxu0 0.0
    %3748 = vmatpush1.msra.mxu0 0.0
    %3749 = vmatprep.subr.mxu0 0.0
    %3750 = vmatpush1.msra.mxu0 0.0
    %3751 = vmatprep.subr.mxu0 0.0
    %3752 = vmatpush1.msra.mxu0 0.0
    %3753 = vmatprep.subr.mxu0 0.0
    %3754 = vmatpush1.msra.mxu0 0.0
    %3755 = vmatprep.subr.mxu0 0.0
    %3756 = vmatpush1.msra.mxu0 0.0
    %3757 = vmatprep.subr.mxu0 0.0
    %3758 = vmatpush1.msra.mxu0 0.0
    %3759 = vmatprep.subr.mxu0 0.0
    %3760 = vmatpush1.msra.mxu0 0.0
    %3761 = vmatprep.subr.mxu0 0.0
    %3762 = vmatpush1.msra.mxu0 0.0
    %3763 = vmatprep.subr.mxu0 0.0
    %3764 = vmatpush1.msra.mxu0 0.0
    %3765 = vmatprep.subr.mxu0 0.0
    %3766 = vmatpush1.msra.mxu0 0.0
    %3767 = vmatprep.subr.mxu0 0.0
    %3768 = vmatpush1.msra.mxu0 0.0
    %3769 = vmatprep.subr.mxu0 0.0
    %3770 = vmatpush1.msra.mxu0 0.0
    %3771 = vmatprep.subr.mxu0 0.0
    %3772 = vmatpush1.msra.mxu0 0.0
    %3773 = vmatprep.subr.mxu0 0.0
    %3774 = vmatpush1.msra.mxu0 0.0
    %3775 = vmatprep.subr.mxu0 0.0
    %3776 = vmatpush1.msra.mxu0 0.0
    %3777 = vmatprep.subr.mxu0 0.0
    %3778 = vmatpush1.msra.mxu0 0.0
    %3779 = vmatprep.subr.mxu0 0.0
    %3780 = vmatpush1.msra.mxu0 0.0
    %3781 = vmatprep.mubr.f32.mxu0 0.0
    %3782 = vmatmul.mubr.f32.gmra.mrb[0].mxu0 %v3713
    %v3783 = vpop.f32.mrb[0].mxu0
    %v3784 = vadd.f32 0.0, %v3783
    %v3785 = vpop.f32.mrb[0].mxu0
    %3786 = vmatprep.mubr.f32.mxu0 0.0
    %3787 = vmatmul.mubr.f32.gmra.mrb[0].mxu0 %v3715
    %v3788 = vpop.f32.mrb[0].mxu0
    %v3789 = vadd.f32 0.0, %v3788
    %v3790 = vpop.f32.mrb[0].mxu0
    %3791 = vdwg.mxu0
    %3794 = vrot.lane.b32.xlu0 %v3281, 8
    %v3795 = vpop.permute.xlu0 %3794
    %3796 = vrot.lane.b32.xlu0 %v3282, 8
    %v3797 = vpop.permute.xlu0 %3796
    %3802 = vrot.lane.b32.xlu0 %v3493, 16
    %v3803 = vpop.permute.xlu0 %3802
    %3804 = vrot.lane.b32.xlu0 %v3494, 16
    %v3805 = vpop.permute.xlu0 %3804
    %3810 = vrot.lane.b32.xlu0 %v3705, 24
    %v3811 = vpop.permute.xlu0 %3810
    %3812 = vrot.lane.b32.xlu0 %v3706, 24
    %v3813 = vpop.permute.xlu0 %3812
    %v3816 = vsel %vm201, %v3069, %v3795
    %v3817 = vsel %vm201, %v3070, %v3797
    %v3818 = vsel %vm289, %v3816, %v3803
    %v3819 = vsel %vm289, %v3817, %v3805
    %v3820 = vsel %vm1071, %v3818, %v3811
    %v3821 = vsel %vm1071, %v3819, %v3813
    %3824 = vrot.lane.b32.xlu0 %v3360, 8
    %v3825 = vpop.permute.xlu0 %3824
    %3826 = vrot.lane.b32.xlu0 %v3365, 8
    %v3827 = vpop.permute.xlu0 %3826
    %3832 = vrot.lane.b32.xlu0 %v3572, 16
    %v3833 = vpop.permute.xlu0 %3832
    %3834 = vrot.lane.b32.xlu0 %v3577, 16
    %v3835 = vpop.permute.xlu0 %3834
    %3840 = vrot.lane.b32.xlu0 %v3784, 24
    %v3841 = vpop.permute.xlu0 %3840
    %3842 = vrot.lane.b32.xlu0 %v3789, 24
    %v3843 = vpop.permute.xlu0 %3842
    %v3846 = vsel %vm201, %v3148, %v3825
    %v3847 = vsel %vm201, %v3153, %v3827
    %v3848 = vsel %vm289, %v3846, %v3833
    %v3849 = vsel %vm289, %v3847, %v3835
    %v3850 = vsel %vm1071, %v3848, %v3841
    %v3851 = vsel %vm1071, %v3849, %v3843
    %s3852 = scalar_lea.vmem %s3, 64
    %v3853 = vld [vmem:[%s3852] sm:$0xff]
    %v3854 = vld [vmem:[%s3852 + $0x8] sm:$0xff]
    %v3855 = vld [vmem:[%s3852 + $0x10] sm:$0xff]
    %v3856 = vld [vmem:[%s3852 + $0x18] sm:$0xff]
    %s3857 = scalar_lea.vmem %s4, 2
    %v3858 = vld [vmem:[%s3857] sm:$0x1]
    %v3860 = vlaneseq
    %v3861 = vshrl.u32 %v3860, 7
    %v3862 = vsub.s32 0, %v3861
    %v3863 = vrot.slane %v3858, %v3862
    %v3866 = vsel %vm66, %v3850, 0
    %v3869 = vsel %vm66, %v3851, 0
    %3871 = vmatprep.subr.mxu0 0.0
    %3872 = vmatpush1.msra.mxu0 %v3853
    %3873 = vmatprep.subr.mxu0 0.0
    %3874 = vmatpush1.msra.mxu0 %v3854
    %3875 = vmatprep.subr.mxu0 0.0
    %3876 = vmatpush1.msra.mxu0 %v3855
    %3877 = vmatprep.subr.mxu0 0.0
    %3878 = vmatpush1.msra.mxu0 %v3856
    %3879 = vmatprep.subr.mxu0 0.0
    %3880 = vmatpush1.msra.mxu0 0.0
    %3881 = vmatprep.subr.mxu0 0.0
    %3882 = vmatpush1.msra.mxu0 0.0
    %3883 = vmatprep.subr.mxu0 0.0
    %3884 = vmatpush1.msra.mxu0 0.0
    %3885 = vmatprep.subr.mxu0 0.0
    %3886 = vmatpush1.msra.mxu0 0.0
    %3887 = vmatprep.subr.mxu0 0.0
    %3888 = vmatpush1.msra.mxu0 0.0
    %3889 = vmatprep.subr.mxu0 0.0
    %3890 = vmatpush1.msra.mxu0 0.0
    %3891 = vmatprep.subr.mxu0 0.0
    %3892 = vmatpush1.msra.mxu0 0.0
    %3893 = vmatprep.subr.mxu0 0.0
    %3894 = vmatpush1.msra.mxu0 0.0
    %3895 = vmatprep.subr.mxu0 0.0
    %3896 = vmatpush1.msra.mxu0 0.0
    %3897 = vmatprep.subr.mxu0 0.0
    %3898 = vmatpush1.msra.mxu0 0.0
    %3899 = vmatprep.subr.mxu0 0.0
    %3900 = vmatpush1.msra.mxu0 0.0
    %3901 = vmatprep.subr.mxu0 0.0
    %3902 = vmatpush1.msra.mxu0 0.0
    %3903 = vmatprep.subr.mxu0 0.0
    %3904 = vmatpush1.msra.mxu0 0.0
    %3905 = vmatprep.subr.mxu0 0.0
    %3906 = vmatpush1.msra.mxu0 0.0
    %3907 = vmatprep.subr.mxu0 0.0
    %3908 = vmatpush1.msra.mxu0 0.0
    %3909 = vmatprep.subr.mxu0 0.0
    %3910 = vmatpush1.msra.mxu0 0.0
    %3911 = vmatprep.subr.mxu0 0.0
    %3912 = vmatpush1.msra.mxu0 0.0
    %3913 = vmatprep.subr.mxu0 0.0
    %3914 = vmatpush1.msra.mxu0 0.0
    %3915 = vmatprep.subr.mxu0 0.0
    %3916 = vmatpush1.msra.mxu0 0.0
    %3917 = vmatprep.subr.mxu0 0.0
    %3918 = vmatpush1.msra.mxu0 0.0
    %3919 = vmatprep.subr.mxu0 0.0
    %3920 = vmatpush1.msra.mxu0 0.0
    %3921 = vmatprep.subr.mxu0 0.0
    %3922 = vmatpush1.msra.mxu0 0.0
    %3923 = vmatprep.subr.mxu0 0.0
    %3924 = vmatpush1.msra.mxu0 0.0
    %3925 = vmatprep.subr.mxu0 0.0
    %3926 = vmatpush1.msra.mxu0 0.0
    %3927 = vmatprep.subr.mxu0 0.0
    %3928 = vmatpush1.msra.mxu0 0.0
    %3929 = vmatprep.subr.mxu0 0.0
    %3930 = vmatpush1.msra.mxu0 0.0
    %3931 = vmatprep.subr.mxu0 0.0
    %3932 = vmatpush1.msra.mxu0 0.0
    %3933 = vmatprep.subr.mxu0 0.0
    %3934 = vmatpush1.msra.mxu0 0.0
    %3935 = vmatprep.mubr.f32.mxu0 0.0
    %3936 = vmatmul.mubr.f32.gmra.mrb[0].mxu0 %v3866
    %v3937 = vpop.f32.mrb[0].mxu0
    %v3938 = vadd.f32 %v3863, %v3937
    %v3939 = vpop.f32.mrb[0].mxu0
    %3940 = vmatprep.mubr.f32.mxu0 0.0
    %3941 = vmatmul.mubr.f32.gmra.mrb[0].mxu0 %v3869
    %v3942 = vpop.f32.mrb[0].mxu0
    %v3943 = vadd.f32 %v3863, %v3942
    %v3944 = vpop.f32.mrb[0].mxu0
    %3945 = vdwg.mxu0
    %v3946 = vadd.f32 %v2812, %v3938
    %v3947 = vadd.f32 %v2813, %v3943
    %s3948 = scalar_lea.vmem %s7, 2
    %v3949 = vld [vmem:[%s3948] sm:$0x1]
    %s3950 = scalar_lea.vmem %s8, 2
    %v3951 = vld [vmem:[%s3950] sm:$0x1]
    %v3952 = vsel %vm66, %v3946, 0.0
    %3953 = vadd.xlane.f32.xlu0 %v3952
    %v3954 = vpop.xlane.xlu0 %3953
    %v3955 = vsel %vm66, %v3947, 0.0
    %3956 = vadd.xlane.f32.xlu0 %v3955
    %v3957 = vpop.xlane.xlu0 %3956
    %v3958 = vmul.f32 %v3954, %v73
    %v3959 = vmul.f32 %v3957, %v73
    %v3960 = vsub.f32 %v3946, %v3958
    %v3961 = vsub.f32 %v3947, %v3959
    %v3962 = vmul.f32 %v3960, %v3960
    %v3963 = vmul.f32 %v3961, %v3961
    %v3964 = vsel %vm66, %v3962, 0.0
    %3965 = vadd.xlane.f32.xlu0 %v3964
    %v3966 = vpop.xlane.xlu0 %3965
    %v3967 = vsel %vm66, %v3963, 0.0
    %3968 = vadd.xlane.f32.xlu0 %v3967
    %v3969 = vpop.xlane.xlu0 %3968
    %v3970 = vmul.f32 %v3966, %v73
    %v3971 = vmul.f32 %v3969, %v73
    %v3972 = vadd.f32 %v3970, 1e-05
    %v3973 = vadd.f32 %v3971, 1e-05
    %v3974 = vrsqrt.pop %v3972
    %v3975 = vrsqrt.pop %v3973
    %v3976 = vmul.f32 %v3960, %v3974
    %v3977 = vmul.f32 %v3961, %v3975
    %v3979 = vlaneseq
    %v3980 = vshrl.u32 %v3979, 7
    %v3981 = vsub.s32 0, %v3980
    %v3982 = vrot.slane %v3949, %v3981
    %v3984 = vmul.f32 %v3976, %v3982
    %v3985 = vmul.f32 %v3977, %v3982
    %v3987 = vlaneseq
    %v3988 = vshrl.u32 %v3987, 7
    %v3989 = vsub.s32 0, %v3988
    %v3990 = vrot.slane %v3951, %v3989
    %v3992 = vadd.f32 %v3984, %v3990
    %v3993 = vadd.f32 %v3985, %v3990
    %s3994 = scalar_lea.vmem %s9, 64
    %v3995 = vld [vmem:[%s3994] sm:$0xff]
    %v3996 = vld [vmem:[%s3994 + $0x8] sm:$0xff]
    %v3997 = vld [vmem:[%s3994 + $0x10] sm:$0xff]
    %v3998 = vld [vmem:[%s3994 + $0x18] sm:$0xff]
    %s3999 = scalar_lea.vmem %s10, 2
    %v4000 = vld [vmem:[%s3999] sm:$0x1]
    %v4002 = vlaneseq
    %v4003 = vshrl.u32 %v4002, 7
    %v4004 = vsub.s32 0, %v4003
    %v4005 = vrot.slane %v4000, %v4004
    %v4008 = vsel %vm66, %v3992, 0
    %v4011 = vsel %vm66, %v3993, 0
    %4013 = vmatprep.subr.mxu0 0.0
    %4014 = vmatpush1.msra.mxu0 %v3995
    %4015 = vmatprep.subr.mxu0 0.0
    %4016 = vmatpush1.msra.mxu0 %v3996
    %4017 = vmatprep.subr.mxu0 0.0
    %4018 = vmatpush1.msra.mxu0 %v3997
    %4019 = vmatprep.subr.mxu0 0.0
    %4020 = vmatpush1.msra.mxu0 %v3998
    %4021 = vmatprep.subr.mxu0 0.0
    %4022 = vmatpush1.msra.mxu0 0.0
    %4023 = vmatprep.subr.mxu0 0.0
    %4024 = vmatpush1.msra.mxu0 0.0
    %4025 = vmatprep.subr.mxu0 0.0
    %4026 = vmatpush1.msra.mxu0 0.0
    %4027 = vmatprep.subr.mxu0 0.0
    %4028 = vmatpush1.msra.mxu0 0.0
    %4029 = vmatprep.subr.mxu0 0.0
    %4030 = vmatpush1.msra.mxu0 0.0
    %4031 = vmatprep.subr.mxu0 0.0
    %4032 = vmatpush1.msra.mxu0 0.0
    %4033 = vmatprep.subr.mxu0 0.0
    %4034 = vmatpush1.msra.mxu0 0.0
    %4035 = vmatprep.subr.mxu0 0.0
    %4036 = vmatpush1.msra.mxu0 0.0
    %4037 = vmatprep.subr.mxu0 0.0
    %4038 = vmatpush1.msra.mxu0 0.0
    %4039 = vmatprep.subr.mxu0 0.0
    %4040 = vmatpush1.msra.mxu0 0.0
    %4041 = vmatprep.subr.mxu0 0.0
    %4042 = vmatpush1.msra.mxu0 0.0
    %4043 = vmatprep.subr.mxu0 0.0
    %4044 = vmatpush1.msra.mxu0 0.0
    %4045 = vmatprep.subr.mxu0 0.0
    %4046 = vmatpush1.msra.mxu0 0.0
    %4047 = vmatprep.subr.mxu0 0.0
    %4048 = vmatpush1.msra.mxu0 0.0
    %4049 = vmatprep.subr.mxu0 0.0
    %4050 = vmatpush1.msra.mxu0 0.0
    %4051 = vmatprep.subr.mxu0 0.0
    %4052 = vmatpush1.msra.mxu0 0.0
    %4053 = vmatprep.subr.mxu0 0.0
    %4054 = vmatpush1.msra.mxu0 0.0
    %4055 = vmatprep.subr.mxu0 0.0
    %4056 = vmatpush1.msra.mxu0 0.0
    %4057 = vmatprep.subr.mxu0 0.0
    %4058 = vmatpush1.msra.mxu0 0.0
    %4059 = vmatprep.subr.mxu0 0.0
    %4060 = vmatpush1.msra.mxu0 0.0
    %4061 = vmatprep.subr.mxu0 0.0
    %4062 = vmatpush1.msra.mxu0 0.0
    %4063 = vmatprep.subr.mxu0 0.0
    %4064 = vmatpush1.msra.mxu0 0.0
    %4065 = vmatprep.subr.mxu0 0.0
    %4066 = vmatpush1.msra.mxu0 0.0
    %4067 = vmatprep.subr.mxu0 0.0
    %4068 = vmatpush1.msra.mxu0 0.0
    %4069 = vmatprep.subr.mxu0 0.0
    %4070 = vmatpush1.msra.mxu0 0.0
    %4071 = vmatprep.subr.mxu0 0.0
    %4072 = vmatpush1.msra.mxu0 0.0
    %4073 = vmatprep.subr.mxu0 0.0
    %4074 = vmatpush1.msra.mxu0 0.0
    %4075 = vmatprep.subr.mxu0 0.0
    %4076 = vmatpush1.msra.mxu0 0.0
    %4077 = vmatprep.mubr.f32.mxu0 0.0
    %4078 = vmatmul.mubr.f32.gmra.mrb[0].mxu0 %v4008
    %v4079 = vpop.f32.mrb[0].mxu0
    %v4080 = vadd.f32 %v4005, %v4079
    %v4081 = vpop.f32.mrb[0].mxu0
    %4082 = vmatprep.mubr.f32.mxu0 0.0
    %4083 = vmatmul.mubr.f32.gmra.mrb[0].mxu0 %v4011
    %v4084 = vpop.f32.mrb[0].mxu0
    %v4085 = vadd.f32 %v4005, %v4084
    %v4086 = vpop.f32.mrb[0].mxu0
    %4087 = vdwg.mxu0
    %v4088 = vmax.f32 %v4080, 0.0
    %v4089 = vmax.f32 %v4085, 0.0
    %s4090 = scalar_lea.vmem %s11, 256
    %v4091 = vld [vmem:[%s4090] sm:$0xff]
    %v4092 = vld [vmem:[%s4090 + $0x8] sm:$0xff]
    %v4093 = vld [vmem:[%s4090 + $0x10] sm:$0xff]
    %v4094 = vld [vmem:[%s4090 + $0x18] sm:$0xff]
    %v4095 = vld [vmem:[%s4090 + $0x20] sm:$0xff]
    %v4096 = vld [vmem:[%s4090 + $0x28] sm:$0xff]
    %v4097 = vld [vmem:[%s4090 + $0x30] sm:$0xff]
    %v4098 = vld [vmem:[%s4090 + $0x38] sm:$0xff]
    %v4099 = vld [vmem:[%s4090 + $0x40] sm:$0xff]
    %v4100 = vld [vmem:[%s4090 + $0x48] sm:$0xff]
    %v4101 = vld [vmem:[%s4090 + $0x50] sm:$0xff]
    %v4102 = vld [vmem:[%s4090 + $0x58] sm:$0xff]
    %v4103 = vld [vmem:[%s4090 + $0x60] sm:$0xff]
    %v4104 = vld [vmem:[%s4090 + $0x68] sm:$0xff]
    %v4105 = vld [vmem:[%s4090 + $0x70] sm:$0xff]
    %v4106 = vld [vmem:[%s4090 + $0x78] sm:$0xff]
    %s4107 = scalar_lea.vmem %s12, 2
    %v4108 = vld [vmem:[%s4107] sm:$0x1]
    %v4110 = vlaneseq
    %v4111 = vshrl.u32 %v4110, 7
    %v4112 = vsub.s32 0, %v4111
    %v4113 = vrot.slane %v4108, %v4112
    %4115 = vmatprep.subr.mxu0 0.0
    %4116 = vmatpush1.msra.mxu0 %v4091
    %4117 = vmatprep.subr.mxu0 0.0
    %4118 = vmatpush1.msra.mxu0 %v4092
    %4119 = vmatprep.subr.mxu0 0.0
    %4120 = vmatpush1.msra.mxu0 %v4093
    %4121 = vmatprep.subr.mxu0 0.0
    %4122 = vmatpush1.msra.mxu0 %v4094
    %4123 = vmatprep.subr.mxu0 0.0
    %4124 = vmatpush1.msra.mxu0 %v4095
    %4125 = vmatprep.subr.mxu0 0.0
    %4126 = vmatpush1.msra.mxu0 %v4096
    %4127 = vmatprep.subr.mxu0 0.0
    %4128 = vmatpush1.msra.mxu0 %v4097
    %4129 = vmatprep.subr.mxu0 0.0
    %4130 = vmatpush1.msra.mxu0 %v4098
    %4131 = vmatprep.subr.mxu0 0.0
    %4132 = vmatpush1.msra.mxu0 %v4099
    %4133 = vmatprep.subr.mxu0 0.0
    %4134 = vmatpush1.msra.mxu0 %v4100
    %4135 = vmatprep.subr.mxu0 0.0
    %4136 = vmatpush1.msra.mxu0 %v4101
    %4137 = vmatprep.subr.mxu0 0.0
    %4138 = vmatpush1.msra.mxu0 %v4102
    %4139 = vmatprep.subr.mxu0 0.0
    %4140 = vmatpush1.msra.mxu0 %v4103
    %4141 = vmatprep.subr.mxu0 0.0
    %4142 = vmatpush1.msra.mxu0 %v4104
    %4143 = vmatprep.subr.mxu0 0.0
    %4144 = vmatpush1.msra.mxu0 %v4105
    %4145 = vmatprep.subr.mxu0 0.0
    %4146 = vmatpush1.msra.mxu0 %v4106
    %4147 = vmatprep.subr.mxu0 0.0
    %4148 = vmatpush1.msra.mxu0 0.0
    %4149 = vmatprep.subr.mxu0 0.0
    %4150 = vmatpush1.msra.mxu0 0.0
    %4151 = vmatprep.subr.mxu0 0.0
    %4152 = vmatpush1.msra.mxu0 0.0
    %4153 = vmatprep.subr.mxu0 0.0
    %4154 = vmatpush1.msra.mxu0 0.0
    %4155 = vmatprep.subr.mxu0 0.0
    %4156 = vmatpush1.msra.mxu0 0.0
    %4157 = vmatprep.subr.mxu0 0.0
    %4158 = vmatpush1.msra.mxu0 0.0
    %4159 = vmatprep.subr.mxu0 0.0
    %4160 = vmatpush1.msra.mxu0 0.0
    %4161 = vmatprep.subr.mxu0 0.0
    %4162 = vmatpush1.msra.mxu0 0.0
    %4163 = vmatprep.subr.mxu0 0.0
    %4164 = vmatpush1.msra.mxu0 0.0
    %4165 = vmatprep.subr.mxu0 0.0
    %4166 = vmatpush1.msra.mxu0 0.0
    %4167 = vmatprep.subr.mxu0 0.0
    %4168 = vmatpush1.msra.mxu0 0.0
    %4169 = vmatprep.subr.mxu0 0.0
    %4170 = vmatpush1.msra.mxu0 0.0
    %4171 = vmatprep.subr.mxu0 0.0
    %4172 = vmatpush1.msra.mxu0 0.0
    %4173 = vmatprep.subr.mxu0 0.0
    %4174 = vmatpush1.msra.mxu0 0.0
    %4175 = vmatprep.subr.mxu0 0.0
    %4176 = vmatpush1.msra.mxu0 0.0
    %4177 = vmatprep.subr.mxu0 0.0
    %4178 = vmatpush1.msra.mxu0 0.0
    %4179 = vmatprep.mubr.f32.mxu0 0.0
    %4180 = vmatmul.mubr.f32.gmra.mrb[0].mxu0 %v4088
    %v4181 = vpop.f32.mrb[0].mxu0
    %v4182 = vadd.f32 %v4113, %v4181
    %v4183 = vpop.f32.mrb[0].mxu0
    %4184 = vmatprep.mubr.f32.mxu0 0.0
    %4185 = vmatmul.mubr.f32.gmra.mrb[0].mxu0 %v4089
    %v4186 = vpop.f32.mrb[0].mxu0
    %v4187 = vadd.f32 %v4113, %v4186
    %v4188 = vpop.f32.mrb[0].mxu0
    %4189 = vdwg.mxu0
    %v4190 = vadd.f32 %v3946, %v4182
    %v4191 = vadd.f32 %v3947, %v4187
    %s4192 = scalar_lea.vmem %s5, 3
    %v4193 = vld [vmem:[%s4192] sm:$0x1]
    %s4194 = scalar_lea.vmem %s6, 3
    %v4195 = vld [vmem:[%s4194] sm:$0x1]
    %v4196 = vsel %vm66, %v4190, 0.0
    %4197 = vadd.xlane.f32.xlu0 %v4196
    %v4198 = vpop.xlane.xlu0 %4197
    %v4199 = vsel %vm66, %v4191, 0.0
    %4200 = vadd.xlane.f32.xlu0 %v4199
    %v4201 = vpop.xlane.xlu0 %4200
    %v4202 = vmul.f32 %v4198, %v73
    %v4203 = vmul.f32 %v4201, %v73
    %v4204 = vsub.f32 %v4190, %v4202
    %v4205 = vsub.f32 %v4191, %v4203
    %v4206 = vmul.f32 %v4204, %v4204
    %v4207 = vmul.f32 %v4205, %v4205
    %v4208 = vsel %vm66, %v4206, 0.0
    %4209 = vadd.xlane.f32.xlu0 %v4208
    %v4210 = vpop.xlane.xlu0 %4209
    %v4211 = vsel %vm66, %v4207, 0.0
    %4212 = vadd.xlane.f32.xlu0 %v4211
    %v4213 = vpop.xlane.xlu0 %4212
    %v4214 = vmul.f32 %v4210, %v73
    %v4215 = vmul.f32 %v4213, %v73
    %v4216 = vadd.f32 %v4214, 1e-05
    %v4217 = vadd.f32 %v4215, 1e-05
    %v4218 = vrsqrt.pop %v4216
    %v4219 = vrsqrt.pop %v4217
    %v4220 = vmul.f32 %v4204, %v4218
    %v4221 = vmul.f32 %v4205, %v4219
    %v4223 = vlaneseq
    %v4224 = vshrl.u32 %v4223, 7
    %v4225 = vsub.s32 0, %v4224
    %v4226 = vrot.slane %v4193, %v4225
    %v4228 = vmul.f32 %v4220, %v4226
    %v4229 = vmul.f32 %v4221, %v4226
    %v4231 = vlaneseq
    %v4232 = vshrl.u32 %v4231, 7
    %v4233 = vsub.s32 0, %v4232
    %v4234 = vrot.slane %v4195, %v4233
    %v4236 = vadd.f32 %v4228, %v4234
    %v4237 = vadd.f32 %v4229, %v4234
    %s4238 = scalar_lea.vmem %s2, 96
    %v4239 = vld [vmem:[%s4238] sm:$0xff]
    %v4240 = vld [vmem:[%s4238 + $0x8] sm:$0xff]
    %v4241 = vld [vmem:[%s4238 + $0x10] sm:$0xff]
    %v4242 = vld [vmem:[%s4238 + $0x18] sm:$0xff]
    %v4244 = vsel %vm66, %v4236, 0
    %v4247 = vsel %vm66, %v4237, 0
    %4249 = vmatprep.subr.mxu0 0.0
    %4250 = vmatpush1.msra.mxu0 %v4239
    %4251 = vmatprep.subr.mxu0 0.0
    %4252 = vmatpush1.msra.mxu0 %v4240
    %4253 = vmatprep.subr.mxu0 0.0
    %4254 = vmatpush1.msra.mxu0 %v4241
    %4255 = vmatprep.subr.mxu0 0.0
    %4256 = vmatpush1.msra.mxu0 %v4242
    %4257 = vmatprep.subr.mxu0 0.0
    %4258 = vmatpush1.msra.mxu0 0.0
    %4259 = vmatprep.subr.mxu0 0.0
    %4260 = vmatpush1.msra.mxu0 0.0
    %4261 = vmatprep.subr.mxu0 0.0
    %4262 = vmatpush1.msra.mxu0 0.0
    %4263 = vmatprep.subr.mxu0 0.0
    %4264 = vmatpush1.msra.mxu0 0.0
    %4265 = vmatprep.subr.mxu0 0.0
    %4266 = vmatpush1.msra.mxu0 0.0
    %4267 = vmatprep.subr.mxu0 0.0
    %4268 = vmatpush1.msra.mxu0 0.0
    %4269 = vmatprep.subr.mxu0 0.0
    %4270 = vmatpush1.msra.mxu0 0.0
    %4271 = vmatprep.subr.mxu0 0.0
    %4272 = vmatpush1.msra.mxu0 0.0
    %4273 = vmatprep.subr.mxu0 0.0
    %4274 = vmatpush1.msra.mxu0 0.0
    %4275 = vmatprep.subr.mxu0 0.0
    %4276 = vmatpush1.msra.mxu0 0.0
    %4277 = vmatprep.subr.mxu0 0.0
    %4278 = vmatpush1.msra.mxu0 0.0
    %4279 = vmatprep.subr.mxu0 0.0
    %4280 = vmatpush1.msra.mxu0 0.0
    %4281 = vmatprep.subr.mxu0 0.0
    %4282 = vmatpush1.msra.mxu0 0.0
    %4283 = vmatprep.subr.mxu0 0.0
    %4284 = vmatpush1.msra.mxu0 0.0
    %4285 = vmatprep.subr.mxu0 0.0
    %4286 = vmatpush1.msra.mxu0 0.0
    %4287 = vmatprep.subr.mxu0 0.0
    %4288 = vmatpush1.msra.mxu0 0.0
    %4289 = vmatprep.subr.mxu0 0.0
    %4290 = vmatpush1.msra.mxu0 0.0
    %4291 = vmatprep.subr.mxu0 0.0
    %4292 = vmatpush1.msra.mxu0 0.0
    %4293 = vmatprep.subr.mxu0 0.0
    %4294 = vmatpush1.msra.mxu0 0.0
    %4295 = vmatprep.subr.mxu0 0.0
    %4296 = vmatpush1.msra.mxu0 0.0
    %4297 = vmatprep.subr.mxu0 0.0
    %4298 = vmatpush1.msra.mxu0 0.0
    %4299 = vmatprep.subr.mxu0 0.0
    %4300 = vmatpush1.msra.mxu0 0.0
    %4301 = vmatprep.subr.mxu0 0.0
    %4302 = vmatpush1.msra.mxu0 0.0
    %4303 = vmatprep.subr.mxu0 0.0
    %4304 = vmatpush1.msra.mxu0 0.0
    %4305 = vmatprep.subr.mxu0 0.0
    %4306 = vmatpush1.msra.mxu0 0.0
    %4307 = vmatprep.subr.mxu0 0.0
    %4308 = vmatpush1.msra.mxu0 0.0
    %4309 = vmatprep.subr.mxu0 0.0
    %4310 = vmatpush1.msra.mxu0 0.0
    %4311 = vmatprep.subr.mxu0 0.0
    %4312 = vmatpush1.msra.mxu0 0.0
    %4313 = vmatprep.mubr.f32.mxu0 0.0
    %4314 = vmatmul.mubr.f32.gmra.mrb[0].mxu0 %v4244
    %v4315 = vpop.f32.mrb[0].mxu0
    %v4316 = vadd.f32 0.0, %v4315
    %v4317 = vpop.f32.mrb[0].mxu0
    %4318 = vmatprep.mubr.f32.mxu0 0.0
    %4319 = vmatmul.mubr.f32.gmra.mrb[0].mxu0 %v4247
    %v4320 = vpop.f32.mrb[0].mxu0
    %v4321 = vadd.f32 0.0, %v4320
    %v4322 = vpop.f32.mrb[0].mxu0
    %4323 = vdwg.mxu0
    %4326 = vrot.lane.b32.xlu0 %v4316, 96
    %v4327 = vpop.permute.xlu0 %4326
    %4328 = vrot.lane.b32.xlu0 %v4321, 96
    %v4329 = vpop.permute.xlu0 %4328
    %v4330 = vsel %vm201, %v4316, 0
    %v4332 = vsel %vm201, %v4321, 0
    %v4334 = vsel %vm201, %v4327, 0
    %v4336 = vsel %vm201, %v4329, 0
    %4338 = vmatprep.subr.mxu0 0.0
    %4339 = vmatpush1.xpose.msra.mxu0 %v4334
    %4340 = vmatprep.subr.mxu0 0.0
    %4341 = vmatpush1.xpose.msra.mxu0 %v4336
    %4342 = vmatprep.subr.mxu0 0.0
    %4343 = vmatpush1.xpose.msra.mxu0 0.0
    %4344 = vmatprep.subr.mxu0 0.0
    %4345 = vmatpush1.xpose.msra.mxu0 0.0
    %4346 = vmatprep.subr.mxu0 0.0
    %4347 = vmatpush1.xpose.msra.mxu0 0.0
    %4348 = vmatprep.subr.mxu0 0.0
    %4349 = vmatpush1.xpose.msra.mxu0 0.0
    %4350 = vmatprep.subr.mxu0 0.0
    %4351 = vmatpush1.xpose.msra.mxu0 0.0
    %4352 = vmatprep.subr.mxu0 0.0
    %4353 = vmatpush1.xpose.msra.mxu0 0.0
    %4354 = vmatprep.subr.mxu0 0.0
    %4355 = vmatpush1.xpose.msra.mxu0 0.0
    %4356 = vmatprep.subr.mxu0 0.0
    %4357 = vmatpush1.xpose.msra.mxu0 0.0
    %4358 = vmatprep.subr.mxu0 0.0
    %4359 = vmatpush1.xpose.msra.mxu0 0.0
    %4360 = vmatprep.subr.mxu0 0.0
    %4361 = vmatpush1.xpose.msra.mxu0 0.0
    %4362 = vmatprep.subr.mxu0 0.0
    %4363 = vmatpush1.xpose.msra.mxu0 0.0
    %4364 = vmatprep.subr.mxu0 0.0
    %4365 = vmatpush1.xpose.msra.mxu0 0.0
    %4366 = vmatprep.subr.mxu0 0.0
    %4367 = vmatpush1.xpose.msra.mxu0 0.0
    %4368 = vmatprep.subr.mxu0 0.0
    %4369 = vmatpush1.xpose.msra.mxu0 0.0
    %4370 = vmatprep.subr.mxu0 0.0
    %4371 = vmatpush1.xpose.msra.mxu0 0.0
    %4372 = vmatprep.subr.mxu0 0.0
    %4373 = vmatpush1.xpose.msra.mxu0 0.0
    %4374 = vmatprep.subr.mxu0 0.0
    %4375 = vmatpush1.xpose.msra.mxu0 0.0
    %4376 = vmatprep.subr.mxu0 0.0
    %4377 = vmatpush1.xpose.msra.mxu0 0.0
    %4378 = vmatprep.subr.mxu0 0.0
    %4379 = vmatpush1.xpose.msra.mxu0 0.0
    %4380 = vmatprep.subr.mxu0 0.0
    %4381 = vmatpush1.xpose.msra.mxu0 0.0
    %4382 = vmatprep.subr.mxu0 0.0
    %4383 = vmatpush1.xpose.msra.mxu0 0.0
    %4384 = vmatprep.subr.mxu0 0.0
    %4385 = vmatpush1.xpose.msra.mxu0 0.0
    %4386 = vmatprep.subr.mxu0 0.0
    %4387 = vmatpush1.xpose.msra.mxu0 0.0
    %4388 = vmatprep.subr.mxu0 0.0
    %4389 = vmatpush1.xpose.msra.mxu0 0.0
    %4390 = vmatprep.subr.mxu0 0.0
    %4391 = vmatpush1.xpose.msra.mxu0 0.0
    %4392 = vmatprep.subr.mxu0 0.0
    %4393 = vmatpush1.xpose.msra.mxu0 0.0
    %4394 = vmatprep.subr.mxu0 0.0
    %4395 = vmatpush1.xpose.msra.mxu0 0.0
    %4396 = vmatprep.subr.mxu0 0.0
    %4397 = vmatpush1.xpose.msra.mxu0 0.0
    %4398 = vmatprep.subr.mxu0 0.0
    %4399 = vmatpush1.xpose.msra.mxu0 0.0
    %4400 = vmatprep.subr.mxu0 0.0
    %4401 = vmatpush1.xpose.msra.mxu0 0.0
    %4402 = vmatprep.mubr.f32.mxu0 0.0
    %4403 = vmatmul.mubr.f32.gmra.mrb[0].mxu0 %v4330
    %v4404 = vpop.f32.mrb[0].mxu0
    %v4405 = vadd.f32 0.0, %v4404
    %v4406 = vpop.f32.mrb[0].mxu0
    %4407 = vmatprep.mubr.f32.mxu0 0.0
    %4408 = vmatmul.mubr.f32.gmra.mrb[0].mxu0 %v4332
    %v4409 = vpop.f32.mrb[0].mxu0
    %v4410 = vadd.f32 0.0, %v4409
    %v4411 = vpop.f32.mrb[0].mxu0
    %4412 = vdwg.mxu0
    %v4413 = vmul.f32 %v4405, 0.35355338
    %v4414 = vmul.f32 %v4410, 0.35355338
    %v4415 = vadd.f32 %v4413, %v62
    %v4416 = vadd.f32 %v4414, %v63
    %v4417 = vsel %vm289, %v4415, -inf
    %4418 = vmax.xlane.f32.xlu0 %v4417
    %v4419 = vpop.xlane.xlu0 %4418
    %v4420 = vsel %vm289, %v4416, -inf
    %4421 = vmax.xlane.f32.xlu0 %v4420
    %v4422 = vpop.xlane.xlu0 %4421
    %v4423 = vsub.f32 %v4415, %v4419
    %v4424 = vsub.f32 %v4416, %v4422
    %v4425 = vmul.f32 %v4423, 1.442695
    %v4426 = vpow.pop %v4425
    %v4427 = vmul.f32 %v4424, 1.442695
    %v4428 = vpow.pop %v4427
    %v4429 = vsel %vm289, %v4426, 0.0
    %4430 = vadd.xlane.f32.xlu0 %v4429
    %v4431 = vpop.xlane.xlu0 %4430
    %v4432 = vsel %vm289, %v4428, 0.0
    %4433 = vadd.xlane.f32.xlu0 %v4432
    %v4434 = vpop.xlane.xlu0 %4433
    %v4435 = vrcp.pop %v4431
    %v4436 = vmul.f32 %v4426, %v4435
    %v4437 = vrcp.pop %v4434
    %v4438 = vmul.f32 %v4428, %v4437
    %4441 = vrot.lane.b32.xlu0 %v4436, 120
    %v4442 = vpop.permute.xlu0 %4441
    %4443 = vrot.lane.b32.xlu0 %v4438, 120
    %v4444 = vpop.permute.xlu0 %4443
    %v4447 = vadd.f32 %v4436, %v4442
    %v4448 = vadd.f32 %v4438, %v4444
    %4449 = vrot.lane.b32.xlu0 %v4316, 64
    %v4450 = vpop.permute.xlu0 %4449
    %4451 = vrot.lane.b32.xlu0 %v4321, 64
    %v4452 = vpop.permute.xlu0 %4451
    %v4455 = vsel %vm289, %v4436, 0
    %v4457 = vsel %vm289, %v4438, 0
    %4459 = vmatprep.subr.mxu0 0.0
    %4460 = vmatpush1.msra.mxu0 %v4450
    %4461 = vmatprep.subr.mxu0 0.0
    %4462 = vmatpush1.msra.mxu0 %v4452
    %4463 = vmatprep.subr.mxu0 0.0
    %4464 = vmatpush1.msra.mxu0 0.0
    %4465 = vmatprep.subr.mxu0 0.0
    %4466 = vmatpush1.msra.mxu0 0.0
    %4467 = vmatprep.subr.mxu0 0.0
    %4468 = vmatpush1.msra.mxu0 0.0
    %4469 = vmatprep.subr.mxu0 0.0
    %4470 = vmatpush1.msra.mxu0 0.0
    %4471 = vmatprep.subr.mxu0 0.0
    %4472 = vmatpush1.msra.mxu0 0.0
    %4473 = vmatprep.subr.mxu0 0.0
    %4474 = vmatpush1.msra.mxu0 0.0
    %4475 = vmatprep.subr.mxu0 0.0
    %4476 = vmatpush1.msra.mxu0 0.0
    %4477 = vmatprep.subr.mxu0 0.0
    %4478 = vmatpush1.msra.mxu0 0.0
    %4479 = vmatprep.subr.mxu0 0.0
    %4480 = vmatpush1.msra.mxu0 0.0
    %4481 = vmatprep.subr.mxu0 0.0
    %4482 = vmatpush1.msra.mxu0 0.0
    %4483 = vmatprep.subr.mxu0 0.0
    %4484 = vmatpush1.msra.mxu0 0.0
    %4485 = vmatprep.subr.mxu0 0.0
    %4486 = vmatpush1.msra.mxu0 0.0
    %4487 = vmatprep.subr.mxu0 0.0
    %4488 = vmatpush1.msra.mxu0 0.0
    %4489 = vmatprep.subr.mxu0 0.0
    %4490 = vmatpush1.msra.mxu0 0.0
    %4491 = vmatprep.subr.mxu0 0.0
    %4492 = vmatpush1.msra.mxu0 0.0
    %4493 = vmatprep.subr.mxu0 0.0
    %4494 = vmatpush1.msra.mxu0 0.0
    %4495 = vmatprep.subr.mxu0 0.0
    %4496 = vmatpush1.msra.mxu0 0.0
    %4497 = vmatprep.subr.mxu0 0.0
    %4498 = vmatpush1.msra.mxu0 0.0
    %4499 = vmatprep.subr.mxu0 0.0
    %4500 = vmatpush1.msra.mxu0 0.0
    %4501 = vmatprep.subr.mxu0 0.0
    %4502 = vmatpush1.msra.mxu0 0.0
    %4503 = vmatprep.subr.mxu0 0.0
    %4504 = vmatpush1.msra.mxu0 0.0
    %4505 = vmatprep.subr.mxu0 0.0
    %4506 = vmatpush1.msra.mxu0 0.0
    %4507 = vmatprep.subr.mxu0 0.0
    %4508 = vmatpush1.msra.mxu0 0.0
    %4509 = vmatprep.subr.mxu0 0.0
    %4510 = vmatpush1.msra.mxu0 0.0
    %4511 = vmatprep.subr.mxu0 0.0
    %4512 = vmatpush1.msra.mxu0 0.0
    %4513 = vmatprep.subr.mxu0 0.0
    %4514 = vmatpush1.msra.mxu0 0.0
    %4515 = vmatprep.subr.mxu0 0.0
    %4516 = vmatpush1.msra.mxu0 0.0
    %4517 = vmatprep.subr.mxu0 0.0
    %4518 = vmatpush1.msra.mxu0 0.0
    %4519 = vmatprep.subr.mxu0 0.0
    %4520 = vmatpush1.msra.mxu0 0.0
    %4521 = vmatprep.subr.mxu0 0.0
    %4522 = vmatpush1.msra.mxu0 0.0
    %4523 = vmatprep.mubr.f32.mxu0 0.0
    %4524 = vmatmul.mubr.f32.gmra.mrb[0].mxu0 %v4455
    %v4525 = vpop.f32.mrb[0].mxu0
    %v4526 = vadd.f32 0.0, %v4525
    %v4527 = vpop.f32.mrb[0].mxu0
    %4528 = vmatprep.mubr.f32.mxu0 0.0
    %4529 = vmatmul.mubr.f32.gmra.mrb[0].mxu0 %v4457
    %v4530 = vpop.f32.mrb[0].mxu0
    %v4531 = vadd.f32 0.0, %v4530
    %v4532 = vpop.f32.mrb[0].mxu0
    %4533 = vdwg.mxu0
    %4534 = vrot.lane.b32.xlu0 %v4316, 120
    %v4535 = vpop.permute.xlu0 %4534
    %4536 = vrot.lane.b32.xlu0 %v4321, 120
    %v4537 = vpop.permute.xlu0 %4536
    %4538 = vrot.lane.b32.xlu0 %v4316, 88
    %v4539 = vpop.permute.xlu0 %4538
    %4540 = vrot.lane.b32.xlu0 %v4321, 88
    %v4541 = vpop.permute.xlu0 %4540
    %v4542 = vsel %vm201, %v4535, 0
    %v4544 = vsel %vm201, %v4537, 0
    %v4546 = vsel %vm201, %v4539, 0
    %v4548 = vsel %vm201, %v4541, 0
    %4550 = vmatprep.subr.mxu0 0.0
    %4551 = vmatpush1.xpose.msra.mxu0 %v4546
    %4552 = vmatprep.subr.mxu0 0.0
    %4553 = vmatpush1.xpose.msra.mxu0 %v4548
    %4554 = vmatprep.subr.mxu0 0.0
    %4555 = vmatpush1.xpose.msra.mxu0 0.0
    %4556 = vmatprep.subr.mxu0 0.0
    %4557 = vmatpush1.xpose.msra.mxu0 0.0
    %4558 = vmatprep.subr.mxu0 0.0
    %4559 = vmatpush1.xpose.msra.mxu0 0.0
    %4560 = vmatprep.subr.mxu0 0.0
    %4561 = vmatpush1.xpose.msra.mxu0 0.0
    %4562 = vmatprep.subr.mxu0 0.0
    %4563 = vmatpush1.xpose.msra.mxu0 0.0
    %4564 = vmatprep.subr.mxu0 0.0
    %4565 = vmatpush1.xpose.msra.mxu0 0.0
    %4566 = vmatprep.subr.mxu0 0.0
    %4567 = vmatpush1.xpose.msra.mxu0 0.0
    %4568 = vmatprep.subr.mxu0 0.0
    %4569 = vmatpush1.xpose.msra.mxu0 0.0
    %4570 = vmatprep.subr.mxu0 0.0
    %4571 = vmatpush1.xpose.msra.mxu0 0.0
    %4572 = vmatprep.subr.mxu0 0.0
    %4573 = vmatpush1.xpose.msra.mxu0 0.0
    %4574 = vmatprep.subr.mxu0 0.0
    %4575 = vmatpush1.xpose.msra.mxu0 0.0
    %4576 = vmatprep.subr.mxu0 0.0
    %4577 = vmatpush1.xpose.msra.mxu0 0.0
    %4578 = vmatprep.subr.mxu0 0.0
    %4579 = vmatpush1.xpose.msra.mxu0 0.0
    %4580 = vmatprep.subr.mxu0 0.0
    %4581 = vmatpush1.xpose.msra.mxu0 0.0
    %4582 = vmatprep.subr.mxu0 0.0
    %4583 = vmatpush1.xpose.msra.mxu0 0.0
    %4584 = vmatprep.subr.mxu0 0.0
    %4585 = vmatpush1.xpose.msra.mxu0 0.0
    %4586 = vmatprep.subr.mxu0 0.0
    %4587 = vmatpush1.xpose.msra.mxu0 0.0
    %4588 = vmatprep.subr.mxu0 0.0
    %4589 = vmatpush1.xpose.msra.mxu0 0.0
    %4590 = vmatprep.subr.mxu0 0.0
    %4591 = vmatpush1.xpose.msra.mxu0 0.0
    %4592 = vmatprep.subr.mxu0 0.0
    %4593 = vmatpush1.xpose.msra.mxu0 0.0
    %4594 = vmatprep.subr.mxu0 0.0
    %4595 = vmatpush1.xpose.msra.mxu0 0.0
    %4596 = vmatprep.subr.mxu0 0.0
    %4597 = vmatpush1.xpose.msra.mxu0 0.0
    %4598 = vmatprep.subr.mxu0 0.0
    %4599 = vmatpush1.xpose.msra.mxu0 0.0
    %4600 = vmatprep.subr.mxu0 0.0
    %4601 = vmatpush1.xpose.msra.mxu0 0.0
    %4602 = vmatprep.subr.mxu0 0.0
    %4603 = vmatpush1.xpose.msra.mxu0 0.0
    %4604 = vmatprep.subr.mxu0 0.0
    %4605 = vmatpush1.xpose.msra.mxu0 0.0
    %4606 = vmatprep.subr.mxu0 0.0
    %4607 = vmatpush1.xpose.msra.mxu0 0.0
    %4608 = vmatprep.subr.mxu0 0.0
    %4609 = vmatpush1.xpose.msra.mxu0 0.0
    %4610 = vmatprep.subr.mxu0 0.0
    %4611 = vmatpush1.xpose.msra.mxu0 0.0
    %4612 = vmatprep.subr.mxu0 0.0
    %4613 = vmatpush1.xpose.msra.mxu0 0.0
    %4614 = vmatprep.mubr.f32.mxu0 0.0
    %4615 = vmatmul.mubr.f32.gmra.mrb[0].mxu0 %v4542
    %v4616 = vpop.f32.mrb[0].mxu0
    %v4617 = vadd.f32 0.0, %v4616
    %v4618 = vpop.f32.mrb[0].mxu0
    %4619 = vmatprep.mubr.f32.mxu0 0.0
    %4620 = vmatmul.mubr.f32.gmra.mrb[0].mxu0 %v4544
    %v4621 = vpop.f32.mrb[0].mxu0
    %v4622 = vadd.f32 0.0, %v4621
    %v4623 = vpop.f32.mrb[0].mxu0
    %4624 = vdwg.mxu0
    %v4625 = vmul.f32 %v4617, 0.35355338
    %v4626 = vmul.f32 %v4622, 0.35355338
    %v4627 = vadd.f32 %v4625, %v62
    %v4628 = vadd.f32 %v4626, %v63
    %v4629 = vsel %vm289, %v4627, -inf
    %4630 = vmax.xlane.f32.xlu0 %v4629
    %v4631 = vpop.xlane.xlu0 %4630
    %v4632 = vsel %vm289, %v4628, -inf
    %4633 = vmax.xlane.f32.xlu0 %v4632
    %v4634 = vpop.xlane.xlu0 %4633
    %v4635 = vsub.f32 %v4627, %v4631
    %v4636 = vsub.f32 %v4628, %v4634
    %v4637 = vmul.f32 %v4635, 1.442695
    %v4638 = vpow.pop %v4637
    %v4639 = vmul.f32 %v4636, 1.442695
    %v4640 = vpow.pop %v4639
    %v4641 = vsel %vm289, %v4638, 0.0
    %4642 = vadd.xlane.f32.xlu0 %v4641
    %v4643 = vpop.xlane.xlu0 %4642
    %v4644 = vsel %vm289, %v4640, 0.0
    %4645 = vadd.xlane.f32.xlu0 %v4644
    %v4646 = vpop.xlane.xlu0 %4645
    %v4647 = vrcp.pop %v4643
    %v4648 = vmul.f32 %v4638, %v4647
    %v4649 = vrcp.pop %v4646
    %v4650 = vmul.f32 %v4640, %v4649
    %4653 = vrot.lane.b32.xlu0 %v4648, 120
    %v4654 = vpop.permute.xlu0 %4653
    %4655 = vrot.lane.b32.xlu0 %v4650, 120
    %v4656 = vpop.permute.xlu0 %4655
    %v4659 = vadd.f32 %v4648, %v4654
    %v4660 = vadd.f32 %v4650, %v4656
    %4661 = vrot.lane.b32.xlu0 %v4316, 56
    %v4662 = vpop.permute.xlu0 %4661
    %4663 = vrot.lane.b32.xlu0 %v4321, 56
    %v4664 = vpop.permute.xlu0 %4663
    %v4667 = vsel %vm289, %v4648, 0
    %v4669 = vsel %vm289, %v4650, 0
    %4671 = vmatprep.subr.mxu0 0.0
    %4672 = vmatpush1.msra.mxu0 %v4662
    %4673 = vmatprep.subr.mxu0 0.0
    %4674 = vmatpush1.msra.mxu0 %v4664
    %4675 = vmatprep.subr.mxu0 0.0
    %4676 = vmatpush1.msra.mxu0 0.0
    %4677 = vmatprep.subr.mxu0 0.0
    %4678 = vmatpush1.msra.mxu0 0.0
    %4679 = vmatprep.subr.mxu0 0.0
    %4680 = vmatpush1.msra.mxu0 0.0
    %4681 = vmatprep.subr.mxu0 0.0
    %4682 = vmatpush1.msra.mxu0 0.0
    %4683 = vmatprep.subr.mxu0 0.0
    %4684 = vmatpush1.msra.mxu0 0.0
    %4685 = vmatprep.subr.mxu0 0.0
    %4686 = vmatpush1.msra.mxu0 0.0
    %4687 = vmatprep.subr.mxu0 0.0
    %4688 = vmatpush1.msra.mxu0 0.0
    %4689 = vmatprep.subr.mxu0 0.0
    %4690 = vmatpush1.msra.mxu0 0.0
    %4691 = vmatprep.subr.mxu0 0.0
    %4692 = vmatpush1.msra.mxu0 0.0
    %4693 = vmatprep.subr.mxu0 0.0
    %4694 = vmatpush1.msra.mxu0 0.0
    %4695 = vmatprep.subr.mxu0 0.0
    %4696 = vmatpush1.msra.mxu0 0.0
    %4697 = vmatprep.subr.mxu0 0.0
    %4698 = vmatpush1.msra.mxu0 0.0
    %4699 = vmatprep.subr.mxu0 0.0
    %4700 = vmatpush1.msra.mxu0 0.0
    %4701 = vmatprep.subr.mxu0 0.0
    %4702 = vmatpush1.msra.mxu0 0.0
    %4703 = vmatprep.subr.mxu0 0.0
    %4704 = vmatpush1.msra.mxu0 0.0
    %4705 = vmatprep.subr.mxu0 0.0
    %4706 = vmatpush1.msra.mxu0 0.0
    %4707 = vmatprep.subr.mxu0 0.0
    %4708 = vmatpush1.msra.mxu0 0.0
    %4709 = vmatprep.subr.mxu0 0.0
    %4710 = vmatpush1.msra.mxu0 0.0
    %4711 = vmatprep.subr.mxu0 0.0
    %4712 = vmatpush1.msra.mxu0 0.0
    %4713 = vmatprep.subr.mxu0 0.0
    %4714 = vmatpush1.msra.mxu0 0.0
    %4715 = vmatprep.subr.mxu0 0.0
    %4716 = vmatpush1.msra.mxu0 0.0
    %4717 = vmatprep.subr.mxu0 0.0
    %4718 = vmatpush1.msra.mxu0 0.0
    %4719 = vmatprep.subr.mxu0 0.0
    %4720 = vmatpush1.msra.mxu0 0.0
    %4721 = vmatprep.subr.mxu0 0.0
    %4722 = vmatpush1.msra.mxu0 0.0
    %4723 = vmatprep.subr.mxu0 0.0
    %4724 = vmatpush1.msra.mxu0 0.0
    %4725 = vmatprep.subr.mxu0 0.0
    %4726 = vmatpush1.msra.mxu0 0.0
    %4727 = vmatprep.subr.mxu0 0.0
    %4728 = vmatpush1.msra.mxu0 0.0
    %4729 = vmatprep.subr.mxu0 0.0
    %4730 = vmatpush1.msra.mxu0 0.0
    %4731 = vmatprep.subr.mxu0 0.0
    %4732 = vmatpush1.msra.mxu0 0.0
    %4733 = vmatprep.subr.mxu0 0.0
    %4734 = vmatpush1.msra.mxu0 0.0
    %4735 = vmatprep.mubr.f32.mxu0 0.0
    %4736 = vmatmul.mubr.f32.gmra.mrb[0].mxu0 %v4667
    %v4737 = vpop.f32.mrb[0].mxu0
    %v4738 = vadd.f32 0.0, %v4737
    %v4739 = vpop.f32.mrb[0].mxu0
    %4740 = vmatprep.mubr.f32.mxu0 0.0
    %4741 = vmatmul.mubr.f32.gmra.mrb[0].mxu0 %v4669
    %v4742 = vpop.f32.mrb[0].mxu0
    %v4743 = vadd.f32 0.0, %v4742
    %v4744 = vpop.f32.mrb[0].mxu0
    %4745 = vdwg.mxu0
    %4746 = vrot.lane.b32.xlu0 %v4316, 112
    %v4747 = vpop.permute.xlu0 %4746
    %4748 = vrot.lane.b32.xlu0 %v4321, 112
    %v4749 = vpop.permute.xlu0 %4748
    %4750 = vrot.lane.b32.xlu0 %v4316, 80
    %v4751 = vpop.permute.xlu0 %4750
    %4752 = vrot.lane.b32.xlu0 %v4321, 80
    %v4753 = vpop.permute.xlu0 %4752
    %v4754 = vsel %vm201, %v4747, 0
    %v4756 = vsel %vm201, %v4749, 0
    %v4758 = vsel %vm201, %v4751, 0
    %v4760 = vsel %vm201, %v4753, 0
    %4762 = vmatprep.subr.mxu0 0.0
    %4763 = vmatpush1.xpose.msra.mxu0 %v4758
    %4764 = vmatprep.subr.mxu0 0.0
    %4765 = vmatpush1.xpose.msra.mxu0 %v4760
    %4766 = vmatprep.subr.mxu0 0.0
    %4767 = vmatpush1.xpose.msra.mxu0 0.0
    %4768 = vmatprep.subr.mxu0 0.0
    %4769 = vmatpush1.xpose.msra.mxu0 0.0
    %4770 = vmatprep.subr.mxu0 0.0
    %4771 = vmatpush1.xpose.msra.mxu0 0.0
    %4772 = vmatprep.subr.mxu0 0.0
    %4773 = vmatpush1.xpose.msra.mxu0 0.0
    %4774 = vmatprep.subr.mxu0 0.0
    %4775 = vmatpush1.xpose.msra.mxu0 0.0
    %4776 = vmatprep.subr.mxu0 0.0
    %4777 = vmatpush1.xpose.msra.mxu0 0.0
    %4778 = vmatprep.subr.mxu0 0.0
    %4779 = vmatpush1.xpose.msra.mxu0 0.0
    %4780 = vmatprep.subr.mxu0 0.0
    %4781 = vmatpush1.xpose.msra.mxu0 0.0
    %4782 = vmatprep.subr.mxu0 0.0
    %4783 = vmatpush1.xpose.msra.mxu0 0.0
    %4784 = vmatprep.subr.mxu0 0.0
    %4785 = vmatpush1.xpose.msra.mxu0 0.0
    %4786 = vmatprep.subr.mxu0 0.0
    %4787 = vmatpush1.xpose.msra.mxu0 0.0
    %4788 = vmatprep.subr.mxu0 0.0
    %4789 = vmatpush1.xpose.msra.mxu0 0.0
    %4790 = vmatprep.subr.mxu0 0.0
    %4791 = vmatpush1.xpose.msra.mxu0 0.0
    %4792 = vmatprep.subr.mxu0 0.0
    %4793 = vmatpush1.xpose.msra.mxu0 0.0
    %4794 = vmatprep.subr.mxu0 0.0
    %4795 = vmatpush1.xpose.msra.mxu0 0.0
    %4796 = vmatprep.subr.mxu0 0.0
    %4797 = vmatpush1.xpose.msra.mxu0 0.0
    %4798 = vmatprep.subr.mxu0 0.0
    %4799 = vmatpush1.xpose.msra.mxu0 0.0
    %4800 = vmatprep.subr.mxu0 0.0
    %4801 = vmatpush1.xpose.msra.mxu0 0.0
    %4802 = vmatprep.subr.mxu0 0.0
    %4803 = vmatpush1.xpose.msra.mxu0 0.0
    %4804 = vmatprep.subr.mxu0 0.0
    %4805 = vmatpush1.xpose.msra.mxu0 0.0
    %4806 = vmatprep.subr.mxu0 0.0
    %4807 = vmatpush1.xpose.msra.mxu0 0.0
    %4808 = vmatprep.subr.mxu0 0.0
    %4809 = vmatpush1.xpose.msra.mxu0 0.0
    %4810 = vmatprep.subr.mxu0 0.0
    %4811 = vmatpush1.xpose.msra.mxu0 0.0
    %4812 = vmatprep.subr.mxu0 0.0
    %4813 = vmatpush1.xpose.msra.mxu0 0.0
    %4814 = vmatprep.subr.mxu0 0.0
    %4815 = vmatpush1.xpose.msra.mxu0 0.0
    %4816 = vmatprep.subr.mxu0 0.0
    %4817 = vmatpush1.xpose.msra.mxu0 0.0
    %4818 = vmatprep.subr.mxu0 0.0
    %4819 = vmatpush1.xpose.msra.mxu0 0.0
    %4820 = vmatprep.subr.mxu0 0.0
    %4821 = vmatpush1.xpose.msra.mxu0 0.0
    %4822 = vmatprep.subr.mxu0 0.0
    %4823 = vmatpush1.xpose.msra.mxu0 0.0
    %4824 = vmatprep.subr.mxu0 0.0
    %4825 = vmatpush1.xpose.msra.mxu0 0.0
    %4826 = vmatprep.mubr.f32.mxu0 0.0
    %4827 = vmatmul.mubr.f32.gmra.mrb[0].mxu0 %v4754
    %v4828 = vpop.f32.mrb[0].mxu0
    %v4829 = vadd.f32 0.0, %v4828
    %v4830 = vpop.f32.mrb[0].mxu0
    %4831 = vmatprep.mubr.f32.mxu0 0.0
    %4832 = vmatmul.mubr.f32.gmra.mrb[0].mxu0 %v4756
    %v4833 = vpop.f32.mrb[0].mxu0
    %v4834 = vadd.f32 0.0, %v4833
    %v4835 = vpop.f32.mrb[0].mxu0
    %4836 = vdwg.mxu0
    %v4837 = vmul.f32 %v4829, 0.35355338
    %v4838 = vmul.f32 %v4834, 0.35355338
    %v4839 = vadd.f32 %v4837, %v62
    %v4840 = vadd.f32 %v4838, %v63
    %v4841 = vsel %vm289, %v4839, -inf
    %4842 = vmax.xlane.f32.xlu0 %v4841
    %v4843 = vpop.xlane.xlu0 %4842
    %v4844 = vsel %vm289, %v4840, -inf
    %4845 = vmax.xlane.f32.xlu0 %v4844
    %v4846 = vpop.xlane.xlu0 %4845
    %v4847 = vsub.f32 %v4839, %v4843
    %v4848 = vsub.f32 %v4840, %v4846
    %v4849 = vmul.f32 %v4847, 1.442695
    %v4850 = vpow.pop %v4849
    %v4851 = vmul.f32 %v4848, 1.442695
    %v4852 = vpow.pop %v4851
    %v4853 = vsel %vm289, %v4850, 0.0
    %4854 = vadd.xlane.f32.xlu0 %v4853
    %v4855 = vpop.xlane.xlu0 %4854
    %v4856 = vsel %vm289, %v4852, 0.0
    %4857 = vadd.xlane.f32.xlu0 %v4856
    %v4858 = vpop.xlane.xlu0 %4857
    %v4859 = vrcp.pop %v4855
    %v4860 = vmul.f32 %v4850, %v4859
    %v4861 = vrcp.pop %v4858
    %v4862 = vmul.f32 %v4852, %v4861
    %4865 = vrot.lane.b32.xlu0 %v4860, 120
    %v4866 = vpop.permute.xlu0 %4865
    %4867 = vrot.lane.b32.xlu0 %v4862, 120
    %v4868 = vpop.permute.xlu0 %4867
    %v4871 = vadd.f32 %v4860, %v4866
    %v4872 = vadd.f32 %v4862, %v4868
    %4873 = vrot.lane.b32.xlu0 %v4316, 48
    %v4874 = vpop.permute.xlu0 %4873
    %4875 = vrot.lane.b32.xlu0 %v4321, 48
    %v4876 = vpop.permute.xlu0 %4875
    %v4879 = vsel %vm289, %v4860, 0
    %v4881 = vsel %vm289, %v4862, 0
    %4883 = vmatprep.subr.mxu0 0.0
    %4884 = vmatpush1.msra.mxu0 %v4874
    %4885 = vmatprep.subr.mxu0 0.0
    %4886 = vmatpush1.msra.mxu0 %v4876
    %4887 = vmatprep.subr.mxu0 0.0
    %4888 = vmatpush1.msra.mxu0 0.0
    %4889 = vmatprep.subr.mxu0 0.0
    %4890 = vmatpush1.msra.mxu0 0.0
    %4891 = vmatprep.subr.mxu0 0.0
    %4892 = vmatpush1.msra.mxu0 0.0
    %4893 = vmatprep.subr.mxu0 0.0
    %4894 = vmatpush1.msra.mxu0 0.0
    %4895 = vmatprep.subr.mxu0 0.0
    %4896 = vmatpush1.msra.mxu0 0.0
    %4897 = vmatprep.subr.mxu0 0.0
    %4898 = vmatpush1.msra.mxu0 0.0
    %4899 = vmatprep.subr.mxu0 0.0
    %4900 = vmatpush1.msra.mxu0 0.0
    %4901 = vmatprep.subr.mxu0 0.0
    %4902 = vmatpush1.msra.mxu0 0.0
    %4903 = vmatprep.subr.mxu0 0.0
    %4904 = vmatpush1.msra.mxu0 0.0
    %4905 = vmatprep.subr.mxu0 0.0
    %4906 = vmatpush1.msra.mxu0 0.0
    %4907 = vmatprep.subr.mxu0 0.0
    %4908 = vmatpush1.msra.mxu0 0.0
    %4909 = vmatprep.subr.mxu0 0.0
    %4910 = vmatpush1.msra.mxu0 0.0
    %4911 = vmatprep.subr.mxu0 0.0
    %4912 = vmatpush1.msra.mxu0 0.0
    %4913 = vmatprep.subr.mxu0 0.0
    %4914 = vmatpush1.msra.mxu0 0.0
    %4915 = vmatprep.subr.mxu0 0.0
    %4916 = vmatpush1.msra.mxu0 0.0
    %4917 = vmatprep.subr.mxu0 0.0
    %4918 = vmatpush1.msra.mxu0 0.0
    %4919 = vmatprep.subr.mxu0 0.0
    %4920 = vmatpush1.msra.mxu0 0.0
    %4921 = vmatprep.subr.mxu0 0.0
    %4922 = vmatpush1.msra.mxu0 0.0
    %4923 = vmatprep.subr.mxu0 0.0
    %4924 = vmatpush1.msra.mxu0 0.0
    %4925 = vmatprep.subr.mxu0 0.0
    %4926 = vmatpush1.msra.mxu0 0.0
    %4927 = vmatprep.subr.mxu0 0.0
    %4928 = vmatpush1.msra.mxu0 0.0
    %4929 = vmatprep.subr.mxu0 0.0
    %4930 = vmatpush1.msra.mxu0 0.0
    %4931 = vmatprep.subr.mxu0 0.0
    %4932 = vmatpush1.msra.mxu0 0.0
    %4933 = vmatprep.subr.mxu0 0.0
    %4934 = vmatpush1.msra.mxu0 0.0
    %4935 = vmatprep.subr.mxu0 0.0
    %4936 = vmatpush1.msra.mxu0 0.0
    %4937 = vmatprep.subr.mxu0 0.0
    %4938 = vmatpush1.msra.mxu0 0.0
    %4939 = vmatprep.subr.mxu0 0.0
    %4940 = vmatpush1.msra.mxu0 0.0
    %4941 = vmatprep.subr.mxu0 0.0
    %4942 = vmatpush1.msra.mxu0 0.0
    %4943 = vmatprep.subr.mxu0 0.0
    %4944 = vmatpush1.msra.mxu0 0.0
    %4945 = vmatprep.subr.mxu0 0.0
    %4946 = vmatpush1.msra.mxu0 0.0
    %4947 = vmatprep.mubr.f32.mxu0 0.0
    %4948 = vmatmul.mubr.f32.gmra.mrb[0].mxu0 %v4879
    %v4949 = vpop.f32.mrb[0].mxu0
    %v4950 = vadd.f32 0.0, %v4949
    %v4951 = vpop.f32.mrb[0].mxu0
    %4952 = vmatprep.mubr.f32.mxu0 0.0
    %4953 = vmatmul.mubr.f32.gmra.mrb[0].mxu0 %v4881
    %v4954 = vpop.f32.mrb[0].mxu0
    %v4955 = vadd.f32 0.0, %v4954
    %v4956 = vpop.f32.mrb[0].mxu0
    %4957 = vdwg.mxu0
    %4958 = vrot.lane.b32.xlu0 %v4316, 104
    %v4959 = vpop.permute.xlu0 %4958
    %4960 = vrot.lane.b32.xlu0 %v4321, 104
    %v4961 = vpop.permute.xlu0 %4960
    %4962 = vrot.lane.b32.xlu0 %v4316, 72
    %v4963 = vpop.permute.xlu0 %4962
    %4964 = vrot.lane.b32.xlu0 %v4321, 72
    %v4965 = vpop.permute.xlu0 %4964
    %v4966 = vsel %vm201, %v4959, 0
    %v4968 = vsel %vm201, %v4961, 0
    %v4970 = vsel %vm201, %v4963, 0
    %v4972 = vsel %vm201, %v4965, 0
    %4974 = vmatprep.subr.mxu0 0.0
    %4975 = vmatpush1.xpose.msra.mxu0 %v4970
    %4976 = vmatprep.subr.mxu0 0.0
    %4977 = vmatpush1.xpose.msra.mxu0 %v4972
    %4978 = vmatprep.subr.mxu0 0.0
    %4979 = vmatpush1.xpose.msra.mxu0 0.0
    %4980 = vmatprep.subr.mxu0 0.0
    %4981 = vmatpush1.xpose.msra.mxu0 0.0
    %4982 = vmatprep.subr.mxu0 0.0
    %4983 = vmatpush1.xpose.msra.mxu0 0.0
    %4984 = vmatprep.subr.mxu0 0.0
    %4985 = vmatpush1.xpose.msra.mxu0 0.0
    %4986 = vmatprep.subr.mxu0 0.0
    %4987 = vmatpush1.xpose.msra.mxu0 0.0
    %4988 = vmatprep.subr.mxu0 0.0
    %4989 = vmatpush1.xpose.msra.mxu0 0.0
    %4990 = vmatprep.subr.mxu0 0.0
    %4991 = vmatpush1.xpose.msra.mxu0 0.0
    %4992 = vmatprep.subr.mxu0 0.0
    %4993 = vmatpush1.xpose.msra.mxu0 0.0
    %4994 = vmatprep.subr.mxu0 0.0
    %4995 = vmatpush1.xpose.msra.mxu0 0.0
    %4996 = vmatprep.subr.mxu0 0.0
    %4997 = vmatpush1.xpose.msra.mxu0 0.0
    %4998 = vmatprep.subr.mxu0 0.0
    %4999 = vmatpush1.xpose.msra.mxu0 0.0
    %5000 = vmatprep.subr.mxu0 0.0
    %5001 = vmatpush1.xpose.msra.mxu0 0.0
    %5002 = vmatprep.subr.mxu0 0.0
    %5003 = vmatpush1.xpose.msra.mxu0 0.0
    %5004 = vmatprep.subr.mxu0 0.0
    %5005 = vmatpush1.xpose.msra.mxu0 0.0
    %5006 = vmatprep.subr.mxu0 0.0
    %5007 = vmatpush1.xpose.msra.mxu0 0.0
    %5008 = vmatprep.subr.mxu0 0.0
    %5009 = vmatpush1.xpose.msra.mxu0 0.0
    %5010 = vmatprep.subr.mxu0 0.0
    %5011 = vmatpush1.xpose.msra.mxu0 0.0
    %5012 = vmatprep.subr.mxu0 0.0
    %5013 = vmatpush1.xpose.msra.mxu0 0.0
    %5014 = vmatprep.subr.mxu0 0.0
    %5015 = vmatpush1.xpose.msra.mxu0 0.0
    %5016 = vmatprep.subr.mxu0 0.0
    %5017 = vmatpush1.xpose.msra.mxu0 0.0
    %5018 = vmatprep.subr.mxu0 0.0
    %5019 = vmatpush1.xpose.msra.mxu0 0.0
    %5020 = vmatprep.subr.mxu0 0.0
    %5021 = vmatpush1.xpose.msra.mxu0 0.0
    %5022 = vmatprep.subr.mxu0 0.0
    %5023 = vmatpush1.xpose.msra.mxu0 0.0
    %5024 = vmatprep.subr.mxu0 0.0
    %5025 = vmatpush1.xpose.msra.mxu0 0.0
    %5026 = vmatprep.subr.mxu0 0.0
    %5027 = vmatpush1.xpose.msra.mxu0 0.0
    %5028 = vmatprep.subr.mxu0 0.0
    %5029 = vmatpush1.xpose.msra.mxu0 0.0
    %5030 = vmatprep.subr.mxu0 0.0
    %5031 = vmatpush1.xpose.msra.mxu0 0.0
    %5032 = vmatprep.subr.mxu0 0.0
    %5033 = vmatpush1.xpose.msra.mxu0 0.0
    %5034 = vmatprep.subr.mxu0 0.0
    %5035 = vmatpush1.xpose.msra.mxu0 0.0
    %5036 = vmatprep.subr.mxu0 0.0
    %5037 = vmatpush1.xpose.msra.mxu0 0.0
    %5038 = vmatprep.mubr.f32.mxu0 0.0
    %5039 = vmatmul.mubr.f32.gmra.mrb[0].mxu0 %v4966
    %v5040 = vpop.f32.mrb[0].mxu0
    %v5041 = vadd.f32 0.0, %v5040
    %v5042 = vpop.f32.mrb[0].mxu0
    %5043 = vmatprep.mubr.f32.mxu0 0.0
    %5044 = vmatmul.mubr.f32.gmra.mrb[0].mxu0 %v4968
    %v5045 = vpop.f32.mrb[0].mxu0
    %v5046 = vadd.f32 0.0, %v5045
    %v5047 = vpop.f32.mrb[0].mxu0
    %5048 = vdwg.mxu0
    %v5049 = vmul.f32 %v5041, 0.35355338
    %v5050 = vmul.f32 %v5046, 0.35355338
    %v5051 = vadd.f32 %v5049, %v62
    %v5052 = vadd.f32 %v5050, %v63
    %v5053 = vsel %vm289, %v5051, -inf
    %5054 = vmax.xlane.f32.xlu0 %v5053
    %v5055 = vpop.xlane.xlu0 %5054
    %v5056 = vsel %vm289, %v5052, -inf
    %5057 = vmax.xlane.f32.xlu0 %v5056
    %v5058 = vpop.xlane.xlu0 %5057
    %v5059 = vsub.f32 %v5051, %v5055
    %v5060 = vsub.f32 %v5052, %v5058
    %v5061 = vmul.f32 %v5059, 1.442695
    %v5062 = vpow.pop %v5061
    %v5063 = vmul.f32 %v5060, 1.442695
    %v5064 = vpow.pop %v5063
    %v5065 = vsel %vm289, %v5062, 0.0
    %5066 = vadd.xlane.f32.xlu0 %v5065
    %v5067 = vpop.xlane.xlu0 %5066
    %v5068 = vsel %vm289, %v5064, 0.0
    %5069 = vadd.xlane.f32.xlu0 %v5068
    %v5070 = vpop.xlane.xlu0 %5069
    %v5071 = vrcp.pop %v5067
    %v5072 = vmul.f32 %v5062, %v5071
    %v5073 = vrcp.pop %v5070
    %v5074 = vmul.f32 %v5064, %v5073
    %5077 = vrot.lane.b32.xlu0 %v5072, 120
    %v5078 = vpop.permute.xlu0 %5077
    %5079 = vrot.lane.b32.xlu0 %v5074, 120
    %v5080 = vpop.permute.xlu0 %5079
    %v5083 = vadd.f32 %v5072, %v5078
    %v5084 = vadd.f32 %v5074, %v5080
    %5085 = vrot.lane.b32.xlu0 %v4316, 40
    %v5086 = vpop.permute.xlu0 %5085
    %5087 = vrot.lane.b32.xlu0 %v4321, 40
    %v5088 = vpop.permute.xlu0 %5087
    %v5091 = vsel %vm289, %v5072, 0
    %v5093 = vsel %vm289, %v5074, 0
    %5095 = vmatprep.subr.mxu0 0.0
    %5096 = vmatpush1.msra.mxu0 %v5086
    %5097 = vmatprep.subr.mxu0 0.0
    %5098 = vmatpush1.msra.mxu0 %v5088
    %5099 = vmatprep.subr.mxu0 0.0
    %5100 = vmatpush1.msra.mxu0 0.0
    %5101 = vmatprep.subr.mxu0 0.0
    %5102 = vmatpush1.msra.mxu0 0.0
    %5103 = vmatprep.subr.mxu0 0.0
    %5104 = vmatpush1.msra.mxu0 0.0
    %5105 = vmatprep.subr.mxu0 0.0
    %5106 = vmatpush1.msra.mxu0 0.0
    %5107 = vmatprep.subr.mxu0 0.0
    %5108 = vmatpush1.msra.mxu0 0.0
    %5109 = vmatprep.subr.mxu0 0.0
    %5110 = vmatpush1.msra.mxu0 0.0
    %5111 = vmatprep.subr.mxu0 0.0
    %5112 = vmatpush1.msra.mxu0 0.0
    %5113 = vmatprep.subr.mxu0 0.0
    %5114 = vmatpush1.msra.mxu0 0.0
    %5115 = vmatprep.subr.mxu0 0.0
    %5116 = vmatpush1.msra.mxu0 0.0
    %5117 = vmatprep.subr.mxu0 0.0
    %5118 = vmatpush1.msra.mxu0 0.0
    %5119 = vmatprep.subr.mxu0 0.0
    %5120 = vmatpush1.msra.mxu0 0.0
    %5121 = vmatprep.subr.mxu0 0.0
    %5122 = vmatpush1.msra.mxu0 0.0
    %5123 = vmatprep.subr.mxu0 0.0
    %5124 = vmatpush1.msra.mxu0 0.0
    %5125 = vmatprep.subr.mxu0 0.0
    %5126 = vmatpush1.msra.mxu0 0.0
    %5127 = vmatprep.subr.mxu0 0.0
    %5128 = vmatpush1.msra.mxu0 0.0
    %5129 = vmatprep.subr.mxu0 0.0
    %5130 = vmatpush1.msra.mxu0 0.0
    %5131 = vmatprep.subr.mxu0 0.0
    %5132 = vmatpush1.msra.mxu0 0.0
    %5133 = vmatprep.subr.mxu0 0.0
    %5134 = vmatpush1.msra.mxu0 0.0
    %5135 = vmatprep.subr.mxu0 0.0
    %5136 = vmatpush1.msra.mxu0 0.0
    %5137 = vmatprep.subr.mxu0 0.0
    %5138 = vmatpush1.msra.mxu0 0.0
    %5139 = vmatprep.subr.mxu0 0.0
    %5140 = vmatpush1.msra.mxu0 0.0
    %5141 = vmatprep.subr.mxu0 0.0
    %5142 = vmatpush1.msra.mxu0 0.0
    %5143 = vmatprep.subr.mxu0 0.0
    %5144 = vmatpush1.msra.mxu0 0.0
    %5145 = vmatprep.subr.mxu0 0.0
    %5146 = vmatpush1.msra.mxu0 0.0
    %5147 = vmatprep.subr.mxu0 0.0
    %5148 = vmatpush1.msra.mxu0 0.0
    %5149 = vmatprep.subr.mxu0 0.0
    %5150 = vmatpush1.msra.mxu0 0.0
    %5151 = vmatprep.subr.mxu0 0.0
    %5152 = vmatpush1.msra.mxu0 0.0
    %5153 = vmatprep.subr.mxu0 0.0
    %5154 = vmatpush1.msra.mxu0 0.0
    %5155 = vmatprep.subr.mxu0 0.0
    %5156 = vmatpush1.msra.mxu0 0.0
    %5157 = vmatprep.subr.mxu0 0.0
    %5158 = vmatpush1.msra.mxu0 0.0
    %5159 = vmatprep.mubr.f32.mxu0 0.0
    %5160 = vmatmul.mubr.f32.gmra.mrb[0].mxu0 %v5091
    %v5161 = vpop.f32.mrb[0].mxu0
    %v5162 = vadd.f32 0.0, %v5161
    %v5163 = vpop.f32.mrb[0].mxu0
    %5164 = vmatprep.mubr.f32.mxu0 0.0
    %5165 = vmatmul.mubr.f32.gmra.mrb[0].mxu0 %v5093
    %v5166 = vpop.f32.mrb[0].mxu0
    %v5167 = vadd.f32 0.0, %v5166
    %v5168 = vpop.f32.mrb[0].mxu0
    %5169 = vdwg.mxu0
    %5172 = vrot.lane.b32.xlu0 %v4659, 8
    %v5173 = vpop.permute.xlu0 %5172
    %5174 = vrot.lane.b32.xlu0 %v4660, 8
    %v5175 = vpop.permute.xlu0 %5174
    %5180 = vrot.lane.b32.xlu0 %v4871, 16
    %v5181 = vpop.permute.xlu0 %5180
    %5182 = vrot.lane.b32.xlu0 %v4872, 16
    %v5183 = vpop.permute.xlu0 %5182
    %5188 = vrot.lane.b32.xlu0 %v5083, 24
    %v5189 = vpop.permute.xlu0 %5188
    %5190 = vrot.lane.b32.xlu0 %v5084, 24
    %v5191 = vpop.permute.xlu0 %5190
    %v5194 = vsel %vm201, %v4447, %v5173
    %v5195 = vsel %vm201, %v4448, %v5175
    %v5196 = vsel %vm289, %v5194, %v5181
    %v5197 = vsel %vm289, %v5195, %v5183
    %v5198 = vsel %vm1071, %v5196, %v5189
    %v5199 = vsel %vm1071, %v5197, %v5191
    %5202 = vrot.lane.b32.xlu0 %v4738, 8
    %v5203 = vpop.permute.xlu0 %5202
    %5204 = vrot.lane.b32.xlu0 %v4743, 8
    %v5205 = vpop.permute.xlu0 %5204
    %5210 = vrot.lane.b32.xlu0 %v4950, 16
    %v5211 = vpop.permute.xlu0 %5210
    %5212 = vrot.lane.b32.xlu0 %v4955, 16
    %v5213 = vpop.permute.xlu0 %5212
    %5218 = vrot.lane.b32.xlu0 %v5162, 24
    %v5219 = vpop.permute.xlu0 %5218
    %5220 = vrot.lane.b32.xlu0 %v5167, 24
    %v5221 = vpop.permute.xlu0 %5220
    %v5224 = vsel %vm201, %v4526, %v5203
    %v5225 = vsel %vm201, %v4531, %v5205
    %v5226 = vsel %vm289, %v5224, %v5211
    %v5227 = vsel %vm289, %v5225, %v5213
    %v5228 = vsel %vm1071, %v5226, %v5219
    %v5229 = vsel %vm1071, %v5227, %v5221
    %s5230 = scalar_lea.vmem %s3, 96
    %v5231 = vld [vmem:[%s5230] sm:$0xff]
    %v5232 = vld [vmem:[%s5230 + $0x8] sm:$0xff]
    %v5233 = vld [vmem:[%s5230 + $0x10] sm:$0xff]
    %v5234 = vld [vmem:[%s5230 + $0x18] sm:$0xff]
    %s5235 = scalar_lea.vmem %s4, 3
    %v5236 = vld [vmem:[%s5235] sm:$0x1]
    %v5238 = vlaneseq
    %v5239 = vshrl.u32 %v5238, 7
    %v5240 = vsub.s32 0, %v5239
    %v5241 = vrot.slane %v5236, %v5240
    %v5244 = vsel %vm66, %v5228, 0
    %v5247 = vsel %vm66, %v5229, 0
    %5249 = vmatprep.subr.mxu0 0.0
    %5250 = vmatpush1.msra.mxu0 %v5231
    %5251 = vmatprep.subr.mxu0 0.0
    %5252 = vmatpush1.msra.mxu0 %v5232
    %5253 = vmatprep.subr.mxu0 0.0
    %5254 = vmatpush1.msra.mxu0 %v5233
    %5255 = vmatprep.subr.mxu0 0.0
    %5256 = vmatpush1.msra.mxu0 %v5234
    %5257 = vmatprep.subr.mxu0 0.0
    %5258 = vmatpush1.msra.mxu0 0.0
    %5259 = vmatprep.subr.mxu0 0.0
    %5260 = vmatpush1.msra.mxu0 0.0
    %5261 = vmatprep.subr.mxu0 0.0
    %5262 = vmatpush1.msra.mxu0 0.0
    %5263 = vmatprep.subr.mxu0 0.0
    %5264 = vmatpush1.msra.mxu0 0.0
    %5265 = vmatprep.subr.mxu0 0.0
    %5266 = vmatpush1.msra.mxu0 0.0
    %5267 = vmatprep.subr.mxu0 0.0
    %5268 = vmatpush1.msra.mxu0 0.0
    %5269 = vmatprep.subr.mxu0 0.0
    %5270 = vmatpush1.msra.mxu0 0.0
    %5271 = vmatprep.subr.mxu0 0.0
    %5272 = vmatpush1.msra.mxu0 0.0
    %5273 = vmatprep.subr.mxu0 0.0
    %5274 = vmatpush1.msra.mxu0 0.0
    %5275 = vmatprep.subr.mxu0 0.0
    %5276 = vmatpush1.msra.mxu0 0.0
    %5277 = vmatprep.subr.mxu0 0.0
    %5278 = vmatpush1.msra.mxu0 0.0
    %5279 = vmatprep.subr.mxu0 0.0
    %5280 = vmatpush1.msra.mxu0 0.0
    %5281 = vmatprep.subr.mxu0 0.0
    %5282 = vmatpush1.msra.mxu0 0.0
    %5283 = vmatprep.subr.mxu0 0.0
    %5284 = vmatpush1.msra.mxu0 0.0
    %5285 = vmatprep.subr.mxu0 0.0
    %5286 = vmatpush1.msra.mxu0 0.0
    %5287 = vmatprep.subr.mxu0 0.0
    %5288 = vmatpush1.msra.mxu0 0.0
    %5289 = vmatprep.subr.mxu0 0.0
    %5290 = vmatpush1.msra.mxu0 0.0
    %5291 = vmatprep.subr.mxu0 0.0
    %5292 = vmatpush1.msra.mxu0 0.0
    %5293 = vmatprep.subr.mxu0 0.0
    %5294 = vmatpush1.msra.mxu0 0.0
    %5295 = vmatprep.subr.mxu0 0.0
    %5296 = vmatpush1.msra.mxu0 0.0
    %5297 = vmatprep.subr.mxu0 0.0
    %5298 = vmatpush1.msra.mxu0 0.0
    %5299 = vmatprep.subr.mxu0 0.0
    %5300 = vmatpush1.msra.mxu0 0.0
    %5301 = vmatprep.subr.mxu0 0.0
    %5302 = vmatpush1.msra.mxu0 0.0
    %5303 = vmatprep.subr.mxu0 0.0
    %5304 = vmatpush1.msra.mxu0 0.0
    %5305 = vmatprep.subr.mxu0 0.0
    %5306 = vmatpush1.msra.mxu0 0.0
    %5307 = vmatprep.subr.mxu0 0.0
    %5308 = vmatpush1.msra.mxu0 0.0
    %5309 = vmatprep.subr.mxu0 0.0
    %5310 = vmatpush1.msra.mxu0 0.0
    %5311 = vmatprep.subr.mxu0 0.0
    %5312 = vmatpush1.msra.mxu0 0.0
    %5313 = vmatprep.mubr.f32.mxu0 0.0
    %5314 = vmatmul.mubr.f32.gmra.mrb[0].mxu0 %v5244
    %v5315 = vpop.f32.mrb[0].mxu0
    %v5316 = vadd.f32 %v5241, %v5315
    %v5317 = vpop.f32.mrb[0].mxu0
    %5318 = vmatprep.mubr.f32.mxu0 0.0
    %5319 = vmatmul.mubr.f32.gmra.mrb[0].mxu0 %v5247
    %v5320 = vpop.f32.mrb[0].mxu0
    %v5321 = vadd.f32 %v5241, %v5320
    %v5322 = vpop.f32.mrb[0].mxu0
    %5323 = vdwg.mxu0
    %v5324 = vadd.f32 %v4190, %v5316
    %v5325 = vadd.f32 %v4191, %v5321
    %s5326 = scalar_lea.vmem %s7, 3
    %v5327 = vld [vmem:[%s5326] sm:$0x1]
    %s5328 = scalar_lea.vmem %s8, 3
    %v5329 = vld [vmem:[%s5328] sm:$0x1]
    %v5330 = vsel %vm66, %v5324, 0.0
    %5331 = vadd.xlane.f32.xlu0 %v5330
    %v5332 = vpop.xlane.xlu0 %5331
    %v5333 = vsel %vm66, %v5325, 0.0
    %5334 = vadd.xlane.f32.xlu0 %v5333
    %v5335 = vpop.xlane.xlu0 %5334
    %v5336 = vmul.f32 %v5332, %v73
    %v5337 = vmul.f32 %v5335, %v73
    %v5338 = vsub.f32 %v5324, %v5336
    %v5339 = vsub.f32 %v5325, %v5337
    %v5340 = vmul.f32 %v5338, %v5338
    %v5341 = vmul.f32 %v5339, %v5339
    %v5342 = vsel %vm66, %v5340, 0.0
    %5343 = vadd.xlane.f32.xlu0 %v5342
    %v5344 = vpop.xlane.xlu0 %5343
    %v5345 = vsel %vm66, %v5341, 0.0
    %5346 = vadd.xlane.f32.xlu0 %v5345
    %v5347 = vpop.xlane.xlu0 %5346
    %v5348 = vmul.f32 %v5344, %v73
    %v5349 = vmul.f32 %v5347, %v73
    %v5350 = vadd.f32 %v5348, 1e-05
    %v5351 = vadd.f32 %v5349, 1e-05
    %v5352 = vrsqrt.pop %v5350
    %v5353 = vrsqrt.pop %v5351
    %v5354 = vmul.f32 %v5338, %v5352
    %v5355 = vmul.f32 %v5339, %v5353
    %v5357 = vlaneseq
    %v5358 = vshrl.u32 %v5357, 7
    %v5359 = vsub.s32 0, %v5358
    %v5360 = vrot.slane %v5327, %v5359
    %v5362 = vmul.f32 %v5354, %v5360
    %v5363 = vmul.f32 %v5355, %v5360
    %v5365 = vlaneseq
    %v5366 = vshrl.u32 %v5365, 7
    %v5367 = vsub.s32 0, %v5366
    %v5368 = vrot.slane %v5329, %v5367
    %v5370 = vadd.f32 %v5362, %v5368
    %v5371 = vadd.f32 %v5363, %v5368
    %s5372 = scalar_lea.vmem %s9, 96
    %v5373 = vld [vmem:[%s5372] sm:$0xff]
    %v5374 = vld [vmem:[%s5372 + $0x8] sm:$0xff]
    %v5375 = vld [vmem:[%s5372 + $0x10] sm:$0xff]
    %v5376 = vld [vmem:[%s5372 + $0x18] sm:$0xff]
    %s5377 = scalar_lea.vmem %s10, 3
    %v5378 = vld [vmem:[%s5377] sm:$0x1]
    %v5380 = vlaneseq
    %v5381 = vshrl.u32 %v5380, 7
    %v5382 = vsub.s32 0, %v5381
    %v5383 = vrot.slane %v5378, %v5382
    %v5386 = vsel %vm66, %v5370, 0
    %v5389 = vsel %vm66, %v5371, 0
    %5391 = vmatprep.subr.mxu0 0.0
    %5392 = vmatpush1.msra.mxu0 %v5373
    %5393 = vmatprep.subr.mxu0 0.0
    %5394 = vmatpush1.msra.mxu0 %v5374
    %5395 = vmatprep.subr.mxu0 0.0
    %5396 = vmatpush1.msra.mxu0 %v5375
    %5397 = vmatprep.subr.mxu0 0.0
    %5398 = vmatpush1.msra.mxu0 %v5376
    %5399 = vmatprep.subr.mxu0 0.0
    %5400 = vmatpush1.msra.mxu0 0.0
    %5401 = vmatprep.subr.mxu0 0.0
    %5402 = vmatpush1.msra.mxu0 0.0
    %5403 = vmatprep.subr.mxu0 0.0
    %5404 = vmatpush1.msra.mxu0 0.0
    %5405 = vmatprep.subr.mxu0 0.0
    %5406 = vmatpush1.msra.mxu0 0.0
    %5407 = vmatprep.subr.mxu0 0.0
    %5408 = vmatpush1.msra.mxu0 0.0
    %5409 = vmatprep.subr.mxu0 0.0
    %5410 = vmatpush1.msra.mxu0 0.0
    %5411 = vmatprep.subr.mxu0 0.0
    %5412 = vmatpush1.msra.mxu0 0.0
    %5413 = vmatprep.subr.mxu0 0.0
    %5414 = vmatpush1.msra.mxu0 0.0
    %5415 = vmatprep.subr.mxu0 0.0
    %5416 = vmatpush1.msra.mxu0 0.0
    %5417 = vmatprep.subr.mxu0 0.0
    %5418 = vmatpush1.msra.mxu0 0.0
    %5419 = vmatprep.subr.mxu0 0.0
    %5420 = vmatpush1.msra.mxu0 0.0
    %5421 = vmatprep.subr.mxu0 0.0
    %5422 = vmatpush1.msra.mxu0 0.0
    %5423 = vmatprep.subr.mxu0 0.0
    %5424 = vmatpush1.msra.mxu0 0.0
    %5425 = vmatprep.subr.mxu0 0.0
    %5426 = vmatpush1.msra.mxu0 0.0
    %5427 = vmatprep.subr.mxu0 0.0
    %5428 = vmatpush1.msra.mxu0 0.0
    %5429 = vmatprep.subr.mxu0 0.0
    %5430 = vmatpush1.msra.mxu0 0.0
    %5431 = vmatprep.subr.mxu0 0.0
    %5432 = vmatpush1.msra.mxu0 0.0
    %5433 = vmatprep.subr.mxu0 0.0
    %5434 = vmatpush1.msra.mxu0 0.0
    %5435 = vmatprep.subr.mxu0 0.0
    %5436 = vmatpush1.msra.mxu0 0.0
    %5437 = vmatprep.subr.mxu0 0.0
    %5438 = vmatpush1.msra.mxu0 0.0
    %5439 = vmatprep.subr.mxu0 0.0
    %5440 = vmatpush1.msra.mxu0 0.0
    %5441 = vmatprep.subr.mxu0 0.0
    %5442 = vmatpush1.msra.mxu0 0.0
    %5443 = vmatprep.subr.mxu0 0.0
    %5444 = vmatpush1.msra.mxu0 0.0
    %5445 = vmatprep.subr.mxu0 0.0
    %5446 = vmatpush1.msra.mxu0 0.0
    %5447 = vmatprep.subr.mxu0 0.0
    %5448 = vmatpush1.msra.mxu0 0.0
    %5449 = vmatprep.subr.mxu0 0.0
    %5450 = vmatpush1.msra.mxu0 0.0
    %5451 = vmatprep.subr.mxu0 0.0
    %5452 = vmatpush1.msra.mxu0 0.0
    %5453 = vmatprep.subr.mxu0 0.0
    %5454 = vmatpush1.msra.mxu0 0.0
    %5455 = vmatprep.mubr.f32.mxu0 0.0
    %5456 = vmatmul.mubr.f32.gmra.mrb[0].mxu0 %v5386
    %v5457 = vpop.f32.mrb[0].mxu0
    %v5458 = vadd.f32 %v5383, %v5457
    %v5459 = vpop.f32.mrb[0].mxu0
    %5460 = vmatprep.mubr.f32.mxu0 0.0
    %5461 = vmatmul.mubr.f32.gmra.mrb[0].mxu0 %v5389
    %v5462 = vpop.f32.mrb[0].mxu0
    %v5463 = vadd.f32 %v5383, %v5462
    %v5464 = vpop.f32.mrb[0].mxu0
    %5465 = vdwg.mxu0
    %v5466 = vmax.f32 %v5458, 0.0
    %v5467 = vmax.f32 %v5463, 0.0
    %s5468 = scalar_lea.vmem %s11, 384
    %v5469 = vld [vmem:[%s5468] sm:$0xff]
    %v5470 = vld [vmem:[%s5468 + $0x8] sm:$0xff]
    %v5471 = vld [vmem:[%s5468 + $0x10] sm:$0xff]
    %v5472 = vld [vmem:[%s5468 + $0x18] sm:$0xff]
    %v5473 = vld [vmem:[%s5468 + $0x20] sm:$0xff]
    %v5474 = vld [vmem:[%s5468 + $0x28] sm:$0xff]
    %v5475 = vld [vmem:[%s5468 + $0x30] sm:$0xff]
    %v5476 = vld [vmem:[%s5468 + $0x38] sm:$0xff]
    %v5477 = vld [vmem:[%s5468 + $0x40] sm:$0xff]
    %v5478 = vld [vmem:[%s5468 + $0x48] sm:$0xff]
    %v5479 = vld [vmem:[%s5468 + $0x50] sm:$0xff]
    %v5480 = vld [vmem:[%s5468 + $0x58] sm:$0xff]
    %v5481 = vld [vmem:[%s5468 + $0x60] sm:$0xff]
    %v5482 = vld [vmem:[%s5468 + $0x68] sm:$0xff]
    %v5483 = vld [vmem:[%s5468 + $0x70] sm:$0xff]
    %v5484 = vld [vmem:[%s5468 + $0x78] sm:$0xff]
    %s5485 = scalar_lea.vmem %s12, 3
    %v5486 = vld [vmem:[%s5485] sm:$0x1]
    %v5488 = vlaneseq
    %v5489 = vshrl.u32 %v5488, 7
    %v5490 = vsub.s32 0, %v5489
    %v5491 = vrot.slane %v5486, %v5490
    %5493 = vmatprep.subr.mxu0 0.0
    %5494 = vmatpush1.msra.mxu0 %v5469
    %5495 = vmatprep.subr.mxu0 0.0
    %5496 = vmatpush1.msra.mxu0 %v5470
    %5497 = vmatprep.subr.mxu0 0.0
    %5498 = vmatpush1.msra.mxu0 %v5471
    %5499 = vmatprep.subr.mxu0 0.0
    %5500 = vmatpush1.msra.mxu0 %v5472
    %5501 = vmatprep.subr.mxu0 0.0
    %5502 = vmatpush1.msra.mxu0 %v5473
    %5503 = vmatprep.subr.mxu0 0.0
    %5504 = vmatpush1.msra.mxu0 %v5474
    %5505 = vmatprep.subr.mxu0 0.0
    %5506 = vmatpush1.msra.mxu0 %v5475
    %5507 = vmatprep.subr.mxu0 0.0
    %5508 = vmatpush1.msra.mxu0 %v5476
    %5509 = vmatprep.subr.mxu0 0.0
    %5510 = vmatpush1.msra.mxu0 %v5477
    %5511 = vmatprep.subr.mxu0 0.0
    %5512 = vmatpush1.msra.mxu0 %v5478
    %5513 = vmatprep.subr.mxu0 0.0
    %5514 = vmatpush1.msra.mxu0 %v5479
    %5515 = vmatprep.subr.mxu0 0.0
    %5516 = vmatpush1.msra.mxu0 %v5480
    %5517 = vmatprep.subr.mxu0 0.0
    %5518 = vmatpush1.msra.mxu0 %v5481
    %5519 = vmatprep.subr.mxu0 0.0
    %5520 = vmatpush1.msra.mxu0 %v5482
    %5521 = vmatprep.subr.mxu0 0.0
    %5522 = vmatpush1.msra.mxu0 %v5483
    %5523 = vmatprep.subr.mxu0 0.0
    %5524 = vmatpush1.msra.mxu0 %v5484
    %5525 = vmatprep.subr.mxu0 0.0
    %5526 = vmatpush1.msra.mxu0 0.0
    %5527 = vmatprep.subr.mxu0 0.0
    %5528 = vmatpush1.msra.mxu0 0.0
    %5529 = vmatprep.subr.mxu0 0.0
    %5530 = vmatpush1.msra.mxu0 0.0
    %5531 = vmatprep.subr.mxu0 0.0
    %5532 = vmatpush1.msra.mxu0 0.0
    %5533 = vmatprep.subr.mxu0 0.0
    %5534 = vmatpush1.msra.mxu0 0.0
    %5535 = vmatprep.subr.mxu0 0.0
    %5536 = vmatpush1.msra.mxu0 0.0
    %5537 = vmatprep.subr.mxu0 0.0
    %5538 = vmatpush1.msra.mxu0 0.0
    %5539 = vmatprep.subr.mxu0 0.0
    %5540 = vmatpush1.msra.mxu0 0.0
    %5541 = vmatprep.subr.mxu0 0.0
    %5542 = vmatpush1.msra.mxu0 0.0
    %5543 = vmatprep.subr.mxu0 0.0
    %5544 = vmatpush1.msra.mxu0 0.0
    %5545 = vmatprep.subr.mxu0 0.0
    %5546 = vmatpush1.msra.mxu0 0.0
    %5547 = vmatprep.subr.mxu0 0.0
    %5548 = vmatpush1.msra.mxu0 0.0
    %5549 = vmatprep.subr.mxu0 0.0
    %5550 = vmatpush1.msra.mxu0 0.0
    %5551 = vmatprep.subr.mxu0 0.0
    %5552 = vmatpush1.msra.mxu0 0.0
    %5553 = vmatprep.subr.mxu0 0.0
    %5554 = vmatpush1.msra.mxu0 0.0
    %5555 = vmatprep.subr.mxu0 0.0
    %5556 = vmatpush1.msra.mxu0 0.0
    %5557 = vmatprep.mubr.f32.mxu0 0.0
    %5558 = vmatmul.mubr.f32.gmra.mrb[0].mxu0 %v5466
    %v5559 = vpop.f32.mrb[0].mxu0
    %v5560 = vadd.f32 %v5491, %v5559
    %v5561 = vpop.f32.mrb[0].mxu0
    %5562 = vmatprep.mubr.f32.mxu0 0.0
    %5563 = vmatmul.mubr.f32.gmra.mrb[0].mxu0 %v5467
    %v5564 = vpop.f32.mrb[0].mxu0
    %v5565 = vadd.f32 %v5491, %v5564
    %v5566 = vpop.f32.mrb[0].mxu0
    %5567 = vdwg.mxu0
    %v5568 = vadd.f32 %v5324, %v5560
    %v5569 = vadd.f32 %v5325, %v5565
    %v5570 = vld [vmem:[%s13] sm:$0x1]
    %v5571 = vld [vmem:[%s14] sm:$0x1]
    %v5572 = vsel %vm66, %v5568, 0.0
    %5573 = vadd.xlane.f32.xlu0 %v5572
    %v5574 = vpop.xlane.xlu0 %5573
    %v5575 = vsel %vm66, %v5569, 0.0
    %5576 = vadd.xlane.f32.xlu0 %v5575
    %v5577 = vpop.xlane.xlu0 %5576
    %v5578 = vmul.f32 %v5574, %v73
    %v5579 = vmul.f32 %v5577, %v73
    %v5580 = vsub.f32 %v5568, %v5578
    %v5581 = vsub.f32 %v5569, %v5579
    %v5582 = vmul.f32 %v5580, %v5580
    %v5583 = vmul.f32 %v5581, %v5581
    %v5584 = vsel %vm66, %v5582, 0.0
    %5585 = vadd.xlane.f32.xlu0 %v5584
    %v5586 = vpop.xlane.xlu0 %5585
    %v5587 = vsel %vm66, %v5583, 0.0
    %5588 = vadd.xlane.f32.xlu0 %v5587
    %v5589 = vpop.xlane.xlu0 %5588
    %v5590 = vmul.f32 %v5586, %v73
    %v5591 = vmul.f32 %v5589, %v73
    %v5592 = vadd.f32 %v5590, 1e-05
    %v5593 = vadd.f32 %v5591, 1e-05
    %v5594 = vrsqrt.pop %v5592
    %v5595 = vrsqrt.pop %v5593
    %v5596 = vmul.f32 %v5580, %v5594
    %v5597 = vmul.f32 %v5581, %v5595
    %v5599 = vlaneseq
    %v5600 = vshrl.u32 %v5599, 7
    %v5601 = vsub.s32 0, %v5600
    %v5602 = vrot.slane %v5570, %v5601
    %v5604 = vmul.f32 %v5596, %v5602
    %v5605 = vmul.f32 %v5597, %v5602
    %v5607 = vlaneseq
    %v5608 = vshrl.u32 %v5607, 7
    %v5609 = vsub.s32 0, %v5608
    %v5610 = vrot.slane %v5571, %v5609
    %v5612 = vadd.f32 %v5604, %v5610
    %v5613 = vadd.f32 %v5605, %v5610
    %v5614 = vld [vmem:[%s15] sm:$0xff]
    %v5615 = vld [vmem:[%s15 + $0x8] sm:$0xff]
    %v5616 = vld [vmem:[%s15 + $0x10] sm:$0xff]
    %v5617 = vld [vmem:[%s15 + $0x18] sm:$0xff]
    %v5618 = vld [vmem:[%s16] sm:$0x1]
    %v5620 = vlaneseq
    %v5621 = vshrl.u32 %v5620, 7
    %v5622 = vsub.s32 0, %v5621
    %v5623 = vrot.slane %v5618, %v5622
    %v5626 = vsel %vm66, %v5612, 0
    %v5629 = vsel %vm66, %v5613, 0
    %5631 = vmatprep.subr.mxu0 0.0
    %5632 = vmatpush1.msra.mxu0 %v5614
    %5633 = vmatprep.subr.mxu0 0.0
    %5634 = vmatpush1.msra.mxu0 %v5615
    %5635 = vmatprep.subr.mxu0 0.0
    %5636 = vmatpush1.msra.mxu0 %v5616
    %5637 = vmatprep.subr.mxu0 0.0
    %5638 = vmatpush1.msra.mxu0 %v5617
    %5639 = vmatprep.subr.mxu0 0.0
    %5640 = vmatpush1.msra.mxu0 0.0
    %5641 = vmatprep.subr.mxu0 0.0
    %5642 = vmatpush1.msra.mxu0 0.0
    %5643 = vmatprep.subr.mxu0 0.0
    %5644 = vmatpush1.msra.mxu0 0.0
    %5645 = vmatprep.subr.mxu0 0.0
    %5646 = vmatpush1.msra.mxu0 0.0
    %5647 = vmatprep.subr.mxu0 0.0
    %5648 = vmatpush1.msra.mxu0 0.0
    %5649 = vmatprep.subr.mxu0 0.0
    %5650 = vmatpush1.msra.mxu0 0.0
    %5651 = vmatprep.subr.mxu0 0.0
    %5652 = vmatpush1.msra.mxu0 0.0
    %5653 = vmatprep.subr.mxu0 0.0
    %5654 = vmatpush1.msra.mxu0 0.0
    %5655 = vmatprep.subr.mxu0 0.0
    %5656 = vmatpush1.msra.mxu0 0.0
    %5657 = vmatprep.subr.mxu0 0.0
    %5658 = vmatpush1.msra.mxu0 0.0
    %5659 = vmatprep.subr.mxu0 0.0
    %5660 = vmatpush1.msra.mxu0 0.0
    %5661 = vmatprep.subr.mxu0 0.0
    %5662 = vmatpush1.msra.mxu0 0.0
    %5663 = vmatprep.subr.mxu0 0.0
    %5664 = vmatpush1.msra.mxu0 0.0
    %5665 = vmatprep.subr.mxu0 0.0
    %5666 = vmatpush1.msra.mxu0 0.0
    %5667 = vmatprep.subr.mxu0 0.0
    %5668 = vmatpush1.msra.mxu0 0.0
    %5669 = vmatprep.subr.mxu0 0.0
    %5670 = vmatpush1.msra.mxu0 0.0
    %5671 = vmatprep.subr.mxu0 0.0
    %5672 = vmatpush1.msra.mxu0 0.0
    %5673 = vmatprep.subr.mxu0 0.0
    %5674 = vmatpush1.msra.mxu0 0.0
    %5675 = vmatprep.subr.mxu0 0.0
    %5676 = vmatpush1.msra.mxu0 0.0
    %5677 = vmatprep.subr.mxu0 0.0
    %5678 = vmatpush1.msra.mxu0 0.0
    %5679 = vmatprep.subr.mxu0 0.0
    %5680 = vmatpush1.msra.mxu0 0.0
    %5681 = vmatprep.subr.mxu0 0.0
    %5682 = vmatpush1.msra.mxu0 0.0
    %5683 = vmatprep.subr.mxu0 0.0
    %5684 = vmatpush1.msra.mxu0 0.0
    %5685 = vmatprep.subr.mxu0 0.0
    %5686 = vmatpush1.msra.mxu0 0.0
    %5687 = vmatprep.subr.mxu0 0.0
    %5688 = vmatpush1.msra.mxu0 0.0
    %5689 = vmatprep.subr.mxu0 0.0
    %5690 = vmatpush1.msra.mxu0 0.0
    %5691 = vmatprep.subr.mxu0 0.0
    %5692 = vmatpush1.msra.mxu0 0.0
    %5693 = vmatprep.subr.mxu0 0.0
    %5694 = vmatpush1.msra.mxu0 0.0
    %5695 = vmatprep.mubr.f32.mxu0 0.0
    %5696 = vmatmul.mubr.f32.gmra.mrb[0].mxu0 %v5626
    %v5697 = vpop.f32.mrb[0].mxu0
    %v5698 = vadd.f32 %v5623, %v5697
    %v5699 = vpop.f32.mrb[0].mxu0
    %5700 = vmatprep.mubr.f32.mxu0 0.0
    %5701 = vmatmul.mubr.f32.gmra.mrb[0].mxu0 %v5629
    %v5702 = vpop.f32.mrb[0].mxu0
    %v5703 = vadd.f32 %v5623, %v5702
    %v5704 = vpop.f32.mrb[0].mxu0
    %5705 = vdwg.mxu0
    %5706 = vst.msk [vmem:[#allocation2] sm:$0xff] %vm289, %v5698
    %5707 = vst.msk [vmem:[#allocation2 + $0x8] sm:$0xff] %vm289, %v5703
    %5710 = vrot.lane.b32.xlu0 %v2442, 32
    %v5711 = vpop.permute.xlu0 %5710
    %5712 = vrot.lane.b32.xlu0 %v2443, 32
    %v5713 = vpop.permute.xlu0 %5712
    %5718 = vrot.lane.b32.xlu0 %v3820, 64
    %v5719 = vpop.permute.xlu0 %5718
    %5720 = vrot.lane.b32.xlu0 %v3821, 64
    %v5721 = vpop.permute.xlu0 %5720
    %5726 = vrot.lane.b32.xlu0 %v5198, 96
    %v5727 = vpop.permute.xlu0 %5726
    %5728 = vrot.lane.b32.xlu0 %v5199, 96
    %v5729 = vpop.permute.xlu0 %5728
    %v5732 = vsel %vm66, %v1072, %v5711
    %v5733 = vsel %vm66, %v1073, %v5713
    %vm5734 = vcmask 523264
    %v5735 = vsel %vm5734, %v5732, %v5719
    %v5736 = vsel %vm5734, %v5733, %v5721
    %vm5737 = vcmask 785408
    %v5738 = vsel %vm5737, %v5735, %v5727
    %v5739 = vsel %vm5737, %v5736, %v5729
    %5740 = vst [vmem:[#allocation4] sm:$0xff] %v5738
    %5741 = vst [vmem:[#allocation4 + $0x8] sm:$0xff] %v5739
    // Predicated region
    $region70: #{tpu_custom_call.1} parent=1 // pred_check
      _
    $region71: #{tpu_custom_call.1} parent=1 // pred_check_branch
      %5743 = sbr.rel (0) target = $region73
    $region72: #{tpu_custom_call.1} parent=1 // pred_region
      %s5745 = ssub.s32 256, 256
      %5746 = vsyncadd [#allocation3], %s5745
      %s5747 = sshll.u32 [#allocation2], 4
      %s5748 = int_to_ptr.vmem [resolvable:$true] %s5747
      %5753 = dma.vmem_to_hbm [thread:$0]  %s5748, 256, %s17, [#allocation3], 128, 128, 8
    $region73: #{tpu_custom_call.1} parent=1 // pred_fallthru
      _
    // Predicated region
    $region74: #{tpu_custom_call.1} parent=1 // pred_check
      _
    $region75: #{tpu_custom_call.1} parent=1 // pred_check_branch
      %5755 = sbr.rel (0) target = $region77
    $region76: #{tpu_custom_call.1} parent=1 // pred_region
      %s5757 = ssub.s32 256, 256
      %5758 = vsyncadd [#allocation5], %s5757
      %s5759 = sshll.u32 [#allocation4], 4
      %s5760 = int_to_ptr.vmem [resolvable:$true] %s5759
      %5765 = dma.vmem_to_hbm [thread:$0]  %s5760, 256, %s18, [#allocation5], 128, 128, 8
    $region77: #{tpu_custom_call.1} parent=1 // pred_fallthru
      _
    // Predicated region
    $region78: #{tpu_custom_call.1} parent=1 // pred_check
      _
    $region79: #{tpu_custom_call.1} parent=1 // pred_check_branch
      %5767 = sbr.rel (0) target = $region81
    $region80: #{tpu_custom_call.1} parent=1 // pred_region
      %5768 = dma.done [#allocation3], 256
    $region81: #{tpu_custom_call.1} parent=1 // pred_fallthru
      _
    // Predicated region
    $region82: #{tpu_custom_call.1} parent=1 // pred_check
      _
    $region83: #{tpu_custom_call.1} parent=1 // pred_check_branch
      %5770 = sbr.rel (0) target = $region85
    $region84: #{tpu_custom_call.1} parent=1 // pred_region
      %5771 = dma.done [#allocation5], 256
    $region85: #{tpu_custom_call.1} parent=1 // pred_fallthru
      _
    %5772 = vsyncpa [#allocation3], 1
    %5773 = vsyncpa [#allocation5], 1

</llo_original>
